<compile_context>
chip_gen: v7x
topology: tpu7x:2x2x1
jax: 0.10.0
libtpu: 0.0.40
codegen_flags: <defaults>
</compile_context>

<pallas_src>
import jax
import jax.numpy as jnp
import numpy as np
from jax.experimental import pallas as pl
from jax.experimental.pallas import tpu as pltpu

EMBEDDING_WIDTH = 128
LAYER_SIZE = 256
MAX_WORDS = 10000
NUM_LAYERS = 2


def encoder_lstm_kernel(x_ref, wih0_ref, whh0_ref, b0_ref,
                        wih1_ref, whh1_ref, b1_ref,
                        hn_ref, cn_ref,
                        gin_ref, h1seq_ref):
    """2-layer LSTM, wavefront-split per layer, everything VMEM-resident.

    x_ref:     (T*B, E)  time-major flattened embedded inputs
    wihK_ref:  (in, 4H)  input->gate weights, gate columns in [i, f, o, g]
    whhK_ref:  (H, 4H)   hidden->gate weights, gate columns in [i, f, o, g]
    bK_ref:    (1, 4H)   combined bias (b_ih + b_hh), [i, f, o, g]
    hn_ref:    (2, B, H) final hidden states per layer
    cn_ref:    (2, B, H) final cell states per layer
    gin_ref:   (T*B, 4H) scratch: batched input projection for current layer
    h1seq_ref: (T*B, H)  scratch: layer-0 hidden outputs for every timestep
    """
    B = hn_ref.shape[1]
    H = whh0_ref.shape[0]
    TB = x_ref.shape[0]
    T = TB // B
    H3 = 3 * H

    def cell(gates_in, h, c, whh):
        # Only the recurrent matmul sits on the serial path.
        gates = gates_in + jnp.dot(h, whh, preferred_element_type=jnp.float32)
        sig = jax.nn.sigmoid(gates[:, :H3])      # [i, f, o] in one EUP pass
        g = jnp.tanh(gates[:, H3:])
        i = sig[:, :H]
        f = sig[:, H:2 * H]
        o = sig[:, 2 * H:]
        c_new = f * c + i * g
        h_new = o * jnp.tanh(c_new)
        return h_new, c_new

    z = jnp.zeros((B, H), jnp.float32)

    # ---- Layer 0: input projection hoisted out of the recurrence ----
    # One (T*B, E) @ (E, 4H) matmul; bias folded in here (no per-step bcast).
    gin_ref[...] = (jnp.dot(x_ref[...], wih0_ref[...],
                            preferred_element_type=jnp.float32)
                    + b0_ref[...])

    whh0 = whh0_ref[...]                         # point-of-use weight load
    h, c = z, z
    for t in range(T):                           # static T -> fully unrolled
        h, c = cell(gin_ref[pl.ds(t * B, B), :], h, c, whh0)
        h1seq_ref[pl.ds(t * B, B), :] = h
    hn_ref[0] = h
    cn_ref[0] = c

    # ---- Layer 1: batched input projection from the layer-0 sequence ----
    gin_ref[...] = (jnp.dot(h1seq_ref[...], wih1_ref[...],
                            preferred_element_type=jnp.float32)
                    + b1_ref[...])

    whh1 = whh1_ref[...]
    h, c = z, z
    for t in range(T):
        h, c = cell(gin_ref[pl.ds(t * B, B), :], h, c, whh1)
    hn_ref[1] = h
    cn_ref[1] = c


def init_params(key):
    ks = jax.random.split(key, 9)
    p = {}
    # nn.Embedding weight, uniform(-0.05, 0.05) as in the module's __init__.
    p["embedding"] = jax.random.uniform(
        ks[0], (MAX_WORDS, EMBEDDING_WIDTH), jnp.float32, -0.05, 0.05)
    # nn.LSTM default init: uniform(-1/sqrt(H), 1/sqrt(H)) for all params.
    bound = 1.0 / float(np.sqrt(LAYER_SIZE))
    shapes = {
        "weight_ih_l0": (4 * LAYER_SIZE, EMBEDDING_WIDTH),
        "weight_hh_l0": (4 * LAYER_SIZE, LAYER_SIZE),
        "bias_ih_l0": (4 * LAYER_SIZE,),
        "bias_hh_l0": (4 * LAYER_SIZE,),
        "weight_ih_l1": (4 * LAYER_SIZE, LAYER_SIZE),
        "weight_hh_l1": (4 * LAYER_SIZE, LAYER_SIZE),
        "bias_ih_l1": (4 * LAYER_SIZE,),
        "bias_hh_l1": (4 * LAYER_SIZE,),
    }
    for k_i, (name, shp) in zip(ks[1:], shapes.items()):
        p[name] = jax.random.uniform(k_i, shp, jnp.float32, -bound, bound)
    return p


def prepare_kernel_params(params):
    """One-time weight packing, done OUTSIDE the per-call forward:
    transpose to (in, 4H), permute gate columns [i,f,g,o] -> [i,f,o,g],
    and combine the two biases."""
    H = LAYER_SIZE

    def perm(w):  # last-dim gate blocks: i, f, (skip g), o, then g
        return jnp.concatenate(
            [w[..., 0:2 * H], w[..., 3 * H:4 * H], w[..., 2 * H:3 * H]],
            axis=-1)

    def pack(layer):
        wih = params[f"weight_ih_l{layer}"].T                    # (in, 4H)
        whh = params[f"weight_hh_l{layer}"].T                    # (H, 4H)
        b = (params[f"bias_ih_l{layer}"]
             + params[f"bias_hh_l{layer}"]).reshape(1, 4 * H)
        return perm(wih), perm(whh), perm(b)

    wih0, whh0, b0 = pack(0)
    wih1, whh1, b1 = pack(1)
    return {"embedding": params["embedding"],
            "wih0": wih0, "whh0": whh0, "b0": b0,
            "wih1": wih1, "whh1": whh1, "b1": b1}


def encoder_forward(inputs, kp):
    """EncoderModel.forward: embedding lookup (glue) + 2-layer LSTM (kernel).

    Returns (h_n, c_n), each (NUM_LAYERS, B, LAYER_SIZE)."""
    B, T = inputs.shape
    H = LAYER_SIZE
    # Embedding gather is data-dependent indexing -> JAX glue, gathered
    # directly in time-major flattened order (row t*B + b).
    idx = jnp.transpose(inputs).reshape(-1)                         # (T*B,)
    x = jnp.take(kp["embedding"], idx, axis=0).astype(jnp.float32)  # (T*B, E)

    vmem = pl.BlockSpec(memory_space=pltpu.MemorySpace.VMEM)
    hn, cn = pl.pallas_call(
        encoder_lstm_kernel,
        out_shape=(jax.ShapeDtypeStruct((NUM_LAYERS, B, H), jnp.float32),
                   jax.ShapeDtypeStruct((NUM_LAYERS, B, H), jnp.float32)),
        in_specs=[vmem] * 7,
        out_specs=(vmem, vmem),
        scratch_shapes=[pltpu.VMEM((T * B, 4 * H), jnp.float32),
                        pltpu.VMEM((T * B, H), jnp.float32)],
    )(x, kp["wih0"], kp["whh0"], kp["b0"],
      kp["wih1"], kp["whh1"], kp["b1"])
    return hn, cn


def encoder_forward_ref(inputs, params):
    """Pure-JAX reference (PyTorch nn.LSTM semantics, no Pallas)."""
    x = jnp.take(params["embedding"], inputs, axis=0)  # (B, T, E)
    B, T = inputs.shape
    H = LAYER_SIZE
    h = [jnp.zeros((B, H), jnp.float32) for _ in range(NUM_LAYERS)]
    c = [jnp.zeros((B, H), jnp.float32) for _ in range(NUM_LAYERS)]
    for t in range(T):
        inp = x[:, t, :]
        for l in range(NUM_LAYERS):
            wih = params[f"weight_ih_l{l}"]
            whh = params[f"weight_hh_l{l}"]
            b = params[f"bias_ih_l{l}"] + params[f"bias_hh_l{l}"]
            gates = inp @ wih.T + h[l] @ whh.T + b
            i, f, g, o = jnp.split(gates, 4, axis=-1)
            i = jax.nn.sigmoid(i)
            f = jax.nn.sigmoid(f)
            g = jnp.tanh(g)
            o = jax.nn.sigmoid(o)
            c[l] = f * c[l] + i * g
            h[l] = o * jnp.tanh(c[l])
            inp = h[l]
    return jnp.stack(h), jnp.stack(c)


if __name__ == "__main__":
    key = jax.random.PRNGKey(0)
    pkey, ikey = jax.random.split(key)
    params = init_params(pkey)
    # Pack weights once, off the per-call forward path.
    kparams = prepare_kernel_params(params)

    B, T = 2, 8  # small batch / sequence length
    inputs = jax.random.randint(ikey, (B, T), 0, MAX_WORDS, dtype=jnp.int32)

    hn, cn = jax.block_until_ready(encoder_forward(inputs, kparams))
    hn_ref, cn_ref = encoder_forward_ref(inputs, params)

    np.testing.assert_allclose(np.asarray(hn), np.asarray(hn_ref),
                               rtol=1e-5, atol=1e-5)
    np.testing.assert_allclose(np.asarray(cn), np.asarray(cn_ref),
                               rtol=1e-5, atol=1e-5)
    assert hn.shape == (NUM_LAYERS, B, LAYER_SIZE)
    assert cn.shape == (NUM_LAYERS, B, LAYER_SIZE)
    print("KERNEL_OK")
</pallas_src>

<mosaic_0001>
module attributes {stable_mosaic.version = 11 : i64} {
  func.func @encoder_lstm_kernel(%arg0: memref<16x128xf32, #tpu.memory_space<vmem>>, %arg1: memref<128x1024xf32, #tpu.memory_space<vmem>>, %arg2: memref<256x1024xf32, #tpu.memory_space<vmem>>, %arg3: memref<1x1024xf32, #tpu.memory_space<vmem>>, %arg4: memref<256x1024xf32, #tpu.memory_space<vmem>>, %arg5: memref<256x1024xf32, #tpu.memory_space<vmem>>, %arg6: memref<1x1024xf32, #tpu.memory_space<vmem>>, %arg7: memref<2x2x256xf32, #tpu.memory_space<vmem>>, %arg8: memref<2x2x256xf32, #tpu.memory_space<vmem>>, %arg9: memref<16x1024xf32, #tpu.memory_space<vmem>>, %arg10: memref<16x256xf32, #tpu.memory_space<vmem>>) attributes {dimension_semantics = [], scalar_prefetch = 0 : i64, scratch_operands = 2 : i64, tpu.core_type = #tpu.core_type<tc>} {
    %cst = arith.constant 0.000000e+00 : f32
    %0 = vector.broadcast %cst : f32 to vector<2x256xf32>
    %c0 = arith.constant 0 : index
    %c0_0 = arith.constant 0 : index
    %1 = vector.load %arg0[%c0, %c0_0] : memref<16x128xf32, #tpu.memory_space<vmem>>, vector<16x128xf32>
    %c0_1 = arith.constant 0 : index
    %c0_2 = arith.constant 0 : index
    %2 = vector.load %arg1[%c0_1, %c0_2] : memref<128x1024xf32, #tpu.memory_space<vmem>>, vector<128x1024xf32>
    %cst_3 = arith.constant dense<0.000000e+00> : vector<16x1024xf32>
    %3 = tpu.matmul %1, %2, %cst_3 {dimension_numbers = #tpu.dot_dimension_numbers<[1], [0], [0], [1], [0, 0, 1, 1], [], []>} : vector<16x128xf32>, vector<128x1024xf32>, vector<16x1024xf32> -> vector<16x1024xf32>
    %c0_4 = arith.constant 0 : index
    %c0_5 = arith.constant 0 : index
    %4 = vector.load %arg3[%c0_4, %c0_5] : memref<1x1024xf32, #tpu.memory_space<vmem>>, vector<1x1024xf32>
    %5 = vector.broadcast %4 : vector<1x1024xf32> to vector<16x1024xf32>
    %6 = arith.addf %3, %5 : vector<16x1024xf32>
    %c0_6 = arith.constant 0 : index
    %c0_7 = arith.constant 0 : index
    %7 = vector.load %arg9[%c0_6, %c0_7] : memref<16x1024xf32, #tpu.memory_space<vmem>>, vector<16x1024xf32>
    tpu.vector_store %arg9[%c0_6, %c0_7], %6 {strides = array<i32>} : memref<16x1024xf32, #tpu.memory_space<vmem>>, vector<16x1024xf32>,
    %c0_8 = arith.constant 0 : index
    %c0_9 = arith.constant 0 : index
    %8 = vector.load %arg2[%c0_8, %c0_9] : memref<256x1024xf32, #tpu.memory_space<vmem>>, vector<256x1024xf32>
    %c0_10 = arith.constant 0 : index
    %c0_11 = arith.constant 0 : index
    %9 = vector.load %arg9[%c0_10, %c0_11] : memref<16x1024xf32, #tpu.memory_space<vmem>>, vector<2x1024xf32>
    %cst_12 = arith.constant dense<0.000000e+00> : vector<2x1024xf32>
    %10 = tpu.matmul %0, %8, %cst_12 {dimension_numbers = #tpu.dot_dimension_numbers<[1], [0], [0], [1], [0, 0, 1, 1], [], []>} : vector<2x256xf32>, vector<256x1024xf32>, vector<2x1024xf32> -> vector<2x1024xf32>
    %11 = arith.addf %9, %10 : vector<2x1024xf32>
    %12 = vector.extract_strided_slice %11 {offsets = [0, 0], sizes = [2, 768], strides = [1, 1]} : vector<2x1024xf32> to vector<2x768xf32>
    %13 = arith.negf %12 : vector<2x768xf32>
    %14 = math.exp %13 : vector<2x768xf32>
    %cst_13 = arith.constant 1.000000e+00 : f32
    %15 = vector.broadcast %cst_13 : f32 to vector<2x768xf32>
    %16 = arith.addf %15, %14 : vector<2x768xf32>
    %17 = arith.divf %15, %16 : vector<2x768xf32>
    %18 = vector.extract_strided_slice %11 {offsets = [0, 768], sizes = [2, 256], strides = [1, 1]} : vector<2x1024xf32> to vector<2x256xf32>
    %19 = math.tanh %18 : vector<2x256xf32>
    %20 = vector.extract_strided_slice %17 {offsets = [0, 0], sizes = [2, 256], strides = [1, 1]} : vector<2x768xf32> to vector<2x256xf32>
    %21 = vector.extract_strided_slice %17 {offsets = [0, 256], sizes = [2, 256], strides = [1, 1]} : vector<2x768xf32> to vector<2x256xf32>
    %22 = vector.extract_strided_slice %17 {offsets = [0, 512], sizes = [2, 256], strides = [1, 1]} : vector<2x768xf32> to vector<2x256xf32>
    %23 = arith.mulf %21, %0 : vector<2x256xf32>
    %24 = arith.mulf %20, %19 : vector<2x256xf32>
    %25 = arith.addf %23, %24 : vector<2x256xf32>
    %26 = math.tanh %25 : vector<2x256xf32>
    %27 = arith.mulf %22, %26 : vector<2x256xf32>
    %c0_14 = arith.constant 0 : index
    %c0_15 = arith.constant 0 : index
    %28 = vector.load %arg10[%c0_14, %c0_15] : memref<16x256xf32, #tpu.memory_space<vmem>>, vector<2x256xf32>
    tpu.vector_store %arg10[%c0_14, %c0_15], %27 {strides = array<i32>} : memref<16x256xf32, #tpu.memory_space<vmem>>, vector<2x256xf32>,
    %c2 = arith.constant 2 : index
    %c0_16 = arith.constant 0 : index
    %29 = vector.load %arg9[%c2, %c0_16] : memref<16x1024xf32, #tpu.memory_space<vmem>>, vector<2x1024xf32>
    %cst_17 = arith.constant dense<0.000000e+00> : vector<2x1024xf32>
    %30 = tpu.matmul %27, %8, %cst_17 {dimension_numbers = #tpu.dot_dimension_numbers<[1], [0], [0], [1], [0, 0, 1, 1], [], []>} : vector<2x256xf32>, vector<256x1024xf32>, vector<2x1024xf32> -> vector<2x1024xf32>
    %31 = arith.addf %29, %30 : vector<2x1024xf32>
    %32 = vector.extract_strided_slice %31 {offsets = [0, 0], sizes = [2, 768], strides = [1, 1]} : vector<2x1024xf32> to vector<2x768xf32>
    %33 = arith.negf %32 : vector<2x768xf32>
    %34 = math.exp %33 : vector<2x768xf32>
    %cst_18 = arith.constant 1.000000e+00 : f32
    %35 = vector.broadcast %cst_18 : f32 to vector<2x768xf32>
    %36 = arith.addf %35, %34 : vector<2x768xf32>
    %37 = arith.divf %35, %36 : vector<2x768xf32>
    %38 = vector.extract_strided_slice %31 {offsets = [0, 768], sizes = [2, 256], strides = [1, 1]} : vector<2x1024xf32> to vector<2x256xf32>
    %39 = math.tanh %38 : vector<2x256xf32>
    %40 = vector.extract_strided_slice %37 {offsets = [0, 0], sizes = [2, 256], strides = [1, 1]} : vector<2x768xf32> to vector<2x256xf32>
    %41 = vector.extract_strided_slice %37 {offsets = [0, 256], sizes = [2, 256], strides = [1, 1]} : vector<2x768xf32> to vector<2x256xf32>
    %42 = vector.extract_strided_slice %37 {offsets = [0, 512], sizes = [2, 256], strides = [1, 1]} : vector<2x768xf32> to vector<2x256xf32>
    %43 = arith.mulf %41, %25 : vector<2x256xf32>
    %44 = arith.mulf %40, %39 : vector<2x256xf32>
    %45 = arith.addf %43, %44 : vector<2x256xf32>
    %46 = math.tanh %45 : vector<2x256xf32>
    %47 = arith.mulf %42, %46 : vector<2x256xf32>
    %c2_19 = arith.constant 2 : index
    %c0_20 = arith.constant 0 : index
    %48 = vector.load %arg10[%c2_19, %c0_20] : memref<16x256xf32, #tpu.memory_space<vmem>>, vector<2x256xf32>
    tpu.vector_store %arg10[%c2_19, %c0_20], %47 {strides = array<i32>} : memref<16x256xf32, #tpu.memory_space<vmem>>, vector<2x256xf32>,
    %c4 = arith.constant 4 : index
    %c0_21 = arith.constant 0 : index
    %49 = vector.load %arg9[%c4, %c0_21] : memref<16x1024xf32, #tpu.memory_space<vmem>>, vector<2x1024xf32>
    %cst_22 = arith.constant dense<0.000000e+00> : vector<2x1024xf32>
    %50 = tpu.matmul %47, %8, %cst_22 {dimension_numbers = #tpu.dot_dimension_numbers<[1], [0], [0], [1], [0, 0, 1, 1], [], []>} : vector<2x256xf32>, vector<256x1024xf32>, vector<2x1024xf32> -> vector<2x1024xf32>
    %51 = arith.addf %49, %50 : vector<2x1024xf32>
    %52 = vector.extract_strided_slice %51 {offsets = [0, 0], sizes = [2, 768], strides = [1, 1]} : vector<2x1024xf32> to vector<2x768xf32>
    %53 = arith.negf %52 : vector<2x768xf32>
    %54 = math.exp %53 : vector<2x768xf32>
    %cst_23 = arith.constant 1.000000e+00 : f32
    %55 = vector.broadcast %cst_23 : f32 to vector<2x768xf32>
    %56 = arith.addf %55, %54 : vector<2x768xf32>
    %57 = arith.divf %55, %56 : vector<2x768xf32>
    %58 = vector.extract_strided_slice %51 {offsets = [0, 768], sizes = [2, 256], strides = [1, 1]} : vector<2x1024xf32> to vector<2x256xf32>
    %59 = math.tanh %58 : vector<2x256xf32>
    %60 = vector.extract_strided_slice %57 {offsets = [0, 0], sizes = [2, 256], strides = [1, 1]} : vector<2x768xf32> to vector<2x256xf32>
    %61 = vector.extract_strided_slice %57 {offsets = [0, 256], sizes = [2, 256], strides = [1, 1]} : vector<2x768xf32> to vector<2x256xf32>
    %62 = vector.extract_strided_slice %57 {offsets = [0, 512], sizes = [2, 256], strides = [1, 1]} : vector<2x768xf32> to vector<2x256xf32>
    %63 = arith.mulf %61, %45 : vector<2x256xf32>
    %64 = arith.mulf %60, %59 : vector<2x256xf32>
    %65 = arith.addf %63, %64 : vector<2x256xf32>
    %66 = math.tanh %65 : vector<2x256xf32>
    %67 = arith.mulf %62, %66 : vector<2x256xf32>
    %c4_24 = arith.constant 4 : index
    %c0_25 = arith.constant 0 : index
    %68 = vector.load %arg10[%c4_24, %c0_25] : memref<16x256xf32, #tpu.memory_space<vmem>>, vector<2x256xf32>
    tpu.vector_store %arg10[%c4_24, %c0_25], %67 {strides = array<i32>} : memref<16x256xf32, #tpu.memory_space<vmem>>, vector<2x256xf32>,
    %c6 = arith.constant 6 : index
    %c0_26 = arith.constant 0 : index
    %69 = vector.load %arg9[%c6, %c0_26] : memref<16x1024xf32, #tpu.memory_space<vmem>>, vector<2x1024xf32>
    %cst_27 = arith.constant dense<0.000000e+00> : vector<2x1024xf32>
    %70 = tpu.matmul %67, %8, %cst_27 {dimension_numbers = #tpu.dot_dimension_numbers<[1], [0], [0], [1], [0, 0, 1, 1], [], []>} : vector<2x256xf32>, vector<256x1024xf32>, vector<2x1024xf32> -> vector<2x1024xf32>
    %71 = arith.addf %69, %70 : vector<2x1024xf32>
    %72 = vector.extract_strided_slice %71 {offsets = [0, 0], sizes = [2, 768], strides = [1, 1]} : vector<2x1024xf32> to vector<2x768xf32>
    %73 = arith.negf %72 : vector<2x768xf32>
    %74 = math.exp %73 : vector<2x768xf32>
    %cst_28 = arith.constant 1.000000e+00 : f32
    %75 = vector.broadcast %cst_28 : f32 to vector<2x768xf32>
    %76 = arith.addf %75, %74 : vector<2x768xf32>
    %77 = arith.divf %75, %76 : vector<2x768xf32>
    %78 = vector.extract_strided_slice %71 {offsets = [0, 768], sizes = [2, 256], strides = [1, 1]} : vector<2x1024xf32> to vector<2x256xf32>
    %79 = math.tanh %78 : vector<2x256xf32>
    %80 = vector.extract_strided_slice %77 {offsets = [0, 0], sizes = [2, 256], strides = [1, 1]} : vector<2x768xf32> to vector<2x256xf32>
    %81 = vector.extract_strided_slice %77 {offsets = [0, 256], sizes = [2, 256], strides = [1, 1]} : vector<2x768xf32> to vector<2x256xf32>
    %82 = vector.extract_strided_slice %77 {offsets = [0, 512], sizes = [2, 256], strides = [1, 1]} : vector<2x768xf32> to vector<2x256xf32>
    %83 = arith.mulf %81, %65 : vector<2x256xf32>
    %84 = arith.mulf %80, %79 : vector<2x256xf32>
    %85 = arith.addf %83, %84 : vector<2x256xf32>
    %86 = math.tanh %85 : vector<2x256xf32>
    %87 = arith.mulf %82, %86 : vector<2x256xf32>
    %c6_29 = arith.constant 6 : index
    %c0_30 = arith.constant 0 : index
    %88 = vector.load %arg10[%c6_29, %c0_30] : memref<16x256xf32, #tpu.memory_space<vmem>>, vector<2x256xf32>
    tpu.vector_store %arg10[%c6_29, %c0_30], %87 {strides = array<i32>} : memref<16x256xf32, #tpu.memory_space<vmem>>, vector<2x256xf32>,
    %c8 = arith.constant 8 : index
    %c0_31 = arith.constant 0 : index
    %89 = vector.load %arg9[%c8, %c0_31] : memref<16x1024xf32, #tpu.memory_space<vmem>>, vector<2x1024xf32>
    %cst_32 = arith.constant dense<0.000000e+00> : vector<2x1024xf32>
    %90 = tpu.matmul %87, %8, %cst_32 {dimension_numbers = #tpu.dot_dimension_numbers<[1], [0], [0], [1], [0, 0, 1, 1], [], []>} : vector<2x256xf32>, vector<256x1024xf32>, vector<2x1024xf32> -> vector<2x1024xf32>
    %91 = arith.addf %89, %90 : vector<2x1024xf32>
    %92 = vector.extract_strided_slice %91 {offsets = [0, 0], sizes = [2, 768], strides = [1, 1]} : vector<2x1024xf32> to vector<2x768xf32>
    %93 = arith.negf %92 : vector<2x768xf32>
    %94 = math.exp %93 : vector<2x768xf32>
    %cst_33 = arith.constant 1.000000e+00 : f32
    %95 = vector.broadcast %cst_33 : f32 to vector<2x768xf32>
    %96 = arith.addf %95, %94 : vector<2x768xf32>
    %97 = arith.divf %95, %96 : vector<2x768xf32>
    %98 = vector.extract_strided_slice %91 {offsets = [0, 768], sizes = [2, 256], strides = [1, 1]} : vector<2x1024xf32> to vector<2x256xf32>
    %99 = math.tanh %98 : vector<2x256xf32>
    %100 = vector.extract_strided_slice %97 {offsets = [0, 0], sizes = [2, 256], strides = [1, 1]} : vector<2x768xf32> to vector<2x256xf32>
    %101 = vector.extract_strided_slice %97 {offsets = [0, 256], sizes = [2, 256], strides = [1, 1]} : vector<2x768xf32> to vector<2x256xf32>
    %102 = vector.extract_strided_slice %97 {offsets = [0, 512], sizes = [2, 256], strides = [1, 1]} : vector<2x768xf32> to vector<2x256xf32>
    %103 = arith.mulf %101, %85 : vector<2x256xf32>
    %104 = arith.mulf %100, %99 : vector<2x256xf32>
    %105 = arith.addf %103, %104 : vector<2x256xf32>
    %106 = math.tanh %105 : vector<2x256xf32>
    %107 = arith.mulf %102, %106 : vector<2x256xf32>
    %c8_34 = arith.constant 8 : index
    %c0_35 = arith.constant 0 : index
    %108 = vector.load %arg10[%c8_34, %c0_35] : memref<16x256xf32, #tpu.memory_space<vmem>>, vector<2x256xf32>
    tpu.vector_store %arg10[%c8_34, %c0_35], %107 {strides = array<i32>} : memref<16x256xf32, #tpu.memory_space<vmem>>, vector<2x256xf32>,
    %c10 = arith.constant 10 : index
    %c0_36 = arith.constant 0 : index
    %109 = vector.load %arg9[%c10, %c0_36] : memref<16x1024xf32, #tpu.memory_space<vmem>>, vector<2x1024xf32>
    %cst_37 = arith.constant dense<0.000000e+00> : vector<2x1024xf32>
    %110 = tpu.matmul %107, %8, %cst_37 {dimension_numbers = #tpu.dot_dimension_numbers<[1], [0], [0], [1], [0, 0, 1, 1], [], []>} : vector<2x256xf32>, vector<256x1024xf32>, vector<2x1024xf32> -> vector<2x1024xf32>
    %111 = arith.addf %109, %110 : vector<2x1024xf32>
    %112 = vector.extract_strided_slice %111 {offsets = [0, 0], sizes = [2, 768], strides = [1, 1]} : vector<2x1024xf32> to vector<2x768xf32>
    %113 = arith.negf %112 : vector<2x768xf32>
    %114 = math.exp %113 : vector<2x768xf32>
    %cst_38 = arith.constant 1.000000e+00 : f32
    %115 = vector.broadcast %cst_38 : f32 to vector<2x768xf32>
    %116 = arith.addf %115, %114 : vector<2x768xf32>
    %117 = arith.divf %115, %116 : vector<2x768xf32>
    %118 = vector.extract_strided_slice %111 {offsets = [0, 768], sizes = [2, 256], strides = [1, 1]} : vector<2x1024xf32> to vector<2x256xf32>
    %119 = math.tanh %118 : vector<2x256xf32>
    %120 = vector.extract_strided_slice %117 {offsets = [0, 0], sizes = [2, 256], strides = [1, 1]} : vector<2x768xf32> to vector<2x256xf32>
    %121 = vector.extract_strided_slice %117 {offsets = [0, 256], sizes = [2, 256], strides = [1, 1]} : vector<2x768xf32> to vector<2x256xf32>
    %122 = vector.extract_strided_slice %117 {offsets = [0, 512], sizes = [2, 256], strides = [1, 1]} : vector<2x768xf32> to vector<2x256xf32>
    %123 = arith.mulf %121, %105 : vector<2x256xf32>
    %124 = arith.mulf %120, %119 : vector<2x256xf32>
    %125 = arith.addf %123, %124 : vector<2x256xf32>
    %126 = math.tanh %125 : vector<2x256xf32>
    %127 = arith.mulf %122, %126 : vector<2x256xf32>
    %c10_39 = arith.constant 10 : index
    %c0_40 = arith.constant 0 : index
    %128 = vector.load %arg10[%c10_39, %c0_40] : memref<16x256xf32, #tpu.memory_space<vmem>>, vector<2x256xf32>
    tpu.vector_store %arg10[%c10_39, %c0_40], %127 {strides = array<i32>} : memref<16x256xf32, #tpu.memory_space<vmem>>, vector<2x256xf32>,
    %c12 = arith.constant 12 : index
    %c0_41 = arith.constant 0 : index
    %129 = vector.load %arg9[%c12, %c0_41] : memref<16x1024xf32, #tpu.memory_space<vmem>>, vector<2x1024xf32>
    %cst_42 = arith.constant dense<0.000000e+00> : vector<2x1024xf32>
    %130 = tpu.matmul %127, %8, %cst_42 {dimension_numbers = #tpu.dot_dimension_numbers<[1], [0], [0], [1], [0, 0, 1, 1], [], []>} : vector<2x256xf32>, vector<256x1024xf32>, vector<2x1024xf32> -> vector<2x1024xf32>
    %131 = arith.addf %129, %130 : vector<2x1024xf32>
    %132 = vector.extract_strided_slice %131 {offsets = [0, 0], sizes = [2, 768], strides = [1, 1]} : vector<2x1024xf32> to vector<2x768xf32>
    %133 = arith.negf %132 : vector<2x768xf32>
    %134 = math.exp %133 : vector<2x768xf32>
    %cst_43 = arith.constant 1.000000e+00 : f32
    %135 = vector.broadcast %cst_43 : f32 to vector<2x768xf32>
    %136 = arith.addf %135, %134 : vector<2x768xf32>
    %137 = arith.divf %135, %136 : vector<2x768xf32>
    %138 = vector.extract_strided_slice %131 {offsets = [0, 768], sizes = [2, 256], strides = [1, 1]} : vector<2x1024xf32> to vector<2x256xf32>
    %139 = math.tanh %138 : vector<2x256xf32>
    %140 = vector.extract_strided_slice %137 {offsets = [0, 0], sizes = [2, 256], strides = [1, 1]} : vector<2x768xf32> to vector<2x256xf32>
    %141 = vector.extract_strided_slice %137 {offsets = [0, 256], sizes = [2, 256], strides = [1, 1]} : vector<2x768xf32> to vector<2x256xf32>
    %142 = vector.extract_strided_slice %137 {offsets = [0, 512], sizes = [2, 256], strides = [1, 1]} : vector<2x768xf32> to vector<2x256xf32>
    %143 = arith.mulf %141, %125 : vector<2x256xf32>
    %144 = arith.mulf %140, %139 : vector<2x256xf32>
    %145 = arith.addf %143, %144 : vector<2x256xf32>
    %146 = math.tanh %145 : vector<2x256xf32>
    %147 = arith.mulf %142, %146 : vector<2x256xf32>
    %c12_44 = arith.constant 12 : index
    %c0_45 = arith.constant 0 : index
    %148 = vector.load %arg10[%c12_44, %c0_45] : memref<16x256xf32, #tpu.memory_space<vmem>>, vector<2x256xf32>
    tpu.vector_store %arg10[%c12_44, %c0_45], %147 {strides = array<i32>} : memref<16x256xf32, #tpu.memory_space<vmem>>, vector<2x256xf32>,
    %c14 = arith.constant 14 : index
    %c0_46 = arith.constant 0 : index
    %149 = vector.load %arg9[%c14, %c0_46] : memref<16x1024xf32, #tpu.memory_space<vmem>>, vector<2x1024xf32>
    %cst_47 = arith.constant dense<0.000000e+00> : vector<2x1024xf32>
    %150 = tpu.matmul %147, %8, %cst_47 {dimension_numbers = #tpu.dot_dimension_numbers<[1], [0], [0], [1], [0, 0, 1, 1], [], []>} : vector<2x256xf32>, vector<256x1024xf32>, vector<2x1024xf32> -> vector<2x1024xf32>
    %151 = arith.addf %149, %150 : vector<2x1024xf32>
    %152 = vector.extract_strided_slice %151 {offsets = [0, 0], sizes = [2, 768], strides = [1, 1]} : vector<2x1024xf32> to vector<2x768xf32>
    %153 = arith.negf %152 : vector<2x768xf32>
    %154 = math.exp %153 : vector<2x768xf32>
    %cst_48 = arith.constant 1.000000e+00 : f32
    %155 = vector.broadcast %cst_48 : f32 to vector<2x768xf32>
    %156 = arith.addf %155, %154 : vector<2x768xf32>
    %157 = arith.divf %155, %156 : vector<2x768xf32>
    %158 = vector.extract_strided_slice %151 {offsets = [0, 768], sizes = [2, 256], strides = [1, 1]} : vector<2x1024xf32> to vector<2x256xf32>
    %159 = math.tanh %158 : vector<2x256xf32>
    %160 = vector.extract_strided_slice %157 {offsets = [0, 0], sizes = [2, 256], strides = [1, 1]} : vector<2x768xf32> to vector<2x256xf32>
    %161 = vector.extract_strided_slice %157 {offsets = [0, 256], sizes = [2, 256], strides = [1, 1]} : vector<2x768xf32> to vector<2x256xf32>
    %162 = vector.extract_strided_slice %157 {offsets = [0, 512], sizes = [2, 256], strides = [1, 1]} : vector<2x768xf32> to vector<2x256xf32>
    %163 = arith.mulf %161, %145 : vector<2x256xf32>
    %164 = arith.mulf %160, %159 : vector<2x256xf32>
    %165 = arith.addf %163, %164 : vector<2x256xf32>
    %166 = math.tanh %165 : vector<2x256xf32>
    %167 = arith.mulf %162, %166 : vector<2x256xf32>
    %c14_49 = arith.constant 14 : index
    %c0_50 = arith.constant 0 : index
    %168 = vector.load %arg10[%c14_49, %c0_50] : memref<16x256xf32, #tpu.memory_space<vmem>>, vector<2x256xf32>
    tpu.vector_store %arg10[%c14_49, %c0_50], %167 {strides = array<i32>} : memref<16x256xf32, #tpu.memory_space<vmem>>, vector<2x256xf32>,
    %c0_51 = arith.constant 0 : index
    %c0_52 = arith.constant 0 : index
    %c0_53 = arith.constant 0 : index
    %169 = vector.load %arg7[%c0_51, %c0_52, %c0_53] : memref<2x2x256xf32, #tpu.memory_space<vmem>>, vector<1x2x256xf32>
    %170 = vector.shape_cast %169 : vector<1x2x256xf32> to vector<2x256xf32>
    %171 = vector.shape_cast %167 : vector<2x256xf32> to vector<1x2x256xf32>
    tpu.vector_store %arg7[%c0_51, %c0_52, %c0_53], %171 {strides = array<i32>} : memref<2x2x256xf32, #tpu.memory_space<vmem>>, vector<1x2x256xf32>,
    %c0_54 = arith.constant 0 : index
    %c0_55 = arith.constant 0 : index
    %c0_56 = arith.constant 0 : index
    %172 = vector.load %arg8[%c0_54, %c0_55, %c0_56] : memref<2x2x256xf32, #tpu.memory_space<vmem>>, vector<1x2x256xf32>
    %173 = vector.shape_cast %172 : vector<1x2x256xf32> to vector<2x256xf32>
    %174 = vector.shape_cast %165 : vector<2x256xf32> to vector<1x2x256xf32>
    tpu.vector_store %arg8[%c0_54, %c0_55, %c0_56], %174 {strides = array<i32>} : memref<2x2x256xf32, #tpu.memory_space<vmem>>, vector<1x2x256xf32>,
    %c0_57 = arith.constant 0 : index
    %c0_58 = arith.constant 0 : index
    %175 = vector.load %arg10[%c0_57, %c0_58] : memref<16x256xf32, #tpu.memory_space<vmem>>, vector<16x256xf32>
    %c0_59 = arith.constant 0 : index
    %c0_60 = arith.constant 0 : index
    %176 = vector.load %arg4[%c0_59, %c0_60] : memref<256x1024xf32, #tpu.memory_space<vmem>>, vector<256x1024xf32>
    %cst_61 = arith.constant dense<0.000000e+00> : vector<16x1024xf32>
    %177 = tpu.matmul %175, %176, %cst_61 {dimension_numbers = #tpu.dot_dimension_numbers<[1], [0], [0], [1], [0, 0, 1, 1], [], []>} : vector<16x256xf32>, vector<256x1024xf32>, vector<16x1024xf32> -> vector<16x1024xf32>
    %c0_62 = arith.constant 0 : index
    %c0_63 = arith.constant 0 : index
    %178 = vector.load %arg6[%c0_62, %c0_63] : memref<1x1024xf32, #tpu.memory_space<vmem>>, vector<1x1024xf32>
    %179 = vector.broadcast %178 : vector<1x1024xf32> to vector<16x1024xf32>
    %180 = arith.addf %177, %179 : vector<16x1024xf32>
    %c0_64 = arith.constant 0 : index
    %c0_65 = arith.constant 0 : index
    %181 = vector.load %arg9[%c0_64, %c0_65] : memref<16x1024xf32, #tpu.memory_space<vmem>>, vector<16x1024xf32>
    tpu.vector_store %arg9[%c0_64, %c0_65], %180 {strides = array<i32>} : memref<16x1024xf32, #tpu.memory_space<vmem>>, vector<16x1024xf32>,
    %c0_66 = arith.constant 0 : index
    %c0_67 = arith.constant 0 : index
    %182 = vector.load %arg5[%c0_66, %c0_67] : memref<256x1024xf32, #tpu.memory_space<vmem>>, vector<256x1024xf32>
    %c0_68 = arith.constant 0 : index
    %c0_69 = arith.constant 0 : index
    %183 = vector.load %arg9[%c0_68, %c0_69] : memref<16x1024xf32, #tpu.memory_space<vmem>>, vector<2x1024xf32>
    %cst_70 = arith.constant dense<0.000000e+00> : vector<2x1024xf32>
    %184 = tpu.matmul %0, %182, %cst_70 {dimension_numbers = #tpu.dot_dimension_numbers<[1], [0], [0], [1], [0, 0, 1, 1], [], []>} : vector<2x256xf32>, vector<256x1024xf32>, vector<2x1024xf32> -> vector<2x1024xf32>
    %185 = arith.addf %183, %184 : vector<2x1024xf32>
    %186 = vector.extract_strided_slice %185 {offsets = [0, 0], sizes = [2, 768], strides = [1, 1]} : vector<2x1024xf32> to vector<2x768xf32>
    %187 = arith.negf %186 : vector<2x768xf32>
    %188 = math.exp %187 : vector<2x768xf32>
    %cst_71 = arith.constant 1.000000e+00 : f32
    %189 = vector.broadcast %cst_71 : f32 to vector<2x768xf32>
    %190 = arith.addf %189, %188 : vector<2x768xf32>
    %191 = arith.divf %189, %190 : vector<2x768xf32>
    %192 = vector.extract_strided_slice %185 {offsets = [0, 768], sizes = [2, 256], strides = [1, 1]} : vector<2x1024xf32> to vector<2x256xf32>
    %193 = math.tanh %192 : vector<2x256xf32>
    %194 = vector.extract_strided_slice %191 {offsets = [0, 0], sizes = [2, 256], strides = [1, 1]} : vector<2x768xf32> to vector<2x256xf32>
    %195 = vector.extract_strided_slice %191 {offsets = [0, 256], sizes = [2, 256], strides = [1, 1]} : vector<2x768xf32> to vector<2x256xf32>
    %196 = vector.extract_strided_slice %191 {offsets = [0, 512], sizes = [2, 256], strides = [1, 1]} : vector<2x768xf32> to vector<2x256xf32>
    %197 = arith.mulf %195, %0 : vector<2x256xf32>
    %198 = arith.mulf %194, %193 : vector<2x256xf32>
    %199 = arith.addf %197, %198 : vector<2x256xf32>
    %200 = math.tanh %199 : vector<2x256xf32>
    %201 = arith.mulf %196, %200 : vector<2x256xf32>
    %c2_72 = arith.constant 2 : index
    %c0_73 = arith.constant 0 : index
    %202 = vector.load %arg9[%c2_72, %c0_73] : memref<16x1024xf32, #tpu.memory_space<vmem>>, vector<2x1024xf32>
    %cst_74 = arith.constant dense<0.000000e+00> : vector<2x1024xf32>
    %203 = tpu.matmul %201, %182, %cst_74 {dimension_numbers = #tpu.dot_dimension_numbers<[1], [0], [0], [1], [0, 0, 1, 1], [], []>} : vector<2x256xf32>, vector<256x1024xf32>, vector<2x1024xf32> -> vector<2x1024xf32>
    %204 = arith.addf %202, %203 : vector<2x1024xf32>
    %205 = vector.extract_strided_slice %204 {offsets = [0, 0], sizes = [2, 768], strides = [1, 1]} : vector<2x1024xf32> to vector<2x768xf32>
    %206 = arith.negf %205 : vector<2x768xf32>
    %207 = math.exp %206 : vector<2x768xf32>
    %cst_75 = arith.constant 1.000000e+00 : f32
    %208 = vector.broadcast %cst_75 : f32 to vector<2x768xf32>
    %209 = arith.addf %208, %207 : vector<2x768xf32>
    %210 = arith.divf %208, %209 : vector<2x768xf32>
    %211 = vector.extract_strided_slice %204 {offsets = [0, 768], sizes = [2, 256], strides = [1, 1]} : vector<2x1024xf32> to vector<2x256xf32>
    %212 = math.tanh %211 : vector<2x256xf32>
    %213 = vector.extract_strided_slice %210 {offsets = [0, 0], sizes = [2, 256], strides = [1, 1]} : vector<2x768xf32> to vector<2x256xf32>
    %214 = vector.extract_strided_slice %210 {offsets = [0, 256], sizes = [2, 256], strides = [1, 1]} : vector<2x768xf32> to vector<2x256xf32>
    %215 = vector.extract_strided_slice %210 {offsets = [0, 512], sizes = [2, 256], strides = [1, 1]} : vector<2x768xf32> to vector<2x256xf32>
    %216 = arith.mulf %214, %199 : vector<2x256xf32>
    %217 = arith.mulf %213, %212 : vector<2x256xf32>
    %218 = arith.addf %216, %217 : vector<2x256xf32>
    %219 = math.tanh %218 : vector<2x256xf32>
    %220 = arith.mulf %215, %219 : vector<2x256xf32>
    %c4_76 = arith.constant 4 : index
    %c0_77 = arith.constant 0 : index
    %221 = vector.load %arg9[%c4_76, %c0_77] : memref<16x1024xf32, #tpu.memory_space<vmem>>, vector<2x1024xf32>
    %cst_78 = arith.constant dense<0.000000e+00> : vector<2x1024xf32>
    %222 = tpu.matmul %220, %182, %cst_78 {dimension_numbers = #tpu.dot_dimension_numbers<[1], [0], [0], [1], [0, 0, 1, 1], [], []>} : vector<2x256xf32>, vector<256x1024xf32>, vector<2x1024xf32> -> vector<2x1024xf32>
    %223 = arith.addf %221, %222 : vector<2x1024xf32>
    %224 = vector.extract_strided_slice %223 {offsets = [0, 0], sizes = [2, 768], strides = [1, 1]} : vector<2x1024xf32> to vector<2x768xf32>
    %225 = arith.negf %224 : vector<2x768xf32>
    %226 = math.exp %225 : vector<2x768xf32>
    %cst_79 = arith.constant 1.000000e+00 : f32
    %227 = vector.broadcast %cst_79 : f32 to vector<2x768xf32>
    %228 = arith.addf %227, %226 : vector<2x768xf32>
    %229 = arith.divf %227, %228 : vector<2x768xf32>
    %230 = vector.extract_strided_slice %223 {offsets = [0, 768], sizes = [2, 256], strides = [1, 1]} : vector<2x1024xf32> to vector<2x256xf32>
    %231 = math.tanh %230 : vector<2x256xf32>
    %232 = vector.extract_strided_slice %229 {offsets = [0, 0], sizes = [2, 256], strides = [1, 1]} : vector<2x768xf32> to vector<2x256xf32>
    %233 = vector.extract_strided_slice %229 {offsets = [0, 256], sizes = [2, 256], strides = [1, 1]} : vector<2x768xf32> to vector<2x256xf32>
    %234 = vector.extract_strided_slice %229 {offsets = [0, 512], sizes = [2, 256], strides = [1, 1]} : vector<2x768xf32> to vector<2x256xf32>
    %235 = arith.mulf %233, %218 : vector<2x256xf32>
    %236 = arith.mulf %232, %231 : vector<2x256xf32>
    %237 = arith.addf %235, %236 : vector<2x256xf32>
    %238 = math.tanh %237 : vector<2x256xf32>
    %239 = arith.mulf %234, %238 : vector<2x256xf32>
    %c6_80 = arith.constant 6 : index
    %c0_81 = arith.constant 0 : index
    %240 = vector.load %arg9[%c6_80, %c0_81] : memref<16x1024xf32, #tpu.memory_space<vmem>>, vector<2x1024xf32>
    %cst_82 = arith.constant dense<0.000000e+00> : vector<2x1024xf32>
    %241 = tpu.matmul %239, %182, %cst_82 {dimension_numbers = #tpu.dot_dimension_numbers<[1], [0], [0], [1], [0, 0, 1, 1], [], []>} : vector<2x256xf32>, vector<256x1024xf32>, vector<2x1024xf32> -> vector<2x1024xf32>
    %242 = arith.addf %240, %241 : vector<2x1024xf32>
    %243 = vector.extract_strided_slice %242 {offsets = [0, 0], sizes = [2, 768], strides = [1, 1]} : vector<2x1024xf32> to vector<2x768xf32>
    %244 = arith.negf %243 : vector<2x768xf32>
    %245 = math.exp %244 : vector<2x768xf32>
    %cst_83 = arith.constant 1.000000e+00 : f32
    %246 = vector.broadcast %cst_83 : f32 to vector<2x768xf32>
    %247 = arith.addf %246, %245 : vector<2x768xf32>
    %248 = arith.divf %246, %247 : vector<2x768xf32>
    %249 = vector.extract_strided_slice %242 {offsets = [0, 768], sizes = [2, 256], strides = [1, 1]} : vector<2x1024xf32> to vector<2x256xf32>
    %250 = math.tanh %249 : vector<2x256xf32>
    %251 = vector.extract_strided_slice %248 {offsets = [0, 0], sizes = [2, 256], strides = [1, 1]} : vector<2x768xf32> to vector<2x256xf32>
    %252 = vector.extract_strided_slice %248 {offsets = [0, 256], sizes = [2, 256], strides = [1, 1]} : vector<2x768xf32> to vector<2x256xf32>
    %253 = vector.extract_strided_slice %248 {offsets = [0, 512], sizes = [2, 256], strides = [1, 1]} : vector<2x768xf32> to vector<2x256xf32>
    %254 = arith.mulf %252, %237 : vector<2x256xf32>
    %255 = arith.mulf %251, %250 : vector<2x256xf32>
    %256 = arith.addf %254, %255 : vector<2x256xf32>
    %257 = math.tanh %256 : vector<2x256xf32>
    %258 = arith.mulf %253, %257 : vector<2x256xf32>
    %c8_84 = arith.constant 8 : index
    %c0_85 = arith.constant 0 : index
    %259 = vector.load %arg9[%c8_84, %c0_85] : memref<16x1024xf32, #tpu.memory_space<vmem>>, vector<2x1024xf32>
    %cst_86 = arith.constant dense<0.000000e+00> : vector<2x1024xf32>
    %260 = tpu.matmul %258, %182, %cst_86 {dimension_numbers = #tpu.dot_dimension_numbers<[1], [0], [0], [1], [0, 0, 1, 1], [], []>} : vector<2x256xf32>, vector<256x1024xf32>, vector<2x1024xf32> -> vector<2x1024xf32>
    %261 = arith.addf %259, %260 : vector<2x1024xf32>
    %262 = vector.extract_strided_slice %261 {offsets = [0, 0], sizes = [2, 768], strides = [1, 1]} : vector<2x1024xf32> to vector<2x768xf32>
    %263 = arith.negf %262 : vector<2x768xf32>
    %264 = math.exp %263 : vector<2x768xf32>
    %cst_87 = arith.constant 1.000000e+00 : f32
    %265 = vector.broadcast %cst_87 : f32 to vector<2x768xf32>
    %266 = arith.addf %265, %264 : vector<2x768xf32>
    %267 = arith.divf %265, %266 : vector<2x768xf32>
    %268 = vector.extract_strided_slice %261 {offsets = [0, 768], sizes = [2, 256], strides = [1, 1]} : vector<2x1024xf32> to vector<2x256xf32>
    %269 = math.tanh %268 : vector<2x256xf32>
    %270 = vector.extract_strided_slice %267 {offsets = [0, 0], sizes = [2, 256], strides = [1, 1]} : vector<2x768xf32> to vector<2x256xf32>
    %271 = vector.extract_strided_slice %267 {offsets = [0, 256], sizes = [2, 256], strides = [1, 1]} : vector<2x768xf32> to vector<2x256xf32>
    %272 = vector.extract_strided_slice %267 {offsets = [0, 512], sizes = [2, 256], strides = [1, 1]} : vector<2x768xf32> to vector<2x256xf32>
    %273 = arith.mulf %271, %256 : vector<2x256xf32>
    %274 = arith.mulf %270, %269 : vector<2x256xf32>
    %275 = arith.addf %273, %274 : vector<2x256xf32>
    %276 = math.tanh %275 : vector<2x256xf32>
    %277 = arith.mulf %272, %276 : vector<2x256xf32>
    %c10_88 = arith.constant 10 : index
    %c0_89 = arith.constant 0 : index
    %278 = vector.load %arg9[%c10_88, %c0_89] : memref<16x1024xf32, #tpu.memory_space<vmem>>, vector<2x1024xf32>
    %cst_90 = arith.constant dense<0.000000e+00> : vector<2x1024xf32>
    %279 = tpu.matmul %277, %182, %cst_90 {dimension_numbers = #tpu.dot_dimension_numbers<[1], [0], [0], [1], [0, 0, 1, 1], [], []>} : vector<2x256xf32>, vector<256x1024xf32>, vector<2x1024xf32> -> vector<2x1024xf32>
    %280 = arith.addf %278, %279 : vector<2x1024xf32>
    %281 = vector.extract_strided_slice %280 {offsets = [0, 0], sizes = [2, 768], strides = [1, 1]} : vector<2x1024xf32> to vector<2x768xf32>
    %282 = arith.negf %281 : vector<2x768xf32>
    %283 = math.exp %282 : vector<2x768xf32>
    %cst_91 = arith.constant 1.000000e+00 : f32
    %284 = vector.broadcast %cst_91 : f32 to vector<2x768xf32>
    %285 = arith.addf %284, %283 : vector<2x768xf32>
    %286 = arith.divf %284, %285 : vector<2x768xf32>
    %287 = vector.extract_strided_slice %280 {offsets = [0, 768], sizes = [2, 256], strides = [1, 1]} : vector<2x1024xf32> to vector<2x256xf32>
    %288 = math.tanh %287 : vector<2x256xf32>
    %289 = vector.extract_strided_slice %286 {offsets = [0, 0], sizes = [2, 256], strides = [1, 1]} : vector<2x768xf32> to vector<2x256xf32>
    %290 = vector.extract_strided_slice %286 {offsets = [0, 256], sizes = [2, 256], strides = [1, 1]} : vector<2x768xf32> to vector<2x256xf32>
    %291 = vector.extract_strided_slice %286 {offsets = [0, 512], sizes = [2, 256], strides = [1, 1]} : vector<2x768xf32> to vector<2x256xf32>
    %292 = arith.mulf %290, %275 : vector<2x256xf32>
    %293 = arith.mulf %289, %288 : vector<2x256xf32>
    %294 = arith.addf %292, %293 : vector<2x256xf32>
    %295 = math.tanh %294 : vector<2x256xf32>
    %296 = arith.mulf %291, %295 : vector<2x256xf32>
    %c12_92 = arith.constant 12 : index
    %c0_93 = arith.constant 0 : index
    %297 = vector.load %arg9[%c12_92, %c0_93] : memref<16x1024xf32, #tpu.memory_space<vmem>>, vector<2x1024xf32>
    %cst_94 = arith.constant dense<0.000000e+00> : vector<2x1024xf32>
    %298 = tpu.matmul %296, %182, %cst_94 {dimension_numbers = #tpu.dot_dimension_numbers<[1], [0], [0], [1], [0, 0, 1, 1], [], []>} : vector<2x256xf32>, vector<256x1024xf32>, vector<2x1024xf32> -> vector<2x1024xf32>
    %299 = arith.addf %297, %298 : vector<2x1024xf32>
    %300 = vector.extract_strided_slice %299 {offsets = [0, 0], sizes = [2, 768], strides = [1, 1]} : vector<2x1024xf32> to vector<2x768xf32>
    %301 = arith.negf %300 : vector<2x768xf32>
    %302 = math.exp %301 : vector<2x768xf32>
    %cst_95 = arith.constant 1.000000e+00 : f32
    %303 = vector.broadcast %cst_95 : f32 to vector<2x768xf32>
    %304 = arith.addf %303, %302 : vector<2x768xf32>
    %305 = arith.divf %303, %304 : vector<2x768xf32>
    %306 = vector.extract_strided_slice %299 {offsets = [0, 768], sizes = [2, 256], strides = [1, 1]} : vector<2x1024xf32> to vector<2x256xf32>
    %307 = math.tanh %306 : vector<2x256xf32>
    %308 = vector.extract_strided_slice %305 {offsets = [0, 0], sizes = [2, 256], strides = [1, 1]} : vector<2x768xf32> to vector<2x256xf32>
    %309 = vector.extract_strided_slice %305 {offsets = [0, 256], sizes = [2, 256], strides = [1, 1]} : vector<2x768xf32> to vector<2x256xf32>
    %310 = vector.extract_strided_slice %305 {offsets = [0, 512], sizes = [2, 256], strides = [1, 1]} : vector<2x768xf32> to vector<2x256xf32>
    %311 = arith.mulf %309, %294 : vector<2x256xf32>
    %312 = arith.mulf %308, %307 : vector<2x256xf32>
    %313 = arith.addf %311, %312 : vector<2x256xf32>
    %314 = math.tanh %313 : vector<2x256xf32>
    %315 = arith.mulf %310, %314 : vector<2x256xf32>
    %c14_96 = arith.constant 14 : index
    %c0_97 = arith.constant 0 : index
    %316 = vector.load %arg9[%c14_96, %c0_97] : memref<16x1024xf32, #tpu.memory_space<vmem>>, vector<2x1024xf32>
    %cst_98 = arith.constant dense<0.000000e+00> : vector<2x1024xf32>
    %317 = tpu.matmul %315, %182, %cst_98 {dimension_numbers = #tpu.dot_dimension_numbers<[1], [0], [0], [1], [0, 0, 1, 1], [], []>} : vector<2x256xf32>, vector<256x1024xf32>, vector<2x1024xf32> -> vector<2x1024xf32>
    %318 = arith.addf %316, %317 : vector<2x1024xf32>
    %319 = vector.extract_strided_slice %318 {offsets = [0, 0], sizes = [2, 768], strides = [1, 1]} : vector<2x1024xf32> to vector<2x768xf32>
    %320 = arith.negf %319 : vector<2x768xf32>
    %321 = math.exp %320 : vector<2x768xf32>
    %cst_99 = arith.constant 1.000000e+00 : f32
    %322 = vector.broadcast %cst_99 : f32 to vector<2x768xf32>
    %323 = arith.addf %322, %321 : vector<2x768xf32>
    %324 = arith.divf %322, %323 : vector<2x768xf32>
    %325 = vector.extract_strided_slice %318 {offsets = [0, 768], sizes = [2, 256], strides = [1, 1]} : vector<2x1024xf32> to vector<2x256xf32>
    %326 = math.tanh %325 : vector<2x256xf32>
    %327 = vector.extract_strided_slice %324 {offsets = [0, 0], sizes = [2, 256], strides = [1, 1]} : vector<2x768xf32> to vector<2x256xf32>
    %328 = vector.extract_strided_slice %324 {offsets = [0, 256], sizes = [2, 256], strides = [1, 1]} : vector<2x768xf32> to vector<2x256xf32>
    %329 = vector.extract_strided_slice %324 {offsets = [0, 512], sizes = [2, 256], strides = [1, 1]} : vector<2x768xf32> to vector<2x256xf32>
    %330 = arith.mulf %328, %313 : vector<2x256xf32>
    %331 = arith.mulf %327, %326 : vector<2x256xf32>
    %332 = arith.addf %330, %331 : vector<2x256xf32>
    %333 = math.tanh %332 : vector<2x256xf32>
    %334 = arith.mulf %329, %333 : vector<2x256xf32>
    %c1 = arith.constant 1 : index
    %c0_100 = arith.constant 0 : index
    %c0_101 = arith.constant 0 : index
    %335 = vector.load %arg7[%c1, %c0_100, %c0_101] : memref<2x2x256xf32, #tpu.memory_space<vmem>>, vector<1x2x256xf32>
    %336 = vector.shape_cast %335 : vector<1x2x256xf32> to vector<2x256xf32>
    %337 = vector.shape_cast %334 : vector<2x256xf32> to vector<1x2x256xf32>
    tpu.vector_store %arg7[%c1, %c0_100, %c0_101], %337 {strides = array<i32>} : memref<2x2x256xf32, #tpu.memory_space<vmem>>, vector<1x2x256xf32>,
    %c1_102 = arith.constant 1 : index
    %c0_103 = arith.constant 0 : index
    %c0_104 = arith.constant 0 : index
    %338 = vector.load %arg8[%c1_102, %c0_103, %c0_104] : memref<2x2x256xf32, #tpu.memory_space<vmem>>, vector<1x2x256xf32>
    %339 = vector.shape_cast %338 : vector<1x2x256xf32> to vector<2x256xf32>
    %340 = vector.shape_cast %332 : vector<2x256xf32> to vector<1x2x256xf32>
    tpu.vector_store %arg8[%c1_102, %c0_103, %c0_104], %340 {strides = array<i32>} : memref<2x2x256xf32, #tpu.memory_space<vmem>>, vector<1x2x256xf32>,
    return
  }
}

</mosaic_0001>

<llo_original>
// kernel: tpu_custom_call.1
$region0: #{tpu_custom_call.1}
  #allocation0 [shape = 'u32[]', space=smem, size = 0x4, offset = 0x4, fixed_abs, tag = 'smem constant byte address 0x4 - core index']
  #allocation1 [shape = 'u32[144,128]{1,0:T(1,128)}', space=vmem, size = 0x12000, scoped, tag = 'internal scratch']
  #allocation2 [shape = 'f32[16,1024]{1,0:T(8,128)}', space=vmem, size = 0x10000, scoped, tag = 'scratch operand']
  #allocation3 [shape = 'f32[16,256]{1,0:T(8,128)}', space=vmem, size = 0x4000, scoped, tag = 'scratch operand']
  %s0 = inlined_call_operand.hbm [shape: f32[16,128], index: 0, kind: input, shape index: {}]
  %s1 = inlined_call_operand.hbm [shape: f32[128,1024], index: 1, kind: input, shape index: {}]
  %s2 = inlined_call_operand.hbm [shape: f32[256,1024], index: 2, kind: input, shape index: {}]
  %s3 = inlined_call_operand.vmem [shape: f32[1,1024], index: 3, kind: input, shape index: {}]
  %s4 = inlined_call_operand.hbm [shape: f32[256,1024], index: 4, kind: input, shape index: {}]
  %s5 = inlined_call_operand.hbm [shape: f32[256,1024], index: 5, kind: input, shape index: {}]
  %s6 = inlined_call_operand.vmem [shape: f32[1,1024], index: 6, kind: input, shape index: {}]
  %s7 = inlined_call_operand.hbm [shape: f32[2,2,256], index: 7, kind: output, shape index: {0}]
  %s8 = inlined_call_operand.hbm [shape: f32[2,2,256], index: 8, kind: output, shape index: {1}]
  %9 = xla_tuple %s7, %s8
  %s10 = sld [smem:[#allocation0]]
  $region66: #{tpu_custom_call.1} parent=0
    _
  %s12 = ssub.s32 1, %s10
  %s13 = scalar_select 0, %s12, %s10
  $region1: #{tpu_custom_call.1} parent=0
    #allocation4 [shape = 'u8[8192]{0}', space=vmem, size = 0x2000, scoped, tag = 'input window, operand 0, single buffered']
    #allocation5 [shape = 's32[1]{0}', space=sflag, size = 0x4, scoped, tag = 'scoped memory for tpu_custom_call.1']
    #allocation6 [shape = 's32[1]{0}', space=sflag, size = 0x4, scoped, tag = 'scoped memory for tpu_custom_call.1']
    #allocation7 [shape = 'u8[524288]{0}', space=vmem, size = 0x80000, scoped, tag = 'input window, operand 1, single buffered']
    #allocation8 [shape = 's32[1]{0}', space=sflag, size = 0x4, scoped, tag = 'scoped memory for tpu_custom_call.1']
    #allocation9 [shape = 'u8[1048576]{0}', space=vmem, size = 0x100000, scoped, tag = 'input window, operand 2, single buffered']
    #allocation10 [shape = 'u8[1048576]{0}', space=vmem, size = 0x100000, scoped, tag = 'input window, operand 4, single buffered']
    #allocation11 [shape = 's32[1]{0}', space=sflag, size = 0x4, scoped, tag = 'scoped memory for tpu_custom_call.1']
    #allocation12 [shape = 'u8[1048576]{0}', space=vmem, size = 0x100000, scoped, tag = 'input window, operand 5, single buffered']
    #allocation13 [shape = 'u8[4096]{0}', space=vmem, size = 0x1000, scoped, tag = 'output window, operand 0, single buffered']
    #allocation14 [shape = 'u8[4096]{0}', space=vmem, size = 0x1000, scoped, tag = 'output window, operand 1, single buffered']
    #allocation15 [shape = 's32[1]{0}', space=sflag, size = 0x4, scoped, tag = 'scoped memory for tpu_custom_call.1']
    %14 = vsyncpa [#allocation5], 0
    %15 = vsyncpa [#allocation8], 0
    %16 = vsyncpa [#allocation11], 0
    %17 = vsyncpa [#allocation6], 0
    %18 = vsyncpa [#allocation15], 0
    // Predicated region
    $region2: #{tpu_custom_call.1} parent=1 // pred_check
      _
    $region3: #{tpu_custom_call.1} parent=1 // pred_check_branch
      %20 = sbr.rel (0) target = $region5
    $region4: #{tpu_custom_call.1} parent=1 // pred_region
      %s22 = ssub.s32 256, 256
      %23 = vsyncadd [#allocation5], %s22
      %s24 = sshll.u32 [#allocation4], 4
      %s25 = int_to_ptr.vmem [resolvable:$true] %s24
      %30 = dma.hbm_to_vmem [thread:$0]  %s0, 256, %s25, [#allocation5], 128, 128, 8
    $region5: #{tpu_custom_call.1} parent=1 // pred_fallthru
      _
    // Predicated region
    $region6: #{tpu_custom_call.1} parent=1 // pred_check
      _
    $region7: #{tpu_custom_call.1} parent=1 // pred_check_branch
      %32 = sbr.rel (0) target = $region9
    $region8: #{tpu_custom_call.1} parent=1 // pred_region
      %s34 = ssub.s32 16384, 16384
      %35 = vsyncadd [#allocation8], %s34
      %s36 = sshll.u32 [#allocation7], 4
      %s37 = int_to_ptr.vmem [resolvable:$true] %s36
      %42 = dma.hbm_to_vmem [thread:$0]  %s1, 16384, %s37, [#allocation8], 1024, 1024, 64
    $region9: #{tpu_custom_call.1} parent=1 // pred_fallthru
      _
    // Predicated region
    $region10: #{tpu_custom_call.1} parent=1 // pred_check
      _
    $region11: #{tpu_custom_call.1} parent=1 // pred_check_branch
      %44 = sbr.rel (0) target = $region13
    $region12: #{tpu_custom_call.1} parent=1 // pred_region
      %s46 = ssub.s32 32768, 32768
      %47 = vsyncadd [#allocation8], %s46
      %s48 = sshll.u32 [#allocation9], 4
      %s49 = int_to_ptr.vmem [resolvable:$true] %s48
      %54 = dma.hbm_to_vmem [thread:$0]  %s2, 32768, %s49, [#allocation8], 1024, 1024, 64
    $region13: #{tpu_custom_call.1} parent=1 // pred_fallthru
      _
    // Predicated region
    $region14: #{tpu_custom_call.1} parent=1 // pred_check
      _
    $region15: #{tpu_custom_call.1} parent=1 // pred_check_branch
      %56 = sbr.rel (0) target = $region17
    $region16: #{tpu_custom_call.1} parent=1 // pred_region
      _
    $region17: #{tpu_custom_call.1} parent=1 // pred_fallthru
      _
    // Predicated region
    $region18: #{tpu_custom_call.1} parent=1 // pred_check
      _
    $region19: #{tpu_custom_call.1} parent=1 // pred_check_branch
      %58 = sbr.rel (0) target = $region21
    $region20: #{tpu_custom_call.1} parent=1 // pred_region
      %s60 = ssub.s32 32768, 32768
      %61 = vsyncadd [#allocation11], %s60
      %s62 = sshll.u32 [#allocation10], 4
      %s63 = int_to_ptr.vmem [resolvable:$true] %s62
      %68 = dma.hbm_to_vmem [thread:$0]  %s4, 32768, %s63, [#allocation11], 1024, 1024, 64
    $region21: #{tpu_custom_call.1} parent=1 // pred_fallthru
      _
    // Predicated region
    $region22: #{tpu_custom_call.1} parent=1 // pred_check
      _
    $region23: #{tpu_custom_call.1} parent=1 // pred_check_branch
      %70 = sbr.rel (0) target = $region25
    $region24: #{tpu_custom_call.1} parent=1 // pred_region
      %s72 = ssub.s32 32768, 32768
      %73 = vsyncadd [#allocation11], %s72
      %s74 = sshll.u32 [#allocation12], 4
      %s75 = int_to_ptr.vmem [resolvable:$true] %s74
      %80 = dma.hbm_to_vmem [thread:$0]  %s5, 32768, %s75, [#allocation11], 1024, 1024, 64
    $region25: #{tpu_custom_call.1} parent=1 // pred_fallthru
      _
    // Predicated region
    $region26: #{tpu_custom_call.1} parent=1 // pred_check
      _
    $region27: #{tpu_custom_call.1} parent=1 // pred_check_branch
      %82 = sbr.rel (0) target = $region29
    $region28: #{tpu_custom_call.1} parent=1 // pred_region
      _
    $region29: #{tpu_custom_call.1} parent=1 // pred_fallthru
      _
    // Predicated region
    $region30: #{tpu_custom_call.1} parent=1 // pred_check
      _
    $region31: #{tpu_custom_call.1} parent=1 // pred_check_branch
      %84 = sbr.rel (0) target = $region33
    $region32: #{tpu_custom_call.1} parent=1 // pred_region
      %85 = dma.done [#allocation5], 256
    $region33: #{tpu_custom_call.1} parent=1 // pred_fallthru
      _
    // Predicated region
    $region34: #{tpu_custom_call.1} parent=1 // pred_check
      _
    $region35: #{tpu_custom_call.1} parent=1 // pred_check_branch
      %87 = sbr.rel (0) target = $region37
    $region36: #{tpu_custom_call.1} parent=1 // pred_region
      %88 = dma.done [#allocation8], 16384
    $region37: #{tpu_custom_call.1} parent=1 // pred_fallthru
      _
    // Predicated region
    $region38: #{tpu_custom_call.1} parent=1 // pred_check
      _
    $region39: #{tpu_custom_call.1} parent=1 // pred_check_branch
      %90 = sbr.rel (0) target = $region41
    $region40: #{tpu_custom_call.1} parent=1 // pred_region
      %91 = dma.done [#allocation8], 32768
    $region41: #{tpu_custom_call.1} parent=1 // pred_fallthru
      _
    // Predicated region
    $region42: #{tpu_custom_call.1} parent=1 // pred_check
      _
    $region43: #{tpu_custom_call.1} parent=1 // pred_check_branch
      %93 = sbr.rel (0) target = $region45
    $region44: #{tpu_custom_call.1} parent=1 // pred_region
      %94 = dma.done [#allocation11], 32768
    $region45: #{tpu_custom_call.1} parent=1 // pred_fallthru
      _
    // Predicated region
    $region46: #{tpu_custom_call.1} parent=1 // pred_check
      _
    $region47: #{tpu_custom_call.1} parent=1 // pred_check_branch
      %96 = sbr.rel (0) target = $region49
    $region48: #{tpu_custom_call.1} parent=1 // pred_region
      %97 = dma.done [#allocation11], 32768
    $region49: #{tpu_custom_call.1} parent=1 // pred_fallthru
      _
    %v98 = vld [vmem:[#allocation4] sm:$0xff]
    %v99 = vld [vmem:[#allocation4 + $0x8] sm:$0xff]
    %v100 = vld [vmem:[#allocation7] sm:$0xff]
    %v101 = vld [vmem:[#allocation7 + $0x8] sm:$0xff]
    %v102 = vld [vmem:[#allocation7 + $0x10] sm:$0xff]
    %v103 = vld [vmem:[#allocation7 + $0x18] sm:$0xff]
    %v104 = vld [vmem:[#allocation7 + $0x20] sm:$0xff]
    %v105 = vld [vmem:[#allocation7 + $0x28] sm:$0xff]
    %v106 = vld [vmem:[#allocation7 + $0x30] sm:$0xff]
    %v107 = vld [vmem:[#allocation7 + $0x38] sm:$0xff]
    %v108 = vld [vmem:[#allocation7 + $0x40] sm:$0xff]
    %v109 = vld [vmem:[#allocation7 + $0x48] sm:$0xff]
    %v110 = vld [vmem:[#allocation7 + $0x50] sm:$0xff]
    %v111 = vld [vmem:[#allocation7 + $0x58] sm:$0xff]
    %v112 = vld [vmem:[#allocation7 + $0x60] sm:$0xff]
    %v113 = vld [vmem:[#allocation7 + $0x68] sm:$0xff]
    %v114 = vld [vmem:[#allocation7 + $0x70] sm:$0xff]
    %v115 = vld [vmem:[#allocation7 + $0x78] sm:$0xff]
    %v116 = vld [vmem:[#allocation7 + $0x80] sm:$0xff]
    %v117 = vld [vmem:[#allocation7 + $0x88] sm:$0xff]
    %v118 = vld [vmem:[#allocation7 + $0x90] sm:$0xff]
    %v119 = vld [vmem:[#allocation7 + $0x98] sm:$0xff]
    %v120 = vld [vmem:[#allocation7 + $0xa0] sm:$0xff]
    %v121 = vld [vmem:[#allocation7 + $0xa8] sm:$0xff]
    %v122 = vld [vmem:[#allocation7 + $0xb0] sm:$0xff]
    %v123 = vld [vmem:[#allocation7 + $0xb8] sm:$0xff]
    %v124 = vld [vmem:[#allocation7 + $0xc0] sm:$0xff]
    %v125 = vld [vmem:[#allocation7 + $0xc8] sm:$0xff]
    %v126 = vld [vmem:[#allocation7 + $0xd0] sm:$0xff]
    %v127 = vld [vmem:[#allocation7 + $0xd8] sm:$0xff]
    %v128 = vld [vmem:[#allocation7 + $0xe0] sm:$0xff]
    %v129 = vld [vmem:[#allocation7 + $0xe8] sm:$0xff]
    %v130 = vld [vmem:[#allocation7 + $0xf0] sm:$0xff]
    %v131 = vld [vmem:[#allocation7 + $0xf8] sm:$0xff]
    %v132 = vld [vmem:[#allocation7 + $0x100] sm:$0xff]
    %v133 = vld [vmem:[#allocation7 + $0x108] sm:$0xff]
    %v134 = vld [vmem:[#allocation7 + $0x110] sm:$0xff]
    %v135 = vld [vmem:[#allocation7 + $0x118] sm:$0xff]
    %v136 = vld [vmem:[#allocation7 + $0x120] sm:$0xff]
    %v137 = vld [vmem:[#allocation7 + $0x128] sm:$0xff]
    %v138 = vld [vmem:[#allocation7 + $0x130] sm:$0xff]
    %v139 = vld [vmem:[#allocation7 + $0x138] sm:$0xff]
    %v140 = vld [vmem:[#allocation7 + $0x140] sm:$0xff]
    %v141 = vld [vmem:[#allocation7 + $0x148] sm:$0xff]
    %v142 = vld [vmem:[#allocation7 + $0x150] sm:$0xff]
    %v143 = vld [vmem:[#allocation7 + $0x158] sm:$0xff]
    %v144 = vld [vmem:[#allocation7 + $0x160] sm:$0xff]
    %v145 = vld [vmem:[#allocation7 + $0x168] sm:$0xff]
    %v146 = vld [vmem:[#allocation7 + $0x170] sm:$0xff]
    %v147 = vld [vmem:[#allocation7 + $0x178] sm:$0xff]
    %v148 = vld [vmem:[#allocation7 + $0x180] sm:$0xff]
    %v149 = vld [vmem:[#allocation7 + $0x188] sm:$0xff]
    %v150 = vld [vmem:[#allocation7 + $0x190] sm:$0xff]
    %v151 = vld [vmem:[#allocation7 + $0x198] sm:$0xff]
    %v152 = vld [vmem:[#allocation7 + $0x1a0] sm:$0xff]
    %v153 = vld [vmem:[#allocation7 + $0x1a8] sm:$0xff]
    %v154 = vld [vmem:[#allocation7 + $0x1b0] sm:$0xff]
    %v155 = vld [vmem:[#allocation7 + $0x1b8] sm:$0xff]
    %v156 = vld [vmem:[#allocation7 + $0x1c0] sm:$0xff]
    %v157 = vld [vmem:[#allocation7 + $0x1c8] sm:$0xff]
    %v158 = vld [vmem:[#allocation7 + $0x1d0] sm:$0xff]
    %v159 = vld [vmem:[#allocation7 + $0x1d8] sm:$0xff]
    %v160 = vld [vmem:[#allocation7 + $0x1e0] sm:$0xff]
    %v161 = vld [vmem:[#allocation7 + $0x1e8] sm:$0xff]
    %v162 = vld [vmem:[#allocation7 + $0x1f0] sm:$0xff]
    %v163 = vld [vmem:[#allocation7 + $0x1f8] sm:$0xff]
    %v164 = vld [vmem:[#allocation7 + $0x200] sm:$0xff]
    %v165 = vld [vmem:[#allocation7 + $0x208] sm:$0xff]
    %v166 = vld [vmem:[#allocation7 + $0x210] sm:$0xff]
    %v167 = vld [vmem:[#allocation7 + $0x218] sm:$0xff]
    %v168 = vld [vmem:[#allocation7 + $0x220] sm:$0xff]
    %v169 = vld [vmem:[#allocation7 + $0x228] sm:$0xff]
    %v170 = vld [vmem:[#allocation7 + $0x230] sm:$0xff]
    %v171 = vld [vmem:[#allocation7 + $0x238] sm:$0xff]
    %v172 = vld [vmem:[#allocation7 + $0x240] sm:$0xff]
    %v173 = vld [vmem:[#allocation7 + $0x248] sm:$0xff]
    %v174 = vld [vmem:[#allocation7 + $0x250] sm:$0xff]
    %v175 = vld [vmem:[#allocation7 + $0x258] sm:$0xff]
    %v176 = vld [vmem:[#allocation7 + $0x260] sm:$0xff]
    %v177 = vld [vmem:[#allocation7 + $0x268] sm:$0xff]
    %v178 = vld [vmem:[#allocation7 + $0x270] sm:$0xff]
    %v179 = vld [vmem:[#allocation7 + $0x278] sm:$0xff]
    %v180 = vld [vmem:[#allocation7 + $0x280] sm:$0xff]
    %v181 = vld [vmem:[#allocation7 + $0x288] sm:$0xff]
    %v182 = vld [vmem:[#allocation7 + $0x290] sm:$0xff]
    %v183 = vld [vmem:[#allocation7 + $0x298] sm:$0xff]
    %v184 = vld [vmem:[#allocation7 + $0x2a0] sm:$0xff]
    %v185 = vld [vmem:[#allocation7 + $0x2a8] sm:$0xff]
    %v186 = vld [vmem:[#allocation7 + $0x2b0] sm:$0xff]
    %v187 = vld [vmem:[#allocation7 + $0x2b8] sm:$0xff]
    %v188 = vld [vmem:[#allocation7 + $0x2c0] sm:$0xff]
    %v189 = vld [vmem:[#allocation7 + $0x2c8] sm:$0xff]
    %v190 = vld [vmem:[#allocation7 + $0x2d0] sm:$0xff]
    %v191 = vld [vmem:[#allocation7 + $0x2d8] sm:$0xff]
    %v192 = vld [vmem:[#allocation7 + $0x2e0] sm:$0xff]
    %v193 = vld [vmem:[#allocation7 + $0x2e8] sm:$0xff]
    %v194 = vld [vmem:[#allocation7 + $0x2f0] sm:$0xff]
    %v195 = vld [vmem:[#allocation7 + $0x2f8] sm:$0xff]
    %v196 = vld [vmem:[#allocation7 + $0x300] sm:$0xff]
    %v197 = vld [vmem:[#allocation7 + $0x308] sm:$0xff]
    %v198 = vld [vmem:[#allocation7 + $0x310] sm:$0xff]
    %v199 = vld [vmem:[#allocation7 + $0x318] sm:$0xff]
    %v200 = vld [vmem:[#allocation7 + $0x320] sm:$0xff]
    %v201 = vld [vmem:[#allocation7 + $0x328] sm:$0xff]
    %v202 = vld [vmem:[#allocation7 + $0x330] sm:$0xff]
    %v203 = vld [vmem:[#allocation7 + $0x338] sm:$0xff]
    %v204 = vld [vmem:[#allocation7 + $0x340] sm:$0xff]
    %v205 = vld [vmem:[#allocation7 + $0x348] sm:$0xff]
    %v206 = vld [vmem:[#allocation7 + $0x350] sm:$0xff]
    %v207 = vld [vmem:[#allocation7 + $0x358] sm:$0xff]
    %v208 = vld [vmem:[#allocation7 + $0x360] sm:$0xff]
    %v209 = vld [vmem:[#allocation7 + $0x368] sm:$0xff]
    %v210 = vld [vmem:[#allocation7 + $0x370] sm:$0xff]
    %v211 = vld [vmem:[#allocation7 + $0x378] sm:$0xff]
    %v212 = vld [vmem:[#allocation7 + $0x380] sm:$0xff]
    %v213 = vld [vmem:[#allocation7 + $0x388] sm:$0xff]
    %v214 = vld [vmem:[#allocation7 + $0x390] sm:$0xff]
    %v215 = vld [vmem:[#allocation7 + $0x398] sm:$0xff]
    %v216 = vld [vmem:[#allocation7 + $0x3a0] sm:$0xff]
    %v217 = vld [vmem:[#allocation7 + $0x3a8] sm:$0xff]
    %v218 = vld [vmem:[#allocation7 + $0x3b0] sm:$0xff]
    %v219 = vld [vmem:[#allocation7 + $0x3b8] sm:$0xff]
    %v220 = vld [vmem:[#allocation7 + $0x3c0] sm:$0xff]
    %v221 = vld [vmem:[#allocation7 + $0x3c8] sm:$0xff]
    %v222 = vld [vmem:[#allocation7 + $0x3d0] sm:$0xff]
    %v223 = vld [vmem:[#allocation7 + $0x3d8] sm:$0xff]
    %v224 = vld [vmem:[#allocation7 + $0x3e0] sm:$0xff]
    %v225 = vld [vmem:[#allocation7 + $0x3e8] sm:$0xff]
    %v226 = vld [vmem:[#allocation7 + $0x3f0] sm:$0xff]
    %v227 = vld [vmem:[#allocation7 + $0x3f8] sm:$0xff]
    %v228 = vld [vmem:[%s3] sm:$0xff]
    %v230 = vlaneseq
    %v231 = vshrl.u32 %v230, 7
    %v232 = vsub.s32 0, %v231
    %v233 = vrot.slane %v228, %v232
    %v234 = vlaneseq
    %v235 = vshrl.u32 %v234, 7
    %v236 = vsub.s32 1, %v235
    %v237 = vrot.slane %v228, %v236
    %v238 = vlaneseq
    %v239 = vshrl.u32 %v238, 7
    %v240 = vsub.s32 2, %v239
    %v241 = vrot.slane %v228, %v240
    %v242 = vlaneseq
    %v243 = vshrl.u32 %v242, 7
    %v244 = vsub.s32 3, %v243
    %v245 = vrot.slane %v228, %v244
    %v246 = vlaneseq
    %v247 = vshrl.u32 %v246, 7
    %v248 = vsub.s32 4, %v247
    %v249 = vrot.slane %v228, %v248
    %v250 = vlaneseq
    %v251 = vshrl.u32 %v250, 7
    %v252 = vsub.s32 5, %v251
    %v253 = vrot.slane %v228, %v252
    %v254 = vlaneseq
    %v255 = vshrl.u32 %v254, 7
    %v256 = vsub.s32 6, %v255
    %v257 = vrot.slane %v228, %v256
    %v258 = vlaneseq
    %v259 = vshrl.u32 %v258, 7
    %v260 = vsub.s32 7, %v259
    %v261 = vrot.slane %v228, %v260
    %270 = vmatprep.subr.mxu0 %v101
    %271 = vmatpush1.msra.mxu0 %v100
    %272 = vmatprep.subr.mxu0 %v109
    %273 = vmatpush1.msra.mxu0 %v108
    %274 = vmatprep.subr.mxu0 %v117
    %275 = vmatpush1.msra.mxu0 %v116
    %276 = vmatprep.subr.mxu0 %v125
    %277 = vmatpush1.msra.mxu0 %v124
    %278 = vmatprep.subr.mxu0 %v133
    %279 = vmatpush1.msra.mxu0 %v132
    %280 = vmatprep.subr.mxu0 %v141
    %281 = vmatpush1.msra.mxu0 %v140
    %282 = vmatprep.subr.mxu0 %v149
    %283 = vmatpush1.msra.mxu0 %v148
    %284 = vmatprep.subr.mxu0 %v157
    %285 = vmatpush1.msra.mxu0 %v156
    %286 = vmatprep.subr.mxu0 %v165
    %287 = vmatpush1.msra.mxu0 %v164
    %288 = vmatprep.subr.mxu0 %v173
    %289 = vmatpush1.msra.mxu0 %v172
    %290 = vmatprep.subr.mxu0 %v181
    %291 = vmatpush1.msra.mxu0 %v180
    %292 = vmatprep.subr.mxu0 %v189
    %293 = vmatpush1.msra.mxu0 %v188
    %294 = vmatprep.subr.mxu0 %v197
    %295 = vmatpush1.msra.mxu0 %v196
    %296 = vmatprep.subr.mxu0 %v205
    %297 = vmatpush1.msra.mxu0 %v204
    %298 = vmatprep.subr.mxu0 %v213
    %299 = vmatpush1.msra.mxu0 %v212
    %300 = vmatprep.subr.mxu0 %v221
    %301 = vmatpush1.msra.mxu0 %v220
    %302 = vmatprep.subr.mxu0 0.0
    %303 = vmatpush1.msra.mxu0 0.0
    %304 = vmatprep.subr.mxu0 0.0
    %305 = vmatpush1.msra.mxu0 0.0
    %306 = vmatprep.subr.mxu0 0.0
    %307 = vmatpush1.msra.mxu0 0.0
    %308 = vmatprep.subr.mxu0 0.0
    %309 = vmatpush1.msra.mxu0 0.0
    %310 = vmatprep.subr.mxu0 0.0
    %311 = vmatpush1.msra.mxu0 0.0
    %312 = vmatprep.subr.mxu0 0.0
    %313 = vmatpush1.msra.mxu0 0.0
    %314 = vmatprep.subr.mxu0 0.0
    %315 = vmatpush1.msra.mxu0 0.0
    %316 = vmatprep.subr.mxu0 0.0
    %317 = vmatpush1.msra.mxu0 0.0
    %318 = vmatprep.subr.mxu0 0.0
    %319 = vmatpush1.msra.mxu0 0.0
    %320 = vmatprep.subr.mxu0 0.0
    %321 = vmatpush1.msra.mxu0 0.0
    %322 = vmatprep.subr.mxu0 0.0
    %323 = vmatpush1.msra.mxu0 0.0
    %324 = vmatprep.subr.mxu0 0.0
    %325 = vmatpush1.msra.mxu0 0.0
    %326 = vmatprep.subr.mxu0 0.0
    %327 = vmatpush1.msra.mxu0 0.0
    %328 = vmatprep.subr.mxu0 0.0
    %329 = vmatpush1.msra.mxu0 0.0
    %330 = vmatprep.subr.mxu0 0.0
    %331 = vmatpush1.msra.mxu0 0.0
    %332 = vmatprep.subr.mxu0 0.0
    %333 = vmatpush1.msra.mxu0 0.0
    %334 = vmatprep.mubr.f32.mxu0 0.0
    %335 = vmatmul.mubr.f32.gmra.mrb[0].mxu0 %v98
    %v336 = vpop.f32.mrb[0].mxu0
    %v337 = vadd.f32 %v233, %v336
    %v338 = vpop.f32.mrb[0].mxu0
    %v339 = vadd.f32 %v237, %v338
    %340 = vmatprep.mubr.f32.mxu0 0.0
    %341 = vmatmul.mubr.f32.gmra.mrb[0].mxu0 %v99
    %v342 = vpop.f32.mrb[0].mxu0
    %v343 = vadd.f32 %v233, %v342
    %v344 = vpop.f32.mrb[0].mxu0
    %v345 = vadd.f32 %v237, %v344
    %346 = vdwg.mxu0
    %347 = vmatprep.subr.mxu0 %v103
    %348 = vmatpush1.msra.mxu0 %v102
    %349 = vmatprep.subr.mxu0 %v111
    %350 = vmatpush1.msra.mxu0 %v110
    %351 = vmatprep.subr.mxu0 %v119
    %352 = vmatpush1.msra.mxu0 %v118
    %353 = vmatprep.subr.mxu0 %v127
    %354 = vmatpush1.msra.mxu0 %v126
    %355 = vmatprep.subr.mxu0 %v135
    %356 = vmatpush1.msra.mxu0 %v134
    %357 = vmatprep.subr.mxu0 %v143
    %358 = vmatpush1.msra.mxu0 %v142
    %359 = vmatprep.subr.mxu0 %v151
    %360 = vmatpush1.msra.mxu0 %v150
    %361 = vmatprep.subr.mxu0 %v159
    %362 = vmatpush1.msra.mxu0 %v158
    %363 = vmatprep.subr.mxu0 %v167
    %364 = vmatpush1.msra.mxu0 %v166
    %365 = vmatprep.subr.mxu0 %v175
    %366 = vmatpush1.msra.mxu0 %v174
    %367 = vmatprep.subr.mxu0 %v183
    %368 = vmatpush1.msra.mxu0 %v182
    %369 = vmatprep.subr.mxu0 %v191
    %370 = vmatpush1.msra.mxu0 %v190
    %371 = vmatprep.subr.mxu0 %v199
    %372 = vmatpush1.msra.mxu0 %v198
    %373 = vmatprep.subr.mxu0 %v207
    %374 = vmatpush1.msra.mxu0 %v206
    %375 = vmatprep.subr.mxu0 %v215
    %376 = vmatpush1.msra.mxu0 %v214
    %377 = vmatprep.subr.mxu0 %v223
    %378 = vmatpush1.msra.mxu0 %v222
    %379 = vmatprep.subr.mxu0 0.0
    %380 = vmatpush1.msra.mxu0 0.0
    %381 = vmatprep.subr.mxu0 0.0
    %382 = vmatpush1.msra.mxu0 0.0
    %383 = vmatprep.subr.mxu0 0.0
    %384 = vmatpush1.msra.mxu0 0.0
    %385 = vmatprep.subr.mxu0 0.0
    %386 = vmatpush1.msra.mxu0 0.0
    %387 = vmatprep.subr.mxu0 0.0
    %388 = vmatpush1.msra.mxu0 0.0
    %389 = vmatprep.subr.mxu0 0.0
    %390 = vmatpush1.msra.mxu0 0.0
    %391 = vmatprep.subr.mxu0 0.0
    %392 = vmatpush1.msra.mxu0 0.0
    %393 = vmatprep.subr.mxu0 0.0
    %394 = vmatpush1.msra.mxu0 0.0
    %395 = vmatprep.subr.mxu0 0.0
    %396 = vmatpush1.msra.mxu0 0.0
    %397 = vmatprep.subr.mxu0 0.0
    %398 = vmatpush1.msra.mxu0 0.0
    %399 = vmatprep.subr.mxu0 0.0
    %400 = vmatpush1.msra.mxu0 0.0
    %401 = vmatprep.subr.mxu0 0.0
    %402 = vmatpush1.msra.mxu0 0.0
    %403 = vmatprep.subr.mxu0 0.0
    %404 = vmatpush1.msra.mxu0 0.0
    %405 = vmatprep.subr.mxu0 0.0
    %406 = vmatpush1.msra.mxu0 0.0
    %407 = vmatprep.subr.mxu0 0.0
    %408 = vmatpush1.msra.mxu0 0.0
    %409 = vmatprep.subr.mxu0 0.0
    %410 = vmatpush1.msra.mxu0 0.0
    %411 = vmatprep.mubr.f32.mxu0 0.0
    %412 = vmatmul.mubr.f32.gmra.mrb[0].mxu0 %v98
    %v413 = vpop.f32.mrb[0].mxu0
    %v414 = vadd.f32 %v241, %v413
    %v415 = vpop.f32.mrb[0].mxu0
    %v416 = vadd.f32 %v245, %v415
    %417 = vmatprep.mubr.f32.mxu0 0.0
    %418 = vmatmul.mubr.f32.gmra.mrb[0].mxu0 %v99
    %v419 = vpop.f32.mrb[0].mxu0
    %v420 = vadd.f32 %v241, %v419
    %v421 = vpop.f32.mrb[0].mxu0
    %v422 = vadd.f32 %v245, %v421
    %423 = vdwg.mxu0
    %424 = vmatprep.subr.mxu0 %v105
    %425 = vmatpush1.msra.mxu0 %v104
    %426 = vmatprep.subr.mxu0 %v113
    %427 = vmatpush1.msra.mxu0 %v112
    %428 = vmatprep.subr.mxu0 %v121
    %429 = vmatpush1.msra.mxu0 %v120
    %430 = vmatprep.subr.mxu0 %v129
    %431 = vmatpush1.msra.mxu0 %v128
    %432 = vmatprep.subr.mxu0 %v137
    %433 = vmatpush1.msra.mxu0 %v136
    %434 = vmatprep.subr.mxu0 %v145
    %435 = vmatpush1.msra.mxu0 %v144
    %436 = vmatprep.subr.mxu0 %v153
    %437 = vmatpush1.msra.mxu0 %v152
    %438 = vmatprep.subr.mxu0 %v161
    %439 = vmatpush1.msra.mxu0 %v160
    %440 = vmatprep.subr.mxu0 %v169
    %441 = vmatpush1.msra.mxu0 %v168
    %442 = vmatprep.subr.mxu0 %v177
    %443 = vmatpush1.msra.mxu0 %v176
    %444 = vmatprep.subr.mxu0 %v185
    %445 = vmatpush1.msra.mxu0 %v184
    %446 = vmatprep.subr.mxu0 %v193
    %447 = vmatpush1.msra.mxu0 %v192
    %448 = vmatprep.subr.mxu0 %v201
    %449 = vmatpush1.msra.mxu0 %v200
    %450 = vmatprep.subr.mxu0 %v209
    %451 = vmatpush1.msra.mxu0 %v208
    %452 = vmatprep.subr.mxu0 %v217
    %453 = vmatpush1.msra.mxu0 %v216
    %454 = vmatprep.subr.mxu0 %v225
    %455 = vmatpush1.msra.mxu0 %v224
    %456 = vmatprep.subr.mxu0 0.0
    %457 = vmatpush1.msra.mxu0 0.0
    %458 = vmatprep.subr.mxu0 0.0
    %459 = vmatpush1.msra.mxu0 0.0
    %460 = vmatprep.subr.mxu0 0.0
    %461 = vmatpush1.msra.mxu0 0.0
    %462 = vmatprep.subr.mxu0 0.0
    %463 = vmatpush1.msra.mxu0 0.0
    %464 = vmatprep.subr.mxu0 0.0
    %465 = vmatpush1.msra.mxu0 0.0
    %466 = vmatprep.subr.mxu0 0.0
    %467 = vmatpush1.msra.mxu0 0.0
    %468 = vmatprep.subr.mxu0 0.0
    %469 = vmatpush1.msra.mxu0 0.0
    %470 = vmatprep.subr.mxu0 0.0
    %471 = vmatpush1.msra.mxu0 0.0
    %472 = vmatprep.subr.mxu0 0.0
    %473 = vmatpush1.msra.mxu0 0.0
    %474 = vmatprep.subr.mxu0 0.0
    %475 = vmatpush1.msra.mxu0 0.0
    %476 = vmatprep.subr.mxu0 0.0
    %477 = vmatpush1.msra.mxu0 0.0
    %478 = vmatprep.subr.mxu0 0.0
    %479 = vmatpush1.msra.mxu0 0.0
    %480 = vmatprep.subr.mxu0 0.0
    %481 = vmatpush1.msra.mxu0 0.0
    %482 = vmatprep.subr.mxu0 0.0
    %483 = vmatpush1.msra.mxu0 0.0
    %484 = vmatprep.subr.mxu0 0.0
    %485 = vmatpush1.msra.mxu0 0.0
    %486 = vmatprep.subr.mxu0 0.0
    %487 = vmatpush1.msra.mxu0 0.0
    %488 = vmatprep.mubr.f32.mxu0 0.0
    %489 = vmatmul.mubr.f32.gmra.mrb[0].mxu0 %v98
    %v490 = vpop.f32.mrb[0].mxu0
    %v491 = vadd.f32 %v249, %v490
    %v492 = vpop.f32.mrb[0].mxu0
    %v493 = vadd.f32 %v253, %v492
    %494 = vmatprep.mubr.f32.mxu0 0.0
    %495 = vmatmul.mubr.f32.gmra.mrb[0].mxu0 %v99
    %v496 = vpop.f32.mrb[0].mxu0
    %v497 = vadd.f32 %v249, %v496
    %v498 = vpop.f32.mrb[0].mxu0
    %v499 = vadd.f32 %v253, %v498
    %500 = vdwg.mxu0
    %501 = vmatprep.subr.mxu0 %v107
    %502 = vmatpush1.msra.mxu0 %v106
    %503 = vmatprep.subr.mxu0 %v115
    %504 = vmatpush1.msra.mxu0 %v114
    %505 = vmatprep.subr.mxu0 %v123
    %506 = vmatpush1.msra.mxu0 %v122
    %507 = vmatprep.subr.mxu0 %v131
    %508 = vmatpush1.msra.mxu0 %v130
    %509 = vmatprep.subr.mxu0 %v139
    %510 = vmatpush1.msra.mxu0 %v138
    %511 = vmatprep.subr.mxu0 %v147
    %512 = vmatpush1.msra.mxu0 %v146
    %513 = vmatprep.subr.mxu0 %v155
    %514 = vmatpush1.msra.mxu0 %v154
    %515 = vmatprep.subr.mxu0 %v163
    %516 = vmatpush1.msra.mxu0 %v162
    %517 = vmatprep.subr.mxu0 %v171
    %518 = vmatpush1.msra.mxu0 %v170
    %519 = vmatprep.subr.mxu0 %v179
    %520 = vmatpush1.msra.mxu0 %v178
    %521 = vmatprep.subr.mxu0 %v187
    %522 = vmatpush1.msra.mxu0 %v186
    %523 = vmatprep.subr.mxu0 %v195
    %524 = vmatpush1.msra.mxu0 %v194
    %525 = vmatprep.subr.mxu0 %v203
    %526 = vmatpush1.msra.mxu0 %v202
    %527 = vmatprep.subr.mxu0 %v211
    %528 = vmatpush1.msra.mxu0 %v210
    %529 = vmatprep.subr.mxu0 %v219
    %530 = vmatpush1.msra.mxu0 %v218
    %531 = vmatprep.subr.mxu0 %v227
    %532 = vmatpush1.msra.mxu0 %v226
    %533 = vmatprep.subr.mxu0 0.0
    %534 = vmatpush1.msra.mxu0 0.0
    %535 = vmatprep.subr.mxu0 0.0
    %536 = vmatpush1.msra.mxu0 0.0
    %537 = vmatprep.subr.mxu0 0.0
    %538 = vmatpush1.msra.mxu0 0.0
    %539 = vmatprep.subr.mxu0 0.0
    %540 = vmatpush1.msra.mxu0 0.0
    %541 = vmatprep.subr.mxu0 0.0
    %542 = vmatpush1.msra.mxu0 0.0
    %543 = vmatprep.subr.mxu0 0.0
    %544 = vmatpush1.msra.mxu0 0.0
    %545 = vmatprep.subr.mxu0 0.0
    %546 = vmatpush1.msra.mxu0 0.0
    %547 = vmatprep.subr.mxu0 0.0
    %548 = vmatpush1.msra.mxu0 0.0
    %549 = vmatprep.subr.mxu0 0.0
    %550 = vmatpush1.msra.mxu0 0.0
    %551 = vmatprep.subr.mxu0 0.0
    %552 = vmatpush1.msra.mxu0 0.0
    %553 = vmatprep.subr.mxu0 0.0
    %554 = vmatpush1.msra.mxu0 0.0
    %555 = vmatprep.subr.mxu0 0.0
    %556 = vmatpush1.msra.mxu0 0.0
    %557 = vmatprep.subr.mxu0 0.0
    %558 = vmatpush1.msra.mxu0 0.0
    %559 = vmatprep.subr.mxu0 0.0
    %560 = vmatpush1.msra.mxu0 0.0
    %561 = vmatprep.subr.mxu0 0.0
    %562 = vmatpush1.msra.mxu0 0.0
    %563 = vmatprep.subr.mxu0 0.0
    %564 = vmatpush1.msra.mxu0 0.0
    %565 = vmatprep.mubr.f32.mxu0 0.0
    %566 = vmatmul.mubr.f32.gmra.mrb[0].mxu0 %v98
    %v567 = vpop.f32.mrb[0].mxu0
    %v568 = vadd.f32 %v257, %v567
    %v569 = vpop.f32.mrb[0].mxu0
    %v570 = vadd.f32 %v261, %v569
    %571 = vmatprep.mubr.f32.mxu0 0.0
    %572 = vmatmul.mubr.f32.gmra.mrb[0].mxu0 %v99
    %v573 = vpop.f32.mrb[0].mxu0
    %v574 = vadd.f32 %v257, %v573
    %v575 = vpop.f32.mrb[0].mxu0
    %v576 = vadd.f32 %v261, %v575
    %577 = vdwg.mxu0
    %578 = vst [vmem:[#allocation2] sm:$0xff] %v337
    %579 = vst [vmem:[#allocation2 + $0x8] sm:$0xff] %v339
    %580 = vst [vmem:[#allocation2 + $0x10] sm:$0xff] %v414
    %581 = vst [vmem:[#allocation2 + $0x18] sm:$0xff] %v416
    %582 = vst [vmem:[#allocation2 + $0x20] sm:$0xff] %v491
    %583 = vst [vmem:[#allocation2 + $0x28] sm:$0xff] %v493
    %584 = vst [vmem:[#allocation2 + $0x30] sm:$0xff] %v568
    %585 = vst [vmem:[#allocation2 + $0x38] sm:$0xff] %v570
    %586 = vst [vmem:[#allocation2 + $0x40] sm:$0xff] %v343
    %587 = vst [vmem:[#allocation2 + $0x48] sm:$0xff] %v345
    %588 = vst [vmem:[#allocation2 + $0x50] sm:$0xff] %v420
    %589 = vst [vmem:[#allocation2 + $0x58] sm:$0xff] %v422
    %590 = vst [vmem:[#allocation2 + $0x60] sm:$0xff] %v497
    %591 = vst [vmem:[#allocation2 + $0x68] sm:$0xff] %v499
    %592 = vst [vmem:[#allocation2 + $0x70] sm:$0xff] %v574
    %593 = vst [vmem:[#allocation2 + $0x78] sm:$0xff] %v576
    %v594 = vld [vmem:[#allocation9] sm:$0xff]
    %v595 = vld [vmem:[#allocation9 + $0x8] sm:$0xff]
    %v596 = vld [vmem:[#allocation9 + $0x10] sm:$0xff]
    %v597 = vld [vmem:[#allocation9 + $0x18] sm:$0xff]
    %v598 = vld [vmem:[#allocation9 + $0x20] sm:$0xff]
    %v599 = vld [vmem:[#allocation9 + $0x28] sm:$0xff]
    %v600 = vld [vmem:[#allocation9 + $0x30] sm:$0xff]
    %v601 = vld [vmem:[#allocation9 + $0x38] sm:$0xff]
    %v602 = vld [vmem:[#allocation9 + $0x40] sm:$0xff]
    %v603 = vld [vmem:[#allocation9 + $0x48] sm:$0xff]
    %v604 = vld [vmem:[#allocation9 + $0x50] sm:$0xff]
    %v605 = vld [vmem:[#allocation9 + $0x58] sm:$0xff]
    %v606 = vld [vmem:[#allocation9 + $0x60] sm:$0xff]
    %v607 = vld [vmem:[#allocation9 + $0x68] sm:$0xff]
    %v608 = vld [vmem:[#allocation9 + $0x70] sm:$0xff]
    %v609 = vld [vmem:[#allocation9 + $0x78] sm:$0xff]
    %v610 = vld [vmem:[#allocation9 + $0x80] sm:$0xff]
    %v611 = vld [vmem:[#allocation9 + $0x88] sm:$0xff]
    %v612 = vld [vmem:[#allocation9 + $0x90] sm:$0xff]
    %v613 = vld [vmem:[#allocation9 + $0x98] sm:$0xff]
    %v614 = vld [vmem:[#allocation9 + $0xa0] sm:$0xff]
    %v615 = vld [vmem:[#allocation9 + $0xa8] sm:$0xff]
    %v616 = vld [vmem:[#allocation9 + $0xb0] sm:$0xff]
    %v617 = vld [vmem:[#allocation9 + $0xb8] sm:$0xff]
    %v618 = vld [vmem:[#allocation9 + $0xc0] sm:$0xff]
    %v619 = vld [vmem:[#allocation9 + $0xc8] sm:$0xff]
    %v620 = vld [vmem:[#allocation9 + $0xd0] sm:$0xff]
    %v621 = vld [vmem:[#allocation9 + $0xd8] sm:$0xff]
    %v622 = vld [vmem:[#allocation9 + $0xe0] sm:$0xff]
    %v623 = vld [vmem:[#allocation9 + $0xe8] sm:$0xff]
    %v624 = vld [vmem:[#allocation9 + $0xf0] sm:$0xff]
    %v625 = vld [vmem:[#allocation9 + $0xf8] sm:$0xff]
    %v626 = vld [vmem:[#allocation9 + $0x100] sm:$0xff]
    %v627 = vld [vmem:[#allocation9 + $0x108] sm:$0xff]
    %v628 = vld [vmem:[#allocation9 + $0x110] sm:$0xff]
    %v629 = vld [vmem:[#allocation9 + $0x118] sm:$0xff]
    %v630 = vld [vmem:[#allocation9 + $0x120] sm:$0xff]
    %v631 = vld [vmem:[#allocation9 + $0x128] sm:$0xff]
    %v632 = vld [vmem:[#allocation9 + $0x130] sm:$0xff]
    %v633 = vld [vmem:[#allocation9 + $0x138] sm:$0xff]
    %v634 = vld [vmem:[#allocation9 + $0x140] sm:$0xff]
    %v635 = vld [vmem:[#allocation9 + $0x148] sm:$0xff]
    %v636 = vld [vmem:[#allocation9 + $0x150] sm:$0xff]
    %v637 = vld [vmem:[#allocation9 + $0x158] sm:$0xff]
    %v638 = vld [vmem:[#allocation9 + $0x160] sm:$0xff]
    %v639 = vld [vmem:[#allocation9 + $0x168] sm:$0xff]
    %v640 = vld [vmem:[#allocation9 + $0x170] sm:$0xff]
    %v641 = vld [vmem:[#allocation9 + $0x178] sm:$0xff]
    %v642 = vld [vmem:[#allocation9 + $0x180] sm:$0xff]
    %v643 = vld [vmem:[#allocation9 + $0x188] sm:$0xff]
    %v644 = vld [vmem:[#allocation9 + $0x190] sm:$0xff]
    %v645 = vld [vmem:[#allocation9 + $0x198] sm:$0xff]
    %v646 = vld [vmem:[#allocation9 + $0x1a0] sm:$0xff]
    %v647 = vld [vmem:[#allocation9 + $0x1a8] sm:$0xff]
    %v648 = vld [vmem:[#allocation9 + $0x1b0] sm:$0xff]
    %v649 = vld [vmem:[#allocation9 + $0x1b8] sm:$0xff]
    %v650 = vld [vmem:[#allocation9 + $0x1c0] sm:$0xff]
    %v651 = vld [vmem:[#allocation9 + $0x1c8] sm:$0xff]
    %v652 = vld [vmem:[#allocation9 + $0x1d0] sm:$0xff]
    %v653 = vld [vmem:[#allocation9 + $0x1d8] sm:$0xff]
    %v654 = vld [vmem:[#allocation9 + $0x1e0] sm:$0xff]
    %v655 = vld [vmem:[#allocation9 + $0x1e8] sm:$0xff]
    %v656 = vld [vmem:[#allocation9 + $0x1f0] sm:$0xff]
    %v657 = vld [vmem:[#allocation9 + $0x1f8] sm:$0xff]
    %v658 = vld [vmem:[#allocation9 + $0x200] sm:$0xff]
    %v659 = vld [vmem:[#allocation9 + $0x208] sm:$0xff]
    %v660 = vld [vmem:[#allocation9 + $0x210] sm:$0xff]
    %v661 = vld [vmem:[#allocation9 + $0x218] sm:$0xff]
    %v662 = vld [vmem:[#allocation9 + $0x220] sm:$0xff]
    %v663 = vld [vmem:[#allocation9 + $0x228] sm:$0xff]
    %v664 = vld [vmem:[#allocation9 + $0x230] sm:$0xff]
    %v665 = vld [vmem:[#allocation9 + $0x238] sm:$0xff]
    %v666 = vld [vmem:[#allocation9 + $0x240] sm:$0xff]
    %v667 = vld [vmem:[#allocation9 + $0x248] sm:$0xff]
    %v668 = vld [vmem:[#allocation9 + $0x250] sm:$0xff]
    %v669 = vld [vmem:[#allocation9 + $0x258] sm:$0xff]
    %v670 = vld [vmem:[#allocation9 + $0x260] sm:$0xff]
    %v671 = vld [vmem:[#allocation9 + $0x268] sm:$0xff]
    %v672 = vld [vmem:[#allocation9 + $0x270] sm:$0xff]
    %v673 = vld [vmem:[#allocation9 + $0x278] sm:$0xff]
    %v674 = vld [vmem:[#allocation9 + $0x280] sm:$0xff]
    %v675 = vld [vmem:[#allocation9 + $0x288] sm:$0xff]
    %v676 = vld [vmem:[#allocation9 + $0x290] sm:$0xff]
    %v677 = vld [vmem:[#allocation9 + $0x298] sm:$0xff]
    %v678 = vld [vmem:[#allocation9 + $0x2a0] sm:$0xff]
    %v679 = vld [vmem:[#allocation9 + $0x2a8] sm:$0xff]
    %v680 = vld [vmem:[#allocation9 + $0x2b0] sm:$0xff]
    %v681 = vld [vmem:[#allocation9 + $0x2b8] sm:$0xff]
    %v682 = vld [vmem:[#allocation9 + $0x2c0] sm:$0xff]
    %v683 = vld [vmem:[#allocation9 + $0x2c8] sm:$0xff]
    %v684 = vld [vmem:[#allocation9 + $0x2d0] sm:$0xff]
    %v685 = vld [vmem:[#allocation9 + $0x2d8] sm:$0xff]
    %v686 = vld [vmem:[#allocation9 + $0x2e0] sm:$0xff]
    %v687 = vld [vmem:[#allocation9 + $0x2e8] sm:$0xff]
    %v688 = vld [vmem:[#allocation9 + $0x2f0] sm:$0xff]
    %v689 = vld [vmem:[#allocation9 + $0x2f8] sm:$0xff]
    %v690 = vld [vmem:[#allocation9 + $0x300] sm:$0xff]
    %v691 = vld [vmem:[#allocation9 + $0x308] sm:$0xff]
    %v692 = vld [vmem:[#allocation9 + $0x310] sm:$0xff]
    %v693 = vld [vmem:[#allocation9 + $0x318] sm:$0xff]
    %v694 = vld [vmem:[#allocation9 + $0x320] sm:$0xff]
    %v695 = vld [vmem:[#allocation9 + $0x328] sm:$0xff]
    %v696 = vld [vmem:[#allocation9 + $0x330] sm:$0xff]
    %v697 = vld [vmem:[#allocation9 + $0x338] sm:$0xff]
    %v698 = vld [vmem:[#allocation9 + $0x340] sm:$0xff]
    %v699 = vld [vmem:[#allocation9 + $0x348] sm:$0xff]
    %v700 = vld [vmem:[#allocation9 + $0x350] sm:$0xff]
    %v701 = vld [vmem:[#allocation9 + $0x358] sm:$0xff]
    %v702 = vld [vmem:[#allocation9 + $0x360] sm:$0xff]
    %v703 = vld [vmem:[#allocation9 + $0x368] sm:$0xff]
    %v704 = vld [vmem:[#allocation9 + $0x370] sm:$0xff]
    %v705 = vld [vmem:[#allocation9 + $0x378] sm:$0xff]
    %v706 = vld [vmem:[#allocation9 + $0x380] sm:$0xff]
    %v707 = vld [vmem:[#allocation9 + $0x388] sm:$0xff]
    %v708 = vld [vmem:[#allocation9 + $0x390] sm:$0xff]
    %v709 = vld [vmem:[#allocation9 + $0x398] sm:$0xff]
    %v710 = vld [vmem:[#allocation9 + $0x3a0] sm:$0xff]
    %v711 = vld [vmem:[#allocation9 + $0x3a8] sm:$0xff]
    %v712 = vld [vmem:[#allocation9 + $0x3b0] sm:$0xff]
    %v713 = vld [vmem:[#allocation9 + $0x3b8] sm:$0xff]
    %v714 = vld [vmem:[#allocation9 + $0x3c0] sm:$0xff]
    %v715 = vld [vmem:[#allocation9 + $0x3c8] sm:$0xff]
    %v716 = vld [vmem:[#allocation9 + $0x3d0] sm:$0xff]
    %v717 = vld [vmem:[#allocation9 + $0x3d8] sm:$0xff]
    %v718 = vld [vmem:[#allocation9 + $0x3e0] sm:$0xff]
    %v719 = vld [vmem:[#allocation9 + $0x3e8] sm:$0xff]
    %v720 = vld [vmem:[#allocation9 + $0x3f0] sm:$0xff]
    %v721 = vld [vmem:[#allocation9 + $0x3f8] sm:$0xff]
    %v722 = vld [vmem:[#allocation9 + $0x400] sm:$0xff]
    %v723 = vld [vmem:[#allocation9 + $0x408] sm:$0xff]
    %v724 = vld [vmem:[#allocation9 + $0x410] sm:$0xff]
    %v725 = vld [vmem:[#allocation9 + $0x418] sm:$0xff]
    %v726 = vld [vmem:[#allocation9 + $0x420] sm:$0xff]
    %v727 = vld [vmem:[#allocation9 + $0x428] sm:$0xff]
    %v728 = vld [vmem:[#allocation9 + $0x430] sm:$0xff]
    %v729 = vld [vmem:[#allocation9 + $0x438] sm:$0xff]
    %v730 = vld [vmem:[#allocation9 + $0x440] sm:$0xff]
    %v731 = vld [vmem:[#allocation9 + $0x448] sm:$0xff]
    %v732 = vld [vmem:[#allocation9 + $0x450] sm:$0xff]
    %v733 = vld [vmem:[#allocation9 + $0x458] sm:$0xff]
    %v734 = vld [vmem:[#allocation9 + $0x460] sm:$0xff]
    %v735 = vld [vmem:[#allocation9 + $0x468] sm:$0xff]
    %v736 = vld [vmem:[#allocation9 + $0x470] sm:$0xff]
    %v737 = vld [vmem:[#allocation9 + $0x478] sm:$0xff]
    %v738 = vld [vmem:[#allocation9 + $0x480] sm:$0xff]
    %v739 = vld [vmem:[#allocation9 + $0x488] sm:$0xff]
    %v740 = vld [vmem:[#allocation9 + $0x490] sm:$0xff]
    %v741 = vld [vmem:[#allocation9 + $0x498] sm:$0xff]
    %v742 = vld [vmem:[#allocation9 + $0x4a0] sm:$0xff]
    %v743 = vld [vmem:[#allocation9 + $0x4a8] sm:$0xff]
    %v744 = vld [vmem:[#allocation9 + $0x4b0] sm:$0xff]
    %v745 = vld [vmem:[#allocation9 + $0x4b8] sm:$0xff]
    %v746 = vld [vmem:[#allocation9 + $0x4c0] sm:$0xff]
    %v747 = vld [vmem:[#allocation9 + $0x4c8] sm:$0xff]
    %v748 = vld [vmem:[#allocation9 + $0x4d0] sm:$0xff]
    %v749 = vld [vmem:[#allocation9 + $0x4d8] sm:$0xff]
    %v750 = vld [vmem:[#allocation9 + $0x4e0] sm:$0xff]
    %v751 = vld [vmem:[#allocation9 + $0x4e8] sm:$0xff]
    %v752 = vld [vmem:[#allocation9 + $0x4f0] sm:$0xff]
    %v753 = vld [vmem:[#allocation9 + $0x4f8] sm:$0xff]
    %v754 = vld [vmem:[#allocation9 + $0x500] sm:$0xff]
    %v755 = vld [vmem:[#allocation9 + $0x508] sm:$0xff]
    %v756 = vld [vmem:[#allocation9 + $0x510] sm:$0xff]
    %v757 = vld [vmem:[#allocation9 + $0x518] sm:$0xff]
    %v758 = vld [vmem:[#allocation9 + $0x520] sm:$0xff]
    %v759 = vld [vmem:[#allocation9 + $0x528] sm:$0xff]
    %v760 = vld [vmem:[#allocation9 + $0x530] sm:$0xff]
    %v761 = vld [vmem:[#allocation9 + $0x538] sm:$0xff]
    %v762 = vld [vmem:[#allocation9 + $0x540] sm:$0xff]
    %v763 = vld [vmem:[#allocation9 + $0x548] sm:$0xff]
    %v764 = vld [vmem:[#allocation9 + $0x550] sm:$0xff]
    %v765 = vld [vmem:[#allocation9 + $0x558] sm:$0xff]
    %v766 = vld [vmem:[#allocation9 + $0x560] sm:$0xff]
    %v767 = vld [vmem:[#allocation9 + $0x568] sm:$0xff]
    %v768 = vld [vmem:[#allocation9 + $0x570] sm:$0xff]
    %v769 = vld [vmem:[#allocation9 + $0x578] sm:$0xff]
    %v770 = vld [vmem:[#allocation9 + $0x580] sm:$0xff]
    %v771 = vld [vmem:[#allocation9 + $0x588] sm:$0xff]
    %v772 = vld [vmem:[#allocation9 + $0x590] sm:$0xff]
    %v773 = vld [vmem:[#allocation9 + $0x598] sm:$0xff]
    %v774 = vld [vmem:[#allocation9 + $0x5a0] sm:$0xff]
    %v775 = vld [vmem:[#allocation9 + $0x5a8] sm:$0xff]
    %v776 = vld [vmem:[#allocation9 + $0x5b0] sm:$0xff]
    %v777 = vld [vmem:[#allocation9 + $0x5b8] sm:$0xff]
    %v778 = vld [vmem:[#allocation9 + $0x5c0] sm:$0xff]
    %v779 = vld [vmem:[#allocation9 + $0x5c8] sm:$0xff]
    %v780 = vld [vmem:[#allocation9 + $0x5d0] sm:$0xff]
    %v781 = vld [vmem:[#allocation9 + $0x5d8] sm:$0xff]
    %v782 = vld [vmem:[#allocation9 + $0x5e0] sm:$0xff]
    %v783 = vld [vmem:[#allocation9 + $0x5e8] sm:$0xff]
    %v784 = vld [vmem:[#allocation9 + $0x5f0] sm:$0xff]
    %v785 = vld [vmem:[#allocation9 + $0x5f8] sm:$0xff]
    %v786 = vld [vmem:[#allocation9 + $0x600] sm:$0xff]
    %v787 = vld [vmem:[#allocation9 + $0x608] sm:$0xff]
    %v788 = vld [vmem:[#allocation9 + $0x610] sm:$0xff]
    %v789 = vld [vmem:[#allocation9 + $0x618] sm:$0xff]
    %v790 = vld [vmem:[#allocation9 + $0x620] sm:$0xff]
    %v791 = vld [vmem:[#allocation9 + $0x628] sm:$0xff]
    %v792 = vld [vmem:[#allocation9 + $0x630] sm:$0xff]
    %v793 = vld [vmem:[#allocation9 + $0x638] sm:$0xff]
    %v794 = vld [vmem:[#allocation9 + $0x640] sm:$0xff]
    %v795 = vld [vmem:[#allocation9 + $0x648] sm:$0xff]
    %v796 = vld [vmem:[#allocation9 + $0x650] sm:$0xff]
    %v797 = vld [vmem:[#allocation9 + $0x658] sm:$0xff]
    %v798 = vld [vmem:[#allocation9 + $0x660] sm:$0xff]
    %v799 = vld [vmem:[#allocation9 + $0x668] sm:$0xff]
    %v800 = vld [vmem:[#allocation9 + $0x670] sm:$0xff]
    %v801 = vld [vmem:[#allocation9 + $0x678] sm:$0xff]
    %v802 = vld [vmem:[#allocation9 + $0x680] sm:$0xff]
    %v803 = vld [vmem:[#allocation9 + $0x688] sm:$0xff]
    %v804 = vld [vmem:[#allocation9 + $0x690] sm:$0xff]
    %v805 = vld [vmem:[#allocation9 + $0x698] sm:$0xff]
    %v806 = vld [vmem:[#allocation9 + $0x6a0] sm:$0xff]
    %v807 = vld [vmem:[#allocation9 + $0x6a8] sm:$0xff]
    %v808 = vld [vmem:[#allocation9 + $0x6b0] sm:$0xff]
    %v809 = vld [vmem:[#allocation9 + $0x6b8] sm:$0xff]
    %v810 = vld [vmem:[#allocation9 + $0x6c0] sm:$0xff]
    %v811 = vld [vmem:[#allocation9 + $0x6c8] sm:$0xff]
    %v812 = vld [vmem:[#allocation9 + $0x6d0] sm:$0xff]
    %v813 = vld [vmem:[#allocation9 + $0x6d8] sm:$0xff]
    %v814 = vld [vmem:[#allocation9 + $0x6e0] sm:$0xff]
    %v815 = vld [vmem:[#allocation9 + $0x6e8] sm:$0xff]
    %v816 = vld [vmem:[#allocation9 + $0x6f0] sm:$0xff]
    %v817 = vld [vmem:[#allocation9 + $0x6f8] sm:$0xff]
    %v818 = vld [vmem:[#allocation9 + $0x700] sm:$0xff]
    %v819 = vld [vmem:[#allocation9 + $0x708] sm:$0xff]
    %v820 = vld [vmem:[#allocation9 + $0x710] sm:$0xff]
    %v821 = vld [vmem:[#allocation9 + $0x718] sm:$0xff]
    %v822 = vld [vmem:[#allocation9 + $0x720] sm:$0xff]
    %v823 = vld [vmem:[#allocation9 + $0x728] sm:$0xff]
    %v824 = vld [vmem:[#allocation9 + $0x730] sm:$0xff]
    %v825 = vld [vmem:[#allocation9 + $0x738] sm:$0xff]
    %v826 = vld [vmem:[#allocation9 + $0x740] sm:$0xff]
    %v827 = vld [vmem:[#allocation9 + $0x748] sm:$0xff]
    %v828 = vld [vmem:[#allocation9 + $0x750] sm:$0xff]
    %v829 = vld [vmem:[#allocation9 + $0x758] sm:$0xff]
    %v830 = vld [vmem:[#allocation9 + $0x760] sm:$0xff]
    %v831 = vld [vmem:[#allocation9 + $0x768] sm:$0xff]
    %v832 = vld [vmem:[#allocation9 + $0x770] sm:$0xff]
    %v833 = vld [vmem:[#allocation9 + $0x778] sm:$0xff]
    %v834 = vld [vmem:[#allocation9 + $0x780] sm:$0xff]
    %v835 = vld [vmem:[#allocation9 + $0x788] sm:$0xff]
    %v836 = vld [vmem:[#allocation9 + $0x790] sm:$0xff]
    %v837 = vld [vmem:[#allocation9 + $0x798] sm:$0xff]
    %v838 = vld [vmem:[#allocation9 + $0x7a0] sm:$0xff]
    %v839 = vld [vmem:[#allocation9 + $0x7a8] sm:$0xff]
    %v840 = vld [vmem:[#allocation9 + $0x7b0] sm:$0xff]
    %v841 = vld [vmem:[#allocation9 + $0x7b8] sm:$0xff]
    %v842 = vld [vmem:[#allocation9 + $0x7c0] sm:$0xff]
    %v843 = vld [vmem:[#allocation9 + $0x7c8] sm:$0xff]
    %v844 = vld [vmem:[#allocation9 + $0x7d0] sm:$0xff]
    %v845 = vld [vmem:[#allocation9 + $0x7d8] sm:$0xff]
    %v846 = vld [vmem:[#allocation9 + $0x7e0] sm:$0xff]
    %v847 = vld [vmem:[#allocation9 + $0x7e8] sm:$0xff]
    %v848 = vld [vmem:[#allocation9 + $0x7f0] sm:$0xff]
    %v849 = vld [vmem:[#allocation9 + $0x7f8] sm:$0xff]
    %v850 = vld [vmem:[#allocation2] sm:$0x3]
    %v851 = vld [vmem:[#allocation2 + $0x8] sm:$0x3]
    %v852 = vld [vmem:[#allocation2 + $0x10] sm:$0x3]
    %v853 = vld [vmem:[#allocation2 + $0x18] sm:$0x3]
    %v854 = vld [vmem:[#allocation2 + $0x20] sm:$0x3]
    %v855 = vld [vmem:[#allocation2 + $0x28] sm:$0x3]
    %v856 = vld [vmem:[#allocation2 + $0x30] sm:$0x3]
    %v857 = vld [vmem:[#allocation2 + $0x38] sm:$0x3]
    %858 = vmatprep.subr.mxu0 %v595
    %859 = vmatpush1.msra.mxu0 %v594
    %860 = vmatprep.subr.mxu0 %v603
    %861 = vmatpush1.msra.mxu0 %v602
    %862 = vmatprep.subr.mxu0 %v611
    %863 = vmatpush1.msra.mxu0 %v610
    %864 = vmatprep.subr.mxu0 %v619
    %865 = vmatpush1.msra.mxu0 %v618
    %866 = vmatprep.subr.mxu0 %v627
    %867 = vmatpush1.msra.mxu0 %v626
    %868 = vmatprep.subr.mxu0 %v635
    %869 = vmatpush1.msra.mxu0 %v634
    %870 = vmatprep.subr.mxu0 %v643
    %871 = vmatpush1.msra.mxu0 %v642
    %872 = vmatprep.subr.mxu0 %v651
    %873 = vmatpush1.msra.mxu0 %v650
    %874 = vmatprep.subr.mxu0 %v659
    %875 = vmatpush1.msra.mxu0 %v658
    %876 = vmatprep.subr.mxu0 %v667
    %877 = vmatpush1.msra.mxu0 %v666
    %878 = vmatprep.subr.mxu0 %v675
    %879 = vmatpush1.msra.mxu0 %v674
    %880 = vmatprep.subr.mxu0 %v683
    %881 = vmatpush1.msra.mxu0 %v682
    %882 = vmatprep.subr.mxu0 %v691
    %883 = vmatpush1.msra.mxu0 %v690
    %884 = vmatprep.subr.mxu0 %v699
    %885 = vmatpush1.msra.mxu0 %v698
    %886 = vmatprep.subr.mxu0 %v707
    %887 = vmatpush1.msra.mxu0 %v706
    %888 = vmatprep.subr.mxu0 %v715
    %889 = vmatpush1.msra.mxu0 %v714
    %890 = vmatprep.subr.mxu0 %v723
    %891 = vmatpush1.msra.mxu0 %v722
    %892 = vmatprep.subr.mxu0 %v731
    %893 = vmatpush1.msra.mxu0 %v730
    %894 = vmatprep.subr.mxu0 %v739
    %895 = vmatpush1.msra.mxu0 %v738
    %896 = vmatprep.subr.mxu0 %v747
    %897 = vmatpush1.msra.mxu0 %v746
    %898 = vmatprep.subr.mxu0 %v755
    %899 = vmatpush1.msra.mxu0 %v754
    %900 = vmatprep.subr.mxu0 %v763
    %901 = vmatpush1.msra.mxu0 %v762
    %902 = vmatprep.subr.mxu0 %v771
    %903 = vmatpush1.msra.mxu0 %v770
    %904 = vmatprep.subr.mxu0 %v779
    %905 = vmatpush1.msra.mxu0 %v778
    %906 = vmatprep.subr.mxu0 %v787
    %907 = vmatpush1.msra.mxu0 %v786
    %908 = vmatprep.subr.mxu0 %v795
    %909 = vmatpush1.msra.mxu0 %v794
    %910 = vmatprep.subr.mxu0 %v803
    %911 = vmatpush1.msra.mxu0 %v802
    %912 = vmatprep.subr.mxu0 %v811
    %913 = vmatpush1.msra.mxu0 %v810
    %914 = vmatprep.subr.mxu0 %v819
    %915 = vmatpush1.msra.mxu0 %v818
    %916 = vmatprep.subr.mxu0 %v827
    %917 = vmatpush1.msra.mxu0 %v826
    %918 = vmatprep.subr.mxu0 %v835
    %919 = vmatpush1.msra.mxu0 %v834
    %920 = vmatprep.subr.mxu0 %v843
    %921 = vmatpush1.msra.mxu0 %v842
    %922 = vmatprep.mubr.f32.mxu0 0.0
    %923 = vmatmul.mubr.f32.gmra.mrb[0].mxu0 0.0
    %v924 = vpop.f32.mrb[0].mxu0
    %v925 = vadd.f32 0.0, %v924
    %v926 = vpop.f32.mrb[0].mxu0
    %v927 = vadd.f32 0.0, %v926
    %928 = vdwg.mxu0
    %929 = vmatprep.subr.mxu0 %v597
    %930 = vmatpush1.msra.mxu0 %v596
    %931 = vmatprep.subr.mxu0 %v605
    %932 = vmatpush1.msra.mxu0 %v604
    %933 = vmatprep.subr.mxu0 %v613
    %934 = vmatpush1.msra.mxu0 %v612
    %935 = vmatprep.subr.mxu0 %v621
    %936 = vmatpush1.msra.mxu0 %v620
    %937 = vmatprep.subr.mxu0 %v629
    %938 = vmatpush1.msra.mxu0 %v628
    %939 = vmatprep.subr.mxu0 %v637
    %940 = vmatpush1.msra.mxu0 %v636
    %941 = vmatprep.subr.mxu0 %v645
    %942 = vmatpush1.msra.mxu0 %v644
    %943 = vmatprep.subr.mxu0 %v653
    %944 = vmatpush1.msra.mxu0 %v652
    %945 = vmatprep.subr.mxu0 %v661
    %946 = vmatpush1.msra.mxu0 %v660
    %947 = vmatprep.subr.mxu0 %v669
    %948 = vmatpush1.msra.mxu0 %v668
    %949 = vmatprep.subr.mxu0 %v677
    %950 = vmatpush1.msra.mxu0 %v676
    %951 = vmatprep.subr.mxu0 %v685
    %952 = vmatpush1.msra.mxu0 %v684
    %953 = vmatprep.subr.mxu0 %v693
    %954 = vmatpush1.msra.mxu0 %v692
    %955 = vmatprep.subr.mxu0 %v701
    %956 = vmatpush1.msra.mxu0 %v700
    %957 = vmatprep.subr.mxu0 %v709
    %958 = vmatpush1.msra.mxu0 %v708
    %959 = vmatprep.subr.mxu0 %v717
    %960 = vmatpush1.msra.mxu0 %v716
    %961 = vmatprep.subr.mxu0 %v725
    %962 = vmatpush1.msra.mxu0 %v724
    %963 = vmatprep.subr.mxu0 %v733
    %964 = vmatpush1.msra.mxu0 %v732
    %965 = vmatprep.subr.mxu0 %v741
    %966 = vmatpush1.msra.mxu0 %v740
    %967 = vmatprep.subr.mxu0 %v749
    %968 = vmatpush1.msra.mxu0 %v748
    %969 = vmatprep.subr.mxu0 %v757
    %970 = vmatpush1.msra.mxu0 %v756
    %971 = vmatprep.subr.mxu0 %v765
    %972 = vmatpush1.msra.mxu0 %v764
    %973 = vmatprep.subr.mxu0 %v773
    %974 = vmatpush1.msra.mxu0 %v772
    %975 = vmatprep.subr.mxu0 %v781
    %976 = vmatpush1.msra.mxu0 %v780
    %977 = vmatprep.subr.mxu0 %v789
    %978 = vmatpush1.msra.mxu0 %v788
    %979 = vmatprep.subr.mxu0 %v797
    %980 = vmatpush1.msra.mxu0 %v796
    %981 = vmatprep.subr.mxu0 %v805
    %982 = vmatpush1.msra.mxu0 %v804
    %983 = vmatprep.subr.mxu0 %v813
    %984 = vmatpush1.msra.mxu0 %v812
    %985 = vmatprep.subr.mxu0 %v821
    %986 = vmatpush1.msra.mxu0 %v820
    %987 = vmatprep.subr.mxu0 %v829
    %988 = vmatpush1.msra.mxu0 %v828
    %989 = vmatprep.subr.mxu0 %v837
    %990 = vmatpush1.msra.mxu0 %v836
    %991 = vmatprep.subr.mxu0 %v845
    %992 = vmatpush1.msra.mxu0 %v844
    %993 = vmatprep.mubr.f32.mxu0 0.0
    %994 = vmatmul.mubr.f32.gmra.mrb[0].mxu0 0.0
    %v995 = vpop.f32.mrb[0].mxu0
    %v996 = vadd.f32 0.0, %v995
    %v997 = vpop.f32.mrb[0].mxu0
    %v998 = vadd.f32 0.0, %v997
    %999 = vdwg.mxu0
    %1000 = vmatprep.subr.mxu0 %v599
    %1001 = vmatpush1.msra.mxu0 %v598
    %1002 = vmatprep.subr.mxu0 %v607
    %1003 = vmatpush1.msra.mxu0 %v606
    %1004 = vmatprep.subr.mxu0 %v615
    %1005 = vmatpush1.msra.mxu0 %v614
    %1006 = vmatprep.subr.mxu0 %v623
    %1007 = vmatpush1.msra.mxu0 %v622
    %1008 = vmatprep.subr.mxu0 %v631
    %1009 = vmatpush1.msra.mxu0 %v630
    %1010 = vmatprep.subr.mxu0 %v639
    %1011 = vmatpush1.msra.mxu0 %v638
    %1012 = vmatprep.subr.mxu0 %v647
    %1013 = vmatpush1.msra.mxu0 %v646
    %1014 = vmatprep.subr.mxu0 %v655
    %1015 = vmatpush1.msra.mxu0 %v654
    %1016 = vmatprep.subr.mxu0 %v663
    %1017 = vmatpush1.msra.mxu0 %v662
    %1018 = vmatprep.subr.mxu0 %v671
    %1019 = vmatpush1.msra.mxu0 %v670
    %1020 = vmatprep.subr.mxu0 %v679
    %1021 = vmatpush1.msra.mxu0 %v678
    %1022 = vmatprep.subr.mxu0 %v687
    %1023 = vmatpush1.msra.mxu0 %v686
    %1024 = vmatprep.subr.mxu0 %v695
    %1025 = vmatpush1.msra.mxu0 %v694
    %1026 = vmatprep.subr.mxu0 %v703
    %1027 = vmatpush1.msra.mxu0 %v702
    %1028 = vmatprep.subr.mxu0 %v711
    %1029 = vmatpush1.msra.mxu0 %v710
    %1030 = vmatprep.subr.mxu0 %v719
    %1031 = vmatpush1.msra.mxu0 %v718
    %1032 = vmatprep.subr.mxu0 %v727
    %1033 = vmatpush1.msra.mxu0 %v726
    %1034 = vmatprep.subr.mxu0 %v735
    %1035 = vmatpush1.msra.mxu0 %v734
    %1036 = vmatprep.subr.mxu0 %v743
    %1037 = vmatpush1.msra.mxu0 %v742
    %1038 = vmatprep.subr.mxu0 %v751
    %1039 = vmatpush1.msra.mxu0 %v750
    %1040 = vmatprep.subr.mxu0 %v759
    %1041 = vmatpush1.msra.mxu0 %v758
    %1042 = vmatprep.subr.mxu0 %v767
    %1043 = vmatpush1.msra.mxu0 %v766
    %1044 = vmatprep.subr.mxu0 %v775
    %1045 = vmatpush1.msra.mxu0 %v774
    %1046 = vmatprep.subr.mxu0 %v783
    %1047 = vmatpush1.msra.mxu0 %v782
    %1048 = vmatprep.subr.mxu0 %v791
    %1049 = vmatpush1.msra.mxu0 %v790
    %1050 = vmatprep.subr.mxu0 %v799
    %1051 = vmatpush1.msra.mxu0 %v798
    %1052 = vmatprep.subr.mxu0 %v807
    %1053 = vmatpush1.msra.mxu0 %v806
    %1054 = vmatprep.subr.mxu0 %v815
    %1055 = vmatpush1.msra.mxu0 %v814
    %1056 = vmatprep.subr.mxu0 %v823
    %1057 = vmatpush1.msra.mxu0 %v822
    %1058 = vmatprep.subr.mxu0 %v831
    %1059 = vmatpush1.msra.mxu0 %v830
    %1060 = vmatprep.subr.mxu0 %v839
    %1061 = vmatpush1.msra.mxu0 %v838
    %1062 = vmatprep.subr.mxu0 %v847
    %1063 = vmatpush1.msra.mxu0 %v846
    %1064 = vmatprep.mubr.f32.mxu0 0.0
    %1065 = vmatmul.mubr.f32.gmra.mrb[0].mxu0 0.0
    %v1066 = vpop.f32.mrb[0].mxu0
    %v1067 = vadd.f32 0.0, %v1066
    %v1068 = vpop.f32.mrb[0].mxu0
    %v1069 = vadd.f32 0.0, %v1068
    %1070 = vdwg.mxu0
    %1071 = vmatprep.subr.mxu0 %v601
    %1072 = vmatpush1.msra.mxu0 %v600
    %1073 = vmatprep.subr.mxu0 %v609
    %1074 = vmatpush1.msra.mxu0 %v608
    %1075 = vmatprep.subr.mxu0 %v617
    %1076 = vmatpush1.msra.mxu0 %v616
    %1077 = vmatprep.subr.mxu0 %v625
    %1078 = vmatpush1.msra.mxu0 %v624
    %1079 = vmatprep.subr.mxu0 %v633
    %1080 = vmatpush1.msra.mxu0 %v632
    %1081 = vmatprep.subr.mxu0 %v641
    %1082 = vmatpush1.msra.mxu0 %v640
    %1083 = vmatprep.subr.mxu0 %v649
    %1084 = vmatpush1.msra.mxu0 %v648
    %1085 = vmatprep.subr.mxu0 %v657
    %1086 = vmatpush1.msra.mxu0 %v656
    %1087 = vmatprep.subr.mxu0 %v665
    %1088 = vmatpush1.msra.mxu0 %v664
    %1089 = vmatprep.subr.mxu0 %v673
    %1090 = vmatpush1.msra.mxu0 %v672
    %1091 = vmatprep.subr.mxu0 %v681
    %1092 = vmatpush1.msra.mxu0 %v680
    %1093 = vmatprep.subr.mxu0 %v689
    %1094 = vmatpush1.msra.mxu0 %v688
    %1095 = vmatprep.subr.mxu0 %v697
    %1096 = vmatpush1.msra.mxu0 %v696
    %1097 = vmatprep.subr.mxu0 %v705
    %1098 = vmatpush1.msra.mxu0 %v704
    %1099 = vmatprep.subr.mxu0 %v713
    %1100 = vmatpush1.msra.mxu0 %v712
    %1101 = vmatprep.subr.mxu0 %v721
    %1102 = vmatpush1.msra.mxu0 %v720
    %1103 = vmatprep.subr.mxu0 %v729
    %1104 = vmatpush1.msra.mxu0 %v728
    %1105 = vmatprep.subr.mxu0 %v737
    %1106 = vmatpush1.msra.mxu0 %v736
    %1107 = vmatprep.subr.mxu0 %v745
    %1108 = vmatpush1.msra.mxu0 %v744
    %1109 = vmatprep.subr.mxu0 %v753
    %1110 = vmatpush1.msra.mxu0 %v752
    %1111 = vmatprep.subr.mxu0 %v761
    %1112 = vmatpush1.msra.mxu0 %v760
    %1113 = vmatprep.subr.mxu0 %v769
    %1114 = vmatpush1.msra.mxu0 %v768
    %1115 = vmatprep.subr.mxu0 %v777
    %1116 = vmatpush1.msra.mxu0 %v776
    %1117 = vmatprep.subr.mxu0 %v785
    %1118 = vmatpush1.msra.mxu0 %v784
    %1119 = vmatprep.subr.mxu0 %v793
    %1120 = vmatpush1.msra.mxu0 %v792
    %1121 = vmatprep.subr.mxu0 %v801
    %1122 = vmatpush1.msra.mxu0 %v800
    %1123 = vmatprep.subr.mxu0 %v809
    %1124 = vmatpush1.msra.mxu0 %v808
    %1125 = vmatprep.subr.mxu0 %v817
    %1126 = vmatpush1.msra.mxu0 %v816
    %1127 = vmatprep.subr.mxu0 %v825
    %1128 = vmatpush1.msra.mxu0 %v824
    %1129 = vmatprep.subr.mxu0 %v833
    %1130 = vmatpush1.msra.mxu0 %v832
    %1131 = vmatprep.subr.mxu0 %v841
    %1132 = vmatpush1.msra.mxu0 %v840
    %1133 = vmatprep.subr.mxu0 %v849
    %1134 = vmatpush1.msra.mxu0 %v848
    %1135 = vmatprep.mubr.f32.mxu0 0.0
    %1136 = vmatmul.mubr.f32.gmra.mrb[0].mxu0 0.0
    %v1137 = vpop.f32.mrb[0].mxu0
    %v1138 = vadd.f32 0.0, %v1137
    %v1139 = vpop.f32.mrb[0].mxu0
    %v1140 = vadd.f32 0.0, %v1139
    %1141 = vdwg.mxu0
    %v1142 = vadd.f32 %v850, %v925
    %v1143 = vadd.f32 %v851, %v927
    %v1144 = vadd.f32 %v852, %v996
    %v1145 = vadd.f32 %v853, %v998
    %v1146 = vadd.f32 %v854, %v1067
    %v1147 = vadd.f32 %v855, %v1069
    %v1148 = vadd.f32 %v856, %v1138
    %v1149 = vadd.f32 %v857, %v1140
    %v1150 = vxor.u32 %v1142, 2147483648
    %v1151 = vxor.u32 %v1143, 2147483648
    %v1152 = vxor.u32 %v1144, 2147483648
    %v1153 = vxor.u32 %v1145, 2147483648
    %v1154 = vxor.u32 %v1146, 2147483648
    %v1155 = vxor.u32 %v1147, 2147483648
    %v1156 = vmul.f32 %v1150, 1.442695
    %v1157 = vpow.pop %v1156
    %v1158 = vmul.f32 %v1151, 1.442695
    %v1159 = vpow.pop %v1158
    %v1160 = vmul.f32 %v1152, 1.442695
    %v1161 = vpow.pop %v1160
    %v1162 = vmul.f32 %v1153, 1.442695
    %v1163 = vpow.pop %v1162
    %v1164 = vmul.f32 %v1154, 1.442695
    %v1165 = vpow.pop %v1164
    %v1166 = vmul.f32 %v1155, 1.442695
    %v1167 = vpow.pop %v1166
    %v1168 = vadd.f32 %v1157, 1.0
    %v1169 = vadd.f32 %v1159, 1.0
    %v1170 = vadd.f32 %v1161, 1.0
    %v1171 = vadd.f32 %v1163, 1.0
    %v1172 = vadd.f32 %v1165, 1.0
    %v1173 = vadd.f32 %v1167, 1.0
    %v1174 = vrcp.pop %v1168
    %v1175 = vmul.f32 1.0, %v1174
    %v1176 = vrcp.pop %v1169
    %v1177 = vmul.f32 1.0, %v1176
    %v1178 = vrcp.pop %v1170
    %v1179 = vmul.f32 1.0, %v1178
    %v1180 = vrcp.pop %v1171
    %v1181 = vmul.f32 1.0, %v1180
    %v1182 = vrcp.pop %v1172
    %v1183 = vmul.f32 1.0, %v1182
    %v1184 = vrcp.pop %v1173
    %v1185 = vmul.f32 1.0, %v1184
    %v1186 = vtanh.pop %v1148
    %v1187 = vtanh.pop %v1149
    %v1188 = vmul.f32 %v1179, 0.0
    %v1189 = vmul.f32 %v1181, 0.0
    %v1190 = vmul.f32 %v1175, %v1186
    %v1191 = vmul.f32 %v1177, %v1187
    %v1192 = vadd.f32 %v1188, %v1190
    %v1193 = vadd.f32 %v1189, %v1191
    %v1194 = vtanh.pop %v1192
    %v1195 = vtanh.pop %v1193
    %v1196 = vmul.f32 %v1183, %v1194
    %v1197 = vmul.f32 %v1185, %v1195
    %1198 = vst [vmem:[#allocation3] sm:$0x3] %v1196
    %1199 = vst [vmem:[#allocation3 + $0x8] sm:$0x3] %v1197
    %v1200 = vld [vmem:[#allocation2] sm:$0xc]
    %v1201 = vld [vmem:[#allocation2 + $0x8] sm:$0xc]
    %v1202 = vld [vmem:[#allocation2 + $0x10] sm:$0xc]
    %v1203 = vld [vmem:[#allocation2 + $0x18] sm:$0xc]
    %v1204 = vld [vmem:[#allocation2 + $0x20] sm:$0xc]
    %v1205 = vld [vmem:[#allocation2 + $0x28] sm:$0xc]
    %v1206 = vld [vmem:[#allocation2 + $0x30] sm:$0xc]
    %v1207 = vld [vmem:[#allocation2 + $0x38] sm:$0xc]
    %1208 = vmatprep.subr.mxu0 %v595
    %1209 = vmatpush1.msra.mxu0 %v594
    %1210 = vmatprep.subr.mxu0 %v603
    %1211 = vmatpush1.msra.mxu0 %v602
    %1212 = vmatprep.subr.mxu0 %v611
    %1213 = vmatpush1.msra.mxu0 %v610
    %1214 = vmatprep.subr.mxu0 %v619
    %1215 = vmatpush1.msra.mxu0 %v618
    %1216 = vmatprep.subr.mxu0 %v627
    %1217 = vmatpush1.msra.mxu0 %v626
    %1218 = vmatprep.subr.mxu0 %v635
    %1219 = vmatpush1.msra.mxu0 %v634
    %1220 = vmatprep.subr.mxu0 %v643
    %1221 = vmatpush1.msra.mxu0 %v642
    %1222 = vmatprep.subr.mxu0 %v651
    %1223 = vmatpush1.msra.mxu0 %v650
    %1224 = vmatprep.subr.mxu0 %v659
    %1225 = vmatpush1.msra.mxu0 %v658
    %1226 = vmatprep.subr.mxu0 %v667
    %1227 = vmatpush1.msra.mxu0 %v666
    %1228 = vmatprep.subr.mxu0 %v675
    %1229 = vmatpush1.msra.mxu0 %v674
    %1230 = vmatprep.subr.mxu0 %v683
    %1231 = vmatpush1.msra.mxu0 %v682
    %1232 = vmatprep.subr.mxu0 %v691
    %1233 = vmatpush1.msra.mxu0 %v690
    %1234 = vmatprep.subr.mxu0 %v699
    %1235 = vmatpush1.msra.mxu0 %v698
    %1236 = vmatprep.subr.mxu0 %v707
    %1237 = vmatpush1.msra.mxu0 %v706
    %1238 = vmatprep.subr.mxu0 %v715
    %1239 = vmatpush1.msra.mxu0 %v714
    %1240 = vmatprep.subr.mxu0 %v723
    %1241 = vmatpush1.msra.mxu0 %v722
    %1242 = vmatprep.subr.mxu0 %v731
    %1243 = vmatpush1.msra.mxu0 %v730
    %1244 = vmatprep.subr.mxu0 %v739
    %1245 = vmatpush1.msra.mxu0 %v738
    %1246 = vmatprep.subr.mxu0 %v747
    %1247 = vmatpush1.msra.mxu0 %v746
    %1248 = vmatprep.subr.mxu0 %v755
    %1249 = vmatpush1.msra.mxu0 %v754
    %1250 = vmatprep.subr.mxu0 %v763
    %1251 = vmatpush1.msra.mxu0 %v762
    %1252 = vmatprep.subr.mxu0 %v771
    %1253 = vmatpush1.msra.mxu0 %v770
    %1254 = vmatprep.subr.mxu0 %v779
    %1255 = vmatpush1.msra.mxu0 %v778
    %1256 = vmatprep.subr.mxu0 %v787
    %1257 = vmatpush1.msra.mxu0 %v786
    %1258 = vmatprep.subr.mxu0 %v795
    %1259 = vmatpush1.msra.mxu0 %v794
    %1260 = vmatprep.subr.mxu0 %v803
    %1261 = vmatpush1.msra.mxu0 %v802
    %1262 = vmatprep.subr.mxu0 %v811
    %1263 = vmatpush1.msra.mxu0 %v810
    %1264 = vmatprep.subr.mxu0 %v819
    %1265 = vmatpush1.msra.mxu0 %v818
    %1266 = vmatprep.subr.mxu0 %v827
    %1267 = vmatpush1.msra.mxu0 %v826
    %1268 = vmatprep.subr.mxu0 %v835
    %1269 = vmatpush1.msra.mxu0 %v834
    %1270 = vmatprep.subr.mxu0 %v843
    %1271 = vmatpush1.msra.mxu0 %v842
    %1272 = vmatprep.mubr.f32.mxu0 %v1197
    %1273 = vmatmul.mubr.f32.gmra.mrb[0].mxu0 %v1196
    %v1274 = vpop.f32.mrb[0].mxu0
    %v1275 = vadd.f32 0.0, %v1274
    %v1276 = vpop.f32.mrb[0].mxu0
    %v1277 = vadd.f32 0.0, %v1276
    %1278 = vdwg.mxu0
    %1279 = vmatprep.subr.mxu0 %v597
    %1280 = vmatpush1.msra.mxu0 %v596
    %1281 = vmatprep.subr.mxu0 %v605
    %1282 = vmatpush1.msra.mxu0 %v604
    %1283 = vmatprep.subr.mxu0 %v613
    %1284 = vmatpush1.msra.mxu0 %v612
    %1285 = vmatprep.subr.mxu0 %v621
    %1286 = vmatpush1.msra.mxu0 %v620
    %1287 = vmatprep.subr.mxu0 %v629
    %1288 = vmatpush1.msra.mxu0 %v628
    %1289 = vmatprep.subr.mxu0 %v637
    %1290 = vmatpush1.msra.mxu0 %v636
    %1291 = vmatprep.subr.mxu0 %v645
    %1292 = vmatpush1.msra.mxu0 %v644
    %1293 = vmatprep.subr.mxu0 %v653
    %1294 = vmatpush1.msra.mxu0 %v652
    %1295 = vmatprep.subr.mxu0 %v661
    %1296 = vmatpush1.msra.mxu0 %v660
    %1297 = vmatprep.subr.mxu0 %v669
    %1298 = vmatpush1.msra.mxu0 %v668
    %1299 = vmatprep.subr.mxu0 %v677
    %1300 = vmatpush1.msra.mxu0 %v676
    %1301 = vmatprep.subr.mxu0 %v685
    %1302 = vmatpush1.msra.mxu0 %v684
    %1303 = vmatprep.subr.mxu0 %v693
    %1304 = vmatpush1.msra.mxu0 %v692
    %1305 = vmatprep.subr.mxu0 %v701
    %1306 = vmatpush1.msra.mxu0 %v700
    %1307 = vmatprep.subr.mxu0 %v709
    %1308 = vmatpush1.msra.mxu0 %v708
    %1309 = vmatprep.subr.mxu0 %v717
    %1310 = vmatpush1.msra.mxu0 %v716
    %1311 = vmatprep.subr.mxu0 %v725
    %1312 = vmatpush1.msra.mxu0 %v724
    %1313 = vmatprep.subr.mxu0 %v733
    %1314 = vmatpush1.msra.mxu0 %v732
    %1315 = vmatprep.subr.mxu0 %v741
    %1316 = vmatpush1.msra.mxu0 %v740
    %1317 = vmatprep.subr.mxu0 %v749
    %1318 = vmatpush1.msra.mxu0 %v748
    %1319 = vmatprep.subr.mxu0 %v757
    %1320 = vmatpush1.msra.mxu0 %v756
    %1321 = vmatprep.subr.mxu0 %v765
    %1322 = vmatpush1.msra.mxu0 %v764
    %1323 = vmatprep.subr.mxu0 %v773
    %1324 = vmatpush1.msra.mxu0 %v772
    %1325 = vmatprep.subr.mxu0 %v781
    %1326 = vmatpush1.msra.mxu0 %v780
    %1327 = vmatprep.subr.mxu0 %v789
    %1328 = vmatpush1.msra.mxu0 %v788
    %1329 = vmatprep.subr.mxu0 %v797
    %1330 = vmatpush1.msra.mxu0 %v796
    %1331 = vmatprep.subr.mxu0 %v805
    %1332 = vmatpush1.msra.mxu0 %v804
    %1333 = vmatprep.subr.mxu0 %v813
    %1334 = vmatpush1.msra.mxu0 %v812
    %1335 = vmatprep.subr.mxu0 %v821
    %1336 = vmatpush1.msra.mxu0 %v820
    %1337 = vmatprep.subr.mxu0 %v829
    %1338 = vmatpush1.msra.mxu0 %v828
    %1339 = vmatprep.subr.mxu0 %v837
    %1340 = vmatpush1.msra.mxu0 %v836
    %1341 = vmatprep.subr.mxu0 %v845
    %1342 = vmatpush1.msra.mxu0 %v844
    %1343 = vmatprep.mubr.f32.mxu0 %v1197
    %1344 = vmatmul.mubr.f32.gmra.mrb[0].mxu0 %v1196
    %v1345 = vpop.f32.mrb[0].mxu0
    %v1346 = vadd.f32 0.0, %v1345
    %v1347 = vpop.f32.mrb[0].mxu0
    %v1348 = vadd.f32 0.0, %v1347
    %1349 = vdwg.mxu0
    %1350 = vmatprep.subr.mxu0 %v599
    %1351 = vmatpush1.msra.mxu0 %v598
    %1352 = vmatprep.subr.mxu0 %v607
    %1353 = vmatpush1.msra.mxu0 %v606
    %1354 = vmatprep.subr.mxu0 %v615
    %1355 = vmatpush1.msra.mxu0 %v614
    %1356 = vmatprep.subr.mxu0 %v623
    %1357 = vmatpush1.msra.mxu0 %v622
    %1358 = vmatprep.subr.mxu0 %v631
    %1359 = vmatpush1.msra.mxu0 %v630
    %1360 = vmatprep.subr.mxu0 %v639
    %1361 = vmatpush1.msra.mxu0 %v638
    %1362 = vmatprep.subr.mxu0 %v647
    %1363 = vmatpush1.msra.mxu0 %v646
    %1364 = vmatprep.subr.mxu0 %v655
    %1365 = vmatpush1.msra.mxu0 %v654
    %1366 = vmatprep.subr.mxu0 %v663
    %1367 = vmatpush1.msra.mxu0 %v662
    %1368 = vmatprep.subr.mxu0 %v671
    %1369 = vmatpush1.msra.mxu0 %v670
    %1370 = vmatprep.subr.mxu0 %v679
    %1371 = vmatpush1.msra.mxu0 %v678
    %1372 = vmatprep.subr.mxu0 %v687
    %1373 = vmatpush1.msra.mxu0 %v686
    %1374 = vmatprep.subr.mxu0 %v695
    %1375 = vmatpush1.msra.mxu0 %v694
    %1376 = vmatprep.subr.mxu0 %v703
    %1377 = vmatpush1.msra.mxu0 %v702
    %1378 = vmatprep.subr.mxu0 %v711
    %1379 = vmatpush1.msra.mxu0 %v710
    %1380 = vmatprep.subr.mxu0 %v719
    %1381 = vmatpush1.msra.mxu0 %v718
    %1382 = vmatprep.subr.mxu0 %v727
    %1383 = vmatpush1.msra.mxu0 %v726
    %1384 = vmatprep.subr.mxu0 %v735
    %1385 = vmatpush1.msra.mxu0 %v734
    %1386 = vmatprep.subr.mxu0 %v743
    %1387 = vmatpush1.msra.mxu0 %v742
    %1388 = vmatprep.subr.mxu0 %v751
    %1389 = vmatpush1.msra.mxu0 %v750
    %1390 = vmatprep.subr.mxu0 %v759
    %1391 = vmatpush1.msra.mxu0 %v758
    %1392 = vmatprep.subr.mxu0 %v767
    %1393 = vmatpush1.msra.mxu0 %v766
    %1394 = vmatprep.subr.mxu0 %v775
    %1395 = vmatpush1.msra.mxu0 %v774
    %1396 = vmatprep.subr.mxu0 %v783
    %1397 = vmatpush1.msra.mxu0 %v782
    %1398 = vmatprep.subr.mxu0 %v791
    %1399 = vmatpush1.msra.mxu0 %v790
    %1400 = vmatprep.subr.mxu0 %v799
    %1401 = vmatpush1.msra.mxu0 %v798
    %1402 = vmatprep.subr.mxu0 %v807
    %1403 = vmatpush1.msra.mxu0 %v806
    %1404 = vmatprep.subr.mxu0 %v815
    %1405 = vmatpush1.msra.mxu0 %v814
    %1406 = vmatprep.subr.mxu0 %v823
    %1407 = vmatpush1.msra.mxu0 %v822
    %1408 = vmatprep.subr.mxu0 %v831
    %1409 = vmatpush1.msra.mxu0 %v830
    %1410 = vmatprep.subr.mxu0 %v839
    %1411 = vmatpush1.msra.mxu0 %v838
    %1412 = vmatprep.subr.mxu0 %v847
    %1413 = vmatpush1.msra.mxu0 %v846
    %1414 = vmatprep.mubr.f32.mxu0 %v1197
    %1415 = vmatmul.mubr.f32.gmra.mrb[0].mxu0 %v1196
    %v1416 = vpop.f32.mrb[0].mxu0
    %v1417 = vadd.f32 0.0, %v1416
    %v1418 = vpop.f32.mrb[0].mxu0
    %v1419 = vadd.f32 0.0, %v1418
    %1420 = vdwg.mxu0
    %1421 = vmatprep.subr.mxu0 %v601
    %1422 = vmatpush1.msra.mxu0 %v600
    %1423 = vmatprep.subr.mxu0 %v609
    %1424 = vmatpush1.msra.mxu0 %v608
    %1425 = vmatprep.subr.mxu0 %v617
    %1426 = vmatpush1.msra.mxu0 %v616
    %1427 = vmatprep.subr.mxu0 %v625
    %1428 = vmatpush1.msra.mxu0 %v624
    %1429 = vmatprep.subr.mxu0 %v633
    %1430 = vmatpush1.msra.mxu0 %v632
    %1431 = vmatprep.subr.mxu0 %v641
    %1432 = vmatpush1.msra.mxu0 %v640
    %1433 = vmatprep.subr.mxu0 %v649
    %1434 = vmatpush1.msra.mxu0 %v648
    %1435 = vmatprep.subr.mxu0 %v657
    %1436 = vmatpush1.msra.mxu0 %v656
    %1437 = vmatprep.subr.mxu0 %v665
    %1438 = vmatpush1.msra.mxu0 %v664
    %1439 = vmatprep.subr.mxu0 %v673
    %1440 = vmatpush1.msra.mxu0 %v672
    %1441 = vmatprep.subr.mxu0 %v681
    %1442 = vmatpush1.msra.mxu0 %v680
    %1443 = vmatprep.subr.mxu0 %v689
    %1444 = vmatpush1.msra.mxu0 %v688
    %1445 = vmatprep.subr.mxu0 %v697
    %1446 = vmatpush1.msra.mxu0 %v696
    %1447 = vmatprep.subr.mxu0 %v705
    %1448 = vmatpush1.msra.mxu0 %v704
    %1449 = vmatprep.subr.mxu0 %v713
    %1450 = vmatpush1.msra.mxu0 %v712
    %1451 = vmatprep.subr.mxu0 %v721
    %1452 = vmatpush1.msra.mxu0 %v720
    %1453 = vmatprep.subr.mxu0 %v729
    %1454 = vmatpush1.msra.mxu0 %v728
    %1455 = vmatprep.subr.mxu0 %v737
    %1456 = vmatpush1.msra.mxu0 %v736
    %1457 = vmatprep.subr.mxu0 %v745
    %1458 = vmatpush1.msra.mxu0 %v744
    %1459 = vmatprep.subr.mxu0 %v753
    %1460 = vmatpush1.msra.mxu0 %v752
    %1461 = vmatprep.subr.mxu0 %v761
    %1462 = vmatpush1.msra.mxu0 %v760
    %1463 = vmatprep.subr.mxu0 %v769
    %1464 = vmatpush1.msra.mxu0 %v768
    %1465 = vmatprep.subr.mxu0 %v777
    %1466 = vmatpush1.msra.mxu0 %v776
    %1467 = vmatprep.subr.mxu0 %v785
    %1468 = vmatpush1.msra.mxu0 %v784
    %1469 = vmatprep.subr.mxu0 %v793
    %1470 = vmatpush1.msra.mxu0 %v792
    %1471 = vmatprep.subr.mxu0 %v801
    %1472 = vmatpush1.msra.mxu0 %v800
    %1473 = vmatprep.subr.mxu0 %v809
    %1474 = vmatpush1.msra.mxu0 %v808
    %1475 = vmatprep.subr.mxu0 %v817
    %1476 = vmatpush1.msra.mxu0 %v816
    %1477 = vmatprep.subr.mxu0 %v825
    %1478 = vmatpush1.msra.mxu0 %v824
    %1479 = vmatprep.subr.mxu0 %v833
    %1480 = vmatpush1.msra.mxu0 %v832
    %1481 = vmatprep.subr.mxu0 %v841
    %1482 = vmatpush1.msra.mxu0 %v840
    %1483 = vmatprep.subr.mxu0 %v849
    %1484 = vmatpush1.msra.mxu0 %v848
    %1485 = vmatprep.mubr.f32.mxu0 %v1197
    %1486 = vmatmul.mubr.f32.gmra.mrb[0].mxu0 %v1196
    %v1487 = vpop.f32.mrb[0].mxu0
    %v1488 = vadd.f32 0.0, %v1487
    %v1489 = vpop.f32.mrb[0].mxu0
    %v1490 = vadd.f32 0.0, %v1489
    %1491 = vdwg.mxu0
    %v1500 = vrot.slane %v1275, 6
    %v1501 = vrot.slane %v1277, 6
    %v1502 = vrot.slane %v1346, 6
    %v1503 = vrot.slane %v1348, 6
    %v1504 = vrot.slane %v1417, 6
    %v1505 = vrot.slane %v1419, 6
    %v1506 = vrot.slane %v1488, 6
    %v1507 = vrot.slane %v1490, 6
    %v1516 = vadd.f32 %v1200, %v1500
    %v1517 = vadd.f32 %v1201, %v1501
    %v1518 = vadd.f32 %v1202, %v1502
    %v1519 = vadd.f32 %v1203, %v1503
    %v1520 = vadd.f32 %v1204, %v1504
    %v1521 = vadd.f32 %v1205, %v1505
    %v1522 = vadd.f32 %v1206, %v1506
    %v1523 = vadd.f32 %v1207, %v1507
    %v1524 = vxor.u32 %v1516, 2147483648
    %v1525 = vxor.u32 %v1517, 2147483648
    %v1526 = vxor.u32 %v1518, 2147483648
    %v1527 = vxor.u32 %v1519, 2147483648
    %v1528 = vxor.u32 %v1520, 2147483648
    %v1529 = vxor.u32 %v1521, 2147483648
    %v1530 = vmul.f32 %v1524, 1.442695
    %v1531 = vpow.pop %v1530
    %v1532 = vmul.f32 %v1525, 1.442695
    %v1533 = vpow.pop %v1532
    %v1534 = vmul.f32 %v1526, 1.442695
    %v1535 = vpow.pop %v1534
    %v1536 = vmul.f32 %v1527, 1.442695
    %v1537 = vpow.pop %v1536
    %v1538 = vmul.f32 %v1528, 1.442695
    %v1539 = vpow.pop %v1538
    %v1540 = vmul.f32 %v1529, 1.442695
    %v1541 = vpow.pop %v1540
    %v1542 = vadd.f32 %v1531, 1.0
    %v1543 = vadd.f32 %v1533, 1.0
    %v1544 = vadd.f32 %v1535, 1.0
    %v1545 = vadd.f32 %v1537, 1.0
    %v1546 = vadd.f32 %v1539, 1.0
    %v1547 = vadd.f32 %v1541, 1.0
    %v1548 = vrcp.pop %v1542
    %v1549 = vmul.f32 1.0, %v1548
    %v1550 = vrcp.pop %v1543
    %v1551 = vmul.f32 1.0, %v1550
    %v1552 = vrcp.pop %v1544
    %v1553 = vmul.f32 1.0, %v1552
    %v1554 = vrcp.pop %v1545
    %v1555 = vmul.f32 1.0, %v1554
    %v1556 = vrcp.pop %v1546
    %v1557 = vmul.f32 1.0, %v1556
    %v1558 = vrcp.pop %v1547
    %v1559 = vmul.f32 1.0, %v1558
    %v1560 = vtanh.pop %v1522
    %v1561 = vtanh.pop %v1523
    %v1564 = vrot.slane %v1192, 6
    %v1565 = vrot.slane %v1193, 6
    %v1568 = vmul.f32 %v1553, %v1564
    %v1569 = vmul.f32 %v1555, %v1565
    %v1570 = vmul.f32 %v1549, %v1560
    %v1571 = vmul.f32 %v1551, %v1561
    %v1572 = vadd.f32 %v1568, %v1570
    %v1573 = vadd.f32 %v1569, %v1571
    %v1574 = vtanh.pop %v1572
    %v1575 = vtanh.pop %v1573
    %v1576 = vmul.f32 %v1557, %v1574
    %v1577 = vmul.f32 %v1559, %v1575
    %1578 = vst [vmem:[#allocation3] sm:$0xc] %v1576
    %1579 = vst [vmem:[#allocation3 + $0x8] sm:$0xc] %v1577
    %v1580 = vld [vmem:[#allocation2] sm:$0x30]
    %v1581 = vld [vmem:[#allocation2 + $0x8] sm:$0x30]
    %v1582 = vld [vmem:[#allocation2 + $0x10] sm:$0x30]
    %v1583 = vld [vmem:[#allocation2 + $0x18] sm:$0x30]
    %v1584 = vld [vmem:[#allocation2 + $0x20] sm:$0x30]
    %v1585 = vld [vmem:[#allocation2 + $0x28] sm:$0x30]
    %v1586 = vld [vmem:[#allocation2 + $0x30] sm:$0x30]
    %v1587 = vld [vmem:[#allocation2 + $0x38] sm:$0x30]
    %v1590 = vrot.slane %v1576, 2
    %v1591 = vrot.slane %v1577, 2
    %1594 = vmatprep.subr.mxu0 %v595
    %1595 = vmatpush1.msra.mxu0 %v594
    %1596 = vmatprep.subr.mxu0 %v603
    %1597 = vmatpush1.msra.mxu0 %v602
    %1598 = vmatprep.subr.mxu0 %v611
    %1599 = vmatpush1.msra.mxu0 %v610
    %1600 = vmatprep.subr.mxu0 %v619
    %1601 = vmatpush1.msra.mxu0 %v618
    %1602 = vmatprep.subr.mxu0 %v627
    %1603 = vmatpush1.msra.mxu0 %v626
    %1604 = vmatprep.subr.mxu0 %v635
    %1605 = vmatpush1.msra.mxu0 %v634
    %1606 = vmatprep.subr.mxu0 %v643
    %1607 = vmatpush1.msra.mxu0 %v642
    %1608 = vmatprep.subr.mxu0 %v651
    %1609 = vmatpush1.msra.mxu0 %v650
    %1610 = vmatprep.subr.mxu0 %v659
    %1611 = vmatpush1.msra.mxu0 %v658
    %1612 = vmatprep.subr.mxu0 %v667
    %1613 = vmatpush1.msra.mxu0 %v666
    %1614 = vmatprep.subr.mxu0 %v675
    %1615 = vmatpush1.msra.mxu0 %v674
    %1616 = vmatprep.subr.mxu0 %v683
    %1617 = vmatpush1.msra.mxu0 %v682
    %1618 = vmatprep.subr.mxu0 %v691
    %1619 = vmatpush1.msra.mxu0 %v690
    %1620 = vmatprep.subr.mxu0 %v699
    %1621 = vmatpush1.msra.mxu0 %v698
    %1622 = vmatprep.subr.mxu0 %v707
    %1623 = vmatpush1.msra.mxu0 %v706
    %1624 = vmatprep.subr.mxu0 %v715
    %1625 = vmatpush1.msra.mxu0 %v714
    %1626 = vmatprep.subr.mxu0 %v723
    %1627 = vmatpush1.msra.mxu0 %v722
    %1628 = vmatprep.subr.mxu0 %v731
    %1629 = vmatpush1.msra.mxu0 %v730
    %1630 = vmatprep.subr.mxu0 %v739
    %1631 = vmatpush1.msra.mxu0 %v738
    %1632 = vmatprep.subr.mxu0 %v747
    %1633 = vmatpush1.msra.mxu0 %v746
    %1634 = vmatprep.subr.mxu0 %v755
    %1635 = vmatpush1.msra.mxu0 %v754
    %1636 = vmatprep.subr.mxu0 %v763
    %1637 = vmatpush1.msra.mxu0 %v762
    %1638 = vmatprep.subr.mxu0 %v771
    %1639 = vmatpush1.msra.mxu0 %v770
    %1640 = vmatprep.subr.mxu0 %v779
    %1641 = vmatpush1.msra.mxu0 %v778
    %1642 = vmatprep.subr.mxu0 %v787
    %1643 = vmatpush1.msra.mxu0 %v786
    %1644 = vmatprep.subr.mxu0 %v795
    %1645 = vmatpush1.msra.mxu0 %v794
    %1646 = vmatprep.subr.mxu0 %v803
    %1647 = vmatpush1.msra.mxu0 %v802
    %1648 = vmatprep.subr.mxu0 %v811
    %1649 = vmatpush1.msra.mxu0 %v810
    %1650 = vmatprep.subr.mxu0 %v819
    %1651 = vmatpush1.msra.mxu0 %v818
    %1652 = vmatprep.subr.mxu0 %v827
    %1653 = vmatpush1.msra.mxu0 %v826
    %1654 = vmatprep.subr.mxu0 %v835
    %1655 = vmatpush1.msra.mxu0 %v834
    %1656 = vmatprep.subr.mxu0 %v843
    %1657 = vmatpush1.msra.mxu0 %v842
    %1658 = vmatprep.mubr.f32.mxu0 %v1591
    %1659 = vmatmul.mubr.f32.gmra.mrb[0].mxu0 %v1590
    %v1660 = vpop.f32.mrb[0].mxu0
    %v1661 = vadd.f32 0.0, %v1660
    %v1662 = vpop.f32.mrb[0].mxu0
    %v1663 = vadd.f32 0.0, %v1662
    %1664 = vdwg.mxu0
    %1665 = vmatprep.subr.mxu0 %v597
    %1666 = vmatpush1.msra.mxu0 %v596
    %1667 = vmatprep.subr.mxu0 %v605
    %1668 = vmatpush1.msra.mxu0 %v604
    %1669 = vmatprep.subr.mxu0 %v613
    %1670 = vmatpush1.msra.mxu0 %v612
    %1671 = vmatprep.subr.mxu0 %v621
    %1672 = vmatpush1.msra.mxu0 %v620
    %1673 = vmatprep.subr.mxu0 %v629
    %1674 = vmatpush1.msra.mxu0 %v628
    %1675 = vmatprep.subr.mxu0 %v637
    %1676 = vmatpush1.msra.mxu0 %v636
    %1677 = vmatprep.subr.mxu0 %v645
    %1678 = vmatpush1.msra.mxu0 %v644
    %1679 = vmatprep.subr.mxu0 %v653
    %1680 = vmatpush1.msra.mxu0 %v652
    %1681 = vmatprep.subr.mxu0 %v661
    %1682 = vmatpush1.msra.mxu0 %v660
    %1683 = vmatprep.subr.mxu0 %v669
    %1684 = vmatpush1.msra.mxu0 %v668
    %1685 = vmatprep.subr.mxu0 %v677
    %1686 = vmatpush1.msra.mxu0 %v676
    %1687 = vmatprep.subr.mxu0 %v685
    %1688 = vmatpush1.msra.mxu0 %v684
    %1689 = vmatprep.subr.mxu0 %v693
    %1690 = vmatpush1.msra.mxu0 %v692
    %1691 = vmatprep.subr.mxu0 %v701
    %1692 = vmatpush1.msra.mxu0 %v700
    %1693 = vmatprep.subr.mxu0 %v709
    %1694 = vmatpush1.msra.mxu0 %v708
    %1695 = vmatprep.subr.mxu0 %v717
    %1696 = vmatpush1.msra.mxu0 %v716
    %1697 = vmatprep.subr.mxu0 %v725
    %1698 = vmatpush1.msra.mxu0 %v724
    %1699 = vmatprep.subr.mxu0 %v733
    %1700 = vmatpush1.msra.mxu0 %v732
    %1701 = vmatprep.subr.mxu0 %v741
    %1702 = vmatpush1.msra.mxu0 %v740
    %1703 = vmatprep.subr.mxu0 %v749
    %1704 = vmatpush1.msra.mxu0 %v748
    %1705 = vmatprep.subr.mxu0 %v757
    %1706 = vmatpush1.msra.mxu0 %v756
    %1707 = vmatprep.subr.mxu0 %v765
    %1708 = vmatpush1.msra.mxu0 %v764
    %1709 = vmatprep.subr.mxu0 %v773
    %1710 = vmatpush1.msra.mxu0 %v772
    %1711 = vmatprep.subr.mxu0 %v781
    %1712 = vmatpush1.msra.mxu0 %v780
    %1713 = vmatprep.subr.mxu0 %v789
    %1714 = vmatpush1.msra.mxu0 %v788
    %1715 = vmatprep.subr.mxu0 %v797
    %1716 = vmatpush1.msra.mxu0 %v796
    %1717 = vmatprep.subr.mxu0 %v805
    %1718 = vmatpush1.msra.mxu0 %v804
    %1719 = vmatprep.subr.mxu0 %v813
    %1720 = vmatpush1.msra.mxu0 %v812
    %1721 = vmatprep.subr.mxu0 %v821
    %1722 = vmatpush1.msra.mxu0 %v820
    %1723 = vmatprep.subr.mxu0 %v829
    %1724 = vmatpush1.msra.mxu0 %v828
    %1725 = vmatprep.subr.mxu0 %v837
    %1726 = vmatpush1.msra.mxu0 %v836
    %1727 = vmatprep.subr.mxu0 %v845
    %1728 = vmatpush1.msra.mxu0 %v844
    %1729 = vmatprep.mubr.f32.mxu0 %v1591
    %1730 = vmatmul.mubr.f32.gmra.mrb[0].mxu0 %v1590
    %v1731 = vpop.f32.mrb[0].mxu0
    %v1732 = vadd.f32 0.0, %v1731
    %v1733 = vpop.f32.mrb[0].mxu0
    %v1734 = vadd.f32 0.0, %v1733
    %1735 = vdwg.mxu0
    %1736 = vmatprep.subr.mxu0 %v599
    %1737 = vmatpush1.msra.mxu0 %v598
    %1738 = vmatprep.subr.mxu0 %v607
    %1739 = vmatpush1.msra.mxu0 %v606
    %1740 = vmatprep.subr.mxu0 %v615
    %1741 = vmatpush1.msra.mxu0 %v614
    %1742 = vmatprep.subr.mxu0 %v623
    %1743 = vmatpush1.msra.mxu0 %v622
    %1744 = vmatprep.subr.mxu0 %v631
    %1745 = vmatpush1.msra.mxu0 %v630
    %1746 = vmatprep.subr.mxu0 %v639
    %1747 = vmatpush1.msra.mxu0 %v638
    %1748 = vmatprep.subr.mxu0 %v647
    %1749 = vmatpush1.msra.mxu0 %v646
    %1750 = vmatprep.subr.mxu0 %v655
    %1751 = vmatpush1.msra.mxu0 %v654
    %1752 = vmatprep.subr.mxu0 %v663
    %1753 = vmatpush1.msra.mxu0 %v662
    %1754 = vmatprep.subr.mxu0 %v671
    %1755 = vmatpush1.msra.mxu0 %v670
    %1756 = vmatprep.subr.mxu0 %v679
    %1757 = vmatpush1.msra.mxu0 %v678
    %1758 = vmatprep.subr.mxu0 %v687
    %1759 = vmatpush1.msra.mxu0 %v686
    %1760 = vmatprep.subr.mxu0 %v695
    %1761 = vmatpush1.msra.mxu0 %v694
    %1762 = vmatprep.subr.mxu0 %v703
    %1763 = vmatpush1.msra.mxu0 %v702
    %1764 = vmatprep.subr.mxu0 %v711
    %1765 = vmatpush1.msra.mxu0 %v710
    %1766 = vmatprep.subr.mxu0 %v719
    %1767 = vmatpush1.msra.mxu0 %v718
    %1768 = vmatprep.subr.mxu0 %v727
    %1769 = vmatpush1.msra.mxu0 %v726
    %1770 = vmatprep.subr.mxu0 %v735
    %1771 = vmatpush1.msra.mxu0 %v734
    %1772 = vmatprep.subr.mxu0 %v743
    %1773 = vmatpush1.msra.mxu0 %v742
    %1774 = vmatprep.subr.mxu0 %v751
    %1775 = vmatpush1.msra.mxu0 %v750
    %1776 = vmatprep.subr.mxu0 %v759
    %1777 = vmatpush1.msra.mxu0 %v758
    %1778 = vmatprep.subr.mxu0 %v767
    %1779 = vmatpush1.msra.mxu0 %v766
    %1780 = vmatprep.subr.mxu0 %v775
    %1781 = vmatpush1.msra.mxu0 %v774
    %1782 = vmatprep.subr.mxu0 %v783
    %1783 = vmatpush1.msra.mxu0 %v782
    %1784 = vmatprep.subr.mxu0 %v791
    %1785 = vmatpush1.msra.mxu0 %v790
    %1786 = vmatprep.subr.mxu0 %v799
    %1787 = vmatpush1.msra.mxu0 %v798
    %1788 = vmatprep.subr.mxu0 %v807
    %1789 = vmatpush1.msra.mxu0 %v806
    %1790 = vmatprep.subr.mxu0 %v815
    %1791 = vmatpush1.msra.mxu0 %v814
    %1792 = vmatprep.subr.mxu0 %v823
    %1793 = vmatpush1.msra.mxu0 %v822
    %1794 = vmatprep.subr.mxu0 %v831
    %1795 = vmatpush1.msra.mxu0 %v830
    %1796 = vmatprep.subr.mxu0 %v839
    %1797 = vmatpush1.msra.mxu0 %v838
    %1798 = vmatprep.subr.mxu0 %v847
    %1799 = vmatpush1.msra.mxu0 %v846
    %1800 = vmatprep.mubr.f32.mxu0 %v1591
    %1801 = vmatmul.mubr.f32.gmra.mrb[0].mxu0 %v1590
    %v1802 = vpop.f32.mrb[0].mxu0
    %v1803 = vadd.f32 0.0, %v1802
    %v1804 = vpop.f32.mrb[0].mxu0
    %v1805 = vadd.f32 0.0, %v1804
    %1806 = vdwg.mxu0
    %1807 = vmatprep.subr.mxu0 %v601
    %1808 = vmatpush1.msra.mxu0 %v600
    %1809 = vmatprep.subr.mxu0 %v609
    %1810 = vmatpush1.msra.mxu0 %v608
    %1811 = vmatprep.subr.mxu0 %v617
    %1812 = vmatpush1.msra.mxu0 %v616
    %1813 = vmatprep.subr.mxu0 %v625
    %1814 = vmatpush1.msra.mxu0 %v624
    %1815 = vmatprep.subr.mxu0 %v633
    %1816 = vmatpush1.msra.mxu0 %v632
    %1817 = vmatprep.subr.mxu0 %v641
    %1818 = vmatpush1.msra.mxu0 %v640
    %1819 = vmatprep.subr.mxu0 %v649
    %1820 = vmatpush1.msra.mxu0 %v648
    %1821 = vmatprep.subr.mxu0 %v657
    %1822 = vmatpush1.msra.mxu0 %v656
    %1823 = vmatprep.subr.mxu0 %v665
    %1824 = vmatpush1.msra.mxu0 %v664
    %1825 = vmatprep.subr.mxu0 %v673
    %1826 = vmatpush1.msra.mxu0 %v672
    %1827 = vmatprep.subr.mxu0 %v681
    %1828 = vmatpush1.msra.mxu0 %v680
    %1829 = vmatprep.subr.mxu0 %v689
    %1830 = vmatpush1.msra.mxu0 %v688
    %1831 = vmatprep.subr.mxu0 %v697
    %1832 = vmatpush1.msra.mxu0 %v696
    %1833 = vmatprep.subr.mxu0 %v705
    %1834 = vmatpush1.msra.mxu0 %v704
    %1835 = vmatprep.subr.mxu0 %v713
    %1836 = vmatpush1.msra.mxu0 %v712
    %1837 = vmatprep.subr.mxu0 %v721
    %1838 = vmatpush1.msra.mxu0 %v720
    %1839 = vmatprep.subr.mxu0 %v729
    %1840 = vmatpush1.msra.mxu0 %v728
    %1841 = vmatprep.subr.mxu0 %v737
    %1842 = vmatpush1.msra.mxu0 %v736
    %1843 = vmatprep.subr.mxu0 %v745
    %1844 = vmatpush1.msra.mxu0 %v744
    %1845 = vmatprep.subr.mxu0 %v753
    %1846 = vmatpush1.msra.mxu0 %v752
    %1847 = vmatprep.subr.mxu0 %v761
    %1848 = vmatpush1.msra.mxu0 %v760
    %1849 = vmatprep.subr.mxu0 %v769
    %1850 = vmatpush1.msra.mxu0 %v768
    %1851 = vmatprep.subr.mxu0 %v777
    %1852 = vmatpush1.msra.mxu0 %v776
    %1853 = vmatprep.subr.mxu0 %v785
    %1854 = vmatpush1.msra.mxu0 %v784
    %1855 = vmatprep.subr.mxu0 %v793
    %1856 = vmatpush1.msra.mxu0 %v792
    %1857 = vmatprep.subr.mxu0 %v801
    %1858 = vmatpush1.msra.mxu0 %v800
    %1859 = vmatprep.subr.mxu0 %v809
    %1860 = vmatpush1.msra.mxu0 %v808
    %1861 = vmatprep.subr.mxu0 %v817
    %1862 = vmatpush1.msra.mxu0 %v816
    %1863 = vmatprep.subr.mxu0 %v825
    %1864 = vmatpush1.msra.mxu0 %v824
    %1865 = vmatprep.subr.mxu0 %v833
    %1866 = vmatpush1.msra.mxu0 %v832
    %1867 = vmatprep.subr.mxu0 %v841
    %1868 = vmatpush1.msra.mxu0 %v840
    %1869 = vmatprep.subr.mxu0 %v849
    %1870 = vmatpush1.msra.mxu0 %v848
    %1871 = vmatprep.mubr.f32.mxu0 %v1591
    %1872 = vmatmul.mubr.f32.gmra.mrb[0].mxu0 %v1590
    %v1873 = vpop.f32.mrb[0].mxu0
    %v1874 = vadd.f32 0.0, %v1873
    %v1875 = vpop.f32.mrb[0].mxu0
    %v1876 = vadd.f32 0.0, %v1875
    %1877 = vdwg.mxu0
    %v1886 = vrot.slane %v1661, 4
    %v1887 = vrot.slane %v1663, 4
    %v1888 = vrot.slane %v1732, 4
    %v1889 = vrot.slane %v1734, 4
    %v1890 = vrot.slane %v1803, 4
    %v1891 = vrot.slane %v1805, 4
    %v1892 = vrot.slane %v1874, 4
    %v1893 = vrot.slane %v1876, 4
    %v1902 = vadd.f32 %v1580, %v1886
    %v1903 = vadd.f32 %v1581, %v1887
    %v1904 = vadd.f32 %v1582, %v1888
    %v1905 = vadd.f32 %v1583, %v1889
    %v1906 = vadd.f32 %v1584, %v1890
    %v1907 = vadd.f32 %v1585, %v1891
    %v1908 = vadd.f32 %v1586, %v1892
    %v1909 = vadd.f32 %v1587, %v1893
    %v1910 = vxor.u32 %v1902, 2147483648
    %v1911 = vxor.u32 %v1903, 2147483648
    %v1912 = vxor.u32 %v1904, 2147483648
    %v1913 = vxor.u32 %v1905, 2147483648
    %v1914 = vxor.u32 %v1906, 2147483648
    %v1915 = vxor.u32 %v1907, 2147483648
    %v1916 = vmul.f32 %v1910, 1.442695
    %v1917 = vpow.pop %v1916
    %v1918 = vmul.f32 %v1911, 1.442695
    %v1919 = vpow.pop %v1918
    %v1920 = vmul.f32 %v1912, 1.442695
    %v1921 = vpow.pop %v1920
    %v1922 = vmul.f32 %v1913, 1.442695
    %v1923 = vpow.pop %v1922
    %v1924 = vmul.f32 %v1914, 1.442695
    %v1925 = vpow.pop %v1924
    %v1926 = vmul.f32 %v1915, 1.442695
    %v1927 = vpow.pop %v1926
    %v1928 = vadd.f32 %v1917, 1.0
    %v1929 = vadd.f32 %v1919, 1.0
    %v1930 = vadd.f32 %v1921, 1.0
    %v1931 = vadd.f32 %v1923, 1.0
    %v1932 = vadd.f32 %v1925, 1.0
    %v1933 = vadd.f32 %v1927, 1.0
    %v1934 = vrcp.pop %v1928
    %v1935 = vmul.f32 1.0, %v1934
    %v1936 = vrcp.pop %v1929
    %v1937 = vmul.f32 1.0, %v1936
    %v1938 = vrcp.pop %v1930
    %v1939 = vmul.f32 1.0, %v1938
    %v1940 = vrcp.pop %v1931
    %v1941 = vmul.f32 1.0, %v1940
    %v1942 = vrcp.pop %v1932
    %v1943 = vmul.f32 1.0, %v1942
    %v1944 = vrcp.pop %v1933
    %v1945 = vmul.f32 1.0, %v1944
    %v1946 = vtanh.pop %v1908
    %v1947 = vtanh.pop %v1909
    %v1950 = vrot.slane %v1572, 6
    %v1951 = vrot.slane %v1573, 6
    %v1954 = vmul.f32 %v1939, %v1950
    %v1955 = vmul.f32 %v1941, %v1951
    %v1956 = vmul.f32 %v1935, %v1946
    %v1957 = vmul.f32 %v1937, %v1947
    %v1958 = vadd.f32 %v1954, %v1956
    %v1959 = vadd.f32 %v1955, %v1957
    %v1960 = vtanh.pop %v1958
    %v1961 = vtanh.pop %v1959
    %v1962 = vmul.f32 %v1943, %v1960
    %v1963 = vmul.f32 %v1945, %v1961
    %1964 = vst [vmem:[#allocation3] sm:$0x30] %v1962
    %1965 = vst [vmem:[#allocation3 + $0x8] sm:$0x30] %v1963
    %v1966 = vld [vmem:[#allocation2] sm:$0xc0]
    %v1967 = vld [vmem:[#allocation2 + $0x8] sm:$0xc0]
    %v1968 = vld [vmem:[#allocation2 + $0x10] sm:$0xc0]
    %v1969 = vld [vmem:[#allocation2 + $0x18] sm:$0xc0]
    %v1970 = vld [vmem:[#allocation2 + $0x20] sm:$0xc0]
    %v1971 = vld [vmem:[#allocation2 + $0x28] sm:$0xc0]
    %v1972 = vld [vmem:[#allocation2 + $0x30] sm:$0xc0]
    %v1973 = vld [vmem:[#allocation2 + $0x38] sm:$0xc0]
    %v1976 = vrot.slane %v1962, 4
    %v1977 = vrot.slane %v1963, 4
    %1980 = vmatprep.subr.mxu0 %v595
    %1981 = vmatpush1.msra.mxu0 %v594
    %1982 = vmatprep.subr.mxu0 %v603
    %1983 = vmatpush1.msra.mxu0 %v602
    %1984 = vmatprep.subr.mxu0 %v611
    %1985 = vmatpush1.msra.mxu0 %v610
    %1986 = vmatprep.subr.mxu0 %v619
    %1987 = vmatpush1.msra.mxu0 %v618
    %1988 = vmatprep.subr.mxu0 %v627
    %1989 = vmatpush1.msra.mxu0 %v626
    %1990 = vmatprep.subr.mxu0 %v635
    %1991 = vmatpush1.msra.mxu0 %v634
    %1992 = vmatprep.subr.mxu0 %v643
    %1993 = vmatpush1.msra.mxu0 %v642
    %1994 = vmatprep.subr.mxu0 %v651
    %1995 = vmatpush1.msra.mxu0 %v650
    %1996 = vmatprep.subr.mxu0 %v659
    %1997 = vmatpush1.msra.mxu0 %v658
    %1998 = vmatprep.subr.mxu0 %v667
    %1999 = vmatpush1.msra.mxu0 %v666
    %2000 = vmatprep.subr.mxu0 %v675
    %2001 = vmatpush1.msra.mxu0 %v674
    %2002 = vmatprep.subr.mxu0 %v683
    %2003 = vmatpush1.msra.mxu0 %v682
    %2004 = vmatprep.subr.mxu0 %v691
    %2005 = vmatpush1.msra.mxu0 %v690
    %2006 = vmatprep.subr.mxu0 %v699
    %2007 = vmatpush1.msra.mxu0 %v698
    %2008 = vmatprep.subr.mxu0 %v707
    %2009 = vmatpush1.msra.mxu0 %v706
    %2010 = vmatprep.subr.mxu0 %v715
    %2011 = vmatpush1.msra.mxu0 %v714
    %2012 = vmatprep.subr.mxu0 %v723
    %2013 = vmatpush1.msra.mxu0 %v722
    %2014 = vmatprep.subr.mxu0 %v731
    %2015 = vmatpush1.msra.mxu0 %v730
    %2016 = vmatprep.subr.mxu0 %v739
    %2017 = vmatpush1.msra.mxu0 %v738
    %2018 = vmatprep.subr.mxu0 %v747
    %2019 = vmatpush1.msra.mxu0 %v746
    %2020 = vmatprep.subr.mxu0 %v755
    %2021 = vmatpush1.msra.mxu0 %v754
    %2022 = vmatprep.subr.mxu0 %v763
    %2023 = vmatpush1.msra.mxu0 %v762
    %2024 = vmatprep.subr.mxu0 %v771
    %2025 = vmatpush1.msra.mxu0 %v770
    %2026 = vmatprep.subr.mxu0 %v779
    %2027 = vmatpush1.msra.mxu0 %v778
    %2028 = vmatprep.subr.mxu0 %v787
    %2029 = vmatpush1.msra.mxu0 %v786
    %2030 = vmatprep.subr.mxu0 %v795
    %2031 = vmatpush1.msra.mxu0 %v794
    %2032 = vmatprep.subr.mxu0 %v803
    %2033 = vmatpush1.msra.mxu0 %v802
    %2034 = vmatprep.subr.mxu0 %v811
    %2035 = vmatpush1.msra.mxu0 %v810
    %2036 = vmatprep.subr.mxu0 %v819
    %2037 = vmatpush1.msra.mxu0 %v818
    %2038 = vmatprep.subr.mxu0 %v827
    %2039 = vmatpush1.msra.mxu0 %v826
    %2040 = vmatprep.subr.mxu0 %v835
    %2041 = vmatpush1.msra.mxu0 %v834
    %2042 = vmatprep.subr.mxu0 %v843
    %2043 = vmatpush1.msra.mxu0 %v842
    %2044 = vmatprep.mubr.f32.mxu0 %v1977
    %2045 = vmatmul.mubr.f32.gmra.mrb[0].mxu0 %v1976
    %v2046 = vpop.f32.mrb[0].mxu0
    %v2047 = vadd.f32 0.0, %v2046
    %v2048 = vpop.f32.mrb[0].mxu0
    %v2049 = vadd.f32 0.0, %v2048
    %2050 = vdwg.mxu0
    %2051 = vmatprep.subr.mxu0 %v597
    %2052 = vmatpush1.msra.mxu0 %v596
    %2053 = vmatprep.subr.mxu0 %v605
    %2054 = vmatpush1.msra.mxu0 %v604
    %2055 = vmatprep.subr.mxu0 %v613
    %2056 = vmatpush1.msra.mxu0 %v612
    %2057 = vmatprep.subr.mxu0 %v621
    %2058 = vmatpush1.msra.mxu0 %v620
    %2059 = vmatprep.subr.mxu0 %v629
    %2060 = vmatpush1.msra.mxu0 %v628
    %2061 = vmatprep.subr.mxu0 %v637
    %2062 = vmatpush1.msra.mxu0 %v636
    %2063 = vmatprep.subr.mxu0 %v645
    %2064 = vmatpush1.msra.mxu0 %v644
    %2065 = vmatprep.subr.mxu0 %v653
    %2066 = vmatpush1.msra.mxu0 %v652
    %2067 = vmatprep.subr.mxu0 %v661
    %2068 = vmatpush1.msra.mxu0 %v660
    %2069 = vmatprep.subr.mxu0 %v669
    %2070 = vmatpush1.msra.mxu0 %v668
    %2071 = vmatprep.subr.mxu0 %v677
    %2072 = vmatpush1.msra.mxu0 %v676
    %2073 = vmatprep.subr.mxu0 %v685
    %2074 = vmatpush1.msra.mxu0 %v684
    %2075 = vmatprep.subr.mxu0 %v693
    %2076 = vmatpush1.msra.mxu0 %v692
    %2077 = vmatprep.subr.mxu0 %v701
    %2078 = vmatpush1.msra.mxu0 %v700
    %2079 = vmatprep.subr.mxu0 %v709
    %2080 = vmatpush1.msra.mxu0 %v708
    %2081 = vmatprep.subr.mxu0 %v717
    %2082 = vmatpush1.msra.mxu0 %v716
    %2083 = vmatprep.subr.mxu0 %v725
    %2084 = vmatpush1.msra.mxu0 %v724
    %2085 = vmatprep.subr.mxu0 %v733
    %2086 = vmatpush1.msra.mxu0 %v732
    %2087 = vmatprep.subr.mxu0 %v741
    %2088 = vmatpush1.msra.mxu0 %v740
    %2089 = vmatprep.subr.mxu0 %v749
    %2090 = vmatpush1.msra.mxu0 %v748
    %2091 = vmatprep.subr.mxu0 %v757
    %2092 = vmatpush1.msra.mxu0 %v756
    %2093 = vmatprep.subr.mxu0 %v765
    %2094 = vmatpush1.msra.mxu0 %v764
    %2095 = vmatprep.subr.mxu0 %v773
    %2096 = vmatpush1.msra.mxu0 %v772
    %2097 = vmatprep.subr.mxu0 %v781
    %2098 = vmatpush1.msra.mxu0 %v780
    %2099 = vmatprep.subr.mxu0 %v789
    %2100 = vmatpush1.msra.mxu0 %v788
    %2101 = vmatprep.subr.mxu0 %v797
    %2102 = vmatpush1.msra.mxu0 %v796
    %2103 = vmatprep.subr.mxu0 %v805
    %2104 = vmatpush1.msra.mxu0 %v804
    %2105 = vmatprep.subr.mxu0 %v813
    %2106 = vmatpush1.msra.mxu0 %v812
    %2107 = vmatprep.subr.mxu0 %v821
    %2108 = vmatpush1.msra.mxu0 %v820
    %2109 = vmatprep.subr.mxu0 %v829
    %2110 = vmatpush1.msra.mxu0 %v828
    %2111 = vmatprep.subr.mxu0 %v837
    %2112 = vmatpush1.msra.mxu0 %v836
    %2113 = vmatprep.subr.mxu0 %v845
    %2114 = vmatpush1.msra.mxu0 %v844
    %2115 = vmatprep.mubr.f32.mxu0 %v1977
    %2116 = vmatmul.mubr.f32.gmra.mrb[0].mxu0 %v1976
    %v2117 = vpop.f32.mrb[0].mxu0
    %v2118 = vadd.f32 0.0, %v2117
    %v2119 = vpop.f32.mrb[0].mxu0
    %v2120 = vadd.f32 0.0, %v2119
    %2121 = vdwg.mxu0
    %2122 = vmatprep.subr.mxu0 %v599
    %2123 = vmatpush1.msra.mxu0 %v598
    %2124 = vmatprep.subr.mxu0 %v607
    %2125 = vmatpush1.msra.mxu0 %v606
    %2126 = vmatprep.subr.mxu0 %v615
    %2127 = vmatpush1.msra.mxu0 %v614
    %2128 = vmatprep.subr.mxu0 %v623
    %2129 = vmatpush1.msra.mxu0 %v622
    %2130 = vmatprep.subr.mxu0 %v631
    %2131 = vmatpush1.msra.mxu0 %v630
    %2132 = vmatprep.subr.mxu0 %v639
    %2133 = vmatpush1.msra.mxu0 %v638
    %2134 = vmatprep.subr.mxu0 %v647
    %2135 = vmatpush1.msra.mxu0 %v646
    %2136 = vmatprep.subr.mxu0 %v655
    %2137 = vmatpush1.msra.mxu0 %v654
    %2138 = vmatprep.subr.mxu0 %v663
    %2139 = vmatpush1.msra.mxu0 %v662
    %2140 = vmatprep.subr.mxu0 %v671
    %2141 = vmatpush1.msra.mxu0 %v670
    %2142 = vmatprep.subr.mxu0 %v679
    %2143 = vmatpush1.msra.mxu0 %v678
    %2144 = vmatprep.subr.mxu0 %v687
    %2145 = vmatpush1.msra.mxu0 %v686
    %2146 = vmatprep.subr.mxu0 %v695
    %2147 = vmatpush1.msra.mxu0 %v694
    %2148 = vmatprep.subr.mxu0 %v703
    %2149 = vmatpush1.msra.mxu0 %v702
    %2150 = vmatprep.subr.mxu0 %v711
    %2151 = vmatpush1.msra.mxu0 %v710
    %2152 = vmatprep.subr.mxu0 %v719
    %2153 = vmatpush1.msra.mxu0 %v718
    %2154 = vmatprep.subr.mxu0 %v727
    %2155 = vmatpush1.msra.mxu0 %v726
    %2156 = vmatprep.subr.mxu0 %v735
    %2157 = vmatpush1.msra.mxu0 %v734
    %2158 = vmatprep.subr.mxu0 %v743
    %2159 = vmatpush1.msra.mxu0 %v742
    %2160 = vmatprep.subr.mxu0 %v751
    %2161 = vmatpush1.msra.mxu0 %v750
    %2162 = vmatprep.subr.mxu0 %v759
    %2163 = vmatpush1.msra.mxu0 %v758
    %2164 = vmatprep.subr.mxu0 %v767
    %2165 = vmatpush1.msra.mxu0 %v766
    %2166 = vmatprep.subr.mxu0 %v775
    %2167 = vmatpush1.msra.mxu0 %v774
    %2168 = vmatprep.subr.mxu0 %v783
    %2169 = vmatpush1.msra.mxu0 %v782
    %2170 = vmatprep.subr.mxu0 %v791
    %2171 = vmatpush1.msra.mxu0 %v790
    %2172 = vmatprep.subr.mxu0 %v799
    %2173 = vmatpush1.msra.mxu0 %v798
    %2174 = vmatprep.subr.mxu0 %v807
    %2175 = vmatpush1.msra.mxu0 %v806
    %2176 = vmatprep.subr.mxu0 %v815
    %2177 = vmatpush1.msra.mxu0 %v814
    %2178 = vmatprep.subr.mxu0 %v823
    %2179 = vmatpush1.msra.mxu0 %v822
    %2180 = vmatprep.subr.mxu0 %v831
    %2181 = vmatpush1.msra.mxu0 %v830
    %2182 = vmatprep.subr.mxu0 %v839
    %2183 = vmatpush1.msra.mxu0 %v838
    %2184 = vmatprep.subr.mxu0 %v847
    %2185 = vmatpush1.msra.mxu0 %v846
    %2186 = vmatprep.mubr.f32.mxu0 %v1977
    %2187 = vmatmul.mubr.f32.gmra.mrb[0].mxu0 %v1976
    %v2188 = vpop.f32.mrb[0].mxu0
    %v2189 = vadd.f32 0.0, %v2188
    %v2190 = vpop.f32.mrb[0].mxu0
    %v2191 = vadd.f32 0.0, %v2190
    %2192 = vdwg.mxu0
    %2193 = vmatprep.subr.mxu0 %v601
    %2194 = vmatpush1.msra.mxu0 %v600
    %2195 = vmatprep.subr.mxu0 %v609
    %2196 = vmatpush1.msra.mxu0 %v608
    %2197 = vmatprep.subr.mxu0 %v617
    %2198 = vmatpush1.msra.mxu0 %v616
    %2199 = vmatprep.subr.mxu0 %v625
    %2200 = vmatpush1.msra.mxu0 %v624
    %2201 = vmatprep.subr.mxu0 %v633
    %2202 = vmatpush1.msra.mxu0 %v632
    %2203 = vmatprep.subr.mxu0 %v641
    %2204 = vmatpush1.msra.mxu0 %v640
    %2205 = vmatprep.subr.mxu0 %v649
    %2206 = vmatpush1.msra.mxu0 %v648
    %2207 = vmatprep.subr.mxu0 %v657
    %2208 = vmatpush1.msra.mxu0 %v656
    %2209 = vmatprep.subr.mxu0 %v665
    %2210 = vmatpush1.msra.mxu0 %v664
    %2211 = vmatprep.subr.mxu0 %v673
    %2212 = vmatpush1.msra.mxu0 %v672
    %2213 = vmatprep.subr.mxu0 %v681
    %2214 = vmatpush1.msra.mxu0 %v680
    %2215 = vmatprep.subr.mxu0 %v689
    %2216 = vmatpush1.msra.mxu0 %v688
    %2217 = vmatprep.subr.mxu0 %v697
    %2218 = vmatpush1.msra.mxu0 %v696
    %2219 = vmatprep.subr.mxu0 %v705
    %2220 = vmatpush1.msra.mxu0 %v704
    %2221 = vmatprep.subr.mxu0 %v713
    %2222 = vmatpush1.msra.mxu0 %v712
    %2223 = vmatprep.subr.mxu0 %v721
    %2224 = vmatpush1.msra.mxu0 %v720
    %2225 = vmatprep.subr.mxu0 %v729
    %2226 = vmatpush1.msra.mxu0 %v728
    %2227 = vmatprep.subr.mxu0 %v737
    %2228 = vmatpush1.msra.mxu0 %v736
    %2229 = vmatprep.subr.mxu0 %v745
    %2230 = vmatpush1.msra.mxu0 %v744
    %2231 = vmatprep.subr.mxu0 %v753
    %2232 = vmatpush1.msra.mxu0 %v752
    %2233 = vmatprep.subr.mxu0 %v761
    %2234 = vmatpush1.msra.mxu0 %v760
    %2235 = vmatprep.subr.mxu0 %v769
    %2236 = vmatpush1.msra.mxu0 %v768
    %2237 = vmatprep.subr.mxu0 %v777
    %2238 = vmatpush1.msra.mxu0 %v776
    %2239 = vmatprep.subr.mxu0 %v785
    %2240 = vmatpush1.msra.mxu0 %v784
    %2241 = vmatprep.subr.mxu0 %v793
    %2242 = vmatpush1.msra.mxu0 %v792
    %2243 = vmatprep.subr.mxu0 %v801
    %2244 = vmatpush1.msra.mxu0 %v800
    %2245 = vmatprep.subr.mxu0 %v809
    %2246 = vmatpush1.msra.mxu0 %v808
    %2247 = vmatprep.subr.mxu0 %v817
    %2248 = vmatpush1.msra.mxu0 %v816
    %2249 = vmatprep.subr.mxu0 %v825
    %2250 = vmatpush1.msra.mxu0 %v824
    %2251 = vmatprep.subr.mxu0 %v833
    %2252 = vmatpush1.msra.mxu0 %v832
    %2253 = vmatprep.subr.mxu0 %v841
    %2254 = vmatpush1.msra.mxu0 %v840
    %2255 = vmatprep.subr.mxu0 %v849
    %2256 = vmatpush1.msra.mxu0 %v848
    %2257 = vmatprep.mubr.f32.mxu0 %v1977
    %2258 = vmatmul.mubr.f32.gmra.mrb[0].mxu0 %v1976
    %v2259 = vpop.f32.mrb[0].mxu0
    %v2260 = vadd.f32 0.0, %v2259
    %v2261 = vpop.f32.mrb[0].mxu0
    %v2262 = vadd.f32 0.0, %v2261
    %2263 = vdwg.mxu0
    %v2272 = vrot.slane %v2047, 2
    %v2273 = vrot.slane %v2049, 2
    %v2274 = vrot.slane %v2118, 2
    %v2275 = vrot.slane %v2120, 2
    %v2276 = vrot.slane %v2189, 2
    %v2277 = vrot.slane %v2191, 2
    %v2278 = vrot.slane %v2260, 2
    %v2279 = vrot.slane %v2262, 2
    %v2288 = vadd.f32 %v1966, %v2272
    %v2289 = vadd.f32 %v1967, %v2273
    %v2290 = vadd.f32 %v1968, %v2274
    %v2291 = vadd.f32 %v1969, %v2275
    %v2292 = vadd.f32 %v1970, %v2276
    %v2293 = vadd.f32 %v1971, %v2277
    %v2294 = vadd.f32 %v1972, %v2278
    %v2295 = vadd.f32 %v1973, %v2279
    %v2296 = vxor.u32 %v2288, 2147483648
    %v2297 = vxor.u32 %v2289, 2147483648
    %v2298 = vxor.u32 %v2290, 2147483648
    %v2299 = vxor.u32 %v2291, 2147483648
    %v2300 = vxor.u32 %v2292, 2147483648
    %v2301 = vxor.u32 %v2293, 2147483648
    %v2302 = vmul.f32 %v2296, 1.442695
    %v2303 = vpow.pop %v2302
    %v2304 = vmul.f32 %v2297, 1.442695
    %v2305 = vpow.pop %v2304
    %v2306 = vmul.f32 %v2298, 1.442695
    %v2307 = vpow.pop %v2306
    %v2308 = vmul.f32 %v2299, 1.442695
    %v2309 = vpow.pop %v2308
    %v2310 = vmul.f32 %v2300, 1.442695
    %v2311 = vpow.pop %v2310
    %v2312 = vmul.f32 %v2301, 1.442695
    %v2313 = vpow.pop %v2312
    %v2314 = vadd.f32 %v2303, 1.0
    %v2315 = vadd.f32 %v2305, 1.0
    %v2316 = vadd.f32 %v2307, 1.0
    %v2317 = vadd.f32 %v2309, 1.0
    %v2318 = vadd.f32 %v2311, 1.0
    %v2319 = vadd.f32 %v2313, 1.0
    %v2320 = vrcp.pop %v2314
    %v2321 = vmul.f32 1.0, %v2320
    %v2322 = vrcp.pop %v2315
    %v2323 = vmul.f32 1.0, %v2322
    %v2324 = vrcp.pop %v2316
    %v2325 = vmul.f32 1.0, %v2324
    %v2326 = vrcp.pop %v2317
    %v2327 = vmul.f32 1.0, %v2326
    %v2328 = vrcp.pop %v2318
    %v2329 = vmul.f32 1.0, %v2328
    %v2330 = vrcp.pop %v2319
    %v2331 = vmul.f32 1.0, %v2330
    %v2332 = vtanh.pop %v2294
    %v2333 = vtanh.pop %v2295
    %v2336 = vrot.slane %v1958, 6
    %v2337 = vrot.slane %v1959, 6
    %v2340 = vmul.f32 %v2325, %v2336
    %v2341 = vmul.f32 %v2327, %v2337
    %v2342 = vmul.f32 %v2321, %v2332
    %v2343 = vmul.f32 %v2323, %v2333
    %v2344 = vadd.f32 %v2340, %v2342
    %v2345 = vadd.f32 %v2341, %v2343
    %v2346 = vtanh.pop %v2344
    %v2347 = vtanh.pop %v2345
    %v2348 = vmul.f32 %v2329, %v2346
    %v2349 = vmul.f32 %v2331, %v2347
    %2350 = vst [vmem:[#allocation3] sm:$0xc0] %v2348
    %2351 = vst [vmem:[#allocation3 + $0x8] sm:$0xc0] %v2349
    %v2352 = vld [vmem:[#allocation2 + $0x40] sm:$0x3]
    %v2353 = vld [vmem:[#allocation2 + $0x48] sm:$0x3]
    %v2354 = vld [vmem:[#allocation2 + $0x50] sm:$0x3]
    %v2355 = vld [vmem:[#allocation2 + $0x58] sm:$0x3]
    %v2356 = vld [vmem:[#allocation2 + $0x60] sm:$0x3]
    %v2357 = vld [vmem:[#allocation2 + $0x68] sm:$0x3]
    %v2358 = vld [vmem:[#allocation2 + $0x70] sm:$0x3]
    %v2359 = vld [vmem:[#allocation2 + $0x78] sm:$0x3]
    %v2362 = vrot.slane %v2348, 6
    %v2363 = vrot.slane %v2349, 6
    %2366 = vmatprep.subr.mxu0 %v595
    %2367 = vmatpush1.msra.mxu0 %v594
    %2368 = vmatprep.subr.mxu0 %v603
    %2369 = vmatpush1.msra.mxu0 %v602
    %2370 = vmatprep.subr.mxu0 %v611
    %2371 = vmatpush1.msra.mxu0 %v610
    %2372 = vmatprep.subr.mxu0 %v619
    %2373 = vmatpush1.msra.mxu0 %v618
    %2374 = vmatprep.subr.mxu0 %v627
    %2375 = vmatpush1.msra.mxu0 %v626
    %2376 = vmatprep.subr.mxu0 %v635
    %2377 = vmatpush1.msra.mxu0 %v634
    %2378 = vmatprep.subr.mxu0 %v643
    %2379 = vmatpush1.msra.mxu0 %v642
    %2380 = vmatprep.subr.mxu0 %v651
    %2381 = vmatpush1.msra.mxu0 %v650
    %2382 = vmatprep.subr.mxu0 %v659
    %2383 = vmatpush1.msra.mxu0 %v658
    %2384 = vmatprep.subr.mxu0 %v667
    %2385 = vmatpush1.msra.mxu0 %v666
    %2386 = vmatprep.subr.mxu0 %v675
    %2387 = vmatpush1.msra.mxu0 %v674
    %2388 = vmatprep.subr.mxu0 %v683
    %2389 = vmatpush1.msra.mxu0 %v682
    %2390 = vmatprep.subr.mxu0 %v691
    %2391 = vmatpush1.msra.mxu0 %v690
    %2392 = vmatprep.subr.mxu0 %v699
    %2393 = vmatpush1.msra.mxu0 %v698
    %2394 = vmatprep.subr.mxu0 %v707
    %2395 = vmatpush1.msra.mxu0 %v706
    %2396 = vmatprep.subr.mxu0 %v715
    %2397 = vmatpush1.msra.mxu0 %v714
    %2398 = vmatprep.subr.mxu0 %v723
    %2399 = vmatpush1.msra.mxu0 %v722
    %2400 = vmatprep.subr.mxu0 %v731
    %2401 = vmatpush1.msra.mxu0 %v730
    %2402 = vmatprep.subr.mxu0 %v739
    %2403 = vmatpush1.msra.mxu0 %v738
    %2404 = vmatprep.subr.mxu0 %v747
    %2405 = vmatpush1.msra.mxu0 %v746
    %2406 = vmatprep.subr.mxu0 %v755
    %2407 = vmatpush1.msra.mxu0 %v754
    %2408 = vmatprep.subr.mxu0 %v763
    %2409 = vmatpush1.msra.mxu0 %v762
    %2410 = vmatprep.subr.mxu0 %v771
    %2411 = vmatpush1.msra.mxu0 %v770
    %2412 = vmatprep.subr.mxu0 %v779
    %2413 = vmatpush1.msra.mxu0 %v778
    %2414 = vmatprep.subr.mxu0 %v787
    %2415 = vmatpush1.msra.mxu0 %v786
    %2416 = vmatprep.subr.mxu0 %v795
    %2417 = vmatpush1.msra.mxu0 %v794
    %2418 = vmatprep.subr.mxu0 %v803
    %2419 = vmatpush1.msra.mxu0 %v802
    %2420 = vmatprep.subr.mxu0 %v811
    %2421 = vmatpush1.msra.mxu0 %v810
    %2422 = vmatprep.subr.mxu0 %v819
    %2423 = vmatpush1.msra.mxu0 %v818
    %2424 = vmatprep.subr.mxu0 %v827
    %2425 = vmatpush1.msra.mxu0 %v826
    %2426 = vmatprep.subr.mxu0 %v835
    %2427 = vmatpush1.msra.mxu0 %v834
    %2428 = vmatprep.subr.mxu0 %v843
    %2429 = vmatpush1.msra.mxu0 %v842
    %2430 = vmatprep.mubr.f32.mxu0 %v2363
    %2431 = vmatmul.mubr.f32.gmra.mrb[0].mxu0 %v2362
    %v2432 = vpop.f32.mrb[0].mxu0
    %v2433 = vadd.f32 0.0, %v2432
    %v2434 = vpop.f32.mrb[0].mxu0
    %v2435 = vadd.f32 0.0, %v2434
    %2436 = vdwg.mxu0
    %2437 = vmatprep.subr.mxu0 %v597
    %2438 = vmatpush1.msra.mxu0 %v596
    %2439 = vmatprep.subr.mxu0 %v605
    %2440 = vmatpush1.msra.mxu0 %v604
    %2441 = vmatprep.subr.mxu0 %v613
    %2442 = vmatpush1.msra.mxu0 %v612
    %2443 = vmatprep.subr.mxu0 %v621
    %2444 = vmatpush1.msra.mxu0 %v620
    %2445 = vmatprep.subr.mxu0 %v629
    %2446 = vmatpush1.msra.mxu0 %v628
    %2447 = vmatprep.subr.mxu0 %v637
    %2448 = vmatpush1.msra.mxu0 %v636
    %2449 = vmatprep.subr.mxu0 %v645
    %2450 = vmatpush1.msra.mxu0 %v644
    %2451 = vmatprep.subr.mxu0 %v653
    %2452 = vmatpush1.msra.mxu0 %v652
    %2453 = vmatprep.subr.mxu0 %v661
    %2454 = vmatpush1.msra.mxu0 %v660
    %2455 = vmatprep.subr.mxu0 %v669
    %2456 = vmatpush1.msra.mxu0 %v668
    %2457 = vmatprep.subr.mxu0 %v677
    %2458 = vmatpush1.msra.mxu0 %v676
    %2459 = vmatprep.subr.mxu0 %v685
    %2460 = vmatpush1.msra.mxu0 %v684
    %2461 = vmatprep.subr.mxu0 %v693
    %2462 = vmatpush1.msra.mxu0 %v692
    %2463 = vmatprep.subr.mxu0 %v701
    %2464 = vmatpush1.msra.mxu0 %v700
    %2465 = vmatprep.subr.mxu0 %v709
    %2466 = vmatpush1.msra.mxu0 %v708
    %2467 = vmatprep.subr.mxu0 %v717
    %2468 = vmatpush1.msra.mxu0 %v716
    %2469 = vmatprep.subr.mxu0 %v725
    %2470 = vmatpush1.msra.mxu0 %v724
    %2471 = vmatprep.subr.mxu0 %v733
    %2472 = vmatpush1.msra.mxu0 %v732
    %2473 = vmatprep.subr.mxu0 %v741
    %2474 = vmatpush1.msra.mxu0 %v740
    %2475 = vmatprep.subr.mxu0 %v749
    %2476 = vmatpush1.msra.mxu0 %v748
    %2477 = vmatprep.subr.mxu0 %v757
    %2478 = vmatpush1.msra.mxu0 %v756
    %2479 = vmatprep.subr.mxu0 %v765
    %2480 = vmatpush1.msra.mxu0 %v764
    %2481 = vmatprep.subr.mxu0 %v773
    %2482 = vmatpush1.msra.mxu0 %v772
    %2483 = vmatprep.subr.mxu0 %v781
    %2484 = vmatpush1.msra.mxu0 %v780
    %2485 = vmatprep.subr.mxu0 %v789
    %2486 = vmatpush1.msra.mxu0 %v788
    %2487 = vmatprep.subr.mxu0 %v797
    %2488 = vmatpush1.msra.mxu0 %v796
    %2489 = vmatprep.subr.mxu0 %v805
    %2490 = vmatpush1.msra.mxu0 %v804
    %2491 = vmatprep.subr.mxu0 %v813
    %2492 = vmatpush1.msra.mxu0 %v812
    %2493 = vmatprep.subr.mxu0 %v821
    %2494 = vmatpush1.msra.mxu0 %v820
    %2495 = vmatprep.subr.mxu0 %v829
    %2496 = vmatpush1.msra.mxu0 %v828
    %2497 = vmatprep.subr.mxu0 %v837
    %2498 = vmatpush1.msra.mxu0 %v836
    %2499 = vmatprep.subr.mxu0 %v845
    %2500 = vmatpush1.msra.mxu0 %v844
    %2501 = vmatprep.mubr.f32.mxu0 %v2363
    %2502 = vmatmul.mubr.f32.gmra.mrb[0].mxu0 %v2362
    %v2503 = vpop.f32.mrb[0].mxu0
    %v2504 = vadd.f32 0.0, %v2503
    %v2505 = vpop.f32.mrb[0].mxu0
    %v2506 = vadd.f32 0.0, %v2505
    %2507 = vdwg.mxu0
    %2508 = vmatprep.subr.mxu0 %v599
    %2509 = vmatpush1.msra.mxu0 %v598
    %2510 = vmatprep.subr.mxu0 %v607
    %2511 = vmatpush1.msra.mxu0 %v606
    %2512 = vmatprep.subr.mxu0 %v615
    %2513 = vmatpush1.msra.mxu0 %v614
    %2514 = vmatprep.subr.mxu0 %v623
    %2515 = vmatpush1.msra.mxu0 %v622
    %2516 = vmatprep.subr.mxu0 %v631
    %2517 = vmatpush1.msra.mxu0 %v630
    %2518 = vmatprep.subr.mxu0 %v639
    %2519 = vmatpush1.msra.mxu0 %v638
    %2520 = vmatprep.subr.mxu0 %v647
    %2521 = vmatpush1.msra.mxu0 %v646
    %2522 = vmatprep.subr.mxu0 %v655
    %2523 = vmatpush1.msra.mxu0 %v654
    %2524 = vmatprep.subr.mxu0 %v663
    %2525 = vmatpush1.msra.mxu0 %v662
    %2526 = vmatprep.subr.mxu0 %v671
    %2527 = vmatpush1.msra.mxu0 %v670
    %2528 = vmatprep.subr.mxu0 %v679
    %2529 = vmatpush1.msra.mxu0 %v678
    %2530 = vmatprep.subr.mxu0 %v687
    %2531 = vmatpush1.msra.mxu0 %v686
    %2532 = vmatprep.subr.mxu0 %v695
    %2533 = vmatpush1.msra.mxu0 %v694
    %2534 = vmatprep.subr.mxu0 %v703
    %2535 = vmatpush1.msra.mxu0 %v702
    %2536 = vmatprep.subr.mxu0 %v711
    %2537 = vmatpush1.msra.mxu0 %v710
    %2538 = vmatprep.subr.mxu0 %v719
    %2539 = vmatpush1.msra.mxu0 %v718
    %2540 = vmatprep.subr.mxu0 %v727
    %2541 = vmatpush1.msra.mxu0 %v726
    %2542 = vmatprep.subr.mxu0 %v735
    %2543 = vmatpush1.msra.mxu0 %v734
    %2544 = vmatprep.subr.mxu0 %v743
    %2545 = vmatpush1.msra.mxu0 %v742
    %2546 = vmatprep.subr.mxu0 %v751
    %2547 = vmatpush1.msra.mxu0 %v750
    %2548 = vmatprep.subr.mxu0 %v759
    %2549 = vmatpush1.msra.mxu0 %v758
    %2550 = vmatprep.subr.mxu0 %v767
    %2551 = vmatpush1.msra.mxu0 %v766
    %2552 = vmatprep.subr.mxu0 %v775
    %2553 = vmatpush1.msra.mxu0 %v774
    %2554 = vmatprep.subr.mxu0 %v783
    %2555 = vmatpush1.msra.mxu0 %v782
    %2556 = vmatprep.subr.mxu0 %v791
    %2557 = vmatpush1.msra.mxu0 %v790
    %2558 = vmatprep.subr.mxu0 %v799
    %2559 = vmatpush1.msra.mxu0 %v798
    %2560 = vmatprep.subr.mxu0 %v807
    %2561 = vmatpush1.msra.mxu0 %v806
    %2562 = vmatprep.subr.mxu0 %v815
    %2563 = vmatpush1.msra.mxu0 %v814
    %2564 = vmatprep.subr.mxu0 %v823
    %2565 = vmatpush1.msra.mxu0 %v822
    %2566 = vmatprep.subr.mxu0 %v831
    %2567 = vmatpush1.msra.mxu0 %v830
    %2568 = vmatprep.subr.mxu0 %v839
    %2569 = vmatpush1.msra.mxu0 %v838
    %2570 = vmatprep.subr.mxu0 %v847
    %2571 = vmatpush1.msra.mxu0 %v846
    %2572 = vmatprep.mubr.f32.mxu0 %v2363
    %2573 = vmatmul.mubr.f32.gmra.mrb[0].mxu0 %v2362
    %v2574 = vpop.f32.mrb[0].mxu0
    %v2575 = vadd.f32 0.0, %v2574
    %v2576 = vpop.f32.mrb[0].mxu0
    %v2577 = vadd.f32 0.0, %v2576
    %2578 = vdwg.mxu0
    %2579 = vmatprep.subr.mxu0 %v601
    %2580 = vmatpush1.msra.mxu0 %v600
    %2581 = vmatprep.subr.mxu0 %v609
    %2582 = vmatpush1.msra.mxu0 %v608
    %2583 = vmatprep.subr.mxu0 %v617
    %2584 = vmatpush1.msra.mxu0 %v616
    %2585 = vmatprep.subr.mxu0 %v625
    %2586 = vmatpush1.msra.mxu0 %v624
    %2587 = vmatprep.subr.mxu0 %v633
    %2588 = vmatpush1.msra.mxu0 %v632
    %2589 = vmatprep.subr.mxu0 %v641
    %2590 = vmatpush1.msra.mxu0 %v640
    %2591 = vmatprep.subr.mxu0 %v649
    %2592 = vmatpush1.msra.mxu0 %v648
    %2593 = vmatprep.subr.mxu0 %v657
    %2594 = vmatpush1.msra.mxu0 %v656
    %2595 = vmatprep.subr.mxu0 %v665
    %2596 = vmatpush1.msra.mxu0 %v664
    %2597 = vmatprep.subr.mxu0 %v673
    %2598 = vmatpush1.msra.mxu0 %v672
    %2599 = vmatprep.subr.mxu0 %v681
    %2600 = vmatpush1.msra.mxu0 %v680
    %2601 = vmatprep.subr.mxu0 %v689
    %2602 = vmatpush1.msra.mxu0 %v688
    %2603 = vmatprep.subr.mxu0 %v697
    %2604 = vmatpush1.msra.mxu0 %v696
    %2605 = vmatprep.subr.mxu0 %v705
    %2606 = vmatpush1.msra.mxu0 %v704
    %2607 = vmatprep.subr.mxu0 %v713
    %2608 = vmatpush1.msra.mxu0 %v712
    %2609 = vmatprep.subr.mxu0 %v721
    %2610 = vmatpush1.msra.mxu0 %v720
    %2611 = vmatprep.subr.mxu0 %v729
    %2612 = vmatpush1.msra.mxu0 %v728
    %2613 = vmatprep.subr.mxu0 %v737
    %2614 = vmatpush1.msra.mxu0 %v736
    %2615 = vmatprep.subr.mxu0 %v745
    %2616 = vmatpush1.msra.mxu0 %v744
    %2617 = vmatprep.subr.mxu0 %v753
    %2618 = vmatpush1.msra.mxu0 %v752
    %2619 = vmatprep.subr.mxu0 %v761
    %2620 = vmatpush1.msra.mxu0 %v760
    %2621 = vmatprep.subr.mxu0 %v769
    %2622 = vmatpush1.msra.mxu0 %v768
    %2623 = vmatprep.subr.mxu0 %v777
    %2624 = vmatpush1.msra.mxu0 %v776
    %2625 = vmatprep.subr.mxu0 %v785
    %2626 = vmatpush1.msra.mxu0 %v784
    %2627 = vmatprep.subr.mxu0 %v793
    %2628 = vmatpush1.msra.mxu0 %v792
    %2629 = vmatprep.subr.mxu0 %v801
    %2630 = vmatpush1.msra.mxu0 %v800
    %2631 = vmatprep.subr.mxu0 %v809
    %2632 = vmatpush1.msra.mxu0 %v808
    %2633 = vmatprep.subr.mxu0 %v817
    %2634 = vmatpush1.msra.mxu0 %v816
    %2635 = vmatprep.subr.mxu0 %v825
    %2636 = vmatpush1.msra.mxu0 %v824
    %2637 = vmatprep.subr.mxu0 %v833
    %2638 = vmatpush1.msra.mxu0 %v832
    %2639 = vmatprep.subr.mxu0 %v841
    %2640 = vmatpush1.msra.mxu0 %v840
    %2641 = vmatprep.subr.mxu0 %v849
    %2642 = vmatpush1.msra.mxu0 %v848
    %2643 = vmatprep.mubr.f32.mxu0 %v2363
    %2644 = vmatmul.mubr.f32.gmra.mrb[0].mxu0 %v2362
    %v2645 = vpop.f32.mrb[0].mxu0
    %v2646 = vadd.f32 0.0, %v2645
    %v2647 = vpop.f32.mrb[0].mxu0
    %v2648 = vadd.f32 0.0, %v2647
    %2649 = vdwg.mxu0
    %v2650 = vadd.f32 %v2352, %v2433
    %v2651 = vadd.f32 %v2353, %v2435
    %v2652 = vadd.f32 %v2354, %v2504
    %v2653 = vadd.f32 %v2355, %v2506
    %v2654 = vadd.f32 %v2356, %v2575
    %v2655 = vadd.f32 %v2357, %v2577
    %v2656 = vadd.f32 %v2358, %v2646
    %v2657 = vadd.f32 %v2359, %v2648
    %v2658 = vxor.u32 %v2650, 2147483648
    %v2659 = vxor.u32 %v2651, 2147483648
    %v2660 = vxor.u32 %v2652, 2147483648
    %v2661 = vxor.u32 %v2653, 2147483648
    %v2662 = vxor.u32 %v2654, 2147483648
    %v2663 = vxor.u32 %v2655, 2147483648
    %v2664 = vmul.f32 %v2658, 1.442695
    %v2665 = vpow.pop %v2664
    %v2666 = vmul.f32 %v2659, 1.442695
    %v2667 = vpow.pop %v2666
    %v2668 = vmul.f32 %v2660, 1.442695
    %v2669 = vpow.pop %v2668
    %v2670 = vmul.f32 %v2661, 1.442695
    %v2671 = vpow.pop %v2670
    %v2672 = vmul.f32 %v2662, 1.442695
    %v2673 = vpow.pop %v2672
    %v2674 = vmul.f32 %v2663, 1.442695
    %v2675 = vpow.pop %v2674
    %v2676 = vadd.f32 %v2665, 1.0
    %v2677 = vadd.f32 %v2667, 1.0
    %v2678 = vadd.f32 %v2669, 1.0
    %v2679 = vadd.f32 %v2671, 1.0
    %v2680 = vadd.f32 %v2673, 1.0
    %v2681 = vadd.f32 %v2675, 1.0
    %v2682 = vrcp.pop %v2676
    %v2683 = vmul.f32 1.0, %v2682
    %v2684 = vrcp.pop %v2677
    %v2685 = vmul.f32 1.0, %v2684
    %v2686 = vrcp.pop %v2678
    %v2687 = vmul.f32 1.0, %v2686
    %v2688 = vrcp.pop %v2679
    %v2689 = vmul.f32 1.0, %v2688
    %v2690 = vrcp.pop %v2680
    %v2691 = vmul.f32 1.0, %v2690
    %v2692 = vrcp.pop %v2681
    %v2693 = vmul.f32 1.0, %v2692
    %v2694 = vtanh.pop %v2656
    %v2695 = vtanh.pop %v2657
    %v2698 = vrot.slane %v2344, 6
    %v2699 = vrot.slane %v2345, 6
    %v2702 = vmul.f32 %v2687, %v2698
    %v2703 = vmul.f32 %v2689, %v2699
    %v2704 = vmul.f32 %v2683, %v2694
    %v2705 = vmul.f32 %v2685, %v2695
    %v2706 = vadd.f32 %v2702, %v2704
    %v2707 = vadd.f32 %v2703, %v2705
    %v2708 = vtanh.pop %v2706
    %v2709 = vtanh.pop %v2707
    %v2710 = vmul.f32 %v2691, %v2708
    %v2711 = vmul.f32 %v2693, %v2709
    %2712 = vst [vmem:[#allocation3 + $0x10] sm:$0x3] %v2710
    %2713 = vst [vmem:[#allocation3 + $0x18] sm:$0x3] %v2711
    %v2714 = vld [vmem:[#allocation2 + $0x40] sm:$0xc]
    %v2715 = vld [vmem:[#allocation2 + $0x48] sm:$0xc]
    %v2716 = vld [vmem:[#allocation2 + $0x50] sm:$0xc]
    %v2717 = vld [vmem:[#allocation2 + $0x58] sm:$0xc]
    %v2718 = vld [vmem:[#allocation2 + $0x60] sm:$0xc]
    %v2719 = vld [vmem:[#allocation2 + $0x68] sm:$0xc]
    %v2720 = vld [vmem:[#allocation2 + $0x70] sm:$0xc]
    %v2721 = vld [vmem:[#allocation2 + $0x78] sm:$0xc]
    %2722 = vmatprep.subr.mxu0 %v595
    %2723 = vmatpush1.msra.mxu0 %v594
    %2724 = vmatprep.subr.mxu0 %v603
    %2725 = vmatpush1.msra.mxu0 %v602
    %2726 = vmatprep.subr.mxu0 %v611
    %2727 = vmatpush1.msra.mxu0 %v610
    %2728 = vmatprep.subr.mxu0 %v619
    %2729 = vmatpush1.msra.mxu0 %v618
    %2730 = vmatprep.subr.mxu0 %v627
    %2731 = vmatpush1.msra.mxu0 %v626
    %2732 = vmatprep.subr.mxu0 %v635
    %2733 = vmatpush1.msra.mxu0 %v634
    %2734 = vmatprep.subr.mxu0 %v643
    %2735 = vmatpush1.msra.mxu0 %v642
    %2736 = vmatprep.subr.mxu0 %v651
    %2737 = vmatpush1.msra.mxu0 %v650
    %2738 = vmatprep.subr.mxu0 %v659
    %2739 = vmatpush1.msra.mxu0 %v658
    %2740 = vmatprep.subr.mxu0 %v667
    %2741 = vmatpush1.msra.mxu0 %v666
    %2742 = vmatprep.subr.mxu0 %v675
    %2743 = vmatpush1.msra.mxu0 %v674
    %2744 = vmatprep.subr.mxu0 %v683
    %2745 = vmatpush1.msra.mxu0 %v682
    %2746 = vmatprep.subr.mxu0 %v691
    %2747 = vmatpush1.msra.mxu0 %v690
    %2748 = vmatprep.subr.mxu0 %v699
    %2749 = vmatpush1.msra.mxu0 %v698
    %2750 = vmatprep.subr.mxu0 %v707
    %2751 = vmatpush1.msra.mxu0 %v706
    %2752 = vmatprep.subr.mxu0 %v715
    %2753 = vmatpush1.msra.mxu0 %v714
    %2754 = vmatprep.subr.mxu0 %v723
    %2755 = vmatpush1.msra.mxu0 %v722
    %2756 = vmatprep.subr.mxu0 %v731
    %2757 = vmatpush1.msra.mxu0 %v730
    %2758 = vmatprep.subr.mxu0 %v739
    %2759 = vmatpush1.msra.mxu0 %v738
    %2760 = vmatprep.subr.mxu0 %v747
    %2761 = vmatpush1.msra.mxu0 %v746
    %2762 = vmatprep.subr.mxu0 %v755
    %2763 = vmatpush1.msra.mxu0 %v754
    %2764 = vmatprep.subr.mxu0 %v763
    %2765 = vmatpush1.msra.mxu0 %v762
    %2766 = vmatprep.subr.mxu0 %v771
    %2767 = vmatpush1.msra.mxu0 %v770
    %2768 = vmatprep.subr.mxu0 %v779
    %2769 = vmatpush1.msra.mxu0 %v778
    %2770 = vmatprep.subr.mxu0 %v787
    %2771 = vmatpush1.msra.mxu0 %v786
    %2772 = vmatprep.subr.mxu0 %v795
    %2773 = vmatpush1.msra.mxu0 %v794
    %2774 = vmatprep.subr.mxu0 %v803
    %2775 = vmatpush1.msra.mxu0 %v802
    %2776 = vmatprep.subr.mxu0 %v811
    %2777 = vmatpush1.msra.mxu0 %v810
    %2778 = vmatprep.subr.mxu0 %v819
    %2779 = vmatpush1.msra.mxu0 %v818
    %2780 = vmatprep.subr.mxu0 %v827
    %2781 = vmatpush1.msra.mxu0 %v826
    %2782 = vmatprep.subr.mxu0 %v835
    %2783 = vmatpush1.msra.mxu0 %v834
    %2784 = vmatprep.subr.mxu0 %v843
    %2785 = vmatpush1.msra.mxu0 %v842
    %2786 = vmatprep.mubr.f32.mxu0 %v2711
    %2787 = vmatmul.mubr.f32.gmra.mrb[0].mxu0 %v2710
    %v2788 = vpop.f32.mrb[0].mxu0
    %v2789 = vadd.f32 0.0, %v2788
    %v2790 = vpop.f32.mrb[0].mxu0
    %v2791 = vadd.f32 0.0, %v2790
    %2792 = vdwg.mxu0
    %2793 = vmatprep.subr.mxu0 %v597
    %2794 = vmatpush1.msra.mxu0 %v596
    %2795 = vmatprep.subr.mxu0 %v605
    %2796 = vmatpush1.msra.mxu0 %v604
    %2797 = vmatprep.subr.mxu0 %v613
    %2798 = vmatpush1.msra.mxu0 %v612
    %2799 = vmatprep.subr.mxu0 %v621
    %2800 = vmatpush1.msra.mxu0 %v620
    %2801 = vmatprep.subr.mxu0 %v629
    %2802 = vmatpush1.msra.mxu0 %v628
    %2803 = vmatprep.subr.mxu0 %v637
    %2804 = vmatpush1.msra.mxu0 %v636
    %2805 = vmatprep.subr.mxu0 %v645
    %2806 = vmatpush1.msra.mxu0 %v644
    %2807 = vmatprep.subr.mxu0 %v653
    %2808 = vmatpush1.msra.mxu0 %v652
    %2809 = vmatprep.subr.mxu0 %v661
    %2810 = vmatpush1.msra.mxu0 %v660
    %2811 = vmatprep.subr.mxu0 %v669
    %2812 = vmatpush1.msra.mxu0 %v668
    %2813 = vmatprep.subr.mxu0 %v677
    %2814 = vmatpush1.msra.mxu0 %v676
    %2815 = vmatprep.subr.mxu0 %v685
    %2816 = vmatpush1.msra.mxu0 %v684
    %2817 = vmatprep.subr.mxu0 %v693
    %2818 = vmatpush1.msra.mxu0 %v692
    %2819 = vmatprep.subr.mxu0 %v701
    %2820 = vmatpush1.msra.mxu0 %v700
    %2821 = vmatprep.subr.mxu0 %v709
    %2822 = vmatpush1.msra.mxu0 %v708
    %2823 = vmatprep.subr.mxu0 %v717
    %2824 = vmatpush1.msra.mxu0 %v716
    %2825 = vmatprep.subr.mxu0 %v725
    %2826 = vmatpush1.msra.mxu0 %v724
    %2827 = vmatprep.subr.mxu0 %v733
    %2828 = vmatpush1.msra.mxu0 %v732
    %2829 = vmatprep.subr.mxu0 %v741
    %2830 = vmatpush1.msra.mxu0 %v740
    %2831 = vmatprep.subr.mxu0 %v749
    %2832 = vmatpush1.msra.mxu0 %v748
    %2833 = vmatprep.subr.mxu0 %v757
    %2834 = vmatpush1.msra.mxu0 %v756
    %2835 = vmatprep.subr.mxu0 %v765
    %2836 = vmatpush1.msra.mxu0 %v764
    %2837 = vmatprep.subr.mxu0 %v773
    %2838 = vmatpush1.msra.mxu0 %v772
    %2839 = vmatprep.subr.mxu0 %v781
    %2840 = vmatpush1.msra.mxu0 %v780
    %2841 = vmatprep.subr.mxu0 %v789
    %2842 = vmatpush1.msra.mxu0 %v788
    %2843 = vmatprep.subr.mxu0 %v797
    %2844 = vmatpush1.msra.mxu0 %v796
    %2845 = vmatprep.subr.mxu0 %v805
    %2846 = vmatpush1.msra.mxu0 %v804
    %2847 = vmatprep.subr.mxu0 %v813
    %2848 = vmatpush1.msra.mxu0 %v812
    %2849 = vmatprep.subr.mxu0 %v821
    %2850 = vmatpush1.msra.mxu0 %v820
    %2851 = vmatprep.subr.mxu0 %v829
    %2852 = vmatpush1.msra.mxu0 %v828
    %2853 = vmatprep.subr.mxu0 %v837
    %2854 = vmatpush1.msra.mxu0 %v836
    %2855 = vmatprep.subr.mxu0 %v845
    %2856 = vmatpush1.msra.mxu0 %v844
    %2857 = vmatprep.mubr.f32.mxu0 %v2711
    %2858 = vmatmul.mubr.f32.gmra.mrb[0].mxu0 %v2710
    %v2859 = vpop.f32.mrb[0].mxu0
    %v2860 = vadd.f32 0.0, %v2859
    %v2861 = vpop.f32.mrb[0].mxu0
    %v2862 = vadd.f32 0.0, %v2861
    %2863 = vdwg.mxu0
    %2864 = vmatprep.subr.mxu0 %v599
    %2865 = vmatpush1.msra.mxu0 %v598
    %2866 = vmatprep.subr.mxu0 %v607
    %2867 = vmatpush1.msra.mxu0 %v606
    %2868 = vmatprep.subr.mxu0 %v615
    %2869 = vmatpush1.msra.mxu0 %v614
    %2870 = vmatprep.subr.mxu0 %v623
    %2871 = vmatpush1.msra.mxu0 %v622
    %2872 = vmatprep.subr.mxu0 %v631
    %2873 = vmatpush1.msra.mxu0 %v630
    %2874 = vmatprep.subr.mxu0 %v639
    %2875 = vmatpush1.msra.mxu0 %v638
    %2876 = vmatprep.subr.mxu0 %v647
    %2877 = vmatpush1.msra.mxu0 %v646
    %2878 = vmatprep.subr.mxu0 %v655
    %2879 = vmatpush1.msra.mxu0 %v654
    %2880 = vmatprep.subr.mxu0 %v663
    %2881 = vmatpush1.msra.mxu0 %v662
    %2882 = vmatprep.subr.mxu0 %v671
    %2883 = vmatpush1.msra.mxu0 %v670
    %2884 = vmatprep.subr.mxu0 %v679
    %2885 = vmatpush1.msra.mxu0 %v678
    %2886 = vmatprep.subr.mxu0 %v687
    %2887 = vmatpush1.msra.mxu0 %v686
    %2888 = vmatprep.subr.mxu0 %v695
    %2889 = vmatpush1.msra.mxu0 %v694
    %2890 = vmatprep.subr.mxu0 %v703
    %2891 = vmatpush1.msra.mxu0 %v702
    %2892 = vmatprep.subr.mxu0 %v711
    %2893 = vmatpush1.msra.mxu0 %v710
    %2894 = vmatprep.subr.mxu0 %v719
    %2895 = vmatpush1.msra.mxu0 %v718
    %2896 = vmatprep.subr.mxu0 %v727
    %2897 = vmatpush1.msra.mxu0 %v726
    %2898 = vmatprep.subr.mxu0 %v735
    %2899 = vmatpush1.msra.mxu0 %v734
    %2900 = vmatprep.subr.mxu0 %v743
    %2901 = vmatpush1.msra.mxu0 %v742
    %2902 = vmatprep.subr.mxu0 %v751
    %2903 = vmatpush1.msra.mxu0 %v750
    %2904 = vmatprep.subr.mxu0 %v759
    %2905 = vmatpush1.msra.mxu0 %v758
    %2906 = vmatprep.subr.mxu0 %v767
    %2907 = vmatpush1.msra.mxu0 %v766
    %2908 = vmatprep.subr.mxu0 %v775
    %2909 = vmatpush1.msra.mxu0 %v774
    %2910 = vmatprep.subr.mxu0 %v783
    %2911 = vmatpush1.msra.mxu0 %v782
    %2912 = vmatprep.subr.mxu0 %v791
    %2913 = vmatpush1.msra.mxu0 %v790
    %2914 = vmatprep.subr.mxu0 %v799
    %2915 = vmatpush1.msra.mxu0 %v798
    %2916 = vmatprep.subr.mxu0 %v807
    %2917 = vmatpush1.msra.mxu0 %v806
    %2918 = vmatprep.subr.mxu0 %v815
    %2919 = vmatpush1.msra.mxu0 %v814
    %2920 = vmatprep.subr.mxu0 %v823
    %2921 = vmatpush1.msra.mxu0 %v822
    %2922 = vmatprep.subr.mxu0 %v831
    %2923 = vmatpush1.msra.mxu0 %v830
    %2924 = vmatprep.subr.mxu0 %v839
    %2925 = vmatpush1.msra.mxu0 %v838
    %2926 = vmatprep.subr.mxu0 %v847
    %2927 = vmatpush1.msra.mxu0 %v846
    %2928 = vmatprep.mubr.f32.mxu0 %v2711
    %2929 = vmatmul.mubr.f32.gmra.mrb[0].mxu0 %v2710
    %v2930 = vpop.f32.mrb[0].mxu0
    %v2931 = vadd.f32 0.0, %v2930
    %v2932 = vpop.f32.mrb[0].mxu0
    %v2933 = vadd.f32 0.0, %v2932
    %2934 = vdwg.mxu0
    %2935 = vmatprep.subr.mxu0 %v601
    %2936 = vmatpush1.msra.mxu0 %v600
    %2937 = vmatprep.subr.mxu0 %v609
    %2938 = vmatpush1.msra.mxu0 %v608
    %2939 = vmatprep.subr.mxu0 %v617
    %2940 = vmatpush1.msra.mxu0 %v616
    %2941 = vmatprep.subr.mxu0 %v625
    %2942 = vmatpush1.msra.mxu0 %v624
    %2943 = vmatprep.subr.mxu0 %v633
    %2944 = vmatpush1.msra.mxu0 %v632
    %2945 = vmatprep.subr.mxu0 %v641
    %2946 = vmatpush1.msra.mxu0 %v640
    %2947 = vmatprep.subr.mxu0 %v649
    %2948 = vmatpush1.msra.mxu0 %v648
    %2949 = vmatprep.subr.mxu0 %v657
    %2950 = vmatpush1.msra.mxu0 %v656
    %2951 = vmatprep.subr.mxu0 %v665
    %2952 = vmatpush1.msra.mxu0 %v664
    %2953 = vmatprep.subr.mxu0 %v673
    %2954 = vmatpush1.msra.mxu0 %v672
    %2955 = vmatprep.subr.mxu0 %v681
    %2956 = vmatpush1.msra.mxu0 %v680
    %2957 = vmatprep.subr.mxu0 %v689
    %2958 = vmatpush1.msra.mxu0 %v688
    %2959 = vmatprep.subr.mxu0 %v697
    %2960 = vmatpush1.msra.mxu0 %v696
    %2961 = vmatprep.subr.mxu0 %v705
    %2962 = vmatpush1.msra.mxu0 %v704
    %2963 = vmatprep.subr.mxu0 %v713
    %2964 = vmatpush1.msra.mxu0 %v712
    %2965 = vmatprep.subr.mxu0 %v721
    %2966 = vmatpush1.msra.mxu0 %v720
    %2967 = vmatprep.subr.mxu0 %v729
    %2968 = vmatpush1.msra.mxu0 %v728
    %2969 = vmatprep.subr.mxu0 %v737
    %2970 = vmatpush1.msra.mxu0 %v736
    %2971 = vmatprep.subr.mxu0 %v745
    %2972 = vmatpush1.msra.mxu0 %v744
    %2973 = vmatprep.subr.mxu0 %v753
    %2974 = vmatpush1.msra.mxu0 %v752
    %2975 = vmatprep.subr.mxu0 %v761
    %2976 = vmatpush1.msra.mxu0 %v760
    %2977 = vmatprep.subr.mxu0 %v769
    %2978 = vmatpush1.msra.mxu0 %v768
    %2979 = vmatprep.subr.mxu0 %v777
    %2980 = vmatpush1.msra.mxu0 %v776
    %2981 = vmatprep.subr.mxu0 %v785
    %2982 = vmatpush1.msra.mxu0 %v784
    %2983 = vmatprep.subr.mxu0 %v793
    %2984 = vmatpush1.msra.mxu0 %v792
    %2985 = vmatprep.subr.mxu0 %v801
    %2986 = vmatpush1.msra.mxu0 %v800
    %2987 = vmatprep.subr.mxu0 %v809
    %2988 = vmatpush1.msra.mxu0 %v808
    %2989 = vmatprep.subr.mxu0 %v817
    %2990 = vmatpush1.msra.mxu0 %v816
    %2991 = vmatprep.subr.mxu0 %v825
    %2992 = vmatpush1.msra.mxu0 %v824
    %2993 = vmatprep.subr.mxu0 %v833
    %2994 = vmatpush1.msra.mxu0 %v832
    %2995 = vmatprep.subr.mxu0 %v841
    %2996 = vmatpush1.msra.mxu0 %v840
    %2997 = vmatprep.subr.mxu0 %v849
    %2998 = vmatpush1.msra.mxu0 %v848
    %2999 = vmatprep.mubr.f32.mxu0 %v2711
    %3000 = vmatmul.mubr.f32.gmra.mrb[0].mxu0 %v2710
    %v3001 = vpop.f32.mrb[0].mxu0
    %v3002 = vadd.f32 0.0, %v3001
    %v3003 = vpop.f32.mrb[0].mxu0
    %v3004 = vadd.f32 0.0, %v3003
    %3005 = vdwg.mxu0
    %v3014 = vrot.slane %v2789, 6
    %v3015 = vrot.slane %v2791, 6
    %v3016 = vrot.slane %v2860, 6
    %v3017 = vrot.slane %v2862, 6
    %v3018 = vrot.slane %v2931, 6
    %v3019 = vrot.slane %v2933, 6
    %v3020 = vrot.slane %v3002, 6
    %v3021 = vrot.slane %v3004, 6
    %v3030 = vadd.f32 %v2714, %v3014
    %v3031 = vadd.f32 %v2715, %v3015
    %v3032 = vadd.f32 %v2716, %v3016
    %v3033 = vadd.f32 %v2717, %v3017
    %v3034 = vadd.f32 %v2718, %v3018
    %v3035 = vadd.f32 %v2719, %v3019
    %v3036 = vadd.f32 %v2720, %v3020
    %v3037 = vadd.f32 %v2721, %v3021
    %v3038 = vxor.u32 %v3030, 2147483648
    %v3039 = vxor.u32 %v3031, 2147483648
    %v3040 = vxor.u32 %v3032, 2147483648
    %v3041 = vxor.u32 %v3033, 2147483648
    %v3042 = vxor.u32 %v3034, 2147483648
    %v3043 = vxor.u32 %v3035, 2147483648
    %v3044 = vmul.f32 %v3038, 1.442695
    %v3045 = vpow.pop %v3044
    %v3046 = vmul.f32 %v3039, 1.442695
    %v3047 = vpow.pop %v3046
    %v3048 = vmul.f32 %v3040, 1.442695
    %v3049 = vpow.pop %v3048
    %v3050 = vmul.f32 %v3041, 1.442695
    %v3051 = vpow.pop %v3050
    %v3052 = vmul.f32 %v3042, 1.442695
    %v3053 = vpow.pop %v3052
    %v3054 = vmul.f32 %v3043, 1.442695
    %v3055 = vpow.pop %v3054
    %v3056 = vadd.f32 %v3045, 1.0
    %v3057 = vadd.f32 %v3047, 1.0
    %v3058 = vadd.f32 %v3049, 1.0
    %v3059 = vadd.f32 %v3051, 1.0
    %v3060 = vadd.f32 %v3053, 1.0
    %v3061 = vadd.f32 %v3055, 1.0
    %v3062 = vrcp.pop %v3056
    %v3063 = vmul.f32 1.0, %v3062
    %v3064 = vrcp.pop %v3057
    %v3065 = vmul.f32 1.0, %v3064
    %v3066 = vrcp.pop %v3058
    %v3067 = vmul.f32 1.0, %v3066
    %v3068 = vrcp.pop %v3059
    %v3069 = vmul.f32 1.0, %v3068
    %v3070 = vrcp.pop %v3060
    %v3071 = vmul.f32 1.0, %v3070
    %v3072 = vrcp.pop %v3061
    %v3073 = vmul.f32 1.0, %v3072
    %v3074 = vtanh.pop %v3036
    %v3075 = vtanh.pop %v3037
    %v3078 = vrot.slane %v2706, 6
    %v3079 = vrot.slane %v2707, 6
    %v3082 = vmul.f32 %v3067, %v3078
    %v3083 = vmul.f32 %v3069, %v3079
    %v3084 = vmul.f32 %v3063, %v3074
    %v3085 = vmul.f32 %v3065, %v3075
    %v3086 = vadd.f32 %v3082, %v3084
    %v3087 = vadd.f32 %v3083, %v3085
    %v3088 = vtanh.pop %v3086
    %v3089 = vtanh.pop %v3087
    %v3090 = vmul.f32 %v3071, %v3088
    %v3091 = vmul.f32 %v3073, %v3089
    %3092 = vst [vmem:[#allocation3 + $0x10] sm:$0xc] %v3090
    %3093 = vst [vmem:[#allocation3 + $0x18] sm:$0xc] %v3091
    %v3094 = vld [vmem:[#allocation2 + $0x40] sm:$0x30]
    %v3095 = vld [vmem:[#allocation2 + $0x48] sm:$0x30]
    %v3096 = vld [vmem:[#allocation2 + $0x50] sm:$0x30]
    %v3097 = vld [vmem:[#allocation2 + $0x58] sm:$0x30]
    %v3098 = vld [vmem:[#allocation2 + $0x60] sm:$0x30]
    %v3099 = vld [vmem:[#allocation2 + $0x68] sm:$0x30]
    %v3100 = vld [vmem:[#allocation2 + $0x70] sm:$0x30]
    %v3101 = vld [vmem:[#allocation2 + $0x78] sm:$0x30]
    %v3104 = vrot.slane %v3090, 2
    %v3105 = vrot.slane %v3091, 2
    %3108 = vmatprep.subr.mxu0 %v595
    %3109 = vmatpush1.msra.mxu0 %v594
    %3110 = vmatprep.subr.mxu0 %v603
    %3111 = vmatpush1.msra.mxu0 %v602
    %3112 = vmatprep.subr.mxu0 %v611
    %3113 = vmatpush1.msra.mxu0 %v610
    %3114 = vmatprep.subr.mxu0 %v619
    %3115 = vmatpush1.msra.mxu0 %v618
    %3116 = vmatprep.subr.mxu0 %v627
    %3117 = vmatpush1.msra.mxu0 %v626
    %3118 = vmatprep.subr.mxu0 %v635
    %3119 = vmatpush1.msra.mxu0 %v634
    %3120 = vmatprep.subr.mxu0 %v643
    %3121 = vmatpush1.msra.mxu0 %v642
    %3122 = vmatprep.subr.mxu0 %v651
    %3123 = vmatpush1.msra.mxu0 %v650
    %3124 = vmatprep.subr.mxu0 %v659
    %3125 = vmatpush1.msra.mxu0 %v658
    %3126 = vmatprep.subr.mxu0 %v667
    %3127 = vmatpush1.msra.mxu0 %v666
    %3128 = vmatprep.subr.mxu0 %v675
    %3129 = vmatpush1.msra.mxu0 %v674
    %3130 = vmatprep.subr.mxu0 %v683
    %3131 = vmatpush1.msra.mxu0 %v682
    %3132 = vmatprep.subr.mxu0 %v691
    %3133 = vmatpush1.msra.mxu0 %v690
    %3134 = vmatprep.subr.mxu0 %v699
    %3135 = vmatpush1.msra.mxu0 %v698
    %3136 = vmatprep.subr.mxu0 %v707
    %3137 = vmatpush1.msra.mxu0 %v706
    %3138 = vmatprep.subr.mxu0 %v715
    %3139 = vmatpush1.msra.mxu0 %v714
    %3140 = vmatprep.subr.mxu0 %v723
    %3141 = vmatpush1.msra.mxu0 %v722
    %3142 = vmatprep.subr.mxu0 %v731
    %3143 = vmatpush1.msra.mxu0 %v730
    %3144 = vmatprep.subr.mxu0 %v739
    %3145 = vmatpush1.msra.mxu0 %v738
    %3146 = vmatprep.subr.mxu0 %v747
    %3147 = vmatpush1.msra.mxu0 %v746
    %3148 = vmatprep.subr.mxu0 %v755
    %3149 = vmatpush1.msra.mxu0 %v754
    %3150 = vmatprep.subr.mxu0 %v763
    %3151 = vmatpush1.msra.mxu0 %v762
    %3152 = vmatprep.subr.mxu0 %v771
    %3153 = vmatpush1.msra.mxu0 %v770
    %3154 = vmatprep.subr.mxu0 %v779
    %3155 = vmatpush1.msra.mxu0 %v778
    %3156 = vmatprep.subr.mxu0 %v787
    %3157 = vmatpush1.msra.mxu0 %v786
    %3158 = vmatprep.subr.mxu0 %v795
    %3159 = vmatpush1.msra.mxu0 %v794
    %3160 = vmatprep.subr.mxu0 %v803
    %3161 = vmatpush1.msra.mxu0 %v802
    %3162 = vmatprep.subr.mxu0 %v811
    %3163 = vmatpush1.msra.mxu0 %v810
    %3164 = vmatprep.subr.mxu0 %v819
    %3165 = vmatpush1.msra.mxu0 %v818
    %3166 = vmatprep.subr.mxu0 %v827
    %3167 = vmatpush1.msra.mxu0 %v826
    %3168 = vmatprep.subr.mxu0 %v835
    %3169 = vmatpush1.msra.mxu0 %v834
    %3170 = vmatprep.subr.mxu0 %v843
    %3171 = vmatpush1.msra.mxu0 %v842
    %3172 = vmatprep.mubr.f32.mxu0 %v3105
    %3173 = vmatmul.mubr.f32.gmra.mrb[0].mxu0 %v3104
    %v3174 = vpop.f32.mrb[0].mxu0
    %v3175 = vadd.f32 0.0, %v3174
    %v3176 = vpop.f32.mrb[0].mxu0
    %v3177 = vadd.f32 0.0, %v3176
    %3178 = vdwg.mxu0
    %3179 = vmatprep.subr.mxu0 %v597
    %3180 = vmatpush1.msra.mxu0 %v596
    %3181 = vmatprep.subr.mxu0 %v605
    %3182 = vmatpush1.msra.mxu0 %v604
    %3183 = vmatprep.subr.mxu0 %v613
    %3184 = vmatpush1.msra.mxu0 %v612
    %3185 = vmatprep.subr.mxu0 %v621
    %3186 = vmatpush1.msra.mxu0 %v620
    %3187 = vmatprep.subr.mxu0 %v629
    %3188 = vmatpush1.msra.mxu0 %v628
    %3189 = vmatprep.subr.mxu0 %v637
    %3190 = vmatpush1.msra.mxu0 %v636
    %3191 = vmatprep.subr.mxu0 %v645
    %3192 = vmatpush1.msra.mxu0 %v644
    %3193 = vmatprep.subr.mxu0 %v653
    %3194 = vmatpush1.msra.mxu0 %v652
    %3195 = vmatprep.subr.mxu0 %v661
    %3196 = vmatpush1.msra.mxu0 %v660
    %3197 = vmatprep.subr.mxu0 %v669
    %3198 = vmatpush1.msra.mxu0 %v668
    %3199 = vmatprep.subr.mxu0 %v677
    %3200 = vmatpush1.msra.mxu0 %v676
    %3201 = vmatprep.subr.mxu0 %v685
    %3202 = vmatpush1.msra.mxu0 %v684
    %3203 = vmatprep.subr.mxu0 %v693
    %3204 = vmatpush1.msra.mxu0 %v692
    %3205 = vmatprep.subr.mxu0 %v701
    %3206 = vmatpush1.msra.mxu0 %v700
    %3207 = vmatprep.subr.mxu0 %v709
    %3208 = vmatpush1.msra.mxu0 %v708
    %3209 = vmatprep.subr.mxu0 %v717
    %3210 = vmatpush1.msra.mxu0 %v716
    %3211 = vmatprep.subr.mxu0 %v725
    %3212 = vmatpush1.msra.mxu0 %v724
    %3213 = vmatprep.subr.mxu0 %v733
    %3214 = vmatpush1.msra.mxu0 %v732
    %3215 = vmatprep.subr.mxu0 %v741
    %3216 = vmatpush1.msra.mxu0 %v740
    %3217 = vmatprep.subr.mxu0 %v749
    %3218 = vmatpush1.msra.mxu0 %v748
    %3219 = vmatprep.subr.mxu0 %v757
    %3220 = vmatpush1.msra.mxu0 %v756
    %3221 = vmatprep.subr.mxu0 %v765
    %3222 = vmatpush1.msra.mxu0 %v764
    %3223 = vmatprep.subr.mxu0 %v773
    %3224 = vmatpush1.msra.mxu0 %v772
    %3225 = vmatprep.subr.mxu0 %v781
    %3226 = vmatpush1.msra.mxu0 %v780
    %3227 = vmatprep.subr.mxu0 %v789
    %3228 = vmatpush1.msra.mxu0 %v788
    %3229 = vmatprep.subr.mxu0 %v797
    %3230 = vmatpush1.msra.mxu0 %v796
    %3231 = vmatprep.subr.mxu0 %v805
    %3232 = vmatpush1.msra.mxu0 %v804
    %3233 = vmatprep.subr.mxu0 %v813
    %3234 = vmatpush1.msra.mxu0 %v812
    %3235 = vmatprep.subr.mxu0 %v821
    %3236 = vmatpush1.msra.mxu0 %v820
    %3237 = vmatprep.subr.mxu0 %v829
    %3238 = vmatpush1.msra.mxu0 %v828
    %3239 = vmatprep.subr.mxu0 %v837
    %3240 = vmatpush1.msra.mxu0 %v836
    %3241 = vmatprep.subr.mxu0 %v845
    %3242 = vmatpush1.msra.mxu0 %v844
    %3243 = vmatprep.mubr.f32.mxu0 %v3105
    %3244 = vmatmul.mubr.f32.gmra.mrb[0].mxu0 %v3104
    %v3245 = vpop.f32.mrb[0].mxu0
    %v3246 = vadd.f32 0.0, %v3245
    %v3247 = vpop.f32.mrb[0].mxu0
    %v3248 = vadd.f32 0.0, %v3247
    %3249 = vdwg.mxu0
    %3250 = vmatprep.subr.mxu0 %v599
    %3251 = vmatpush1.msra.mxu0 %v598
    %3252 = vmatprep.subr.mxu0 %v607
    %3253 = vmatpush1.msra.mxu0 %v606
    %3254 = vmatprep.subr.mxu0 %v615
    %3255 = vmatpush1.msra.mxu0 %v614
    %3256 = vmatprep.subr.mxu0 %v623
    %3257 = vmatpush1.msra.mxu0 %v622
    %3258 = vmatprep.subr.mxu0 %v631
    %3259 = vmatpush1.msra.mxu0 %v630
    %3260 = vmatprep.subr.mxu0 %v639
    %3261 = vmatpush1.msra.mxu0 %v638
    %3262 = vmatprep.subr.mxu0 %v647
    %3263 = vmatpush1.msra.mxu0 %v646
    %3264 = vmatprep.subr.mxu0 %v655
    %3265 = vmatpush1.msra.mxu0 %v654
    %3266 = vmatprep.subr.mxu0 %v663
    %3267 = vmatpush1.msra.mxu0 %v662
    %3268 = vmatprep.subr.mxu0 %v671
    %3269 = vmatpush1.msra.mxu0 %v670
    %3270 = vmatprep.subr.mxu0 %v679
    %3271 = vmatpush1.msra.mxu0 %v678
    %3272 = vmatprep.subr.mxu0 %v687
    %3273 = vmatpush1.msra.mxu0 %v686
    %3274 = vmatprep.subr.mxu0 %v695
    %3275 = vmatpush1.msra.mxu0 %v694
    %3276 = vmatprep.subr.mxu0 %v703
    %3277 = vmatpush1.msra.mxu0 %v702
    %3278 = vmatprep.subr.mxu0 %v711
    %3279 = vmatpush1.msra.mxu0 %v710
    %3280 = vmatprep.subr.mxu0 %v719
    %3281 = vmatpush1.msra.mxu0 %v718
    %3282 = vmatprep.subr.mxu0 %v727
    %3283 = vmatpush1.msra.mxu0 %v726
    %3284 = vmatprep.subr.mxu0 %v735
    %3285 = vmatpush1.msra.mxu0 %v734
    %3286 = vmatprep.subr.mxu0 %v743
    %3287 = vmatpush1.msra.mxu0 %v742
    %3288 = vmatprep.subr.mxu0 %v751
    %3289 = vmatpush1.msra.mxu0 %v750
    %3290 = vmatprep.subr.mxu0 %v759
    %3291 = vmatpush1.msra.mxu0 %v758
    %3292 = vmatprep.subr.mxu0 %v767
    %3293 = vmatpush1.msra.mxu0 %v766
    %3294 = vmatprep.subr.mxu0 %v775
    %3295 = vmatpush1.msra.mxu0 %v774
    %3296 = vmatprep.subr.mxu0 %v783
    %3297 = vmatpush1.msra.mxu0 %v782
    %3298 = vmatprep.subr.mxu0 %v791
    %3299 = vmatpush1.msra.mxu0 %v790
    %3300 = vmatprep.subr.mxu0 %v799
    %3301 = vmatpush1.msra.mxu0 %v798
    %3302 = vmatprep.subr.mxu0 %v807
    %3303 = vmatpush1.msra.mxu0 %v806
    %3304 = vmatprep.subr.mxu0 %v815
    %3305 = vmatpush1.msra.mxu0 %v814
    %3306 = vmatprep.subr.mxu0 %v823
    %3307 = vmatpush1.msra.mxu0 %v822
    %3308 = vmatprep.subr.mxu0 %v831
    %3309 = vmatpush1.msra.mxu0 %v830
    %3310 = vmatprep.subr.mxu0 %v839
    %3311 = vmatpush1.msra.mxu0 %v838
    %3312 = vmatprep.subr.mxu0 %v847
    %3313 = vmatpush1.msra.mxu0 %v846
    %3314 = vmatprep.mubr.f32.mxu0 %v3105
    %3315 = vmatmul.mubr.f32.gmra.mrb[0].mxu0 %v3104
    %v3316 = vpop.f32.mrb[0].mxu0
    %v3317 = vadd.f32 0.0, %v3316
    %v3318 = vpop.f32.mrb[0].mxu0
    %v3319 = vadd.f32 0.0, %v3318
    %3320 = vdwg.mxu0
    %3321 = vmatprep.subr.mxu0 %v601
    %3322 = vmatpush1.msra.mxu0 %v600
    %3323 = vmatprep.subr.mxu0 %v609
    %3324 = vmatpush1.msra.mxu0 %v608
    %3325 = vmatprep.subr.mxu0 %v617
    %3326 = vmatpush1.msra.mxu0 %v616
    %3327 = vmatprep.subr.mxu0 %v625
    %3328 = vmatpush1.msra.mxu0 %v624
    %3329 = vmatprep.subr.mxu0 %v633
    %3330 = vmatpush1.msra.mxu0 %v632
    %3331 = vmatprep.subr.mxu0 %v641
    %3332 = vmatpush1.msra.mxu0 %v640
    %3333 = vmatprep.subr.mxu0 %v649
    %3334 = vmatpush1.msra.mxu0 %v648
    %3335 = vmatprep.subr.mxu0 %v657
    %3336 = vmatpush1.msra.mxu0 %v656
    %3337 = vmatprep.subr.mxu0 %v665
    %3338 = vmatpush1.msra.mxu0 %v664
    %3339 = vmatprep.subr.mxu0 %v673
    %3340 = vmatpush1.msra.mxu0 %v672
    %3341 = vmatprep.subr.mxu0 %v681
    %3342 = vmatpush1.msra.mxu0 %v680
    %3343 = vmatprep.subr.mxu0 %v689
    %3344 = vmatpush1.msra.mxu0 %v688
    %3345 = vmatprep.subr.mxu0 %v697
    %3346 = vmatpush1.msra.mxu0 %v696
    %3347 = vmatprep.subr.mxu0 %v705
    %3348 = vmatpush1.msra.mxu0 %v704
    %3349 = vmatprep.subr.mxu0 %v713
    %3350 = vmatpush1.msra.mxu0 %v712
    %3351 = vmatprep.subr.mxu0 %v721
    %3352 = vmatpush1.msra.mxu0 %v720
    %3353 = vmatprep.subr.mxu0 %v729
    %3354 = vmatpush1.msra.mxu0 %v728
    %3355 = vmatprep.subr.mxu0 %v737
    %3356 = vmatpush1.msra.mxu0 %v736
    %3357 = vmatprep.subr.mxu0 %v745
    %3358 = vmatpush1.msra.mxu0 %v744
    %3359 = vmatprep.subr.mxu0 %v753
    %3360 = vmatpush1.msra.mxu0 %v752
    %3361 = vmatprep.subr.mxu0 %v761
    %3362 = vmatpush1.msra.mxu0 %v760
    %3363 = vmatprep.subr.mxu0 %v769
    %3364 = vmatpush1.msra.mxu0 %v768
    %3365 = vmatprep.subr.mxu0 %v777
    %3366 = vmatpush1.msra.mxu0 %v776
    %3367 = vmatprep.subr.mxu0 %v785
    %3368 = vmatpush1.msra.mxu0 %v784
    %3369 = vmatprep.subr.mxu0 %v793
    %3370 = vmatpush1.msra.mxu0 %v792
    %3371 = vmatprep.subr.mxu0 %v801
    %3372 = vmatpush1.msra.mxu0 %v800
    %3373 = vmatprep.subr.mxu0 %v809
    %3374 = vmatpush1.msra.mxu0 %v808
    %3375 = vmatprep.subr.mxu0 %v817
    %3376 = vmatpush1.msra.mxu0 %v816
    %3377 = vmatprep.subr.mxu0 %v825
    %3378 = vmatpush1.msra.mxu0 %v824
    %3379 = vmatprep.subr.mxu0 %v833
    %3380 = vmatpush1.msra.mxu0 %v832
    %3381 = vmatprep.subr.mxu0 %v841
    %3382 = vmatpush1.msra.mxu0 %v840
    %3383 = vmatprep.subr.mxu0 %v849
    %3384 = vmatpush1.msra.mxu0 %v848
    %3385 = vmatprep.mubr.f32.mxu0 %v3105
    %3386 = vmatmul.mubr.f32.gmra.mrb[0].mxu0 %v3104
    %v3387 = vpop.f32.mrb[0].mxu0
    %v3388 = vadd.f32 0.0, %v3387
    %v3389 = vpop.f32.mrb[0].mxu0
    %v3390 = vadd.f32 0.0, %v3389
    %3391 = vdwg.mxu0
    %v3400 = vrot.slane %v3175, 4
    %v3401 = vrot.slane %v3177, 4
    %v3402 = vrot.slane %v3246, 4
    %v3403 = vrot.slane %v3248, 4
    %v3404 = vrot.slane %v3317, 4
    %v3405 = vrot.slane %v3319, 4
    %v3406 = vrot.slane %v3388, 4
    %v3407 = vrot.slane %v3390, 4
    %v3416 = vadd.f32 %v3094, %v3400
    %v3417 = vadd.f32 %v3095, %v3401
    %v3418 = vadd.f32 %v3096, %v3402
    %v3419 = vadd.f32 %v3097, %v3403
    %v3420 = vadd.f32 %v3098, %v3404
    %v3421 = vadd.f32 %v3099, %v3405
    %v3422 = vadd.f32 %v3100, %v3406
    %v3423 = vadd.f32 %v3101, %v3407
    %v3424 = vxor.u32 %v3416, 2147483648
    %v3425 = vxor.u32 %v3417, 2147483648
    %v3426 = vxor.u32 %v3418, 2147483648
    %v3427 = vxor.u32 %v3419, 2147483648
    %v3428 = vxor.u32 %v3420, 2147483648
    %v3429 = vxor.u32 %v3421, 2147483648
    %v3430 = vmul.f32 %v3424, 1.442695
    %v3431 = vpow.pop %v3430
    %v3432 = vmul.f32 %v3425, 1.442695
    %v3433 = vpow.pop %v3432
    %v3434 = vmul.f32 %v3426, 1.442695
    %v3435 = vpow.pop %v3434
    %v3436 = vmul.f32 %v3427, 1.442695
    %v3437 = vpow.pop %v3436
    %v3438 = vmul.f32 %v3428, 1.442695
    %v3439 = vpow.pop %v3438
    %v3440 = vmul.f32 %v3429, 1.442695
    %v3441 = vpow.pop %v3440
    %v3442 = vadd.f32 %v3431, 1.0
    %v3443 = vadd.f32 %v3433, 1.0
    %v3444 = vadd.f32 %v3435, 1.0
    %v3445 = vadd.f32 %v3437, 1.0
    %v3446 = vadd.f32 %v3439, 1.0
    %v3447 = vadd.f32 %v3441, 1.0
    %v3448 = vrcp.pop %v3442
    %v3449 = vmul.f32 1.0, %v3448
    %v3450 = vrcp.pop %v3443
    %v3451 = vmul.f32 1.0, %v3450
    %v3452 = vrcp.pop %v3444
    %v3453 = vmul.f32 1.0, %v3452
    %v3454 = vrcp.pop %v3445
    %v3455 = vmul.f32 1.0, %v3454
    %v3456 = vrcp.pop %v3446
    %v3457 = vmul.f32 1.0, %v3456
    %v3458 = vrcp.pop %v3447
    %v3459 = vmul.f32 1.0, %v3458
    %v3460 = vtanh.pop %v3422
    %v3461 = vtanh.pop %v3423
    %v3464 = vrot.slane %v3086, 6
    %v3465 = vrot.slane %v3087, 6
    %v3468 = vmul.f32 %v3453, %v3464
    %v3469 = vmul.f32 %v3455, %v3465
    %v3470 = vmul.f32 %v3449, %v3460
    %v3471 = vmul.f32 %v3451, %v3461
    %v3472 = vadd.f32 %v3468, %v3470
    %v3473 = vadd.f32 %v3469, %v3471
    %v3474 = vtanh.pop %v3472
    %v3475 = vtanh.pop %v3473
    %v3476 = vmul.f32 %v3457, %v3474
    %v3477 = vmul.f32 %v3459, %v3475
    %3478 = vst [vmem:[#allocation3 + $0x10] sm:$0x30] %v3476
    %3479 = vst [vmem:[#allocation3 + $0x18] sm:$0x30] %v3477
    %v3480 = vld [vmem:[#allocation2 + $0x40] sm:$0xc0]
    %v3481 = vld [vmem:[#allocation2 + $0x48] sm:$0xc0]
    %v3482 = vld [vmem:[#allocation2 + $0x50] sm:$0xc0]
    %v3483 = vld [vmem:[#allocation2 + $0x58] sm:$0xc0]
    %v3484 = vld [vmem:[#allocation2 + $0x60] sm:$0xc0]
    %v3485 = vld [vmem:[#allocation2 + $0x68] sm:$0xc0]
    %v3486 = vld [vmem:[#allocation2 + $0x70] sm:$0xc0]
    %v3487 = vld [vmem:[#allocation2 + $0x78] sm:$0xc0]
    %v3490 = vrot.slane %v3476, 4
    %v3491 = vrot.slane %v3477, 4
    %3494 = vmatprep.subr.mxu0 %v595
    %3495 = vmatpush1.msra.mxu0 %v594
    %3496 = vmatprep.subr.mxu0 %v603
    %3497 = vmatpush1.msra.mxu0 %v602
    %3498 = vmatprep.subr.mxu0 %v611
    %3499 = vmatpush1.msra.mxu0 %v610
    %3500 = vmatprep.subr.mxu0 %v619
    %3501 = vmatpush1.msra.mxu0 %v618
    %3502 = vmatprep.subr.mxu0 %v627
    %3503 = vmatpush1.msra.mxu0 %v626
    %3504 = vmatprep.subr.mxu0 %v635
    %3505 = vmatpush1.msra.mxu0 %v634
    %3506 = vmatprep.subr.mxu0 %v643
    %3507 = vmatpush1.msra.mxu0 %v642
    %3508 = vmatprep.subr.mxu0 %v651
    %3509 = vmatpush1.msra.mxu0 %v650
    %3510 = vmatprep.subr.mxu0 %v659
    %3511 = vmatpush1.msra.mxu0 %v658
    %3512 = vmatprep.subr.mxu0 %v667
    %3513 = vmatpush1.msra.mxu0 %v666
    %3514 = vmatprep.subr.mxu0 %v675
    %3515 = vmatpush1.msra.mxu0 %v674
    %3516 = vmatprep.subr.mxu0 %v683
    %3517 = vmatpush1.msra.mxu0 %v682
    %3518 = vmatprep.subr.mxu0 %v691
    %3519 = vmatpush1.msra.mxu0 %v690
    %3520 = vmatprep.subr.mxu0 %v699
    %3521 = vmatpush1.msra.mxu0 %v698
    %3522 = vmatprep.subr.mxu0 %v707
    %3523 = vmatpush1.msra.mxu0 %v706
    %3524 = vmatprep.subr.mxu0 %v715
    %3525 = vmatpush1.msra.mxu0 %v714
    %3526 = vmatprep.subr.mxu0 %v723
    %3527 = vmatpush1.msra.mxu0 %v722
    %3528 = vmatprep.subr.mxu0 %v731
    %3529 = vmatpush1.msra.mxu0 %v730
    %3530 = vmatprep.subr.mxu0 %v739
    %3531 = vmatpush1.msra.mxu0 %v738
    %3532 = vmatprep.subr.mxu0 %v747
    %3533 = vmatpush1.msra.mxu0 %v746
    %3534 = vmatprep.subr.mxu0 %v755
    %3535 = vmatpush1.msra.mxu0 %v754
    %3536 = vmatprep.subr.mxu0 %v763
    %3537 = vmatpush1.msra.mxu0 %v762
    %3538 = vmatprep.subr.mxu0 %v771
    %3539 = vmatpush1.msra.mxu0 %v770
    %3540 = vmatprep.subr.mxu0 %v779
    %3541 = vmatpush1.msra.mxu0 %v778
    %3542 = vmatprep.subr.mxu0 %v787
    %3543 = vmatpush1.msra.mxu0 %v786
    %3544 = vmatprep.subr.mxu0 %v795
    %3545 = vmatpush1.msra.mxu0 %v794
    %3546 = vmatprep.subr.mxu0 %v803
    %3547 = vmatpush1.msra.mxu0 %v802
    %3548 = vmatprep.subr.mxu0 %v811
    %3549 = vmatpush1.msra.mxu0 %v810
    %3550 = vmatprep.subr.mxu0 %v819
    %3551 = vmatpush1.msra.mxu0 %v818
    %3552 = vmatprep.subr.mxu0 %v827
    %3553 = vmatpush1.msra.mxu0 %v826
    %3554 = vmatprep.subr.mxu0 %v835
    %3555 = vmatpush1.msra.mxu0 %v834
    %3556 = vmatprep.subr.mxu0 %v843
    %3557 = vmatpush1.msra.mxu0 %v842
    %3558 = vmatprep.mubr.f32.mxu0 %v3491
    %3559 = vmatmul.mubr.f32.gmra.mrb[0].mxu0 %v3490
    %v3560 = vpop.f32.mrb[0].mxu0
    %v3561 = vadd.f32 0.0, %v3560
    %v3562 = vpop.f32.mrb[0].mxu0
    %v3563 = vadd.f32 0.0, %v3562
    %3564 = vdwg.mxu0
    %3565 = vmatprep.subr.mxu0 %v597
    %3566 = vmatpush1.msra.mxu0 %v596
    %3567 = vmatprep.subr.mxu0 %v605
    %3568 = vmatpush1.msra.mxu0 %v604
    %3569 = vmatprep.subr.mxu0 %v613
    %3570 = vmatpush1.msra.mxu0 %v612
    %3571 = vmatprep.subr.mxu0 %v621
    %3572 = vmatpush1.msra.mxu0 %v620
    %3573 = vmatprep.subr.mxu0 %v629
    %3574 = vmatpush1.msra.mxu0 %v628
    %3575 = vmatprep.subr.mxu0 %v637
    %3576 = vmatpush1.msra.mxu0 %v636
    %3577 = vmatprep.subr.mxu0 %v645
    %3578 = vmatpush1.msra.mxu0 %v644
    %3579 = vmatprep.subr.mxu0 %v653
    %3580 = vmatpush1.msra.mxu0 %v652
    %3581 = vmatprep.subr.mxu0 %v661
    %3582 = vmatpush1.msra.mxu0 %v660
    %3583 = vmatprep.subr.mxu0 %v669
    %3584 = vmatpush1.msra.mxu0 %v668
    %3585 = vmatprep.subr.mxu0 %v677
    %3586 = vmatpush1.msra.mxu0 %v676
    %3587 = vmatprep.subr.mxu0 %v685
    %3588 = vmatpush1.msra.mxu0 %v684
    %3589 = vmatprep.subr.mxu0 %v693
    %3590 = vmatpush1.msra.mxu0 %v692
    %3591 = vmatprep.subr.mxu0 %v701
    %3592 = vmatpush1.msra.mxu0 %v700
    %3593 = vmatprep.subr.mxu0 %v709
    %3594 = vmatpush1.msra.mxu0 %v708
    %3595 = vmatprep.subr.mxu0 %v717
    %3596 = vmatpush1.msra.mxu0 %v716
    %3597 = vmatprep.subr.mxu0 %v725
    %3598 = vmatpush1.msra.mxu0 %v724
    %3599 = vmatprep.subr.mxu0 %v733
    %3600 = vmatpush1.msra.mxu0 %v732
    %3601 = vmatprep.subr.mxu0 %v741
    %3602 = vmatpush1.msra.mxu0 %v740
    %3603 = vmatprep.subr.mxu0 %v749
    %3604 = vmatpush1.msra.mxu0 %v748
    %3605 = vmatprep.subr.mxu0 %v757
    %3606 = vmatpush1.msra.mxu0 %v756
    %3607 = vmatprep.subr.mxu0 %v765
    %3608 = vmatpush1.msra.mxu0 %v764
    %3609 = vmatprep.subr.mxu0 %v773
    %3610 = vmatpush1.msra.mxu0 %v772
    %3611 = vmatprep.subr.mxu0 %v781
    %3612 = vmatpush1.msra.mxu0 %v780
    %3613 = vmatprep.subr.mxu0 %v789
    %3614 = vmatpush1.msra.mxu0 %v788
    %3615 = vmatprep.subr.mxu0 %v797
    %3616 = vmatpush1.msra.mxu0 %v796
    %3617 = vmatprep.subr.mxu0 %v805
    %3618 = vmatpush1.msra.mxu0 %v804
    %3619 = vmatprep.subr.mxu0 %v813
    %3620 = vmatpush1.msra.mxu0 %v812
    %3621 = vmatprep.subr.mxu0 %v821
    %3622 = vmatpush1.msra.mxu0 %v820
    %3623 = vmatprep.subr.mxu0 %v829
    %3624 = vmatpush1.msra.mxu0 %v828
    %3625 = vmatprep.subr.mxu0 %v837
    %3626 = vmatpush1.msra.mxu0 %v836
    %3627 = vmatprep.subr.mxu0 %v845
    %3628 = vmatpush1.msra.mxu0 %v844
    %3629 = vmatprep.mubr.f32.mxu0 %v3491
    %3630 = vmatmul.mubr.f32.gmra.mrb[0].mxu0 %v3490
    %v3631 = vpop.f32.mrb[0].mxu0
    %v3632 = vadd.f32 0.0, %v3631
    %v3633 = vpop.f32.mrb[0].mxu0
    %v3634 = vadd.f32 0.0, %v3633
    %3635 = vdwg.mxu0
    %3636 = vmatprep.subr.mxu0 %v599
    %3637 = vmatpush1.msra.mxu0 %v598
    %3638 = vmatprep.subr.mxu0 %v607
    %3639 = vmatpush1.msra.mxu0 %v606
    %3640 = vmatprep.subr.mxu0 %v615
    %3641 = vmatpush1.msra.mxu0 %v614
    %3642 = vmatprep.subr.mxu0 %v623
    %3643 = vmatpush1.msra.mxu0 %v622
    %3644 = vmatprep.subr.mxu0 %v631
    %3645 = vmatpush1.msra.mxu0 %v630
    %3646 = vmatprep.subr.mxu0 %v639
    %3647 = vmatpush1.msra.mxu0 %v638
    %3648 = vmatprep.subr.mxu0 %v647
    %3649 = vmatpush1.msra.mxu0 %v646
    %3650 = vmatprep.subr.mxu0 %v655
    %3651 = vmatpush1.msra.mxu0 %v654
    %3652 = vmatprep.subr.mxu0 %v663
    %3653 = vmatpush1.msra.mxu0 %v662
    %3654 = vmatprep.subr.mxu0 %v671
    %3655 = vmatpush1.msra.mxu0 %v670
    %3656 = vmatprep.subr.mxu0 %v679
    %3657 = vmatpush1.msra.mxu0 %v678
    %3658 = vmatprep.subr.mxu0 %v687
    %3659 = vmatpush1.msra.mxu0 %v686
    %3660 = vmatprep.subr.mxu0 %v695
    %3661 = vmatpush1.msra.mxu0 %v694
    %3662 = vmatprep.subr.mxu0 %v703
    %3663 = vmatpush1.msra.mxu0 %v702
    %3664 = vmatprep.subr.mxu0 %v711
    %3665 = vmatpush1.msra.mxu0 %v710
    %3666 = vmatprep.subr.mxu0 %v719
    %3667 = vmatpush1.msra.mxu0 %v718
    %3668 = vmatprep.subr.mxu0 %v727
    %3669 = vmatpush1.msra.mxu0 %v726
    %3670 = vmatprep.subr.mxu0 %v735
    %3671 = vmatpush1.msra.mxu0 %v734
    %3672 = vmatprep.subr.mxu0 %v743
    %3673 = vmatpush1.msra.mxu0 %v742
    %3674 = vmatprep.subr.mxu0 %v751
    %3675 = vmatpush1.msra.mxu0 %v750
    %3676 = vmatprep.subr.mxu0 %v759
    %3677 = vmatpush1.msra.mxu0 %v758
    %3678 = vmatprep.subr.mxu0 %v767
    %3679 = vmatpush1.msra.mxu0 %v766
    %3680 = vmatprep.subr.mxu0 %v775
    %3681 = vmatpush1.msra.mxu0 %v774
    %3682 = vmatprep.subr.mxu0 %v783
    %3683 = vmatpush1.msra.mxu0 %v782
    %3684 = vmatprep.subr.mxu0 %v791
    %3685 = vmatpush1.msra.mxu0 %v790
    %3686 = vmatprep.subr.mxu0 %v799
    %3687 = vmatpush1.msra.mxu0 %v798
    %3688 = vmatprep.subr.mxu0 %v807
    %3689 = vmatpush1.msra.mxu0 %v806
    %3690 = vmatprep.subr.mxu0 %v815
    %3691 = vmatpush1.msra.mxu0 %v814
    %3692 = vmatprep.subr.mxu0 %v823
    %3693 = vmatpush1.msra.mxu0 %v822
    %3694 = vmatprep.subr.mxu0 %v831
    %3695 = vmatpush1.msra.mxu0 %v830
    %3696 = vmatprep.subr.mxu0 %v839
    %3697 = vmatpush1.msra.mxu0 %v838
    %3698 = vmatprep.subr.mxu0 %v847
    %3699 = vmatpush1.msra.mxu0 %v846
    %3700 = vmatprep.mubr.f32.mxu0 %v3491
    %3701 = vmatmul.mubr.f32.gmra.mrb[0].mxu0 %v3490
    %v3702 = vpop.f32.mrb[0].mxu0
    %v3703 = vadd.f32 0.0, %v3702
    %v3704 = vpop.f32.mrb[0].mxu0
    %v3705 = vadd.f32 0.0, %v3704
    %3706 = vdwg.mxu0
    %3707 = vmatprep.subr.mxu0 %v601
    %3708 = vmatpush1.msra.mxu0 %v600
    %3709 = vmatprep.subr.mxu0 %v609
    %3710 = vmatpush1.msra.mxu0 %v608
    %3711 = vmatprep.subr.mxu0 %v617
    %3712 = vmatpush1.msra.mxu0 %v616
    %3713 = vmatprep.subr.mxu0 %v625
    %3714 = vmatpush1.msra.mxu0 %v624
    %3715 = vmatprep.subr.mxu0 %v633
    %3716 = vmatpush1.msra.mxu0 %v632
    %3717 = vmatprep.subr.mxu0 %v641
    %3718 = vmatpush1.msra.mxu0 %v640
    %3719 = vmatprep.subr.mxu0 %v649
    %3720 = vmatpush1.msra.mxu0 %v648
    %3721 = vmatprep.subr.mxu0 %v657
    %3722 = vmatpush1.msra.mxu0 %v656
    %3723 = vmatprep.subr.mxu0 %v665
    %3724 = vmatpush1.msra.mxu0 %v664
    %3725 = vmatprep.subr.mxu0 %v673
    %3726 = vmatpush1.msra.mxu0 %v672
    %3727 = vmatprep.subr.mxu0 %v681
    %3728 = vmatpush1.msra.mxu0 %v680
    %3729 = vmatprep.subr.mxu0 %v689
    %3730 = vmatpush1.msra.mxu0 %v688
    %3731 = vmatprep.subr.mxu0 %v697
    %3732 = vmatpush1.msra.mxu0 %v696
    %3733 = vmatprep.subr.mxu0 %v705
    %3734 = vmatpush1.msra.mxu0 %v704
    %3735 = vmatprep.subr.mxu0 %v713
    %3736 = vmatpush1.msra.mxu0 %v712
    %3737 = vmatprep.subr.mxu0 %v721
    %3738 = vmatpush1.msra.mxu0 %v720
    %3739 = vmatprep.subr.mxu0 %v729
    %3740 = vmatpush1.msra.mxu0 %v728
    %3741 = vmatprep.subr.mxu0 %v737
    %3742 = vmatpush1.msra.mxu0 %v736
    %3743 = vmatprep.subr.mxu0 %v745
    %3744 = vmatpush1.msra.mxu0 %v744
    %3745 = vmatprep.subr.mxu0 %v753
    %3746 = vmatpush1.msra.mxu0 %v752
    %3747 = vmatprep.subr.mxu0 %v761
    %3748 = vmatpush1.msra.mxu0 %v760
    %3749 = vmatprep.subr.mxu0 %v769
    %3750 = vmatpush1.msra.mxu0 %v768
    %3751 = vmatprep.subr.mxu0 %v777
    %3752 = vmatpush1.msra.mxu0 %v776
    %3753 = vmatprep.subr.mxu0 %v785
    %3754 = vmatpush1.msra.mxu0 %v784
    %3755 = vmatprep.subr.mxu0 %v793
    %3756 = vmatpush1.msra.mxu0 %v792
    %3757 = vmatprep.subr.mxu0 %v801
    %3758 = vmatpush1.msra.mxu0 %v800
    %3759 = vmatprep.subr.mxu0 %v809
    %3760 = vmatpush1.msra.mxu0 %v808
    %3761 = vmatprep.subr.mxu0 %v817
    %3762 = vmatpush1.msra.mxu0 %v816
    %3763 = vmatprep.subr.mxu0 %v825
    %3764 = vmatpush1.msra.mxu0 %v824
    %3765 = vmatprep.subr.mxu0 %v833
    %3766 = vmatpush1.msra.mxu0 %v832
    %3767 = vmatprep.subr.mxu0 %v841
    %3768 = vmatpush1.msra.mxu0 %v840
    %3769 = vmatprep.subr.mxu0 %v849
    %3770 = vmatpush1.msra.mxu0 %v848
    %3771 = vmatprep.mubr.f32.mxu0 %v3491
    %3772 = vmatmul.mubr.f32.gmra.mrb[0].mxu0 %v3490
    %v3773 = vpop.f32.mrb[0].mxu0
    %v3774 = vadd.f32 0.0, %v3773
    %v3775 = vpop.f32.mrb[0].mxu0
    %v3776 = vadd.f32 0.0, %v3775
    %3777 = vdwg.mxu0
    %v3786 = vrot.slane %v3561, 2
    %v3787 = vrot.slane %v3563, 2
    %v3788 = vrot.slane %v3632, 2
    %v3789 = vrot.slane %v3634, 2
    %v3790 = vrot.slane %v3703, 2
    %v3791 = vrot.slane %v3705, 2
    %v3792 = vrot.slane %v3774, 2
    %v3793 = vrot.slane %v3776, 2
    %v3802 = vadd.f32 %v3480, %v3786
    %v3803 = vadd.f32 %v3481, %v3787
    %v3804 = vadd.f32 %v3482, %v3788
    %v3805 = vadd.f32 %v3483, %v3789
    %v3806 = vadd.f32 %v3484, %v3790
    %v3807 = vadd.f32 %v3485, %v3791
    %v3808 = vadd.f32 %v3486, %v3792
    %v3809 = vadd.f32 %v3487, %v3793
    %v3810 = vxor.u32 %v3802, 2147483648
    %v3811 = vxor.u32 %v3803, 2147483648
    %v3812 = vxor.u32 %v3804, 2147483648
    %v3813 = vxor.u32 %v3805, 2147483648
    %v3814 = vxor.u32 %v3806, 2147483648
    %v3815 = vxor.u32 %v3807, 2147483648
    %v3816 = vmul.f32 %v3810, 1.442695
    %v3817 = vpow.pop %v3816
    %v3818 = vmul.f32 %v3811, 1.442695
    %v3819 = vpow.pop %v3818
    %v3820 = vmul.f32 %v3812, 1.442695
    %v3821 = vpow.pop %v3820
    %v3822 = vmul.f32 %v3813, 1.442695
    %v3823 = vpow.pop %v3822
    %v3824 = vmul.f32 %v3814, 1.442695
    %v3825 = vpow.pop %v3824
    %v3826 = vmul.f32 %v3815, 1.442695
    %v3827 = vpow.pop %v3826
    %v3828 = vadd.f32 %v3817, 1.0
    %v3829 = vadd.f32 %v3819, 1.0
    %v3830 = vadd.f32 %v3821, 1.0
    %v3831 = vadd.f32 %v3823, 1.0
    %v3832 = vadd.f32 %v3825, 1.0
    %v3833 = vadd.f32 %v3827, 1.0
    %v3834 = vrcp.pop %v3828
    %v3835 = vmul.f32 1.0, %v3834
    %v3836 = vrcp.pop %v3829
    %v3837 = vmul.f32 1.0, %v3836
    %v3838 = vrcp.pop %v3830
    %v3839 = vmul.f32 1.0, %v3838
    %v3840 = vrcp.pop %v3831
    %v3841 = vmul.f32 1.0, %v3840
    %v3842 = vrcp.pop %v3832
    %v3843 = vmul.f32 1.0, %v3842
    %v3844 = vrcp.pop %v3833
    %v3845 = vmul.f32 1.0, %v3844
    %v3846 = vtanh.pop %v3808
    %v3847 = vtanh.pop %v3809
    %v3850 = vrot.slane %v3472, 6
    %v3851 = vrot.slane %v3473, 6
    %v3854 = vmul.f32 %v3839, %v3850
    %v3855 = vmul.f32 %v3841, %v3851
    %v3856 = vmul.f32 %v3835, %v3846
    %v3857 = vmul.f32 %v3837, %v3847
    %v3858 = vadd.f32 %v3854, %v3856
    %v3859 = vadd.f32 %v3855, %v3857
    %v3860 = vtanh.pop %v3858
    %v3861 = vtanh.pop %v3859
    %v3862 = vmul.f32 %v3843, %v3860
    %v3863 = vmul.f32 %v3845, %v3861
    %3864 = vst [vmem:[#allocation3 + $0x10] sm:$0xc0] %v3862
    %3865 = vst [vmem:[#allocation3 + $0x18] sm:$0xc0] %v3863
    %v3868 = vcombine.high %v3862, %v3863
    %v3870 = vunpack.c.l.s4 1983009808
    %v3871 = vunpack.c.0.s8 %v3870
    %v3872 = vlaneseq
    %v3873 = vshrl.u32 %v3872, 7
    %v3874 = vsub.s32 %v3871, %v3873
    %v3875 = vrot.slane %v3868, %v3874
    %v3876 = vcombine.high %v3875, %v3875
    %3878 = vst [vmem:[#allocation13] sm:$0xf] %v3876
    %v3881 = vcombine.high %v3858, %v3859
    %v3883 = vunpack.c.l.s4 1983009808
    %v3884 = vunpack.c.0.s8 %v3883
    %v3885 = vlaneseq
    %v3886 = vshrl.u32 %v3885, 7
    %v3887 = vsub.s32 %v3884, %v3886
    %v3888 = vrot.slane %v3881, %v3887
    %v3889 = vcombine.high %v3888, %v3888
    %3891 = vst [vmem:[#allocation14] sm:$0xf] %v3889
    %v3892 = vld [vmem:[#allocation3] sm:$0xff]
    %v3893 = vld [vmem:[#allocation3 + $0x8] sm:$0xff]
    %v3894 = vld [vmem:[#allocation3 + $0x10] sm:$0xff]
    %v3895 = vld [vmem:[#allocation3 + $0x18] sm:$0xff]
    %v3896 = vld [vmem:[#allocation10] sm:$0xff]
    %v3897 = vld [vmem:[#allocation10 + $0x8] sm:$0xff]
    %v3898 = vld [vmem:[#allocation10 + $0x10] sm:$0xff]
    %v3899 = vld [vmem:[#allocation10 + $0x18] sm:$0xff]
    %v3900 = vld [vmem:[#allocation10 + $0x20] sm:$0xff]
    %v3901 = vld [vmem:[#allocation10 + $0x28] sm:$0xff]
    %v3902 = vld [vmem:[#allocation10 + $0x30] sm:$0xff]
    %v3903 = vld [vmem:[#allocation10 + $0x38] sm:$0xff]
    %v3904 = vld [vmem:[#allocation10 + $0x40] sm:$0xff]
    %v3905 = vld [vmem:[#allocation10 + $0x48] sm:$0xff]
    %v3906 = vld [vmem:[#allocation10 + $0x50] sm:$0xff]
    %v3907 = vld [vmem:[#allocation10 + $0x58] sm:$0xff]
    %v3908 = vld [vmem:[#allocation10 + $0x60] sm:$0xff]
    %v3909 = vld [vmem:[#allocation10 + $0x68] sm:$0xff]
    %v3910 = vld [vmem:[#allocation10 + $0x70] sm:$0xff]
    %v3911 = vld [vmem:[#allocation10 + $0x78] sm:$0xff]
    %v3912 = vld [vmem:[#allocation10 + $0x80] sm:$0xff]
    %v3913 = vld [vmem:[#allocation10 + $0x88] sm:$0xff]
    %v3914 = vld [vmem:[#allocation10 + $0x90] sm:$0xff]
    %v3915 = vld [vmem:[#allocation10 + $0x98] sm:$0xff]
    %v3916 = vld [vmem:[#allocation10 + $0xa0] sm:$0xff]
    %v3917 = vld [vmem:[#allocation10 + $0xa8] sm:$0xff]
    %v3918 = vld [vmem:[#allocation10 + $0xb0] sm:$0xff]
    %v3919 = vld [vmem:[#allocation10 + $0xb8] sm:$0xff]
    %v3920 = vld [vmem:[#allocation10 + $0xc0] sm:$0xff]
    %v3921 = vld [vmem:[#allocation10 + $0xc8] sm:$0xff]
    %v3922 = vld [vmem:[#allocation10 + $0xd0] sm:$0xff]
    %v3923 = vld [vmem:[#allocation10 + $0xd8] sm:$0xff]
    %v3924 = vld [vmem:[#allocation10 + $0xe0] sm:$0xff]
    %v3925 = vld [vmem:[#allocation10 + $0xe8] sm:$0xff]
    %v3926 = vld [vmem:[#allocation10 + $0xf0] sm:$0xff]
    %v3927 = vld [vmem:[#allocation10 + $0xf8] sm:$0xff]
    %v3928 = vld [vmem:[#allocation10 + $0x100] sm:$0xff]
    %v3929 = vld [vmem:[#allocation10 + $0x108] sm:$0xff]
    %v3930 = vld [vmem:[#allocation10 + $0x110] sm:$0xff]
    %v3931 = vld [vmem:[#allocation10 + $0x118] sm:$0xff]
    %v3932 = vld [vmem:[#allocation10 + $0x120] sm:$0xff]
    %v3933 = vld [vmem:[#allocation10 + $0x128] sm:$0xff]
    %v3934 = vld [vmem:[#allocation10 + $0x130] sm:$0xff]
    %v3935 = vld [vmem:[#allocation10 + $0x138] sm:$0xff]
    %v3936 = vld [vmem:[#allocation10 + $0x140] sm:$0xff]
    %v3937 = vld [vmem:[#allocation10 + $0x148] sm:$0xff]
    %v3938 = vld [vmem:[#allocation10 + $0x150] sm:$0xff]
    %v3939 = vld [vmem:[#allocation10 + $0x158] sm:$0xff]
    %v3940 = vld [vmem:[#allocation10 + $0x160] sm:$0xff]
    %v3941 = vld [vmem:[#allocation10 + $0x168] sm:$0xff]
    %v3942 = vld [vmem:[#allocation10 + $0x170] sm:$0xff]
    %v3943 = vld [vmem:[#allocation10 + $0x178] sm:$0xff]
    %v3944 = vld [vmem:[#allocation10 + $0x180] sm:$0xff]
    %v3945 = vld [vmem:[#allocation10 + $0x188] sm:$0xff]
    %v3946 = vld [vmem:[#allocation10 + $0x190] sm:$0xff]
    %v3947 = vld [vmem:[#allocation10 + $0x198] sm:$0xff]
    %v3948 = vld [vmem:[#allocation10 + $0x1a0] sm:$0xff]
    %v3949 = vld [vmem:[#allocation10 + $0x1a8] sm:$0xff]
    %v3950 = vld [vmem:[#allocation10 + $0x1b0] sm:$0xff]
    %v3951 = vld [vmem:[#allocation10 + $0x1b8] sm:$0xff]
    %v3952 = vld [vmem:[#allocation10 + $0x1c0] sm:$0xff]
    %v3953 = vld [vmem:[#allocation10 + $0x1c8] sm:$0xff]
    %v3954 = vld [vmem:[#allocation10 + $0x1d0] sm:$0xff]
    %v3955 = vld [vmem:[#allocation10 + $0x1d8] sm:$0xff]
    %v3956 = vld [vmem:[#allocation10 + $0x1e0] sm:$0xff]
    %v3957 = vld [vmem:[#allocation10 + $0x1e8] sm:$0xff]
    %v3958 = vld [vmem:[#allocation10 + $0x1f0] sm:$0xff]
    %v3959 = vld [vmem:[#allocation10 + $0x1f8] sm:$0xff]
    %v3960 = vld [vmem:[#allocation10 + $0x200] sm:$0xff]
    %v3961 = vld [vmem:[#allocation10 + $0x208] sm:$0xff]
    %v3962 = vld [vmem:[#allocation10 + $0x210] sm:$0xff]
    %v3963 = vld [vmem:[#allocation10 + $0x218] sm:$0xff]
    %v3964 = vld [vmem:[#allocation10 + $0x220] sm:$0xff]
    %v3965 = vld [vmem:[#allocation10 + $0x228] sm:$0xff]
    %v3966 = vld [vmem:[#allocation10 + $0x230] sm:$0xff]
    %v3967 = vld [vmem:[#allocation10 + $0x238] sm:$0xff]
    %v3968 = vld [vmem:[#allocation10 + $0x240] sm:$0xff]
    %v3969 = vld [vmem:[#allocation10 + $0x248] sm:$0xff]
    %v3970 = vld [vmem:[#allocation10 + $0x250] sm:$0xff]
    %v3971 = vld [vmem:[#allocation10 + $0x258] sm:$0xff]
    %v3972 = vld [vmem:[#allocation10 + $0x260] sm:$0xff]
    %v3973 = vld [vmem:[#allocation10 + $0x268] sm:$0xff]
    %v3974 = vld [vmem:[#allocation10 + $0x270] sm:$0xff]
    %v3975 = vld [vmem:[#allocation10 + $0x278] sm:$0xff]
    %v3976 = vld [vmem:[#allocation10 + $0x280] sm:$0xff]
    %v3977 = vld [vmem:[#allocation10 + $0x288] sm:$0xff]
    %v3978 = vld [vmem:[#allocation10 + $0x290] sm:$0xff]
    %v3979 = vld [vmem:[#allocation10 + $0x298] sm:$0xff]
    %v3980 = vld [vmem:[#allocation10 + $0x2a0] sm:$0xff]
    %v3981 = vld [vmem:[#allocation10 + $0x2a8] sm:$0xff]
    %v3982 = vld [vmem:[#allocation10 + $0x2b0] sm:$0xff]
    %v3983 = vld [vmem:[#allocation10 + $0x2b8] sm:$0xff]
    %v3984 = vld [vmem:[#allocation10 + $0x2c0] sm:$0xff]
    %v3985 = vld [vmem:[#allocation10 + $0x2c8] sm:$0xff]
    %v3986 = vld [vmem:[#allocation10 + $0x2d0] sm:$0xff]
    %v3987 = vld [vmem:[#allocation10 + $0x2d8] sm:$0xff]
    %v3988 = vld [vmem:[#allocation10 + $0x2e0] sm:$0xff]
    %v3989 = vld [vmem:[#allocation10 + $0x2e8] sm:$0xff]
    %v3990 = vld [vmem:[#allocation10 + $0x2f0] sm:$0xff]
    %v3991 = vld [vmem:[#allocation10 + $0x2f8] sm:$0xff]
    %v3992 = vld [vmem:[#allocation10 + $0x300] sm:$0xff]
    %v3993 = vld [vmem:[#allocation10 + $0x308] sm:$0xff]
    %v3994 = vld [vmem:[#allocation10 + $0x310] sm:$0xff]
    %v3995 = vld [vmem:[#allocation10 + $0x318] sm:$0xff]
    %v3996 = vld [vmem:[#allocation10 + $0x320] sm:$0xff]
    %v3997 = vld [vmem:[#allocation10 + $0x328] sm:$0xff]
    %v3998 = vld [vmem:[#allocation10 + $0x330] sm:$0xff]
    %v3999 = vld [vmem:[#allocation10 + $0x338] sm:$0xff]
    %v4000 = vld [vmem:[#allocation10 + $0x340] sm:$0xff]
    %v4001 = vld [vmem:[#allocation10 + $0x348] sm:$0xff]
    %v4002 = vld [vmem:[#allocation10 + $0x350] sm:$0xff]
    %v4003 = vld [vmem:[#allocation10 + $0x358] sm:$0xff]
    %v4004 = vld [vmem:[#allocation10 + $0x360] sm:$0xff]
    %v4005 = vld [vmem:[#allocation10 + $0x368] sm:$0xff]
    %v4006 = vld [vmem:[#allocation10 + $0x370] sm:$0xff]
    %v4007 = vld [vmem:[#allocation10 + $0x378] sm:$0xff]
    %v4008 = vld [vmem:[#allocation10 + $0x380] sm:$0xff]
    %v4009 = vld [vmem:[#allocation10 + $0x388] sm:$0xff]
    %v4010 = vld [vmem:[#allocation10 + $0x390] sm:$0xff]
    %v4011 = vld [vmem:[#allocation10 + $0x398] sm:$0xff]
    %v4012 = vld [vmem:[#allocation10 + $0x3a0] sm:$0xff]
    %v4013 = vld [vmem:[#allocation10 + $0x3a8] sm:$0xff]
    %v4014 = vld [vmem:[#allocation10 + $0x3b0] sm:$0xff]
    %v4015 = vld [vmem:[#allocation10 + $0x3b8] sm:$0xff]
    %v4016 = vld [vmem:[#allocation10 + $0x3c0] sm:$0xff]
    %v4017 = vld [vmem:[#allocation10 + $0x3c8] sm:$0xff]
    %v4018 = vld [vmem:[#allocation10 + $0x3d0] sm:$0xff]
    %v4019 = vld [vmem:[#allocation10 + $0x3d8] sm:$0xff]
    %v4020 = vld [vmem:[#allocation10 + $0x3e0] sm:$0xff]
    %v4021 = vld [vmem:[#allocation10 + $0x3e8] sm:$0xff]
    %v4022 = vld [vmem:[#allocation10 + $0x3f0] sm:$0xff]
    %v4023 = vld [vmem:[#allocation10 + $0x3f8] sm:$0xff]
    %v4024 = vld [vmem:[#allocation10 + $0x400] sm:$0xff]
    %v4025 = vld [vmem:[#allocation10 + $0x408] sm:$0xff]
    %v4026 = vld [vmem:[#allocation10 + $0x410] sm:$0xff]
    %v4027 = vld [vmem:[#allocation10 + $0x418] sm:$0xff]
    %v4028 = vld [vmem:[#allocation10 + $0x420] sm:$0xff]
    %v4029 = vld [vmem:[#allocation10 + $0x428] sm:$0xff]
    %v4030 = vld [vmem:[#allocation10 + $0x430] sm:$0xff]
    %v4031 = vld [vmem:[#allocation10 + $0x438] sm:$0xff]
    %v4032 = vld [vmem:[#allocation10 + $0x440] sm:$0xff]
    %v4033 = vld [vmem:[#allocation10 + $0x448] sm:$0xff]
    %v4034 = vld [vmem:[#allocation10 + $0x450] sm:$0xff]
    %v4035 = vld [vmem:[#allocation10 + $0x458] sm:$0xff]
    %v4036 = vld [vmem:[#allocation10 + $0x460] sm:$0xff]
    %v4037 = vld [vmem:[#allocation10 + $0x468] sm:$0xff]
    %v4038 = vld [vmem:[#allocation10 + $0x470] sm:$0xff]
    %v4039 = vld [vmem:[#allocation10 + $0x478] sm:$0xff]
    %v4040 = vld [vmem:[#allocation10 + $0x480] sm:$0xff]
    %v4041 = vld [vmem:[#allocation10 + $0x488] sm:$0xff]
    %v4042 = vld [vmem:[#allocation10 + $0x490] sm:$0xff]
    %v4043 = vld [vmem:[#allocation10 + $0x498] sm:$0xff]
    %v4044 = vld [vmem:[#allocation10 + $0x4a0] sm:$0xff]
    %v4045 = vld [vmem:[#allocation10 + $0x4a8] sm:$0xff]
    %v4046 = vld [vmem:[#allocation10 + $0x4b0] sm:$0xff]
    %v4047 = vld [vmem:[#allocation10 + $0x4b8] sm:$0xff]
    %v4048 = vld [vmem:[#allocation10 + $0x4c0] sm:$0xff]
    %v4049 = vld [vmem:[#allocation10 + $0x4c8] sm:$0xff]
    %v4050 = vld [vmem:[#allocation10 + $0x4d0] sm:$0xff]
    %v4051 = vld [vmem:[#allocation10 + $0x4d8] sm:$0xff]
    %v4052 = vld [vmem:[#allocation10 + $0x4e0] sm:$0xff]
    %v4053 = vld [vmem:[#allocation10 + $0x4e8] sm:$0xff]
    %v4054 = vld [vmem:[#allocation10 + $0x4f0] sm:$0xff]
    %v4055 = vld [vmem:[#allocation10 + $0x4f8] sm:$0xff]
    %v4056 = vld [vmem:[#allocation10 + $0x500] sm:$0xff]
    %v4057 = vld [vmem:[#allocation10 + $0x508] sm:$0xff]
    %v4058 = vld [vmem:[#allocation10 + $0x510] sm:$0xff]
    %v4059 = vld [vmem:[#allocation10 + $0x518] sm:$0xff]
    %v4060 = vld [vmem:[#allocation10 + $0x520] sm:$0xff]
    %v4061 = vld [vmem:[#allocation10 + $0x528] sm:$0xff]
    %v4062 = vld [vmem:[#allocation10 + $0x530] sm:$0xff]
    %v4063 = vld [vmem:[#allocation10 + $0x538] sm:$0xff]
    %v4064 = vld [vmem:[#allocation10 + $0x540] sm:$0xff]
    %v4065 = vld [vmem:[#allocation10 + $0x548] sm:$0xff]
    %v4066 = vld [vmem:[#allocation10 + $0x550] sm:$0xff]
    %v4067 = vld [vmem:[#allocation10 + $0x558] sm:$0xff]
    %v4068 = vld [vmem:[#allocation10 + $0x560] sm:$0xff]
    %v4069 = vld [vmem:[#allocation10 + $0x568] sm:$0xff]
    %v4070 = vld [vmem:[#allocation10 + $0x570] sm:$0xff]
    %v4071 = vld [vmem:[#allocation10 + $0x578] sm:$0xff]
    %v4072 = vld [vmem:[#allocation10 + $0x580] sm:$0xff]
    %v4073 = vld [vmem:[#allocation10 + $0x588] sm:$0xff]
    %v4074 = vld [vmem:[#allocation10 + $0x590] sm:$0xff]
    %v4075 = vld [vmem:[#allocation10 + $0x598] sm:$0xff]
    %v4076 = vld [vmem:[#allocation10 + $0x5a0] sm:$0xff]
    %v4077 = vld [vmem:[#allocation10 + $0x5a8] sm:$0xff]
    %v4078 = vld [vmem:[#allocation10 + $0x5b0] sm:$0xff]
    %v4079 = vld [vmem:[#allocation10 + $0x5b8] sm:$0xff]
    %v4080 = vld [vmem:[#allocation10 + $0x5c0] sm:$0xff]
    %v4081 = vld [vmem:[#allocation10 + $0x5c8] sm:$0xff]
    %v4082 = vld [vmem:[#allocation10 + $0x5d0] sm:$0xff]
    %v4083 = vld [vmem:[#allocation10 + $0x5d8] sm:$0xff]
    %v4084 = vld [vmem:[#allocation10 + $0x5e0] sm:$0xff]
    %v4085 = vld [vmem:[#allocation10 + $0x5e8] sm:$0xff]
    %v4086 = vld [vmem:[#allocation10 + $0x5f0] sm:$0xff]
    %v4087 = vld [vmem:[#allocation10 + $0x5f8] sm:$0xff]
    %v4088 = vld [vmem:[#allocation10 + $0x600] sm:$0xff]
    %v4089 = vld [vmem:[#allocation10 + $0x608] sm:$0xff]
    %v4090 = vld [vmem:[#allocation10 + $0x610] sm:$0xff]
    %v4091 = vld [vmem:[#allocation10 + $0x618] sm:$0xff]
    %v4092 = vld [vmem:[#allocation10 + $0x620] sm:$0xff]
    %v4093 = vld [vmem:[#allocation10 + $0x628] sm:$0xff]
    %v4094 = vld [vmem:[#allocation10 + $0x630] sm:$0xff]
    %v4095 = vld [vmem:[#allocation10 + $0x638] sm:$0xff]
    %v4096 = vld [vmem:[#allocation10 + $0x640] sm:$0xff]
    %v4097 = vld [vmem:[#allocation10 + $0x648] sm:$0xff]
    %v4098 = vld [vmem:[#allocation10 + $0x650] sm:$0xff]
    %v4099 = vld [vmem:[#allocation10 + $0x658] sm:$0xff]
    %v4100 = vld [vmem:[#allocation10 + $0x660] sm:$0xff]
    %v4101 = vld [vmem:[#allocation10 + $0x668] sm:$0xff]
    %v4102 = vld [vmem:[#allocation10 + $0x670] sm:$0xff]
    %v4103 = vld [vmem:[#allocation10 + $0x678] sm:$0xff]
    %v4104 = vld [vmem:[#allocation10 + $0x680] sm:$0xff]
    %v4105 = vld [vmem:[#allocation10 + $0x688] sm:$0xff]
    %v4106 = vld [vmem:[#allocation10 + $0x690] sm:$0xff]
    %v4107 = vld [vmem:[#allocation10 + $0x698] sm:$0xff]
    %v4108 = vld [vmem:[#allocation10 + $0x6a0] sm:$0xff]
    %v4109 = vld [vmem:[#allocation10 + $0x6a8] sm:$0xff]
    %v4110 = vld [vmem:[#allocation10 + $0x6b0] sm:$0xff]
    %v4111 = vld [vmem:[#allocation10 + $0x6b8] sm:$0xff]
    %v4112 = vld [vmem:[#allocation10 + $0x6c0] sm:$0xff]
    %v4113 = vld [vmem:[#allocation10 + $0x6c8] sm:$0xff]
    %v4114 = vld [vmem:[#allocation10 + $0x6d0] sm:$0xff]
    %v4115 = vld [vmem:[#allocation10 + $0x6d8] sm:$0xff]
    %v4116 = vld [vmem:[#allocation10 + $0x6e0] sm:$0xff]
    %v4117 = vld [vmem:[#allocation10 + $0x6e8] sm:$0xff]
    %v4118 = vld [vmem:[#allocation10 + $0x6f0] sm:$0xff]
    %v4119 = vld [vmem:[#allocation10 + $0x6f8] sm:$0xff]
    %v4120 = vld [vmem:[#allocation10 + $0x700] sm:$0xff]
    %v4121 = vld [vmem:[#allocation10 + $0x708] sm:$0xff]
    %v4122 = vld [vmem:[#allocation10 + $0x710] sm:$0xff]
    %v4123 = vld [vmem:[#allocation10 + $0x718] sm:$0xff]
    %v4124 = vld [vmem:[#allocation10 + $0x720] sm:$0xff]
    %v4125 = vld [vmem:[#allocation10 + $0x728] sm:$0xff]
    %v4126 = vld [vmem:[#allocation10 + $0x730] sm:$0xff]
    %v4127 = vld [vmem:[#allocation10 + $0x738] sm:$0xff]
    %v4128 = vld [vmem:[#allocation10 + $0x740] sm:$0xff]
    %v4129 = vld [vmem:[#allocation10 + $0x748] sm:$0xff]
    %v4130 = vld [vmem:[#allocation10 + $0x750] sm:$0xff]
    %v4131 = vld [vmem:[#allocation10 + $0x758] sm:$0xff]
    %v4132 = vld [vmem:[#allocation10 + $0x760] sm:$0xff]
    %v4133 = vld [vmem:[#allocation10 + $0x768] sm:$0xff]
    %v4134 = vld [vmem:[#allocation10 + $0x770] sm:$0xff]
    %v4135 = vld [vmem:[#allocation10 + $0x778] sm:$0xff]
    %v4136 = vld [vmem:[#allocation10 + $0x780] sm:$0xff]
    %v4137 = vld [vmem:[#allocation10 + $0x788] sm:$0xff]
    %v4138 = vld [vmem:[#allocation10 + $0x790] sm:$0xff]
    %v4139 = vld [vmem:[#allocation10 + $0x798] sm:$0xff]
    %v4140 = vld [vmem:[#allocation10 + $0x7a0] sm:$0xff]
    %v4141 = vld [vmem:[#allocation10 + $0x7a8] sm:$0xff]
    %v4142 = vld [vmem:[#allocation10 + $0x7b0] sm:$0xff]
    %v4143 = vld [vmem:[#allocation10 + $0x7b8] sm:$0xff]
    %v4144 = vld [vmem:[#allocation10 + $0x7c0] sm:$0xff]
    %v4145 = vld [vmem:[#allocation10 + $0x7c8] sm:$0xff]
    %v4146 = vld [vmem:[#allocation10 + $0x7d0] sm:$0xff]
    %v4147 = vld [vmem:[#allocation10 + $0x7d8] sm:$0xff]
    %v4148 = vld [vmem:[#allocation10 + $0x7e0] sm:$0xff]
    %v4149 = vld [vmem:[#allocation10 + $0x7e8] sm:$0xff]
    %v4150 = vld [vmem:[#allocation10 + $0x7f0] sm:$0xff]
    %v4151 = vld [vmem:[#allocation10 + $0x7f8] sm:$0xff]
    %v4152 = vld [vmem:[%s6] sm:$0xff]
    %v4154 = vlaneseq
    %v4155 = vshrl.u32 %v4154, 7
    %v4156 = vsub.s32 0, %v4155
    %v4157 = vrot.slane %v4152, %v4156
    %v4158 = vlaneseq
    %v4159 = vshrl.u32 %v4158, 7
    %v4160 = vsub.s32 1, %v4159
    %v4161 = vrot.slane %v4152, %v4160
    %v4162 = vlaneseq
    %v4163 = vshrl.u32 %v4162, 7
    %v4164 = vsub.s32 2, %v4163
    %v4165 = vrot.slane %v4152, %v4164
    %v4166 = vlaneseq
    %v4167 = vshrl.u32 %v4166, 7
    %v4168 = vsub.s32 3, %v4167
    %v4169 = vrot.slane %v4152, %v4168
    %v4170 = vlaneseq
    %v4171 = vshrl.u32 %v4170, 7
    %v4172 = vsub.s32 4, %v4171
    %v4173 = vrot.slane %v4152, %v4172
    %v4174 = vlaneseq
    %v4175 = vshrl.u32 %v4174, 7
    %v4176 = vsub.s32 5, %v4175
    %v4177 = vrot.slane %v4152, %v4176
    %v4178 = vlaneseq
    %v4179 = vshrl.u32 %v4178, 7
    %v4180 = vsub.s32 6, %v4179
    %v4181 = vrot.slane %v4152, %v4180
    %v4182 = vlaneseq
    %v4183 = vshrl.u32 %v4182, 7
    %v4184 = vsub.s32 7, %v4183
    %v4185 = vrot.slane %v4152, %v4184
    %4194 = vmatprep.subr.mxu0 %v3897
    %4195 = vmatpush1.msra.mxu0 %v3896
    %4196 = vmatprep.subr.mxu0 %v3905
    %4197 = vmatpush1.msra.mxu0 %v3904
    %4198 = vmatprep.subr.mxu0 %v3913
    %4199 = vmatpush1.msra.mxu0 %v3912
    %4200 = vmatprep.subr.mxu0 %v3921
    %4201 = vmatpush1.msra.mxu0 %v3920
    %4202 = vmatprep.subr.mxu0 %v3929
    %4203 = vmatpush1.msra.mxu0 %v3928
    %4204 = vmatprep.subr.mxu0 %v3937
    %4205 = vmatpush1.msra.mxu0 %v3936
    %4206 = vmatprep.subr.mxu0 %v3945
    %4207 = vmatpush1.msra.mxu0 %v3944
    %4208 = vmatprep.subr.mxu0 %v3953
    %4209 = vmatpush1.msra.mxu0 %v3952
    %4210 = vmatprep.subr.mxu0 %v3961
    %4211 = vmatpush1.msra.mxu0 %v3960
    %4212 = vmatprep.subr.mxu0 %v3969
    %4213 = vmatpush1.msra.mxu0 %v3968
    %4214 = vmatprep.subr.mxu0 %v3977
    %4215 = vmatpush1.msra.mxu0 %v3976
    %4216 = vmatprep.subr.mxu0 %v3985
    %4217 = vmatpush1.msra.mxu0 %v3984
    %4218 = vmatprep.subr.mxu0 %v3993
    %4219 = vmatpush1.msra.mxu0 %v3992
    %4220 = vmatprep.subr.mxu0 %v4001
    %4221 = vmatpush1.msra.mxu0 %v4000
    %4222 = vmatprep.subr.mxu0 %v4009
    %4223 = vmatpush1.msra.mxu0 %v4008
    %4224 = vmatprep.subr.mxu0 %v4017
    %4225 = vmatpush1.msra.mxu0 %v4016
    %4226 = vmatprep.subr.mxu0 %v4025
    %4227 = vmatpush1.msra.mxu0 %v4024
    %4228 = vmatprep.subr.mxu0 %v4033
    %4229 = vmatpush1.msra.mxu0 %v4032
    %4230 = vmatprep.subr.mxu0 %v4041
    %4231 = vmatpush1.msra.mxu0 %v4040
    %4232 = vmatprep.subr.mxu0 %v4049
    %4233 = vmatpush1.msra.mxu0 %v4048
    %4234 = vmatprep.subr.mxu0 %v4057
    %4235 = vmatpush1.msra.mxu0 %v4056
    %4236 = vmatprep.subr.mxu0 %v4065
    %4237 = vmatpush1.msra.mxu0 %v4064
    %4238 = vmatprep.subr.mxu0 %v4073
    %4239 = vmatpush1.msra.mxu0 %v4072
    %4240 = vmatprep.subr.mxu0 %v4081
    %4241 = vmatpush1.msra.mxu0 %v4080
    %4242 = vmatprep.subr.mxu0 %v4089
    %4243 = vmatpush1.msra.mxu0 %v4088
    %4244 = vmatprep.subr.mxu0 %v4097
    %4245 = vmatpush1.msra.mxu0 %v4096
    %4246 = vmatprep.subr.mxu0 %v4105
    %4247 = vmatpush1.msra.mxu0 %v4104
    %4248 = vmatprep.subr.mxu0 %v4113
    %4249 = vmatpush1.msra.mxu0 %v4112
    %4250 = vmatprep.subr.mxu0 %v4121
    %4251 = vmatpush1.msra.mxu0 %v4120
    %4252 = vmatprep.subr.mxu0 %v4129
    %4253 = vmatpush1.msra.mxu0 %v4128
    %4254 = vmatprep.subr.mxu0 %v4137
    %4255 = vmatpush1.msra.mxu0 %v4136
    %4256 = vmatprep.subr.mxu0 %v4145
    %4257 = vmatpush1.msra.mxu0 %v4144
    %4258 = vmatprep.mubr.f32.mxu0 %v3893
    %4259 = vmatmul.mubr.f32.gmra.mrb[0].mxu0 %v3892
    %v4260 = vpop.f32.mrb[0].mxu0
    %v4261 = vadd.f32 %v4157, %v4260
    %v4262 = vpop.f32.mrb[0].mxu0
    %v4263 = vadd.f32 %v4161, %v4262
    %4264 = vmatprep.mubr.f32.mxu0 %v3895
    %4265 = vmatmul.mubr.f32.gmra.mrb[0].mxu0 %v3894
    %v4266 = vpop.f32.mrb[0].mxu0
    %v4267 = vadd.f32 %v4157, %v4266
    %v4268 = vpop.f32.mrb[0].mxu0
    %v4269 = vadd.f32 %v4161, %v4268
    %4270 = vdwg.mxu0
    %4271 = vmatprep.subr.mxu0 %v3899
    %4272 = vmatpush1.msra.mxu0 %v3898
    %4273 = vmatprep.subr.mxu0 %v3907
    %4274 = vmatpush1.msra.mxu0 %v3906
    %4275 = vmatprep.subr.mxu0 %v3915
    %4276 = vmatpush1.msra.mxu0 %v3914
    %4277 = vmatprep.subr.mxu0 %v3923
    %4278 = vmatpush1.msra.mxu0 %v3922
    %4279 = vmatprep.subr.mxu0 %v3931
    %4280 = vmatpush1.msra.mxu0 %v3930
    %4281 = vmatprep.subr.mxu0 %v3939
    %4282 = vmatpush1.msra.mxu0 %v3938
    %4283 = vmatprep.subr.mxu0 %v3947
    %4284 = vmatpush1.msra.mxu0 %v3946
    %4285 = vmatprep.subr.mxu0 %v3955
    %4286 = vmatpush1.msra.mxu0 %v3954
    %4287 = vmatprep.subr.mxu0 %v3963
    %4288 = vmatpush1.msra.mxu0 %v3962
    %4289 = vmatprep.subr.mxu0 %v3971
    %4290 = vmatpush1.msra.mxu0 %v3970
    %4291 = vmatprep.subr.mxu0 %v3979
    %4292 = vmatpush1.msra.mxu0 %v3978
    %4293 = vmatprep.subr.mxu0 %v3987
    %4294 = vmatpush1.msra.mxu0 %v3986
    %4295 = vmatprep.subr.mxu0 %v3995
    %4296 = vmatpush1.msra.mxu0 %v3994
    %4297 = vmatprep.subr.mxu0 %v4003
    %4298 = vmatpush1.msra.mxu0 %v4002
    %4299 = vmatprep.subr.mxu0 %v4011
    %4300 = vmatpush1.msra.mxu0 %v4010
    %4301 = vmatprep.subr.mxu0 %v4019
    %4302 = vmatpush1.msra.mxu0 %v4018
    %4303 = vmatprep.subr.mxu0 %v4027
    %4304 = vmatpush1.msra.mxu0 %v4026
    %4305 = vmatprep.subr.mxu0 %v4035
    %4306 = vmatpush1.msra.mxu0 %v4034
    %4307 = vmatprep.subr.mxu0 %v4043
    %4308 = vmatpush1.msra.mxu0 %v4042
    %4309 = vmatprep.subr.mxu0 %v4051
    %4310 = vmatpush1.msra.mxu0 %v4050
    %4311 = vmatprep.subr.mxu0 %v4059
    %4312 = vmatpush1.msra.mxu0 %v4058
    %4313 = vmatprep.subr.mxu0 %v4067
    %4314 = vmatpush1.msra.mxu0 %v4066
    %4315 = vmatprep.subr.mxu0 %v4075
    %4316 = vmatpush1.msra.mxu0 %v4074
    %4317 = vmatprep.subr.mxu0 %v4083
    %4318 = vmatpush1.msra.mxu0 %v4082
    %4319 = vmatprep.subr.mxu0 %v4091
    %4320 = vmatpush1.msra.mxu0 %v4090
    %4321 = vmatprep.subr.mxu0 %v4099
    %4322 = vmatpush1.msra.mxu0 %v4098
    %4323 = vmatprep.subr.mxu0 %v4107
    %4324 = vmatpush1.msra.mxu0 %v4106
    %4325 = vmatprep.subr.mxu0 %v4115
    %4326 = vmatpush1.msra.mxu0 %v4114
    %4327 = vmatprep.subr.mxu0 %v4123
    %4328 = vmatpush1.msra.mxu0 %v4122
    %4329 = vmatprep.subr.mxu0 %v4131
    %4330 = vmatpush1.msra.mxu0 %v4130
    %4331 = vmatprep.subr.mxu0 %v4139
    %4332 = vmatpush1.msra.mxu0 %v4138
    %4333 = vmatprep.subr.mxu0 %v4147
    %4334 = vmatpush1.msra.mxu0 %v4146
    %4335 = vmatprep.mubr.f32.mxu0 %v3893
    %4336 = vmatmul.mubr.f32.gmra.mrb[0].mxu0 %v3892
    %v4337 = vpop.f32.mrb[0].mxu0
    %v4338 = vadd.f32 %v4165, %v4337
    %v4339 = vpop.f32.mrb[0].mxu0
    %v4340 = vadd.f32 %v4169, %v4339
    %4341 = vmatprep.mubr.f32.mxu0 %v3895
    %4342 = vmatmul.mubr.f32.gmra.mrb[0].mxu0 %v3894
    %v4343 = vpop.f32.mrb[0].mxu0
    %v4344 = vadd.f32 %v4165, %v4343
    %v4345 = vpop.f32.mrb[0].mxu0
    %v4346 = vadd.f32 %v4169, %v4345
    %4347 = vdwg.mxu0
    %4348 = vmatprep.subr.mxu0 %v3901
    %4349 = vmatpush1.msra.mxu0 %v3900
    %4350 = vmatprep.subr.mxu0 %v3909
    %4351 = vmatpush1.msra.mxu0 %v3908
    %4352 = vmatprep.subr.mxu0 %v3917
    %4353 = vmatpush1.msra.mxu0 %v3916
    %4354 = vmatprep.subr.mxu0 %v3925
    %4355 = vmatpush1.msra.mxu0 %v3924
    %4356 = vmatprep.subr.mxu0 %v3933
    %4357 = vmatpush1.msra.mxu0 %v3932
    %4358 = vmatprep.subr.mxu0 %v3941
    %4359 = vmatpush1.msra.mxu0 %v3940
    %4360 = vmatprep.subr.mxu0 %v3949
    %4361 = vmatpush1.msra.mxu0 %v3948
    %4362 = vmatprep.subr.mxu0 %v3957
    %4363 = vmatpush1.msra.mxu0 %v3956
    %4364 = vmatprep.subr.mxu0 %v3965
    %4365 = vmatpush1.msra.mxu0 %v3964
    %4366 = vmatprep.subr.mxu0 %v3973
    %4367 = vmatpush1.msra.mxu0 %v3972
    %4368 = vmatprep.subr.mxu0 %v3981
    %4369 = vmatpush1.msra.mxu0 %v3980
    %4370 = vmatprep.subr.mxu0 %v3989
    %4371 = vmatpush1.msra.mxu0 %v3988
    %4372 = vmatprep.subr.mxu0 %v3997
    %4373 = vmatpush1.msra.mxu0 %v3996
    %4374 = vmatprep.subr.mxu0 %v4005
    %4375 = vmatpush1.msra.mxu0 %v4004
    %4376 = vmatprep.subr.mxu0 %v4013
    %4377 = vmatpush1.msra.mxu0 %v4012
    %4378 = vmatprep.subr.mxu0 %v4021
    %4379 = vmatpush1.msra.mxu0 %v4020
    %4380 = vmatprep.subr.mxu0 %v4029
    %4381 = vmatpush1.msra.mxu0 %v4028
    %4382 = vmatprep.subr.mxu0 %v4037
    %4383 = vmatpush1.msra.mxu0 %v4036
    %4384 = vmatprep.subr.mxu0 %v4045
    %4385 = vmatpush1.msra.mxu0 %v4044
    %4386 = vmatprep.subr.mxu0 %v4053
    %4387 = vmatpush1.msra.mxu0 %v4052
    %4388 = vmatprep.subr.mxu0 %v4061
    %4389 = vmatpush1.msra.mxu0 %v4060
    %4390 = vmatprep.subr.mxu0 %v4069
    %4391 = vmatpush1.msra.mxu0 %v4068
    %4392 = vmatprep.subr.mxu0 %v4077
    %4393 = vmatpush1.msra.mxu0 %v4076
    %4394 = vmatprep.subr.mxu0 %v4085
    %4395 = vmatpush1.msra.mxu0 %v4084
    %4396 = vmatprep.subr.mxu0 %v4093
    %4397 = vmatpush1.msra.mxu0 %v4092
    %4398 = vmatprep.subr.mxu0 %v4101
    %4399 = vmatpush1.msra.mxu0 %v4100
    %4400 = vmatprep.subr.mxu0 %v4109
    %4401 = vmatpush1.msra.mxu0 %v4108
    %4402 = vmatprep.subr.mxu0 %v4117
    %4403 = vmatpush1.msra.mxu0 %v4116
    %4404 = vmatprep.subr.mxu0 %v4125
    %4405 = vmatpush1.msra.mxu0 %v4124
    %4406 = vmatprep.subr.mxu0 %v4133
    %4407 = vmatpush1.msra.mxu0 %v4132
    %4408 = vmatprep.subr.mxu0 %v4141
    %4409 = vmatpush1.msra.mxu0 %v4140
    %4410 = vmatprep.subr.mxu0 %v4149
    %4411 = vmatpush1.msra.mxu0 %v4148
    %4412 = vmatprep.mubr.f32.mxu0 %v3893
    %4413 = vmatmul.mubr.f32.gmra.mrb[0].mxu0 %v3892
    %v4414 = vpop.f32.mrb[0].mxu0
    %v4415 = vadd.f32 %v4173, %v4414
    %v4416 = vpop.f32.mrb[0].mxu0
    %v4417 = vadd.f32 %v4177, %v4416
    %4418 = vmatprep.mubr.f32.mxu0 %v3895
    %4419 = vmatmul.mubr.f32.gmra.mrb[0].mxu0 %v3894
    %v4420 = vpop.f32.mrb[0].mxu0
    %v4421 = vadd.f32 %v4173, %v4420
    %v4422 = vpop.f32.mrb[0].mxu0
    %v4423 = vadd.f32 %v4177, %v4422
    %4424 = vdwg.mxu0
    %4425 = vmatprep.subr.mxu0 %v3903
    %4426 = vmatpush1.msra.mxu0 %v3902
    %4427 = vmatprep.subr.mxu0 %v3911
    %4428 = vmatpush1.msra.mxu0 %v3910
    %4429 = vmatprep.subr.mxu0 %v3919
    %4430 = vmatpush1.msra.mxu0 %v3918
    %4431 = vmatprep.subr.mxu0 %v3927
    %4432 = vmatpush1.msra.mxu0 %v3926
    %4433 = vmatprep.subr.mxu0 %v3935
    %4434 = vmatpush1.msra.mxu0 %v3934
    %4435 = vmatprep.subr.mxu0 %v3943
    %4436 = vmatpush1.msra.mxu0 %v3942
    %4437 = vmatprep.subr.mxu0 %v3951
    %4438 = vmatpush1.msra.mxu0 %v3950
    %4439 = vmatprep.subr.mxu0 %v3959
    %4440 = vmatpush1.msra.mxu0 %v3958
    %4441 = vmatprep.subr.mxu0 %v3967
    %4442 = vmatpush1.msra.mxu0 %v3966
    %4443 = vmatprep.subr.mxu0 %v3975
    %4444 = vmatpush1.msra.mxu0 %v3974
    %4445 = vmatprep.subr.mxu0 %v3983
    %4446 = vmatpush1.msra.mxu0 %v3982
    %4447 = vmatprep.subr.mxu0 %v3991
    %4448 = vmatpush1.msra.mxu0 %v3990
    %4449 = vmatprep.subr.mxu0 %v3999
    %4450 = vmatpush1.msra.mxu0 %v3998
    %4451 = vmatprep.subr.mxu0 %v4007
    %4452 = vmatpush1.msra.mxu0 %v4006
    %4453 = vmatprep.subr.mxu0 %v4015
    %4454 = vmatpush1.msra.mxu0 %v4014
    %4455 = vmatprep.subr.mxu0 %v4023
    %4456 = vmatpush1.msra.mxu0 %v4022
    %4457 = vmatprep.subr.mxu0 %v4031
    %4458 = vmatpush1.msra.mxu0 %v4030
    %4459 = vmatprep.subr.mxu0 %v4039
    %4460 = vmatpush1.msra.mxu0 %v4038
    %4461 = vmatprep.subr.mxu0 %v4047
    %4462 = vmatpush1.msra.mxu0 %v4046
    %4463 = vmatprep.subr.mxu0 %v4055
    %4464 = vmatpush1.msra.mxu0 %v4054
    %4465 = vmatprep.subr.mxu0 %v4063
    %4466 = vmatpush1.msra.mxu0 %v4062
    %4467 = vmatprep.subr.mxu0 %v4071
    %4468 = vmatpush1.msra.mxu0 %v4070
    %4469 = vmatprep.subr.mxu0 %v4079
    %4470 = vmatpush1.msra.mxu0 %v4078
    %4471 = vmatprep.subr.mxu0 %v4087
    %4472 = vmatpush1.msra.mxu0 %v4086
    %4473 = vmatprep.subr.mxu0 %v4095
    %4474 = vmatpush1.msra.mxu0 %v4094
    %4475 = vmatprep.subr.mxu0 %v4103
    %4476 = vmatpush1.msra.mxu0 %v4102
    %4477 = vmatprep.subr.mxu0 %v4111
    %4478 = vmatpush1.msra.mxu0 %v4110
    %4479 = vmatprep.subr.mxu0 %v4119
    %4480 = vmatpush1.msra.mxu0 %v4118
    %4481 = vmatprep.subr.mxu0 %v4127
    %4482 = vmatpush1.msra.mxu0 %v4126
    %4483 = vmatprep.subr.mxu0 %v4135
    %4484 = vmatpush1.msra.mxu0 %v4134
    %4485 = vmatprep.subr.mxu0 %v4143
    %4486 = vmatpush1.msra.mxu0 %v4142
    %4487 = vmatprep.subr.mxu0 %v4151
    %4488 = vmatpush1.msra.mxu0 %v4150
    %4489 = vmatprep.mubr.f32.mxu0 %v3893
    %4490 = vmatmul.mubr.f32.gmra.mrb[0].mxu0 %v3892
    %v4491 = vpop.f32.mrb[0].mxu0
    %v4492 = vadd.f32 %v4181, %v4491
    %v4493 = vpop.f32.mrb[0].mxu0
    %v4494 = vadd.f32 %v4185, %v4493
    %4495 = vmatprep.mubr.f32.mxu0 %v3895
    %4496 = vmatmul.mubr.f32.gmra.mrb[0].mxu0 %v3894
    %v4497 = vpop.f32.mrb[0].mxu0
    %v4498 = vadd.f32 %v4181, %v4497
    %v4499 = vpop.f32.mrb[0].mxu0
    %v4500 = vadd.f32 %v4185, %v4499
    %4501 = vdwg.mxu0
    %4502 = vst [vmem:[#allocation2] sm:$0xff] %v4261
    %4503 = vst [vmem:[#allocation2 + $0x8] sm:$0xff] %v4263
    %4504 = vst [vmem:[#allocation2 + $0x10] sm:$0xff] %v4338
    %4505 = vst [vmem:[#allocation2 + $0x18] sm:$0xff] %v4340
    %4506 = vst [vmem:[#allocation2 + $0x20] sm:$0xff] %v4415
    %4507 = vst [vmem:[#allocation2 + $0x28] sm:$0xff] %v4417
    %4508 = vst [vmem:[#allocation2 + $0x30] sm:$0xff] %v4492
    %4509 = vst [vmem:[#allocation2 + $0x38] sm:$0xff] %v4494
    %4510 = vst [vmem:[#allocation2 + $0x40] sm:$0xff] %v4267
    %4511 = vst [vmem:[#allocation2 + $0x48] sm:$0xff] %v4269
    %4512 = vst [vmem:[#allocation2 + $0x50] sm:$0xff] %v4344
    %4513 = vst [vmem:[#allocation2 + $0x58] sm:$0xff] %v4346
    %4514 = vst [vmem:[#allocation2 + $0x60] sm:$0xff] %v4421
    %4515 = vst [vmem:[#allocation2 + $0x68] sm:$0xff] %v4423
    %4516 = vst [vmem:[#allocation2 + $0x70] sm:$0xff] %v4498
    %4517 = vst [vmem:[#allocation2 + $0x78] sm:$0xff] %v4500
    %v4518 = vld [vmem:[#allocation12] sm:$0xff]
    %v4519 = vld [vmem:[#allocation12 + $0x8] sm:$0xff]
    %v4520 = vld [vmem:[#allocation12 + $0x10] sm:$0xff]
    %v4521 = vld [vmem:[#allocation12 + $0x18] sm:$0xff]
    %v4522 = vld [vmem:[#allocation12 + $0x20] sm:$0xff]
    %v4523 = vld [vmem:[#allocation12 + $0x28] sm:$0xff]
    %v4524 = vld [vmem:[#allocation12 + $0x30] sm:$0xff]
    %v4525 = vld [vmem:[#allocation12 + $0x38] sm:$0xff]
    %v4526 = vld [vmem:[#allocation12 + $0x40] sm:$0xff]
    %v4527 = vld [vmem:[#allocation12 + $0x48] sm:$0xff]
    %v4528 = vld [vmem:[#allocation12 + $0x50] sm:$0xff]
    %v4529 = vld [vmem:[#allocation12 + $0x58] sm:$0xff]
    %v4530 = vld [vmem:[#allocation12 + $0x60] sm:$0xff]
    %v4531 = vld [vmem:[#allocation12 + $0x68] sm:$0xff]
    %v4532 = vld [vmem:[#allocation12 + $0x70] sm:$0xff]
    %v4533 = vld [vmem:[#allocation12 + $0x78] sm:$0xff]
    %v4534 = vld [vmem:[#allocation12 + $0x80] sm:$0xff]
    %v4535 = vld [vmem:[#allocation12 + $0x88] sm:$0xff]
    %v4536 = vld [vmem:[#allocation12 + $0x90] sm:$0xff]
    %v4537 = vld [vmem:[#allocation12 + $0x98] sm:$0xff]
    %v4538 = vld [vmem:[#allocation12 + $0xa0] sm:$0xff]
    %v4539 = vld [vmem:[#allocation12 + $0xa8] sm:$0xff]
    %v4540 = vld [vmem:[#allocation12 + $0xb0] sm:$0xff]
    %v4541 = vld [vmem:[#allocation12 + $0xb8] sm:$0xff]
    %v4542 = vld [vmem:[#allocation12 + $0xc0] sm:$0xff]
    %v4543 = vld [vmem:[#allocation12 + $0xc8] sm:$0xff]
    %v4544 = vld [vmem:[#allocation12 + $0xd0] sm:$0xff]
    %v4545 = vld [vmem:[#allocation12 + $0xd8] sm:$0xff]
    %v4546 = vld [vmem:[#allocation12 + $0xe0] sm:$0xff]
    %v4547 = vld [vmem:[#allocation12 + $0xe8] sm:$0xff]
    %v4548 = vld [vmem:[#allocation12 + $0xf0] sm:$0xff]
    %v4549 = vld [vmem:[#allocation12 + $0xf8] sm:$0xff]
    %v4550 = vld [vmem:[#allocation12 + $0x100] sm:$0xff]
    %v4551 = vld [vmem:[#allocation12 + $0x108] sm:$0xff]
    %v4552 = vld [vmem:[#allocation12 + $0x110] sm:$0xff]
    %v4553 = vld [vmem:[#allocation12 + $0x118] sm:$0xff]
    %v4554 = vld [vmem:[#allocation12 + $0x120] sm:$0xff]
    %v4555 = vld [vmem:[#allocation12 + $0x128] sm:$0xff]
    %v4556 = vld [vmem:[#allocation12 + $0x130] sm:$0xff]
    %v4557 = vld [vmem:[#allocation12 + $0x138] sm:$0xff]
    %v4558 = vld [vmem:[#allocation12 + $0x140] sm:$0xff]
    %v4559 = vld [vmem:[#allocation12 + $0x148] sm:$0xff]
    %v4560 = vld [vmem:[#allocation12 + $0x150] sm:$0xff]
    %v4561 = vld [vmem:[#allocation12 + $0x158] sm:$0xff]
    %v4562 = vld [vmem:[#allocation12 + $0x160] sm:$0xff]
    %v4563 = vld [vmem:[#allocation12 + $0x168] sm:$0xff]
    %v4564 = vld [vmem:[#allocation12 + $0x170] sm:$0xff]
    %v4565 = vld [vmem:[#allocation12 + $0x178] sm:$0xff]
    %v4566 = vld [vmem:[#allocation12 + $0x180] sm:$0xff]
    %v4567 = vld [vmem:[#allocation12 + $0x188] sm:$0xff]
    %v4568 = vld [vmem:[#allocation12 + $0x190] sm:$0xff]
    %v4569 = vld [vmem:[#allocation12 + $0x198] sm:$0xff]
    %v4570 = vld [vmem:[#allocation12 + $0x1a0] sm:$0xff]
    %v4571 = vld [vmem:[#allocation12 + $0x1a8] sm:$0xff]
    %v4572 = vld [vmem:[#allocation12 + $0x1b0] sm:$0xff]
    %v4573 = vld [vmem:[#allocation12 + $0x1b8] sm:$0xff]
    %v4574 = vld [vmem:[#allocation12 + $0x1c0] sm:$0xff]
    %v4575 = vld [vmem:[#allocation12 + $0x1c8] sm:$0xff]
    %v4576 = vld [vmem:[#allocation12 + $0x1d0] sm:$0xff]
    %v4577 = vld [vmem:[#allocation12 + $0x1d8] sm:$0xff]
    %v4578 = vld [vmem:[#allocation12 + $0x1e0] sm:$0xff]
    %v4579 = vld [vmem:[#allocation12 + $0x1e8] sm:$0xff]
    %v4580 = vld [vmem:[#allocation12 + $0x1f0] sm:$0xff]
    %v4581 = vld [vmem:[#allocation12 + $0x1f8] sm:$0xff]
    %v4582 = vld [vmem:[#allocation12 + $0x200] sm:$0xff]
    %v4583 = vld [vmem:[#allocation12 + $0x208] sm:$0xff]
    %v4584 = vld [vmem:[#allocation12 + $0x210] sm:$0xff]
    %v4585 = vld [vmem:[#allocation12 + $0x218] sm:$0xff]
    %v4586 = vld [vmem:[#allocation12 + $0x220] sm:$0xff]
    %v4587 = vld [vmem:[#allocation12 + $0x228] sm:$0xff]
    %v4588 = vld [vmem:[#allocation12 + $0x230] sm:$0xff]
    %v4589 = vld [vmem:[#allocation12 + $0x238] sm:$0xff]
    %v4590 = vld [vmem:[#allocation12 + $0x240] sm:$0xff]
    %v4591 = vld [vmem:[#allocation12 + $0x248] sm:$0xff]
    %v4592 = vld [vmem:[#allocation12 + $0x250] sm:$0xff]
    %v4593 = vld [vmem:[#allocation12 + $0x258] sm:$0xff]
    %v4594 = vld [vmem:[#allocation12 + $0x260] sm:$0xff]
    %v4595 = vld [vmem:[#allocation12 + $0x268] sm:$0xff]
    %v4596 = vld [vmem:[#allocation12 + $0x270] sm:$0xff]
    %v4597 = vld [vmem:[#allocation12 + $0x278] sm:$0xff]
    %v4598 = vld [vmem:[#allocation12 + $0x280] sm:$0xff]
    %v4599 = vld [vmem:[#allocation12 + $0x288] sm:$0xff]
    %v4600 = vld [vmem:[#allocation12 + $0x290] sm:$0xff]
    %v4601 = vld [vmem:[#allocation12 + $0x298] sm:$0xff]
    %v4602 = vld [vmem:[#allocation12 + $0x2a0] sm:$0xff]
    %v4603 = vld [vmem:[#allocation12 + $0x2a8] sm:$0xff]
    %v4604 = vld [vmem:[#allocation12 + $0x2b0] sm:$0xff]
    %v4605 = vld [vmem:[#allocation12 + $0x2b8] sm:$0xff]
    %v4606 = vld [vmem:[#allocation12 + $0x2c0] sm:$0xff]
    %v4607 = vld [vmem:[#allocation12 + $0x2c8] sm:$0xff]
    %v4608 = vld [vmem:[#allocation12 + $0x2d0] sm:$0xff]
    %v4609 = vld [vmem:[#allocation12 + $0x2d8] sm:$0xff]
    %v4610 = vld [vmem:[#allocation12 + $0x2e0] sm:$0xff]
    %v4611 = vld [vmem:[#allocation12 + $0x2e8] sm:$0xff]
    %v4612 = vld [vmem:[#allocation12 + $0x2f0] sm:$0xff]
    %v4613 = vld [vmem:[#allocation12 + $0x2f8] sm:$0xff]
    %v4614 = vld [vmem:[#allocation12 + $0x300] sm:$0xff]
    %v4615 = vld [vmem:[#allocation12 + $0x308] sm:$0xff]
    %v4616 = vld [vmem:[#allocation12 + $0x310] sm:$0xff]
    %v4617 = vld [vmem:[#allocation12 + $0x318] sm:$0xff]
    %v4618 = vld [vmem:[#allocation12 + $0x320] sm:$0xff]
    %v4619 = vld [vmem:[#allocation12 + $0x328] sm:$0xff]
    %v4620 = vld [vmem:[#allocation12 + $0x330] sm:$0xff]
    %v4621 = vld [vmem:[#allocation12 + $0x338] sm:$0xff]
    %v4622 = vld [vmem:[#allocation12 + $0x340] sm:$0xff]
    %v4623 = vld [vmem:[#allocation12 + $0x348] sm:$0xff]
    %v4624 = vld [vmem:[#allocation12 + $0x350] sm:$0xff]
    %v4625 = vld [vmem:[#allocation12 + $0x358] sm:$0xff]
    %v4626 = vld [vmem:[#allocation12 + $0x360] sm:$0xff]
    %v4627 = vld [vmem:[#allocation12 + $0x368] sm:$0xff]
    %v4628 = vld [vmem:[#allocation12 + $0x370] sm:$0xff]
    %v4629 = vld [vmem:[#allocation12 + $0x378] sm:$0xff]
    %v4630 = vld [vmem:[#allocation12 + $0x380] sm:$0xff]
    %v4631 = vld [vmem:[#allocation12 + $0x388] sm:$0xff]
    %v4632 = vld [vmem:[#allocation12 + $0x390] sm:$0xff]
    %v4633 = vld [vmem:[#allocation12 + $0x398] sm:$0xff]
    %v4634 = vld [vmem:[#allocation12 + $0x3a0] sm:$0xff]
    %v4635 = vld [vmem:[#allocation12 + $0x3a8] sm:$0xff]
    %v4636 = vld [vmem:[#allocation12 + $0x3b0] sm:$0xff]
    %v4637 = vld [vmem:[#allocation12 + $0x3b8] sm:$0xff]
    %v4638 = vld [vmem:[#allocation12 + $0x3c0] sm:$0xff]
    %v4639 = vld [vmem:[#allocation12 + $0x3c8] sm:$0xff]
    %v4640 = vld [vmem:[#allocation12 + $0x3d0] sm:$0xff]
    %v4641 = vld [vmem:[#allocation12 + $0x3d8] sm:$0xff]
    %v4642 = vld [vmem:[#allocation12 + $0x3e0] sm:$0xff]
    %v4643 = vld [vmem:[#allocation12 + $0x3e8] sm:$0xff]
    %v4644 = vld [vmem:[#allocation12 + $0x3f0] sm:$0xff]
    %v4645 = vld [vmem:[#allocation12 + $0x3f8] sm:$0xff]
    %v4646 = vld [vmem:[#allocation12 + $0x400] sm:$0xff]
    %v4647 = vld [vmem:[#allocation12 + $0x408] sm:$0xff]
    %v4648 = vld [vmem:[#allocation12 + $0x410] sm:$0xff]
    %v4649 = vld [vmem:[#allocation12 + $0x418] sm:$0xff]
    %v4650 = vld [vmem:[#allocation12 + $0x420] sm:$0xff]
    %v4651 = vld [vmem:[#allocation12 + $0x428] sm:$0xff]
    %v4652 = vld [vmem:[#allocation12 + $0x430] sm:$0xff]
    %v4653 = vld [vmem:[#allocation12 + $0x438] sm:$0xff]
    %v4654 = vld [vmem:[#allocation12 + $0x440] sm:$0xff]
    %v4655 = vld [vmem:[#allocation12 + $0x448] sm:$0xff]
    %v4656 = vld [vmem:[#allocation12 + $0x450] sm:$0xff]
    %v4657 = vld [vmem:[#allocation12 + $0x458] sm:$0xff]
    %v4658 = vld [vmem:[#allocation12 + $0x460] sm:$0xff]
    %v4659 = vld [vmem:[#allocation12 + $0x468] sm:$0xff]
    %v4660 = vld [vmem:[#allocation12 + $0x470] sm:$0xff]
    %v4661 = vld [vmem:[#allocation12 + $0x478] sm:$0xff]
    %v4662 = vld [vmem:[#allocation12 + $0x480] sm:$0xff]
    %v4663 = vld [vmem:[#allocation12 + $0x488] sm:$0xff]
    %v4664 = vld [vmem:[#allocation12 + $0x490] sm:$0xff]
    %v4665 = vld [vmem:[#allocation12 + $0x498] sm:$0xff]
    %v4666 = vld [vmem:[#allocation12 + $0x4a0] sm:$0xff]
    %v4667 = vld [vmem:[#allocation12 + $0x4a8] sm:$0xff]
    %v4668 = vld [vmem:[#allocation12 + $0x4b0] sm:$0xff]
    %v4669 = vld [vmem:[#allocation12 + $0x4b8] sm:$0xff]
    %v4670 = vld [vmem:[#allocation12 + $0x4c0] sm:$0xff]
    %v4671 = vld [vmem:[#allocation12 + $0x4c8] sm:$0xff]
    %v4672 = vld [vmem:[#allocation12 + $0x4d0] sm:$0xff]
    %v4673 = vld [vmem:[#allocation12 + $0x4d8] sm:$0xff]
    %v4674 = vld [vmem:[#allocation12 + $0x4e0] sm:$0xff]
    %v4675 = vld [vmem:[#allocation12 + $0x4e8] sm:$0xff]
    %v4676 = vld [vmem:[#allocation12 + $0x4f0] sm:$0xff]
    %v4677 = vld [vmem:[#allocation12 + $0x4f8] sm:$0xff]
    %v4678 = vld [vmem:[#allocation12 + $0x500] sm:$0xff]
    %v4679 = vld [vmem:[#allocation12 + $0x508] sm:$0xff]
    %v4680 = vld [vmem:[#allocation12 + $0x510] sm:$0xff]
    %v4681 = vld [vmem:[#allocation12 + $0x518] sm:$0xff]
    %v4682 = vld [vmem:[#allocation12 + $0x520] sm:$0xff]
    %v4683 = vld [vmem:[#allocation12 + $0x528] sm:$0xff]
    %v4684 = vld [vmem:[#allocation12 + $0x530] sm:$0xff]
    %v4685 = vld [vmem:[#allocation12 + $0x538] sm:$0xff]
    %v4686 = vld [vmem:[#allocation12 + $0x540] sm:$0xff]
    %v4687 = vld [vmem:[#allocation12 + $0x548] sm:$0xff]
    %v4688 = vld [vmem:[#allocation12 + $0x550] sm:$0xff]
    %v4689 = vld [vmem:[#allocation12 + $0x558] sm:$0xff]
    %v4690 = vld [vmem:[#allocation12 + $0x560] sm:$0xff]
    %v4691 = vld [vmem:[#allocation12 + $0x568] sm:$0xff]
    %v4692 = vld [vmem:[#allocation12 + $0x570] sm:$0xff]
    %v4693 = vld [vmem:[#allocation12 + $0x578] sm:$0xff]
    %v4694 = vld [vmem:[#allocation12 + $0x580] sm:$0xff]
    %v4695 = vld [vmem:[#allocation12 + $0x588] sm:$0xff]
    %v4696 = vld [vmem:[#allocation12 + $0x590] sm:$0xff]
    %v4697 = vld [vmem:[#allocation12 + $0x598] sm:$0xff]
    %v4698 = vld [vmem:[#allocation12 + $0x5a0] sm:$0xff]
    %v4699 = vld [vmem:[#allocation12 + $0x5a8] sm:$0xff]
    %v4700 = vld [vmem:[#allocation12 + $0x5b0] sm:$0xff]
    %v4701 = vld [vmem:[#allocation12 + $0x5b8] sm:$0xff]
    %v4702 = vld [vmem:[#allocation12 + $0x5c0] sm:$0xff]
    %v4703 = vld [vmem:[#allocation12 + $0x5c8] sm:$0xff]
    %v4704 = vld [vmem:[#allocation12 + $0x5d0] sm:$0xff]
    %v4705 = vld [vmem:[#allocation12 + $0x5d8] sm:$0xff]
    %v4706 = vld [vmem:[#allocation12 + $0x5e0] sm:$0xff]
    %v4707 = vld [vmem:[#allocation12 + $0x5e8] sm:$0xff]
    %v4708 = vld [vmem:[#allocation12 + $0x5f0] sm:$0xff]
    %v4709 = vld [vmem:[#allocation12 + $0x5f8] sm:$0xff]
    %v4710 = vld [vmem:[#allocation12 + $0x600] sm:$0xff]
    %v4711 = vld [vmem:[#allocation12 + $0x608] sm:$0xff]
    %v4712 = vld [vmem:[#allocation12 + $0x610] sm:$0xff]
    %v4713 = vld [vmem:[#allocation12 + $0x618] sm:$0xff]
    %v4714 = vld [vmem:[#allocation12 + $0x620] sm:$0xff]
    %v4715 = vld [vmem:[#allocation12 + $0x628] sm:$0xff]
    %v4716 = vld [vmem:[#allocation12 + $0x630] sm:$0xff]
    %v4717 = vld [vmem:[#allocation12 + $0x638] sm:$0xff]
    %v4718 = vld [vmem:[#allocation12 + $0x640] sm:$0xff]
    %v4719 = vld [vmem:[#allocation12 + $0x648] sm:$0xff]
    %v4720 = vld [vmem:[#allocation12 + $0x650] sm:$0xff]
    %v4721 = vld [vmem:[#allocation12 + $0x658] sm:$0xff]
    %v4722 = vld [vmem:[#allocation12 + $0x660] sm:$0xff]
    %v4723 = vld [vmem:[#allocation12 + $0x668] sm:$0xff]
    %v4724 = vld [vmem:[#allocation12 + $0x670] sm:$0xff]
    %v4725 = vld [vmem:[#allocation12 + $0x678] sm:$0xff]
    %v4726 = vld [vmem:[#allocation12 + $0x680] sm:$0xff]
    %v4727 = vld [vmem:[#allocation12 + $0x688] sm:$0xff]
    %v4728 = vld [vmem:[#allocation12 + $0x690] sm:$0xff]
    %v4729 = vld [vmem:[#allocation12 + $0x698] sm:$0xff]
    %v4730 = vld [vmem:[#allocation12 + $0x6a0] sm:$0xff]
    %v4731 = vld [vmem:[#allocation12 + $0x6a8] sm:$0xff]
    %v4732 = vld [vmem:[#allocation12 + $0x6b0] sm:$0xff]
    %v4733 = vld [vmem:[#allocation12 + $0x6b8] sm:$0xff]
    %v4734 = vld [vmem:[#allocation12 + $0x6c0] sm:$0xff]
    %v4735 = vld [vmem:[#allocation12 + $0x6c8] sm:$0xff]
    %v4736 = vld [vmem:[#allocation12 + $0x6d0] sm:$0xff]
    %v4737 = vld [vmem:[#allocation12 + $0x6d8] sm:$0xff]
    %v4738 = vld [vmem:[#allocation12 + $0x6e0] sm:$0xff]
    %v4739 = vld [vmem:[#allocation12 + $0x6e8] sm:$0xff]
    %v4740 = vld [vmem:[#allocation12 + $0x6f0] sm:$0xff]
    %v4741 = vld [vmem:[#allocation12 + $0x6f8] sm:$0xff]
    %v4742 = vld [vmem:[#allocation12 + $0x700] sm:$0xff]
    %v4743 = vld [vmem:[#allocation12 + $0x708] sm:$0xff]
    %v4744 = vld [vmem:[#allocation12 + $0x710] sm:$0xff]
    %v4745 = vld [vmem:[#allocation12 + $0x718] sm:$0xff]
    %v4746 = vld [vmem:[#allocation12 + $0x720] sm:$0xff]
    %v4747 = vld [vmem:[#allocation12 + $0x728] sm:$0xff]
    %v4748 = vld [vmem:[#allocation12 + $0x730] sm:$0xff]
    %v4749 = vld [vmem:[#allocation12 + $0x738] sm:$0xff]
    %v4750 = vld [vmem:[#allocation12 + $0x740] sm:$0xff]
    %v4751 = vld [vmem:[#allocation12 + $0x748] sm:$0xff]
    %v4752 = vld [vmem:[#allocation12 + $0x750] sm:$0xff]
    %v4753 = vld [vmem:[#allocation12 + $0x758] sm:$0xff]
    %v4754 = vld [vmem:[#allocation12 + $0x760] sm:$0xff]
    %v4755 = vld [vmem:[#allocation12 + $0x768] sm:$0xff]
    %v4756 = vld [vmem:[#allocation12 + $0x770] sm:$0xff]
    %v4757 = vld [vmem:[#allocation12 + $0x778] sm:$0xff]
    %v4758 = vld [vmem:[#allocation12 + $0x780] sm:$0xff]
    %v4759 = vld [vmem:[#allocation12 + $0x788] sm:$0xff]
    %v4760 = vld [vmem:[#allocation12 + $0x790] sm:$0xff]
    %v4761 = vld [vmem:[#allocation12 + $0x798] sm:$0xff]
    %v4762 = vld [vmem:[#allocation12 + $0x7a0] sm:$0xff]
    %v4763 = vld [vmem:[#allocation12 + $0x7a8] sm:$0xff]
    %v4764 = vld [vmem:[#allocation12 + $0x7b0] sm:$0xff]
    %v4765 = vld [vmem:[#allocation12 + $0x7b8] sm:$0xff]
    %v4766 = vld [vmem:[#allocation12 + $0x7c0] sm:$0xff]
    %v4767 = vld [vmem:[#allocation12 + $0x7c8] sm:$0xff]
    %v4768 = vld [vmem:[#allocation12 + $0x7d0] sm:$0xff]
    %v4769 = vld [vmem:[#allocation12 + $0x7d8] sm:$0xff]
    %v4770 = vld [vmem:[#allocation12 + $0x7e0] sm:$0xff]
    %v4771 = vld [vmem:[#allocation12 + $0x7e8] sm:$0xff]
    %v4772 = vld [vmem:[#allocation12 + $0x7f0] sm:$0xff]
    %v4773 = vld [vmem:[#allocation12 + $0x7f8] sm:$0xff]
    %v4774 = vld [vmem:[#allocation2] sm:$0x3]
    %v4775 = vld [vmem:[#allocation2 + $0x8] sm:$0x3]
    %v4776 = vld [vmem:[#allocation2 + $0x10] sm:$0x3]
    %v4777 = vld [vmem:[#allocation2 + $0x18] sm:$0x3]
    %v4778 = vld [vmem:[#allocation2 + $0x20] sm:$0x3]
    %v4779 = vld [vmem:[#allocation2 + $0x28] sm:$0x3]
    %v4780 = vld [vmem:[#allocation2 + $0x30] sm:$0x3]
    %v4781 = vld [vmem:[#allocation2 + $0x38] sm:$0x3]
    %4782 = vmatprep.subr.mxu0 %v4519
    %4783 = vmatpush1.msra.mxu0 %v4518
    %4784 = vmatprep.subr.mxu0 %v4527
    %4785 = vmatpush1.msra.mxu0 %v4526
    %4786 = vmatprep.subr.mxu0 %v4535
    %4787 = vmatpush1.msra.mxu0 %v4534
    %4788 = vmatprep.subr.mxu0 %v4543
    %4789 = vmatpush1.msra.mxu0 %v4542
    %4790 = vmatprep.subr.mxu0 %v4551
    %4791 = vmatpush1.msra.mxu0 %v4550
    %4792 = vmatprep.subr.mxu0 %v4559
    %4793 = vmatpush1.msra.mxu0 %v4558
    %4794 = vmatprep.subr.mxu0 %v4567
    %4795 = vmatpush1.msra.mxu0 %v4566
    %4796 = vmatprep.subr.mxu0 %v4575
    %4797 = vmatpush1.msra.mxu0 %v4574
    %4798 = vmatprep.subr.mxu0 %v4583
    %4799 = vmatpush1.msra.mxu0 %v4582
    %4800 = vmatprep.subr.mxu0 %v4591
    %4801 = vmatpush1.msra.mxu0 %v4590
    %4802 = vmatprep.subr.mxu0 %v4599
    %4803 = vmatpush1.msra.mxu0 %v4598
    %4804 = vmatprep.subr.mxu0 %v4607
    %4805 = vmatpush1.msra.mxu0 %v4606
    %4806 = vmatprep.subr.mxu0 %v4615
    %4807 = vmatpush1.msra.mxu0 %v4614
    %4808 = vmatprep.subr.mxu0 %v4623
    %4809 = vmatpush1.msra.mxu0 %v4622
    %4810 = vmatprep.subr.mxu0 %v4631
    %4811 = vmatpush1.msra.mxu0 %v4630
    %4812 = vmatprep.subr.mxu0 %v4639
    %4813 = vmatpush1.msra.mxu0 %v4638
    %4814 = vmatprep.subr.mxu0 %v4647
    %4815 = vmatpush1.msra.mxu0 %v4646
    %4816 = vmatprep.subr.mxu0 %v4655
    %4817 = vmatpush1.msra.mxu0 %v4654
    %4818 = vmatprep.subr.mxu0 %v4663
    %4819 = vmatpush1.msra.mxu0 %v4662
    %4820 = vmatprep.subr.mxu0 %v4671
    %4821 = vmatpush1.msra.mxu0 %v4670
    %4822 = vmatprep.subr.mxu0 %v4679
    %4823 = vmatpush1.msra.mxu0 %v4678
    %4824 = vmatprep.subr.mxu0 %v4687
    %4825 = vmatpush1.msra.mxu0 %v4686
    %4826 = vmatprep.subr.mxu0 %v4695
    %4827 = vmatpush1.msra.mxu0 %v4694
    %4828 = vmatprep.subr.mxu0 %v4703
    %4829 = vmatpush1.msra.mxu0 %v4702
    %4830 = vmatprep.subr.mxu0 %v4711
    %4831 = vmatpush1.msra.mxu0 %v4710
    %4832 = vmatprep.subr.mxu0 %v4719
    %4833 = vmatpush1.msra.mxu0 %v4718
    %4834 = vmatprep.subr.mxu0 %v4727
    %4835 = vmatpush1.msra.mxu0 %v4726
    %4836 = vmatprep.subr.mxu0 %v4735
    %4837 = vmatpush1.msra.mxu0 %v4734
    %4838 = vmatprep.subr.mxu0 %v4743
    %4839 = vmatpush1.msra.mxu0 %v4742
    %4840 = vmatprep.subr.mxu0 %v4751
    %4841 = vmatpush1.msra.mxu0 %v4750
    %4842 = vmatprep.subr.mxu0 %v4759
    %4843 = vmatpush1.msra.mxu0 %v4758
    %4844 = vmatprep.subr.mxu0 %v4767
    %4845 = vmatpush1.msra.mxu0 %v4766
    %4846 = vmatprep.mubr.f32.mxu0 0.0
    %4847 = vmatmul.mubr.f32.gmra.mrb[0].mxu0 0.0
    %v4848 = vpop.f32.mrb[0].mxu0
    %v4849 = vadd.f32 0.0, %v4848
    %v4850 = vpop.f32.mrb[0].mxu0
    %v4851 = vadd.f32 0.0, %v4850
    %4852 = vdwg.mxu0
    %4853 = vmatprep.subr.mxu0 %v4521
    %4854 = vmatpush1.msra.mxu0 %v4520
    %4855 = vmatprep.subr.mxu0 %v4529
    %4856 = vmatpush1.msra.mxu0 %v4528
    %4857 = vmatprep.subr.mxu0 %v4537
    %4858 = vmatpush1.msra.mxu0 %v4536
    %4859 = vmatprep.subr.mxu0 %v4545
    %4860 = vmatpush1.msra.mxu0 %v4544
    %4861 = vmatprep.subr.mxu0 %v4553
    %4862 = vmatpush1.msra.mxu0 %v4552
    %4863 = vmatprep.subr.mxu0 %v4561
    %4864 = vmatpush1.msra.mxu0 %v4560
    %4865 = vmatprep.subr.mxu0 %v4569
    %4866 = vmatpush1.msra.mxu0 %v4568
    %4867 = vmatprep.subr.mxu0 %v4577
    %4868 = vmatpush1.msra.mxu0 %v4576
    %4869 = vmatprep.subr.mxu0 %v4585
    %4870 = vmatpush1.msra.mxu0 %v4584
    %4871 = vmatprep.subr.mxu0 %v4593
    %4872 = vmatpush1.msra.mxu0 %v4592
    %4873 = vmatprep.subr.mxu0 %v4601
    %4874 = vmatpush1.msra.mxu0 %v4600
    %4875 = vmatprep.subr.mxu0 %v4609
    %4876 = vmatpush1.msra.mxu0 %v4608
    %4877 = vmatprep.subr.mxu0 %v4617
    %4878 = vmatpush1.msra.mxu0 %v4616
    %4879 = vmatprep.subr.mxu0 %v4625
    %4880 = vmatpush1.msra.mxu0 %v4624
    %4881 = vmatprep.subr.mxu0 %v4633
    %4882 = vmatpush1.msra.mxu0 %v4632
    %4883 = vmatprep.subr.mxu0 %v4641
    %4884 = vmatpush1.msra.mxu0 %v4640
    %4885 = vmatprep.subr.mxu0 %v4649
    %4886 = vmatpush1.msra.mxu0 %v4648
    %4887 = vmatprep.subr.mxu0 %v4657
    %4888 = vmatpush1.msra.mxu0 %v4656
    %4889 = vmatprep.subr.mxu0 %v4665
    %4890 = vmatpush1.msra.mxu0 %v4664
    %4891 = vmatprep.subr.mxu0 %v4673
    %4892 = vmatpush1.msra.mxu0 %v4672
    %4893 = vmatprep.subr.mxu0 %v4681
    %4894 = vmatpush1.msra.mxu0 %v4680
    %4895 = vmatprep.subr.mxu0 %v4689
    %4896 = vmatpush1.msra.mxu0 %v4688
    %4897 = vmatprep.subr.mxu0 %v4697
    %4898 = vmatpush1.msra.mxu0 %v4696
    %4899 = vmatprep.subr.mxu0 %v4705
    %4900 = vmatpush1.msra.mxu0 %v4704
    %4901 = vmatprep.subr.mxu0 %v4713
    %4902 = vmatpush1.msra.mxu0 %v4712
    %4903 = vmatprep.subr.mxu0 %v4721
    %4904 = vmatpush1.msra.mxu0 %v4720
    %4905 = vmatprep.subr.mxu0 %v4729
    %4906 = vmatpush1.msra.mxu0 %v4728
    %4907 = vmatprep.subr.mxu0 %v4737
    %4908 = vmatpush1.msra.mxu0 %v4736
    %4909 = vmatprep.subr.mxu0 %v4745
    %4910 = vmatpush1.msra.mxu0 %v4744
    %4911 = vmatprep.subr.mxu0 %v4753
    %4912 = vmatpush1.msra.mxu0 %v4752
    %4913 = vmatprep.subr.mxu0 %v4761
    %4914 = vmatpush1.msra.mxu0 %v4760
    %4915 = vmatprep.subr.mxu0 %v4769
    %4916 = vmatpush1.msra.mxu0 %v4768
    %4917 = vmatprep.mubr.f32.mxu0 0.0
    %4918 = vmatmul.mubr.f32.gmra.mrb[0].mxu0 0.0
    %v4919 = vpop.f32.mrb[0].mxu0
    %v4920 = vadd.f32 0.0, %v4919
    %v4921 = vpop.f32.mrb[0].mxu0
    %v4922 = vadd.f32 0.0, %v4921
    %4923 = vdwg.mxu0
    %4924 = vmatprep.subr.mxu0 %v4523
    %4925 = vmatpush1.msra.mxu0 %v4522
    %4926 = vmatprep.subr.mxu0 %v4531
    %4927 = vmatpush1.msra.mxu0 %v4530
    %4928 = vmatprep.subr.mxu0 %v4539
    %4929 = vmatpush1.msra.mxu0 %v4538
    %4930 = vmatprep.subr.mxu0 %v4547
    %4931 = vmatpush1.msra.mxu0 %v4546
    %4932 = vmatprep.subr.mxu0 %v4555
    %4933 = vmatpush1.msra.mxu0 %v4554
    %4934 = vmatprep.subr.mxu0 %v4563
    %4935 = vmatpush1.msra.mxu0 %v4562
    %4936 = vmatprep.subr.mxu0 %v4571
    %4937 = vmatpush1.msra.mxu0 %v4570
    %4938 = vmatprep.subr.mxu0 %v4579
    %4939 = vmatpush1.msra.mxu0 %v4578
    %4940 = vmatprep.subr.mxu0 %v4587
    %4941 = vmatpush1.msra.mxu0 %v4586
    %4942 = vmatprep.subr.mxu0 %v4595
    %4943 = vmatpush1.msra.mxu0 %v4594
    %4944 = vmatprep.subr.mxu0 %v4603
    %4945 = vmatpush1.msra.mxu0 %v4602
    %4946 = vmatprep.subr.mxu0 %v4611
    %4947 = vmatpush1.msra.mxu0 %v4610
    %4948 = vmatprep.subr.mxu0 %v4619
    %4949 = vmatpush1.msra.mxu0 %v4618
    %4950 = vmatprep.subr.mxu0 %v4627
    %4951 = vmatpush1.msra.mxu0 %v4626
    %4952 = vmatprep.subr.mxu0 %v4635
    %4953 = vmatpush1.msra.mxu0 %v4634
    %4954 = vmatprep.subr.mxu0 %v4643
    %4955 = vmatpush1.msra.mxu0 %v4642
    %4956 = vmatprep.subr.mxu0 %v4651
    %4957 = vmatpush1.msra.mxu0 %v4650
    %4958 = vmatprep.subr.mxu0 %v4659
    %4959 = vmatpush1.msra.mxu0 %v4658
    %4960 = vmatprep.subr.mxu0 %v4667
    %4961 = vmatpush1.msra.mxu0 %v4666
    %4962 = vmatprep.subr.mxu0 %v4675
    %4963 = vmatpush1.msra.mxu0 %v4674
    %4964 = vmatprep.subr.mxu0 %v4683
    %4965 = vmatpush1.msra.mxu0 %v4682
    %4966 = vmatprep.subr.mxu0 %v4691
    %4967 = vmatpush1.msra.mxu0 %v4690
    %4968 = vmatprep.subr.mxu0 %v4699
    %4969 = vmatpush1.msra.mxu0 %v4698
    %4970 = vmatprep.subr.mxu0 %v4707
    %4971 = vmatpush1.msra.mxu0 %v4706
    %4972 = vmatprep.subr.mxu0 %v4715
    %4973 = vmatpush1.msra.mxu0 %v4714
    %4974 = vmatprep.subr.mxu0 %v4723
    %4975 = vmatpush1.msra.mxu0 %v4722
    %4976 = vmatprep.subr.mxu0 %v4731
    %4977 = vmatpush1.msra.mxu0 %v4730
    %4978 = vmatprep.subr.mxu0 %v4739
    %4979 = vmatpush1.msra.mxu0 %v4738
    %4980 = vmatprep.subr.mxu0 %v4747
    %4981 = vmatpush1.msra.mxu0 %v4746
    %4982 = vmatprep.subr.mxu0 %v4755
    %4983 = vmatpush1.msra.mxu0 %v4754
    %4984 = vmatprep.subr.mxu0 %v4763
    %4985 = vmatpush1.msra.mxu0 %v4762
    %4986 = vmatprep.subr.mxu0 %v4771
    %4987 = vmatpush1.msra.mxu0 %v4770
    %4988 = vmatprep.mubr.f32.mxu0 0.0
    %4989 = vmatmul.mubr.f32.gmra.mrb[0].mxu0 0.0
    %v4990 = vpop.f32.mrb[0].mxu0
    %v4991 = vadd.f32 0.0, %v4990
    %v4992 = vpop.f32.mrb[0].mxu0
    %v4993 = vadd.f32 0.0, %v4992
    %4994 = vdwg.mxu0
    %4995 = vmatprep.subr.mxu0 %v4525
    %4996 = vmatpush1.msra.mxu0 %v4524
    %4997 = vmatprep.subr.mxu0 %v4533
    %4998 = vmatpush1.msra.mxu0 %v4532
    %4999 = vmatprep.subr.mxu0 %v4541
    %5000 = vmatpush1.msra.mxu0 %v4540
    %5001 = vmatprep.subr.mxu0 %v4549
    %5002 = vmatpush1.msra.mxu0 %v4548
    %5003 = vmatprep.subr.mxu0 %v4557
    %5004 = vmatpush1.msra.mxu0 %v4556
    %5005 = vmatprep.subr.mxu0 %v4565
    %5006 = vmatpush1.msra.mxu0 %v4564
    %5007 = vmatprep.subr.mxu0 %v4573
    %5008 = vmatpush1.msra.mxu0 %v4572
    %5009 = vmatprep.subr.mxu0 %v4581
    %5010 = vmatpush1.msra.mxu0 %v4580
    %5011 = vmatprep.subr.mxu0 %v4589
    %5012 = vmatpush1.msra.mxu0 %v4588
    %5013 = vmatprep.subr.mxu0 %v4597
    %5014 = vmatpush1.msra.mxu0 %v4596
    %5015 = vmatprep.subr.mxu0 %v4605
    %5016 = vmatpush1.msra.mxu0 %v4604
    %5017 = vmatprep.subr.mxu0 %v4613
    %5018 = vmatpush1.msra.mxu0 %v4612
    %5019 = vmatprep.subr.mxu0 %v4621
    %5020 = vmatpush1.msra.mxu0 %v4620
    %5021 = vmatprep.subr.mxu0 %v4629
    %5022 = vmatpush1.msra.mxu0 %v4628
    %5023 = vmatprep.subr.mxu0 %v4637
    %5024 = vmatpush1.msra.mxu0 %v4636
    %5025 = vmatprep.subr.mxu0 %v4645
    %5026 = vmatpush1.msra.mxu0 %v4644
    %5027 = vmatprep.subr.mxu0 %v4653
    %5028 = vmatpush1.msra.mxu0 %v4652
    %5029 = vmatprep.subr.mxu0 %v4661
    %5030 = vmatpush1.msra.mxu0 %v4660
    %5031 = vmatprep.subr.mxu0 %v4669
    %5032 = vmatpush1.msra.mxu0 %v4668
    %5033 = vmatprep.subr.mxu0 %v4677
    %5034 = vmatpush1.msra.mxu0 %v4676
    %5035 = vmatprep.subr.mxu0 %v4685
    %5036 = vmatpush1.msra.mxu0 %v4684
    %5037 = vmatprep.subr.mxu0 %v4693
    %5038 = vmatpush1.msra.mxu0 %v4692
    %5039 = vmatprep.subr.mxu0 %v4701
    %5040 = vmatpush1.msra.mxu0 %v4700
    %5041 = vmatprep.subr.mxu0 %v4709
    %5042 = vmatpush1.msra.mxu0 %v4708
    %5043 = vmatprep.subr.mxu0 %v4717
    %5044 = vmatpush1.msra.mxu0 %v4716
    %5045 = vmatprep.subr.mxu0 %v4725
    %5046 = vmatpush1.msra.mxu0 %v4724
    %5047 = vmatprep.subr.mxu0 %v4733
    %5048 = vmatpush1.msra.mxu0 %v4732
    %5049 = vmatprep.subr.mxu0 %v4741
    %5050 = vmatpush1.msra.mxu0 %v4740
    %5051 = vmatprep.subr.mxu0 %v4749
    %5052 = vmatpush1.msra.mxu0 %v4748
    %5053 = vmatprep.subr.mxu0 %v4757
    %5054 = vmatpush1.msra.mxu0 %v4756
    %5055 = vmatprep.subr.mxu0 %v4765
    %5056 = vmatpush1.msra.mxu0 %v4764
    %5057 = vmatprep.subr.mxu0 %v4773
    %5058 = vmatpush1.msra.mxu0 %v4772
    %5059 = vmatprep.mubr.f32.mxu0 0.0
    %5060 = vmatmul.mubr.f32.gmra.mrb[0].mxu0 0.0
    %v5061 = vpop.f32.mrb[0].mxu0
    %v5062 = vadd.f32 0.0, %v5061
    %v5063 = vpop.f32.mrb[0].mxu0
    %v5064 = vadd.f32 0.0, %v5063
    %5065 = vdwg.mxu0
    %v5066 = vadd.f32 %v4774, %v4849
    %v5067 = vadd.f32 %v4775, %v4851
    %v5068 = vadd.f32 %v4776, %v4920
    %v5069 = vadd.f32 %v4777, %v4922
    %v5070 = vadd.f32 %v4778, %v4991
    %v5071 = vadd.f32 %v4779, %v4993
    %v5072 = vadd.f32 %v4780, %v5062
    %v5073 = vadd.f32 %v4781, %v5064
    %v5074 = vxor.u32 %v5066, 2147483648
    %v5075 = vxor.u32 %v5067, 2147483648
    %v5076 = vxor.u32 %v5068, 2147483648
    %v5077 = vxor.u32 %v5069, 2147483648
    %v5078 = vxor.u32 %v5070, 2147483648
    %v5079 = vxor.u32 %v5071, 2147483648
    %v5080 = vmul.f32 %v5074, 1.442695
    %v5081 = vpow.pop %v5080
    %v5082 = vmul.f32 %v5075, 1.442695
    %v5083 = vpow.pop %v5082
    %v5084 = vmul.f32 %v5076, 1.442695
    %v5085 = vpow.pop %v5084
    %v5086 = vmul.f32 %v5077, 1.442695
    %v5087 = vpow.pop %v5086
    %v5088 = vmul.f32 %v5078, 1.442695
    %v5089 = vpow.pop %v5088
    %v5090 = vmul.f32 %v5079, 1.442695
    %v5091 = vpow.pop %v5090
    %v5092 = vadd.f32 %v5081, 1.0
    %v5093 = vadd.f32 %v5083, 1.0
    %v5094 = vadd.f32 %v5085, 1.0
    %v5095 = vadd.f32 %v5087, 1.0
    %v5096 = vadd.f32 %v5089, 1.0
    %v5097 = vadd.f32 %v5091, 1.0
    %v5098 = vrcp.pop %v5092
    %v5099 = vmul.f32 1.0, %v5098
    %v5100 = vrcp.pop %v5093
    %v5101 = vmul.f32 1.0, %v5100
    %v5102 = vrcp.pop %v5094
    %v5103 = vmul.f32 1.0, %v5102
    %v5104 = vrcp.pop %v5095
    %v5105 = vmul.f32 1.0, %v5104
    %v5106 = vrcp.pop %v5096
    %v5107 = vmul.f32 1.0, %v5106
    %v5108 = vrcp.pop %v5097
    %v5109 = vmul.f32 1.0, %v5108
    %v5110 = vtanh.pop %v5072
    %v5111 = vtanh.pop %v5073
    %v5112 = vmul.f32 %v5103, 0.0
    %v5113 = vmul.f32 %v5105, 0.0
    %v5114 = vmul.f32 %v5099, %v5110
    %v5115 = vmul.f32 %v5101, %v5111
    %v5116 = vadd.f32 %v5112, %v5114
    %v5117 = vadd.f32 %v5113, %v5115
    %v5118 = vtanh.pop %v5116
    %v5119 = vtanh.pop %v5117
    %v5120 = vmul.f32 %v5107, %v5118
    %v5121 = vmul.f32 %v5109, %v5119
    %v5122 = vld [vmem:[#allocation2] sm:$0xc]
    %v5123 = vld [vmem:[#allocation2 + $0x8] sm:$0xc]
    %v5124 = vld [vmem:[#allocation2 + $0x10] sm:$0xc]
    %v5125 = vld [vmem:[#allocation2 + $0x18] sm:$0xc]
    %v5126 = vld [vmem:[#allocation2 + $0x20] sm:$0xc]
    %v5127 = vld [vmem:[#allocation2 + $0x28] sm:$0xc]
    %v5128 = vld [vmem:[#allocation2 + $0x30] sm:$0xc]
    %v5129 = vld [vmem:[#allocation2 + $0x38] sm:$0xc]
    %5130 = vmatprep.subr.mxu0 %v4519
    %5131 = vmatpush1.msra.mxu0 %v4518
    %5132 = vmatprep.subr.mxu0 %v4527
    %5133 = vmatpush1.msra.mxu0 %v4526
    %5134 = vmatprep.subr.mxu0 %v4535
    %5135 = vmatpush1.msra.mxu0 %v4534
    %5136 = vmatprep.subr.mxu0 %v4543
    %5137 = vmatpush1.msra.mxu0 %v4542
    %5138 = vmatprep.subr.mxu0 %v4551
    %5139 = vmatpush1.msra.mxu0 %v4550
    %5140 = vmatprep.subr.mxu0 %v4559
    %5141 = vmatpush1.msra.mxu0 %v4558
    %5142 = vmatprep.subr.mxu0 %v4567
    %5143 = vmatpush1.msra.mxu0 %v4566
    %5144 = vmatprep.subr.mxu0 %v4575
    %5145 = vmatpush1.msra.mxu0 %v4574
    %5146 = vmatprep.subr.mxu0 %v4583
    %5147 = vmatpush1.msra.mxu0 %v4582
    %5148 = vmatprep.subr.mxu0 %v4591
    %5149 = vmatpush1.msra.mxu0 %v4590
    %5150 = vmatprep.subr.mxu0 %v4599
    %5151 = vmatpush1.msra.mxu0 %v4598
    %5152 = vmatprep.subr.mxu0 %v4607
    %5153 = vmatpush1.msra.mxu0 %v4606
    %5154 = vmatprep.subr.mxu0 %v4615
    %5155 = vmatpush1.msra.mxu0 %v4614
    %5156 = vmatprep.subr.mxu0 %v4623
    %5157 = vmatpush1.msra.mxu0 %v4622
    %5158 = vmatprep.subr.mxu0 %v4631
    %5159 = vmatpush1.msra.mxu0 %v4630
    %5160 = vmatprep.subr.mxu0 %v4639
    %5161 = vmatpush1.msra.mxu0 %v4638
    %5162 = vmatprep.subr.mxu0 %v4647
    %5163 = vmatpush1.msra.mxu0 %v4646
    %5164 = vmatprep.subr.mxu0 %v4655
    %5165 = vmatpush1.msra.mxu0 %v4654
    %5166 = vmatprep.subr.mxu0 %v4663
    %5167 = vmatpush1.msra.mxu0 %v4662
    %5168 = vmatprep.subr.mxu0 %v4671
    %5169 = vmatpush1.msra.mxu0 %v4670
    %5170 = vmatprep.subr.mxu0 %v4679
    %5171 = vmatpush1.msra.mxu0 %v4678
    %5172 = vmatprep.subr.mxu0 %v4687
    %5173 = vmatpush1.msra.mxu0 %v4686
    %5174 = vmatprep.subr.mxu0 %v4695
    %5175 = vmatpush1.msra.mxu0 %v4694
    %5176 = vmatprep.subr.mxu0 %v4703
    %5177 = vmatpush1.msra.mxu0 %v4702
    %5178 = vmatprep.subr.mxu0 %v4711
    %5179 = vmatpush1.msra.mxu0 %v4710
    %5180 = vmatprep.subr.mxu0 %v4719
    %5181 = vmatpush1.msra.mxu0 %v4718
    %5182 = vmatprep.subr.mxu0 %v4727
    %5183 = vmatpush1.msra.mxu0 %v4726
    %5184 = vmatprep.subr.mxu0 %v4735
    %5185 = vmatpush1.msra.mxu0 %v4734
    %5186 = vmatprep.subr.mxu0 %v4743
    %5187 = vmatpush1.msra.mxu0 %v4742
    %5188 = vmatprep.subr.mxu0 %v4751
    %5189 = vmatpush1.msra.mxu0 %v4750
    %5190 = vmatprep.subr.mxu0 %v4759
    %5191 = vmatpush1.msra.mxu0 %v4758
    %5192 = vmatprep.subr.mxu0 %v4767
    %5193 = vmatpush1.msra.mxu0 %v4766
    %5194 = vmatprep.mubr.f32.mxu0 %v5121
    %5195 = vmatmul.mubr.f32.gmra.mrb[0].mxu0 %v5120
    %v5196 = vpop.f32.mrb[0].mxu0
    %v5197 = vadd.f32 0.0, %v5196
    %v5198 = vpop.f32.mrb[0].mxu0
    %v5199 = vadd.f32 0.0, %v5198
    %5200 = vdwg.mxu0
    %5201 = vmatprep.subr.mxu0 %v4521
    %5202 = vmatpush1.msra.mxu0 %v4520
    %5203 = vmatprep.subr.mxu0 %v4529
    %5204 = vmatpush1.msra.mxu0 %v4528
    %5205 = vmatprep.subr.mxu0 %v4537
    %5206 = vmatpush1.msra.mxu0 %v4536
    %5207 = vmatprep.subr.mxu0 %v4545
    %5208 = vmatpush1.msra.mxu0 %v4544
    %5209 = vmatprep.subr.mxu0 %v4553
    %5210 = vmatpush1.msra.mxu0 %v4552
    %5211 = vmatprep.subr.mxu0 %v4561
    %5212 = vmatpush1.msra.mxu0 %v4560
    %5213 = vmatprep.subr.mxu0 %v4569
    %5214 = vmatpush1.msra.mxu0 %v4568
    %5215 = vmatprep.subr.mxu0 %v4577
    %5216 = vmatpush1.msra.mxu0 %v4576
    %5217 = vmatprep.subr.mxu0 %v4585
    %5218 = vmatpush1.msra.mxu0 %v4584
    %5219 = vmatprep.subr.mxu0 %v4593
    %5220 = vmatpush1.msra.mxu0 %v4592
    %5221 = vmatprep.subr.mxu0 %v4601
    %5222 = vmatpush1.msra.mxu0 %v4600
    %5223 = vmatprep.subr.mxu0 %v4609
    %5224 = vmatpush1.msra.mxu0 %v4608
    %5225 = vmatprep.subr.mxu0 %v4617
    %5226 = vmatpush1.msra.mxu0 %v4616
    %5227 = vmatprep.subr.mxu0 %v4625
    %5228 = vmatpush1.msra.mxu0 %v4624
    %5229 = vmatprep.subr.mxu0 %v4633
    %5230 = vmatpush1.msra.mxu0 %v4632
    %5231 = vmatprep.subr.mxu0 %v4641
    %5232 = vmatpush1.msra.mxu0 %v4640
    %5233 = vmatprep.subr.mxu0 %v4649
    %5234 = vmatpush1.msra.mxu0 %v4648
    %5235 = vmatprep.subr.mxu0 %v4657
    %5236 = vmatpush1.msra.mxu0 %v4656
    %5237 = vmatprep.subr.mxu0 %v4665
    %5238 = vmatpush1.msra.mxu0 %v4664
    %5239 = vmatprep.subr.mxu0 %v4673
    %5240 = vmatpush1.msra.mxu0 %v4672
    %5241 = vmatprep.subr.mxu0 %v4681
    %5242 = vmatpush1.msra.mxu0 %v4680
    %5243 = vmatprep.subr.mxu0 %v4689
    %5244 = vmatpush1.msra.mxu0 %v4688
    %5245 = vmatprep.subr.mxu0 %v4697
    %5246 = vmatpush1.msra.mxu0 %v4696
    %5247 = vmatprep.subr.mxu0 %v4705
    %5248 = vmatpush1.msra.mxu0 %v4704
    %5249 = vmatprep.subr.mxu0 %v4713
    %5250 = vmatpush1.msra.mxu0 %v4712
    %5251 = vmatprep.subr.mxu0 %v4721
    %5252 = vmatpush1.msra.mxu0 %v4720
    %5253 = vmatprep.subr.mxu0 %v4729
    %5254 = vmatpush1.msra.mxu0 %v4728
    %5255 = vmatprep.subr.mxu0 %v4737
    %5256 = vmatpush1.msra.mxu0 %v4736
    %5257 = vmatprep.subr.mxu0 %v4745
    %5258 = vmatpush1.msra.mxu0 %v4744
    %5259 = vmatprep.subr.mxu0 %v4753
    %5260 = vmatpush1.msra.mxu0 %v4752
    %5261 = vmatprep.subr.mxu0 %v4761
    %5262 = vmatpush1.msra.mxu0 %v4760
    %5263 = vmatprep.subr.mxu0 %v4769
    %5264 = vmatpush1.msra.mxu0 %v4768
    %5265 = vmatprep.mubr.f32.mxu0 %v5121
    %5266 = vmatmul.mubr.f32.gmra.mrb[0].mxu0 %v5120
    %v5267 = vpop.f32.mrb[0].mxu0
    %v5268 = vadd.f32 0.0, %v5267
    %v5269 = vpop.f32.mrb[0].mxu0
    %v5270 = vadd.f32 0.0, %v5269
    %5271 = vdwg.mxu0
    %5272 = vmatprep.subr.mxu0 %v4523
    %5273 = vmatpush1.msra.mxu0 %v4522
    %5274 = vmatprep.subr.mxu0 %v4531
    %5275 = vmatpush1.msra.mxu0 %v4530
    %5276 = vmatprep.subr.mxu0 %v4539
    %5277 = vmatpush1.msra.mxu0 %v4538
    %5278 = vmatprep.subr.mxu0 %v4547
    %5279 = vmatpush1.msra.mxu0 %v4546
    %5280 = vmatprep.subr.mxu0 %v4555
    %5281 = vmatpush1.msra.mxu0 %v4554
    %5282 = vmatprep.subr.mxu0 %v4563
    %5283 = vmatpush1.msra.mxu0 %v4562
    %5284 = vmatprep.subr.mxu0 %v4571
    %5285 = vmatpush1.msra.mxu0 %v4570
    %5286 = vmatprep.subr.mxu0 %v4579
    %5287 = vmatpush1.msra.mxu0 %v4578
    %5288 = vmatprep.subr.mxu0 %v4587
    %5289 = vmatpush1.msra.mxu0 %v4586
    %5290 = vmatprep.subr.mxu0 %v4595
    %5291 = vmatpush1.msra.mxu0 %v4594
    %5292 = vmatprep.subr.mxu0 %v4603
    %5293 = vmatpush1.msra.mxu0 %v4602
    %5294 = vmatprep.subr.mxu0 %v4611
    %5295 = vmatpush1.msra.mxu0 %v4610
    %5296 = vmatprep.subr.mxu0 %v4619
    %5297 = vmatpush1.msra.mxu0 %v4618
    %5298 = vmatprep.subr.mxu0 %v4627
    %5299 = vmatpush1.msra.mxu0 %v4626
    %5300 = vmatprep.subr.mxu0 %v4635
    %5301 = vmatpush1.msra.mxu0 %v4634
    %5302 = vmatprep.subr.mxu0 %v4643
    %5303 = vmatpush1.msra.mxu0 %v4642
    %5304 = vmatprep.subr.mxu0 %v4651
    %5305 = vmatpush1.msra.mxu0 %v4650
    %5306 = vmatprep.subr.mxu0 %v4659
    %5307 = vmatpush1.msra.mxu0 %v4658
    %5308 = vmatprep.subr.mxu0 %v4667
    %5309 = vmatpush1.msra.mxu0 %v4666
    %5310 = vmatprep.subr.mxu0 %v4675
    %5311 = vmatpush1.msra.mxu0 %v4674
    %5312 = vmatprep.subr.mxu0 %v4683
    %5313 = vmatpush1.msra.mxu0 %v4682
    %5314 = vmatprep.subr.mxu0 %v4691
    %5315 = vmatpush1.msra.mxu0 %v4690
    %5316 = vmatprep.subr.mxu0 %v4699
    %5317 = vmatpush1.msra.mxu0 %v4698
    %5318 = vmatprep.subr.mxu0 %v4707
    %5319 = vmatpush1.msra.mxu0 %v4706
    %5320 = vmatprep.subr.mxu0 %v4715
    %5321 = vmatpush1.msra.mxu0 %v4714
    %5322 = vmatprep.subr.mxu0 %v4723
    %5323 = vmatpush1.msra.mxu0 %v4722
    %5324 = vmatprep.subr.mxu0 %v4731
    %5325 = vmatpush1.msra.mxu0 %v4730
    %5326 = vmatprep.subr.mxu0 %v4739
    %5327 = vmatpush1.msra.mxu0 %v4738
    %5328 = vmatprep.subr.mxu0 %v4747
    %5329 = vmatpush1.msra.mxu0 %v4746
    %5330 = vmatprep.subr.mxu0 %v4755
    %5331 = vmatpush1.msra.mxu0 %v4754
    %5332 = vmatprep.subr.mxu0 %v4763
    %5333 = vmatpush1.msra.mxu0 %v4762
    %5334 = vmatprep.subr.mxu0 %v4771
    %5335 = vmatpush1.msra.mxu0 %v4770
    %5336 = vmatprep.mubr.f32.mxu0 %v5121
    %5337 = vmatmul.mubr.f32.gmra.mrb[0].mxu0 %v5120
    %v5338 = vpop.f32.mrb[0].mxu0
    %v5339 = vadd.f32 0.0, %v5338
    %v5340 = vpop.f32.mrb[0].mxu0
    %v5341 = vadd.f32 0.0, %v5340
    %5342 = vdwg.mxu0
    %5343 = vmatprep.subr.mxu0 %v4525
    %5344 = vmatpush1.msra.mxu0 %v4524
    %5345 = vmatprep.subr.mxu0 %v4533
    %5346 = vmatpush1.msra.mxu0 %v4532
    %5347 = vmatprep.subr.mxu0 %v4541
    %5348 = vmatpush1.msra.mxu0 %v4540
    %5349 = vmatprep.subr.mxu0 %v4549
    %5350 = vmatpush1.msra.mxu0 %v4548
    %5351 = vmatprep.subr.mxu0 %v4557
    %5352 = vmatpush1.msra.mxu0 %v4556
    %5353 = vmatprep.subr.mxu0 %v4565
    %5354 = vmatpush1.msra.mxu0 %v4564
    %5355 = vmatprep.subr.mxu0 %v4573
    %5356 = vmatpush1.msra.mxu0 %v4572
    %5357 = vmatprep.subr.mxu0 %v4581
    %5358 = vmatpush1.msra.mxu0 %v4580
    %5359 = vmatprep.subr.mxu0 %v4589
    %5360 = vmatpush1.msra.mxu0 %v4588
    %5361 = vmatprep.subr.mxu0 %v4597
    %5362 = vmatpush1.msra.mxu0 %v4596
    %5363 = vmatprep.subr.mxu0 %v4605
    %5364 = vmatpush1.msra.mxu0 %v4604
    %5365 = vmatprep.subr.mxu0 %v4613
    %5366 = vmatpush1.msra.mxu0 %v4612
    %5367 = vmatprep.subr.mxu0 %v4621
    %5368 = vmatpush1.msra.mxu0 %v4620
    %5369 = vmatprep.subr.mxu0 %v4629
    %5370 = vmatpush1.msra.mxu0 %v4628
    %5371 = vmatprep.subr.mxu0 %v4637
    %5372 = vmatpush1.msra.mxu0 %v4636
    %5373 = vmatprep.subr.mxu0 %v4645
    %5374 = vmatpush1.msra.mxu0 %v4644
    %5375 = vmatprep.subr.mxu0 %v4653
    %5376 = vmatpush1.msra.mxu0 %v4652
    %5377 = vmatprep.subr.mxu0 %v4661
    %5378 = vmatpush1.msra.mxu0 %v4660
    %5379 = vmatprep.subr.mxu0 %v4669
    %5380 = vmatpush1.msra.mxu0 %v4668
    %5381 = vmatprep.subr.mxu0 %v4677
    %5382 = vmatpush1.msra.mxu0 %v4676
    %5383 = vmatprep.subr.mxu0 %v4685
    %5384 = vmatpush1.msra.mxu0 %v4684
    %5385 = vmatprep.subr.mxu0 %v4693
    %5386 = vmatpush1.msra.mxu0 %v4692
    %5387 = vmatprep.subr.mxu0 %v4701
    %5388 = vmatpush1.msra.mxu0 %v4700
    %5389 = vmatprep.subr.mxu0 %v4709
    %5390 = vmatpush1.msra.mxu0 %v4708
    %5391 = vmatprep.subr.mxu0 %v4717
    %5392 = vmatpush1.msra.mxu0 %v4716
    %5393 = vmatprep.subr.mxu0 %v4725
    %5394 = vmatpush1.msra.mxu0 %v4724
    %5395 = vmatprep.subr.mxu0 %v4733
    %5396 = vmatpush1.msra.mxu0 %v4732
    %5397 = vmatprep.subr.mxu0 %v4741
    %5398 = vmatpush1.msra.mxu0 %v4740
    %5399 = vmatprep.subr.mxu0 %v4749
    %5400 = vmatpush1.msra.mxu0 %v4748
    %5401 = vmatprep.subr.mxu0 %v4757
    %5402 = vmatpush1.msra.mxu0 %v4756
    %5403 = vmatprep.subr.mxu0 %v4765
    %5404 = vmatpush1.msra.mxu0 %v4764
    %5405 = vmatprep.subr.mxu0 %v4773
    %5406 = vmatpush1.msra.mxu0 %v4772
    %5407 = vmatprep.mubr.f32.mxu0 %v5121
    %5408 = vmatmul.mubr.f32.gmra.mrb[0].mxu0 %v5120
    %v5409 = vpop.f32.mrb[0].mxu0
    %v5410 = vadd.f32 0.0, %v5409
    %v5411 = vpop.f32.mrb[0].mxu0
    %v5412 = vadd.f32 0.0, %v5411
    %5413 = vdwg.mxu0
    %v5422 = vrot.slane %v5197, 6
    %v5423 = vrot.slane %v5199, 6
    %v5424 = vrot.slane %v5268, 6
    %v5425 = vrot.slane %v5270, 6
    %v5426 = vrot.slane %v5339, 6
    %v5427 = vrot.slane %v5341, 6
    %v5428 = vrot.slane %v5410, 6
    %v5429 = vrot.slane %v5412, 6
    %v5438 = vadd.f32 %v5122, %v5422
    %v5439 = vadd.f32 %v5123, %v5423
    %v5440 = vadd.f32 %v5124, %v5424
    %v5441 = vadd.f32 %v5125, %v5425
    %v5442 = vadd.f32 %v5126, %v5426
    %v5443 = vadd.f32 %v5127, %v5427
    %v5444 = vadd.f32 %v5128, %v5428
    %v5445 = vadd.f32 %v5129, %v5429
    %v5446 = vxor.u32 %v5438, 2147483648
    %v5447 = vxor.u32 %v5439, 2147483648
    %v5448 = vxor.u32 %v5440, 2147483648
    %v5449 = vxor.u32 %v5441, 2147483648
    %v5450 = vxor.u32 %v5442, 2147483648
    %v5451 = vxor.u32 %v5443, 2147483648
    %v5452 = vmul.f32 %v5446, 1.442695
    %v5453 = vpow.pop %v5452
    %v5454 = vmul.f32 %v5447, 1.442695
    %v5455 = vpow.pop %v5454
    %v5456 = vmul.f32 %v5448, 1.442695
    %v5457 = vpow.pop %v5456
    %v5458 = vmul.f32 %v5449, 1.442695
    %v5459 = vpow.pop %v5458
    %v5460 = vmul.f32 %v5450, 1.442695
    %v5461 = vpow.pop %v5460
    %v5462 = vmul.f32 %v5451, 1.442695
    %v5463 = vpow.pop %v5462
    %v5464 = vadd.f32 %v5453, 1.0
    %v5465 = vadd.f32 %v5455, 1.0
    %v5466 = vadd.f32 %v5457, 1.0
    %v5467 = vadd.f32 %v5459, 1.0
    %v5468 = vadd.f32 %v5461, 1.0
    %v5469 = vadd.f32 %v5463, 1.0
    %v5470 = vrcp.pop %v5464
    %v5471 = vmul.f32 1.0, %v5470
    %v5472 = vrcp.pop %v5465
    %v5473 = vmul.f32 1.0, %v5472
    %v5474 = vrcp.pop %v5466
    %v5475 = vmul.f32 1.0, %v5474
    %v5476 = vrcp.pop %v5467
    %v5477 = vmul.f32 1.0, %v5476
    %v5478 = vrcp.pop %v5468
    %v5479 = vmul.f32 1.0, %v5478
    %v5480 = vrcp.pop %v5469
    %v5481 = vmul.f32 1.0, %v5480
    %v5482 = vtanh.pop %v5444
    %v5483 = vtanh.pop %v5445
    %v5486 = vrot.slane %v5116, 6
    %v5487 = vrot.slane %v5117, 6
    %v5490 = vmul.f32 %v5475, %v5486
    %v5491 = vmul.f32 %v5477, %v5487
    %v5492 = vmul.f32 %v5471, %v5482
    %v5493 = vmul.f32 %v5473, %v5483
    %v5494 = vadd.f32 %v5490, %v5492
    %v5495 = vadd.f32 %v5491, %v5493
    %v5496 = vtanh.pop %v5494
    %v5497 = vtanh.pop %v5495
    %v5498 = vmul.f32 %v5479, %v5496
    %v5499 = vmul.f32 %v5481, %v5497
    %v5500 = vld [vmem:[#allocation2] sm:$0x30]
    %v5501 = vld [vmem:[#allocation2 + $0x8] sm:$0x30]
    %v5502 = vld [vmem:[#allocation2 + $0x10] sm:$0x30]
    %v5503 = vld [vmem:[#allocation2 + $0x18] sm:$0x30]
    %v5504 = vld [vmem:[#allocation2 + $0x20] sm:$0x30]
    %v5505 = vld [vmem:[#allocation2 + $0x28] sm:$0x30]
    %v5506 = vld [vmem:[#allocation2 + $0x30] sm:$0x30]
    %v5507 = vld [vmem:[#allocation2 + $0x38] sm:$0x30]
    %v5510 = vrot.slane %v5498, 2
    %v5511 = vrot.slane %v5499, 2
    %5514 = vmatprep.subr.mxu0 %v4519
    %5515 = vmatpush1.msra.mxu0 %v4518
    %5516 = vmatprep.subr.mxu0 %v4527
    %5517 = vmatpush1.msra.mxu0 %v4526
    %5518 = vmatprep.subr.mxu0 %v4535
    %5519 = vmatpush1.msra.mxu0 %v4534
    %5520 = vmatprep.subr.mxu0 %v4543
    %5521 = vmatpush1.msra.mxu0 %v4542
    %5522 = vmatprep.subr.mxu0 %v4551
    %5523 = vmatpush1.msra.mxu0 %v4550
    %5524 = vmatprep.subr.mxu0 %v4559
    %5525 = vmatpush1.msra.mxu0 %v4558
    %5526 = vmatprep.subr.mxu0 %v4567
    %5527 = vmatpush1.msra.mxu0 %v4566
    %5528 = vmatprep.subr.mxu0 %v4575
    %5529 = vmatpush1.msra.mxu0 %v4574
    %5530 = vmatprep.subr.mxu0 %v4583
    %5531 = vmatpush1.msra.mxu0 %v4582
    %5532 = vmatprep.subr.mxu0 %v4591
    %5533 = vmatpush1.msra.mxu0 %v4590
    %5534 = vmatprep.subr.mxu0 %v4599
    %5535 = vmatpush1.msra.mxu0 %v4598
    %5536 = vmatprep.subr.mxu0 %v4607
    %5537 = vmatpush1.msra.mxu0 %v4606
    %5538 = vmatprep.subr.mxu0 %v4615
    %5539 = vmatpush1.msra.mxu0 %v4614
    %5540 = vmatprep.subr.mxu0 %v4623
    %5541 = vmatpush1.msra.mxu0 %v4622
    %5542 = vmatprep.subr.mxu0 %v4631
    %5543 = vmatpush1.msra.mxu0 %v4630
    %5544 = vmatprep.subr.mxu0 %v4639
    %5545 = vmatpush1.msra.mxu0 %v4638
    %5546 = vmatprep.subr.mxu0 %v4647
    %5547 = vmatpush1.msra.mxu0 %v4646
    %5548 = vmatprep.subr.mxu0 %v4655
    %5549 = vmatpush1.msra.mxu0 %v4654
    %5550 = vmatprep.subr.mxu0 %v4663
    %5551 = vmatpush1.msra.mxu0 %v4662
    %5552 = vmatprep.subr.mxu0 %v4671
    %5553 = vmatpush1.msra.mxu0 %v4670
    %5554 = vmatprep.subr.mxu0 %v4679
    %5555 = vmatpush1.msra.mxu0 %v4678
    %5556 = vmatprep.subr.mxu0 %v4687
    %5557 = vmatpush1.msra.mxu0 %v4686
    %5558 = vmatprep.subr.mxu0 %v4695
    %5559 = vmatpush1.msra.mxu0 %v4694
    %5560 = vmatprep.subr.mxu0 %v4703
    %5561 = vmatpush1.msra.mxu0 %v4702
    %5562 = vmatprep.subr.mxu0 %v4711
    %5563 = vmatpush1.msra.mxu0 %v4710
    %5564 = vmatprep.subr.mxu0 %v4719
    %5565 = vmatpush1.msra.mxu0 %v4718
    %5566 = vmatprep.subr.mxu0 %v4727
    %5567 = vmatpush1.msra.mxu0 %v4726
    %5568 = vmatprep.subr.mxu0 %v4735
    %5569 = vmatpush1.msra.mxu0 %v4734
    %5570 = vmatprep.subr.mxu0 %v4743
    %5571 = vmatpush1.msra.mxu0 %v4742
    %5572 = vmatprep.subr.mxu0 %v4751
    %5573 = vmatpush1.msra.mxu0 %v4750
    %5574 = vmatprep.subr.mxu0 %v4759
    %5575 = vmatpush1.msra.mxu0 %v4758
    %5576 = vmatprep.subr.mxu0 %v4767
    %5577 = vmatpush1.msra.mxu0 %v4766
    %5578 = vmatprep.mubr.f32.mxu0 %v5511
    %5579 = vmatmul.mubr.f32.gmra.mrb[0].mxu0 %v5510
    %v5580 = vpop.f32.mrb[0].mxu0
    %v5581 = vadd.f32 0.0, %v5580
    %v5582 = vpop.f32.mrb[0].mxu0
    %v5583 = vadd.f32 0.0, %v5582
    %5584 = vdwg.mxu0
    %5585 = vmatprep.subr.mxu0 %v4521
    %5586 = vmatpush1.msra.mxu0 %v4520
    %5587 = vmatprep.subr.mxu0 %v4529
    %5588 = vmatpush1.msra.mxu0 %v4528
    %5589 = vmatprep.subr.mxu0 %v4537
    %5590 = vmatpush1.msra.mxu0 %v4536
    %5591 = vmatprep.subr.mxu0 %v4545
    %5592 = vmatpush1.msra.mxu0 %v4544
    %5593 = vmatprep.subr.mxu0 %v4553
    %5594 = vmatpush1.msra.mxu0 %v4552
    %5595 = vmatprep.subr.mxu0 %v4561
    %5596 = vmatpush1.msra.mxu0 %v4560
    %5597 = vmatprep.subr.mxu0 %v4569
    %5598 = vmatpush1.msra.mxu0 %v4568
    %5599 = vmatprep.subr.mxu0 %v4577
    %5600 = vmatpush1.msra.mxu0 %v4576
    %5601 = vmatprep.subr.mxu0 %v4585
    %5602 = vmatpush1.msra.mxu0 %v4584
    %5603 = vmatprep.subr.mxu0 %v4593
    %5604 = vmatpush1.msra.mxu0 %v4592
    %5605 = vmatprep.subr.mxu0 %v4601
    %5606 = vmatpush1.msra.mxu0 %v4600
    %5607 = vmatprep.subr.mxu0 %v4609
    %5608 = vmatpush1.msra.mxu0 %v4608
    %5609 = vmatprep.subr.mxu0 %v4617
    %5610 = vmatpush1.msra.mxu0 %v4616
    %5611 = vmatprep.subr.mxu0 %v4625
    %5612 = vmatpush1.msra.mxu0 %v4624
    %5613 = vmatprep.subr.mxu0 %v4633
    %5614 = vmatpush1.msra.mxu0 %v4632
    %5615 = vmatprep.subr.mxu0 %v4641
    %5616 = vmatpush1.msra.mxu0 %v4640
    %5617 = vmatprep.subr.mxu0 %v4649
    %5618 = vmatpush1.msra.mxu0 %v4648
    %5619 = vmatprep.subr.mxu0 %v4657
    %5620 = vmatpush1.msra.mxu0 %v4656
    %5621 = vmatprep.subr.mxu0 %v4665
    %5622 = vmatpush1.msra.mxu0 %v4664
    %5623 = vmatprep.subr.mxu0 %v4673
    %5624 = vmatpush1.msra.mxu0 %v4672
    %5625 = vmatprep.subr.mxu0 %v4681
    %5626 = vmatpush1.msra.mxu0 %v4680
    %5627 = vmatprep.subr.mxu0 %v4689
    %5628 = vmatpush1.msra.mxu0 %v4688
    %5629 = vmatprep.subr.mxu0 %v4697
    %5630 = vmatpush1.msra.mxu0 %v4696
    %5631 = vmatprep.subr.mxu0 %v4705
    %5632 = vmatpush1.msra.mxu0 %v4704
    %5633 = vmatprep.subr.mxu0 %v4713
    %5634 = vmatpush1.msra.mxu0 %v4712
    %5635 = vmatprep.subr.mxu0 %v4721
    %5636 = vmatpush1.msra.mxu0 %v4720
    %5637 = vmatprep.subr.mxu0 %v4729
    %5638 = vmatpush1.msra.mxu0 %v4728
    %5639 = vmatprep.subr.mxu0 %v4737
    %5640 = vmatpush1.msra.mxu0 %v4736
    %5641 = vmatprep.subr.mxu0 %v4745
    %5642 = vmatpush1.msra.mxu0 %v4744
    %5643 = vmatprep.subr.mxu0 %v4753
    %5644 = vmatpush1.msra.mxu0 %v4752
    %5645 = vmatprep.subr.mxu0 %v4761
    %5646 = vmatpush1.msra.mxu0 %v4760
    %5647 = vmatprep.subr.mxu0 %v4769
    %5648 = vmatpush1.msra.mxu0 %v4768
    %5649 = vmatprep.mubr.f32.mxu0 %v5511
    %5650 = vmatmul.mubr.f32.gmra.mrb[0].mxu0 %v5510
    %v5651 = vpop.f32.mrb[0].mxu0
    %v5652 = vadd.f32 0.0, %v5651
    %v5653 = vpop.f32.mrb[0].mxu0
    %v5654 = vadd.f32 0.0, %v5653
    %5655 = vdwg.mxu0
    %5656 = vmatprep.subr.mxu0 %v4523
    %5657 = vmatpush1.msra.mxu0 %v4522
    %5658 = vmatprep.subr.mxu0 %v4531
    %5659 = vmatpush1.msra.mxu0 %v4530
    %5660 = vmatprep.subr.mxu0 %v4539
    %5661 = vmatpush1.msra.mxu0 %v4538
    %5662 = vmatprep.subr.mxu0 %v4547
    %5663 = vmatpush1.msra.mxu0 %v4546
    %5664 = vmatprep.subr.mxu0 %v4555
    %5665 = vmatpush1.msra.mxu0 %v4554
    %5666 = vmatprep.subr.mxu0 %v4563
    %5667 = vmatpush1.msra.mxu0 %v4562
    %5668 = vmatprep.subr.mxu0 %v4571
    %5669 = vmatpush1.msra.mxu0 %v4570
    %5670 = vmatprep.subr.mxu0 %v4579
    %5671 = vmatpush1.msra.mxu0 %v4578
    %5672 = vmatprep.subr.mxu0 %v4587
    %5673 = vmatpush1.msra.mxu0 %v4586
    %5674 = vmatprep.subr.mxu0 %v4595
    %5675 = vmatpush1.msra.mxu0 %v4594
    %5676 = vmatprep.subr.mxu0 %v4603
    %5677 = vmatpush1.msra.mxu0 %v4602
    %5678 = vmatprep.subr.mxu0 %v4611
    %5679 = vmatpush1.msra.mxu0 %v4610
    %5680 = vmatprep.subr.mxu0 %v4619
    %5681 = vmatpush1.msra.mxu0 %v4618
    %5682 = vmatprep.subr.mxu0 %v4627
    %5683 = vmatpush1.msra.mxu0 %v4626
    %5684 = vmatprep.subr.mxu0 %v4635
    %5685 = vmatpush1.msra.mxu0 %v4634
    %5686 = vmatprep.subr.mxu0 %v4643
    %5687 = vmatpush1.msra.mxu0 %v4642
    %5688 = vmatprep.subr.mxu0 %v4651
    %5689 = vmatpush1.msra.mxu0 %v4650
    %5690 = vmatprep.subr.mxu0 %v4659
    %5691 = vmatpush1.msra.mxu0 %v4658
    %5692 = vmatprep.subr.mxu0 %v4667
    %5693 = vmatpush1.msra.mxu0 %v4666
    %5694 = vmatprep.subr.mxu0 %v4675
    %5695 = vmatpush1.msra.mxu0 %v4674
    %5696 = vmatprep.subr.mxu0 %v4683
    %5697 = vmatpush1.msra.mxu0 %v4682
    %5698 = vmatprep.subr.mxu0 %v4691
    %5699 = vmatpush1.msra.mxu0 %v4690
    %5700 = vmatprep.subr.mxu0 %v4699
    %5701 = vmatpush1.msra.mxu0 %v4698
    %5702 = vmatprep.subr.mxu0 %v4707
    %5703 = vmatpush1.msra.mxu0 %v4706
    %5704 = vmatprep.subr.mxu0 %v4715
    %5705 = vmatpush1.msra.mxu0 %v4714
    %5706 = vmatprep.subr.mxu0 %v4723
    %5707 = vmatpush1.msra.mxu0 %v4722
    %5708 = vmatprep.subr.mxu0 %v4731
    %5709 = vmatpush1.msra.mxu0 %v4730
    %5710 = vmatprep.subr.mxu0 %v4739
    %5711 = vmatpush1.msra.mxu0 %v4738
    %5712 = vmatprep.subr.mxu0 %v4747
    %5713 = vmatpush1.msra.mxu0 %v4746
    %5714 = vmatprep.subr.mxu0 %v4755
    %5715 = vmatpush1.msra.mxu0 %v4754
    %5716 = vmatprep.subr.mxu0 %v4763
    %5717 = vmatpush1.msra.mxu0 %v4762
    %5718 = vmatprep.subr.mxu0 %v4771
    %5719 = vmatpush1.msra.mxu0 %v4770
    %5720 = vmatprep.mubr.f32.mxu0 %v5511
    %5721 = vmatmul.mubr.f32.gmra.mrb[0].mxu0 %v5510
    %v5722 = vpop.f32.mrb[0].mxu0
    %v5723 = vadd.f32 0.0, %v5722
    %v5724 = vpop.f32.mrb[0].mxu0
    %v5725 = vadd.f32 0.0, %v5724
    %5726 = vdwg.mxu0
    %5727 = vmatprep.subr.mxu0 %v4525
    %5728 = vmatpush1.msra.mxu0 %v4524
    %5729 = vmatprep.subr.mxu0 %v4533
    %5730 = vmatpush1.msra.mxu0 %v4532
    %5731 = vmatprep.subr.mxu0 %v4541
    %5732 = vmatpush1.msra.mxu0 %v4540
    %5733 = vmatprep.subr.mxu0 %v4549
    %5734 = vmatpush1.msra.mxu0 %v4548
    %5735 = vmatprep.subr.mxu0 %v4557
    %5736 = vmatpush1.msra.mxu0 %v4556
    %5737 = vmatprep.subr.mxu0 %v4565
    %5738 = vmatpush1.msra.mxu0 %v4564
    %5739 = vmatprep.subr.mxu0 %v4573
    %5740 = vmatpush1.msra.mxu0 %v4572
    %5741 = vmatprep.subr.mxu0 %v4581
    %5742 = vmatpush1.msra.mxu0 %v4580
    %5743 = vmatprep.subr.mxu0 %v4589
    %5744 = vmatpush1.msra.mxu0 %v4588
    %5745 = vmatprep.subr.mxu0 %v4597
    %5746 = vmatpush1.msra.mxu0 %v4596
    %5747 = vmatprep.subr.mxu0 %v4605
    %5748 = vmatpush1.msra.mxu0 %v4604
    %5749 = vmatprep.subr.mxu0 %v4613
    %5750 = vmatpush1.msra.mxu0 %v4612
    %5751 = vmatprep.subr.mxu0 %v4621
    %5752 = vmatpush1.msra.mxu0 %v4620
    %5753 = vmatprep.subr.mxu0 %v4629
    %5754 = vmatpush1.msra.mxu0 %v4628
    %5755 = vmatprep.subr.mxu0 %v4637
    %5756 = vmatpush1.msra.mxu0 %v4636
    %5757 = vmatprep.subr.mxu0 %v4645
    %5758 = vmatpush1.msra.mxu0 %v4644
    %5759 = vmatprep.subr.mxu0 %v4653
    %5760 = vmatpush1.msra.mxu0 %v4652
    %5761 = vmatprep.subr.mxu0 %v4661
    %5762 = vmatpush1.msra.mxu0 %v4660
    %5763 = vmatprep.subr.mxu0 %v4669
    %5764 = vmatpush1.msra.mxu0 %v4668
    %5765 = vmatprep.subr.mxu0 %v4677
    %5766 = vmatpush1.msra.mxu0 %v4676
    %5767 = vmatprep.subr.mxu0 %v4685
    %5768 = vmatpush1.msra.mxu0 %v4684
    %5769 = vmatprep.subr.mxu0 %v4693
    %5770 = vmatpush1.msra.mxu0 %v4692
    %5771 = vmatprep.subr.mxu0 %v4701
    %5772 = vmatpush1.msra.mxu0 %v4700
    %5773 = vmatprep.subr.mxu0 %v4709
    %5774 = vmatpush1.msra.mxu0 %v4708
    %5775 = vmatprep.subr.mxu0 %v4717
    %5776 = vmatpush1.msra.mxu0 %v4716
    %5777 = vmatprep.subr.mxu0 %v4725
    %5778 = vmatpush1.msra.mxu0 %v4724
    %5779 = vmatprep.subr.mxu0 %v4733
    %5780 = vmatpush1.msra.mxu0 %v4732
    %5781 = vmatprep.subr.mxu0 %v4741
    %5782 = vmatpush1.msra.mxu0 %v4740
    %5783 = vmatprep.subr.mxu0 %v4749
    %5784 = vmatpush1.msra.mxu0 %v4748
    %5785 = vmatprep.subr.mxu0 %v4757
    %5786 = vmatpush1.msra.mxu0 %v4756
    %5787 = vmatprep.subr.mxu0 %v4765
    %5788 = vmatpush1.msra.mxu0 %v4764
    %5789 = vmatprep.subr.mxu0 %v4773
    %5790 = vmatpush1.msra.mxu0 %v4772
    %5791 = vmatprep.mubr.f32.mxu0 %v5511
    %5792 = vmatmul.mubr.f32.gmra.mrb[0].mxu0 %v5510
    %v5793 = vpop.f32.mrb[0].mxu0
    %v5794 = vadd.f32 0.0, %v5793
    %v5795 = vpop.f32.mrb[0].mxu0
    %v5796 = vadd.f32 0.0, %v5795
    %5797 = vdwg.mxu0
    %v5806 = vrot.slane %v5581, 4
    %v5807 = vrot.slane %v5583, 4
    %v5808 = vrot.slane %v5652, 4
    %v5809 = vrot.slane %v5654, 4
    %v5810 = vrot.slane %v5723, 4
    %v5811 = vrot.slane %v5725, 4
    %v5812 = vrot.slane %v5794, 4
    %v5813 = vrot.slane %v5796, 4
    %v5822 = vadd.f32 %v5500, %v5806
    %v5823 = vadd.f32 %v5501, %v5807
    %v5824 = vadd.f32 %v5502, %v5808
    %v5825 = vadd.f32 %v5503, %v5809
    %v5826 = vadd.f32 %v5504, %v5810
    %v5827 = vadd.f32 %v5505, %v5811
    %v5828 = vadd.f32 %v5506, %v5812
    %v5829 = vadd.f32 %v5507, %v5813
    %v5830 = vxor.u32 %v5822, 2147483648
    %v5831 = vxor.u32 %v5823, 2147483648
    %v5832 = vxor.u32 %v5824, 2147483648
    %v5833 = vxor.u32 %v5825, 2147483648
    %v5834 = vxor.u32 %v5826, 2147483648
    %v5835 = vxor.u32 %v5827, 2147483648
    %v5836 = vmul.f32 %v5830, 1.442695
    %v5837 = vpow.pop %v5836
    %v5838 = vmul.f32 %v5831, 1.442695
    %v5839 = vpow.pop %v5838
    %v5840 = vmul.f32 %v5832, 1.442695
    %v5841 = vpow.pop %v5840
    %v5842 = vmul.f32 %v5833, 1.442695
    %v5843 = vpow.pop %v5842
    %v5844 = vmul.f32 %v5834, 1.442695
    %v5845 = vpow.pop %v5844
    %v5846 = vmul.f32 %v5835, 1.442695
    %v5847 = vpow.pop %v5846
    %v5848 = vadd.f32 %v5837, 1.0
    %v5849 = vadd.f32 %v5839, 1.0
    %v5850 = vadd.f32 %v5841, 1.0
    %v5851 = vadd.f32 %v5843, 1.0
    %v5852 = vadd.f32 %v5845, 1.0
    %v5853 = vadd.f32 %v5847, 1.0
    %v5854 = vrcp.pop %v5848
    %v5855 = vmul.f32 1.0, %v5854
    %v5856 = vrcp.pop %v5849
    %v5857 = vmul.f32 1.0, %v5856
    %v5858 = vrcp.pop %v5850
    %v5859 = vmul.f32 1.0, %v5858
    %v5860 = vrcp.pop %v5851
    %v5861 = vmul.f32 1.0, %v5860
    %v5862 = vrcp.pop %v5852
    %v5863 = vmul.f32 1.0, %v5862
    %v5864 = vrcp.pop %v5853
    %v5865 = vmul.f32 1.0, %v5864
    %v5866 = vtanh.pop %v5828
    %v5867 = vtanh.pop %v5829
    %v5870 = vrot.slane %v5494, 6
    %v5871 = vrot.slane %v5495, 6
    %v5874 = vmul.f32 %v5859, %v5870
    %v5875 = vmul.f32 %v5861, %v5871
    %v5876 = vmul.f32 %v5855, %v5866
    %v5877 = vmul.f32 %v5857, %v5867
    %v5878 = vadd.f32 %v5874, %v5876
    %v5879 = vadd.f32 %v5875, %v5877
    %v5880 = vtanh.pop %v5878
    %v5881 = vtanh.pop %v5879
    %v5882 = vmul.f32 %v5863, %v5880
    %v5883 = vmul.f32 %v5865, %v5881
    %v5884 = vld [vmem:[#allocation2] sm:$0xc0]
    %v5885 = vld [vmem:[#allocation2 + $0x8] sm:$0xc0]
    %v5886 = vld [vmem:[#allocation2 + $0x10] sm:$0xc0]
    %v5887 = vld [vmem:[#allocation2 + $0x18] sm:$0xc0]
    %v5888 = vld [vmem:[#allocation2 + $0x20] sm:$0xc0]
    %v5889 = vld [vmem:[#allocation2 + $0x28] sm:$0xc0]
    %v5890 = vld [vmem:[#allocation2 + $0x30] sm:$0xc0]
    %v5891 = vld [vmem:[#allocation2 + $0x38] sm:$0xc0]
    %v5894 = vrot.slane %v5882, 4
    %v5895 = vrot.slane %v5883, 4
    %5898 = vmatprep.subr.mxu0 %v4519
    %5899 = vmatpush1.msra.mxu0 %v4518
    %5900 = vmatprep.subr.mxu0 %v4527
    %5901 = vmatpush1.msra.mxu0 %v4526
    %5902 = vmatprep.subr.mxu0 %v4535
    %5903 = vmatpush1.msra.mxu0 %v4534
    %5904 = vmatprep.subr.mxu0 %v4543
    %5905 = vmatpush1.msra.mxu0 %v4542
    %5906 = vmatprep.subr.mxu0 %v4551
    %5907 = vmatpush1.msra.mxu0 %v4550
    %5908 = vmatprep.subr.mxu0 %v4559
    %5909 = vmatpush1.msra.mxu0 %v4558
    %5910 = vmatprep.subr.mxu0 %v4567
    %5911 = vmatpush1.msra.mxu0 %v4566
    %5912 = vmatprep.subr.mxu0 %v4575
    %5913 = vmatpush1.msra.mxu0 %v4574
    %5914 = vmatprep.subr.mxu0 %v4583
    %5915 = vmatpush1.msra.mxu0 %v4582
    %5916 = vmatprep.subr.mxu0 %v4591
    %5917 = vmatpush1.msra.mxu0 %v4590
    %5918 = vmatprep.subr.mxu0 %v4599
    %5919 = vmatpush1.msra.mxu0 %v4598
    %5920 = vmatprep.subr.mxu0 %v4607
    %5921 = vmatpush1.msra.mxu0 %v4606
    %5922 = vmatprep.subr.mxu0 %v4615
    %5923 = vmatpush1.msra.mxu0 %v4614
    %5924 = vmatprep.subr.mxu0 %v4623
    %5925 = vmatpush1.msra.mxu0 %v4622
    %5926 = vmatprep.subr.mxu0 %v4631
    %5927 = vmatpush1.msra.mxu0 %v4630
    %5928 = vmatprep.subr.mxu0 %v4639
    %5929 = vmatpush1.msra.mxu0 %v4638
    %5930 = vmatprep.subr.mxu0 %v4647
    %5931 = vmatpush1.msra.mxu0 %v4646
    %5932 = vmatprep.subr.mxu0 %v4655
    %5933 = vmatpush1.msra.mxu0 %v4654
    %5934 = vmatprep.subr.mxu0 %v4663
    %5935 = vmatpush1.msra.mxu0 %v4662
    %5936 = vmatprep.subr.mxu0 %v4671
    %5937 = vmatpush1.msra.mxu0 %v4670
    %5938 = vmatprep.subr.mxu0 %v4679
    %5939 = vmatpush1.msra.mxu0 %v4678
    %5940 = vmatprep.subr.mxu0 %v4687
    %5941 = vmatpush1.msra.mxu0 %v4686
    %5942 = vmatprep.subr.mxu0 %v4695
    %5943 = vmatpush1.msra.mxu0 %v4694
    %5944 = vmatprep.subr.mxu0 %v4703
    %5945 = vmatpush1.msra.mxu0 %v4702
    %5946 = vmatprep.subr.mxu0 %v4711
    %5947 = vmatpush1.msra.mxu0 %v4710
    %5948 = vmatprep.subr.mxu0 %v4719
    %5949 = vmatpush1.msra.mxu0 %v4718
    %5950 = vmatprep.subr.mxu0 %v4727
    %5951 = vmatpush1.msra.mxu0 %v4726
    %5952 = vmatprep.subr.mxu0 %v4735
    %5953 = vmatpush1.msra.mxu0 %v4734
    %5954 = vmatprep.subr.mxu0 %v4743
    %5955 = vmatpush1.msra.mxu0 %v4742
    %5956 = vmatprep.subr.mxu0 %v4751
    %5957 = vmatpush1.msra.mxu0 %v4750
    %5958 = vmatprep.subr.mxu0 %v4759
    %5959 = vmatpush1.msra.mxu0 %v4758
    %5960 = vmatprep.subr.mxu0 %v4767
    %5961 = vmatpush1.msra.mxu0 %v4766
    %5962 = vmatprep.mubr.f32.mxu0 %v5895
    %5963 = vmatmul.mubr.f32.gmra.mrb[0].mxu0 %v5894
    %v5964 = vpop.f32.mrb[0].mxu0
    %v5965 = vadd.f32 0.0, %v5964
    %v5966 = vpop.f32.mrb[0].mxu0
    %v5967 = vadd.f32 0.0, %v5966
    %5968 = vdwg.mxu0
    %5969 = vmatprep.subr.mxu0 %v4521
    %5970 = vmatpush1.msra.mxu0 %v4520
    %5971 = vmatprep.subr.mxu0 %v4529
    %5972 = vmatpush1.msra.mxu0 %v4528
    %5973 = vmatprep.subr.mxu0 %v4537
    %5974 = vmatpush1.msra.mxu0 %v4536
    %5975 = vmatprep.subr.mxu0 %v4545
    %5976 = vmatpush1.msra.mxu0 %v4544
    %5977 = vmatprep.subr.mxu0 %v4553
    %5978 = vmatpush1.msra.mxu0 %v4552
    %5979 = vmatprep.subr.mxu0 %v4561
    %5980 = vmatpush1.msra.mxu0 %v4560
    %5981 = vmatprep.subr.mxu0 %v4569
    %5982 = vmatpush1.msra.mxu0 %v4568
    %5983 = vmatprep.subr.mxu0 %v4577
    %5984 = vmatpush1.msra.mxu0 %v4576
    %5985 = vmatprep.subr.mxu0 %v4585
    %5986 = vmatpush1.msra.mxu0 %v4584
    %5987 = vmatprep.subr.mxu0 %v4593
    %5988 = vmatpush1.msra.mxu0 %v4592
    %5989 = vmatprep.subr.mxu0 %v4601
    %5990 = vmatpush1.msra.mxu0 %v4600
    %5991 = vmatprep.subr.mxu0 %v4609
    %5992 = vmatpush1.msra.mxu0 %v4608
    %5993 = vmatprep.subr.mxu0 %v4617
    %5994 = vmatpush1.msra.mxu0 %v4616
    %5995 = vmatprep.subr.mxu0 %v4625
    %5996 = vmatpush1.msra.mxu0 %v4624
    %5997 = vmatprep.subr.mxu0 %v4633
    %5998 = vmatpush1.msra.mxu0 %v4632
    %5999 = vmatprep.subr.mxu0 %v4641
    %6000 = vmatpush1.msra.mxu0 %v4640
    %6001 = vmatprep.subr.mxu0 %v4649
    %6002 = vmatpush1.msra.mxu0 %v4648
    %6003 = vmatprep.subr.mxu0 %v4657
    %6004 = vmatpush1.msra.mxu0 %v4656
    %6005 = vmatprep.subr.mxu0 %v4665
    %6006 = vmatpush1.msra.mxu0 %v4664
    %6007 = vmatprep.subr.mxu0 %v4673
    %6008 = vmatpush1.msra.mxu0 %v4672
    %6009 = vmatprep.subr.mxu0 %v4681
    %6010 = vmatpush1.msra.mxu0 %v4680
    %6011 = vmatprep.subr.mxu0 %v4689
    %6012 = vmatpush1.msra.mxu0 %v4688
    %6013 = vmatprep.subr.mxu0 %v4697
    %6014 = vmatpush1.msra.mxu0 %v4696
    %6015 = vmatprep.subr.mxu0 %v4705
    %6016 = vmatpush1.msra.mxu0 %v4704
    %6017 = vmatprep.subr.mxu0 %v4713
    %6018 = vmatpush1.msra.mxu0 %v4712
    %6019 = vmatprep.subr.mxu0 %v4721
    %6020 = vmatpush1.msra.mxu0 %v4720
    %6021 = vmatprep.subr.mxu0 %v4729
    %6022 = vmatpush1.msra.mxu0 %v4728
    %6023 = vmatprep.subr.mxu0 %v4737
    %6024 = vmatpush1.msra.mxu0 %v4736
    %6025 = vmatprep.subr.mxu0 %v4745
    %6026 = vmatpush1.msra.mxu0 %v4744
    %6027 = vmatprep.subr.mxu0 %v4753
    %6028 = vmatpush1.msra.mxu0 %v4752
    %6029 = vmatprep.subr.mxu0 %v4761
    %6030 = vmatpush1.msra.mxu0 %v4760
    %6031 = vmatprep.subr.mxu0 %v4769
    %6032 = vmatpush1.msra.mxu0 %v4768
    %6033 = vmatprep.mubr.f32.mxu0 %v5895
    %6034 = vmatmul.mubr.f32.gmra.mrb[0].mxu0 %v5894
    %v6035 = vpop.f32.mrb[0].mxu0
    %v6036 = vadd.f32 0.0, %v6035
    %v6037 = vpop.f32.mrb[0].mxu0
    %v6038 = vadd.f32 0.0, %v6037
    %6039 = vdwg.mxu0
    %6040 = vmatprep.subr.mxu0 %v4523
    %6041 = vmatpush1.msra.mxu0 %v4522
    %6042 = vmatprep.subr.mxu0 %v4531
    %6043 = vmatpush1.msra.mxu0 %v4530
    %6044 = vmatprep.subr.mxu0 %v4539
    %6045 = vmatpush1.msra.mxu0 %v4538
    %6046 = vmatprep.subr.mxu0 %v4547
    %6047 = vmatpush1.msra.mxu0 %v4546
    %6048 = vmatprep.subr.mxu0 %v4555
    %6049 = vmatpush1.msra.mxu0 %v4554
    %6050 = vmatprep.subr.mxu0 %v4563
    %6051 = vmatpush1.msra.mxu0 %v4562
    %6052 = vmatprep.subr.mxu0 %v4571
    %6053 = vmatpush1.msra.mxu0 %v4570
    %6054 = vmatprep.subr.mxu0 %v4579
    %6055 = vmatpush1.msra.mxu0 %v4578
    %6056 = vmatprep.subr.mxu0 %v4587
    %6057 = vmatpush1.msra.mxu0 %v4586
    %6058 = vmatprep.subr.mxu0 %v4595
    %6059 = vmatpush1.msra.mxu0 %v4594
    %6060 = vmatprep.subr.mxu0 %v4603
    %6061 = vmatpush1.msra.mxu0 %v4602
    %6062 = vmatprep.subr.mxu0 %v4611
    %6063 = vmatpush1.msra.mxu0 %v4610
    %6064 = vmatprep.subr.mxu0 %v4619
    %6065 = vmatpush1.msra.mxu0 %v4618
    %6066 = vmatprep.subr.mxu0 %v4627
    %6067 = vmatpush1.msra.mxu0 %v4626
    %6068 = vmatprep.subr.mxu0 %v4635
    %6069 = vmatpush1.msra.mxu0 %v4634
    %6070 = vmatprep.subr.mxu0 %v4643
    %6071 = vmatpush1.msra.mxu0 %v4642
    %6072 = vmatprep.subr.mxu0 %v4651
    %6073 = vmatpush1.msra.mxu0 %v4650
    %6074 = vmatprep.subr.mxu0 %v4659
    %6075 = vmatpush1.msra.mxu0 %v4658
    %6076 = vmatprep.subr.mxu0 %v4667
    %6077 = vmatpush1.msra.mxu0 %v4666
    %6078 = vmatprep.subr.mxu0 %v4675
    %6079 = vmatpush1.msra.mxu0 %v4674
    %6080 = vmatprep.subr.mxu0 %v4683
    %6081 = vmatpush1.msra.mxu0 %v4682
    %6082 = vmatprep.subr.mxu0 %v4691
    %6083 = vmatpush1.msra.mxu0 %v4690
    %6084 = vmatprep.subr.mxu0 %v4699
    %6085 = vmatpush1.msra.mxu0 %v4698
    %6086 = vmatprep.subr.mxu0 %v4707
    %6087 = vmatpush1.msra.mxu0 %v4706
    %6088 = vmatprep.subr.mxu0 %v4715
    %6089 = vmatpush1.msra.mxu0 %v4714
    %6090 = vmatprep.subr.mxu0 %v4723
    %6091 = vmatpush1.msra.mxu0 %v4722
    %6092 = vmatprep.subr.mxu0 %v4731
    %6093 = vmatpush1.msra.mxu0 %v4730
    %6094 = vmatprep.subr.mxu0 %v4739
    %6095 = vmatpush1.msra.mxu0 %v4738
    %6096 = vmatprep.subr.mxu0 %v4747
    %6097 = vmatpush1.msra.mxu0 %v4746
    %6098 = vmatprep.subr.mxu0 %v4755
    %6099 = vmatpush1.msra.mxu0 %v4754
    %6100 = vmatprep.subr.mxu0 %v4763
    %6101 = vmatpush1.msra.mxu0 %v4762
    %6102 = vmatprep.subr.mxu0 %v4771
    %6103 = vmatpush1.msra.mxu0 %v4770
    %6104 = vmatprep.mubr.f32.mxu0 %v5895
    %6105 = vmatmul.mubr.f32.gmra.mrb[0].mxu0 %v5894
    %v6106 = vpop.f32.mrb[0].mxu0
    %v6107 = vadd.f32 0.0, %v6106
    %v6108 = vpop.f32.mrb[0].mxu0
    %v6109 = vadd.f32 0.0, %v6108
    %6110 = vdwg.mxu0
    %6111 = vmatprep.subr.mxu0 %v4525
    %6112 = vmatpush1.msra.mxu0 %v4524
    %6113 = vmatprep.subr.mxu0 %v4533
    %6114 = vmatpush1.msra.mxu0 %v4532
    %6115 = vmatprep.subr.mxu0 %v4541
    %6116 = vmatpush1.msra.mxu0 %v4540
    %6117 = vmatprep.subr.mxu0 %v4549
    %6118 = vmatpush1.msra.mxu0 %v4548
    %6119 = vmatprep.subr.mxu0 %v4557
    %6120 = vmatpush1.msra.mxu0 %v4556
    %6121 = vmatprep.subr.mxu0 %v4565
    %6122 = vmatpush1.msra.mxu0 %v4564
    %6123 = vmatprep.subr.mxu0 %v4573
    %6124 = vmatpush1.msra.mxu0 %v4572
    %6125 = vmatprep.subr.mxu0 %v4581
    %6126 = vmatpush1.msra.mxu0 %v4580
    %6127 = vmatprep.subr.mxu0 %v4589
    %6128 = vmatpush1.msra.mxu0 %v4588
    %6129 = vmatprep.subr.mxu0 %v4597
    %6130 = vmatpush1.msra.mxu0 %v4596
    %6131 = vmatprep.subr.mxu0 %v4605
    %6132 = vmatpush1.msra.mxu0 %v4604
    %6133 = vmatprep.subr.mxu0 %v4613
    %6134 = vmatpush1.msra.mxu0 %v4612
    %6135 = vmatprep.subr.mxu0 %v4621
    %6136 = vmatpush1.msra.mxu0 %v4620
    %6137 = vmatprep.subr.mxu0 %v4629
    %6138 = vmatpush1.msra.mxu0 %v4628
    %6139 = vmatprep.subr.mxu0 %v4637
    %6140 = vmatpush1.msra.mxu0 %v4636
    %6141 = vmatprep.subr.mxu0 %v4645
    %6142 = vmatpush1.msra.mxu0 %v4644
    %6143 = vmatprep.subr.mxu0 %v4653
    %6144 = vmatpush1.msra.mxu0 %v4652
    %6145 = vmatprep.subr.mxu0 %v4661
    %6146 = vmatpush1.msra.mxu0 %v4660
    %6147 = vmatprep.subr.mxu0 %v4669
    %6148 = vmatpush1.msra.mxu0 %v4668
    %6149 = vmatprep.subr.mxu0 %v4677
    %6150 = vmatpush1.msra.mxu0 %v4676
    %6151 = vmatprep.subr.mxu0 %v4685
    %6152 = vmatpush1.msra.mxu0 %v4684
    %6153 = vmatprep.subr.mxu0 %v4693
    %6154 = vmatpush1.msra.mxu0 %v4692
    %6155 = vmatprep.subr.mxu0 %v4701
    %6156 = vmatpush1.msra.mxu0 %v4700
    %6157 = vmatprep.subr.mxu0 %v4709
    %6158 = vmatpush1.msra.mxu0 %v4708
    %6159 = vmatprep.subr.mxu0 %v4717
    %6160 = vmatpush1.msra.mxu0 %v4716
    %6161 = vmatprep.subr.mxu0 %v4725
    %6162 = vmatpush1.msra.mxu0 %v4724
    %6163 = vmatprep.subr.mxu0 %v4733
    %6164 = vmatpush1.msra.mxu0 %v4732
    %6165 = vmatprep.subr.mxu0 %v4741
    %6166 = vmatpush1.msra.mxu0 %v4740
    %6167 = vmatprep.subr.mxu0 %v4749
    %6168 = vmatpush1.msra.mxu0 %v4748
    %6169 = vmatprep.subr.mxu0 %v4757
    %6170 = vmatpush1.msra.mxu0 %v4756
    %6171 = vmatprep.subr.mxu0 %v4765
    %6172 = vmatpush1.msra.mxu0 %v4764
    %6173 = vmatprep.subr.mxu0 %v4773
    %6174 = vmatpush1.msra.mxu0 %v4772
    %6175 = vmatprep.mubr.f32.mxu0 %v5895
    %6176 = vmatmul.mubr.f32.gmra.mrb[0].mxu0 %v5894
    %v6177 = vpop.f32.mrb[0].mxu0
    %v6178 = vadd.f32 0.0, %v6177
    %v6179 = vpop.f32.mrb[0].mxu0
    %v6180 = vadd.f32 0.0, %v6179
    %6181 = vdwg.mxu0
    %v6190 = vrot.slane %v5965, 2
    %v6191 = vrot.slane %v5967, 2
    %v6192 = vrot.slane %v6036, 2
    %v6193 = vrot.slane %v6038, 2
    %v6194 = vrot.slane %v6107, 2
    %v6195 = vrot.slane %v6109, 2
    %v6196 = vrot.slane %v6178, 2
    %v6197 = vrot.slane %v6180, 2
    %v6206 = vadd.f32 %v5884, %v6190
    %v6207 = vadd.f32 %v5885, %v6191
    %v6208 = vadd.f32 %v5886, %v6192
    %v6209 = vadd.f32 %v5887, %v6193
    %v6210 = vadd.f32 %v5888, %v6194
    %v6211 = vadd.f32 %v5889, %v6195
    %v6212 = vadd.f32 %v5890, %v6196
    %v6213 = vadd.f32 %v5891, %v6197
    %v6214 = vxor.u32 %v6206, 2147483648
    %v6215 = vxor.u32 %v6207, 2147483648
    %v6216 = vxor.u32 %v6208, 2147483648
    %v6217 = vxor.u32 %v6209, 2147483648
    %v6218 = vxor.u32 %v6210, 2147483648
    %v6219 = vxor.u32 %v6211, 2147483648
    %v6220 = vmul.f32 %v6214, 1.442695
    %v6221 = vpow.pop %v6220
    %v6222 = vmul.f32 %v6215, 1.442695
    %v6223 = vpow.pop %v6222
    %v6224 = vmul.f32 %v6216, 1.442695
    %v6225 = vpow.pop %v6224
    %v6226 = vmul.f32 %v6217, 1.442695
    %v6227 = vpow.pop %v6226
    %v6228 = vmul.f32 %v6218, 1.442695
    %v6229 = vpow.pop %v6228
    %v6230 = vmul.f32 %v6219, 1.442695
    %v6231 = vpow.pop %v6230
    %v6232 = vadd.f32 %v6221, 1.0
    %v6233 = vadd.f32 %v6223, 1.0
    %v6234 = vadd.f32 %v6225, 1.0
    %v6235 = vadd.f32 %v6227, 1.0
    %v6236 = vadd.f32 %v6229, 1.0
    %v6237 = vadd.f32 %v6231, 1.0
    %v6238 = vrcp.pop %v6232
    %v6239 = vmul.f32 1.0, %v6238
    %v6240 = vrcp.pop %v6233
    %v6241 = vmul.f32 1.0, %v6240
    %v6242 = vrcp.pop %v6234
    %v6243 = vmul.f32 1.0, %v6242
    %v6244 = vrcp.pop %v6235
    %v6245 = vmul.f32 1.0, %v6244
    %v6246 = vrcp.pop %v6236
    %v6247 = vmul.f32 1.0, %v6246
    %v6248 = vrcp.pop %v6237
    %v6249 = vmul.f32 1.0, %v6248
    %v6250 = vtanh.pop %v6212
    %v6251 = vtanh.pop %v6213
    %v6254 = vrot.slane %v5878, 6
    %v6255 = vrot.slane %v5879, 6
    %v6258 = vmul.f32 %v6243, %v6254
    %v6259 = vmul.f32 %v6245, %v6255
    %v6260 = vmul.f32 %v6239, %v6250
    %v6261 = vmul.f32 %v6241, %v6251
    %v6262 = vadd.f32 %v6258, %v6260
    %v6263 = vadd.f32 %v6259, %v6261
    %v6264 = vtanh.pop %v6262
    %v6265 = vtanh.pop %v6263
    %v6266 = vmul.f32 %v6247, %v6264
    %v6267 = vmul.f32 %v6249, %v6265
    %v6268 = vld [vmem:[#allocation2 + $0x40] sm:$0x3]
    %v6269 = vld [vmem:[#allocation2 + $0x48] sm:$0x3]
    %v6270 = vld [vmem:[#allocation2 + $0x50] sm:$0x3]
    %v6271 = vld [vmem:[#allocation2 + $0x58] sm:$0x3]
    %v6272 = vld [vmem:[#allocation2 + $0x60] sm:$0x3]
    %v6273 = vld [vmem:[#allocation2 + $0x68] sm:$0x3]
    %v6274 = vld [vmem:[#allocation2 + $0x70] sm:$0x3]
    %v6275 = vld [vmem:[#allocation2 + $0x78] sm:$0x3]
    %v6278 = vrot.slane %v6266, 6
    %v6279 = vrot.slane %v6267, 6
    %6282 = vmatprep.subr.mxu0 %v4519
    %6283 = vmatpush1.msra.mxu0 %v4518
    %6284 = vmatprep.subr.mxu0 %v4527
    %6285 = vmatpush1.msra.mxu0 %v4526
    %6286 = vmatprep.subr.mxu0 %v4535
    %6287 = vmatpush1.msra.mxu0 %v4534
    %6288 = vmatprep.subr.mxu0 %v4543
    %6289 = vmatpush1.msra.mxu0 %v4542
    %6290 = vmatprep.subr.mxu0 %v4551
    %6291 = vmatpush1.msra.mxu0 %v4550
    %6292 = vmatprep.subr.mxu0 %v4559
    %6293 = vmatpush1.msra.mxu0 %v4558
    %6294 = vmatprep.subr.mxu0 %v4567
    %6295 = vmatpush1.msra.mxu0 %v4566
    %6296 = vmatprep.subr.mxu0 %v4575
    %6297 = vmatpush1.msra.mxu0 %v4574
    %6298 = vmatprep.subr.mxu0 %v4583
    %6299 = vmatpush1.msra.mxu0 %v4582
    %6300 = vmatprep.subr.mxu0 %v4591
    %6301 = vmatpush1.msra.mxu0 %v4590
    %6302 = vmatprep.subr.mxu0 %v4599
    %6303 = vmatpush1.msra.mxu0 %v4598
    %6304 = vmatprep.subr.mxu0 %v4607
    %6305 = vmatpush1.msra.mxu0 %v4606
    %6306 = vmatprep.subr.mxu0 %v4615
    %6307 = vmatpush1.msra.mxu0 %v4614
    %6308 = vmatprep.subr.mxu0 %v4623
    %6309 = vmatpush1.msra.mxu0 %v4622
    %6310 = vmatprep.subr.mxu0 %v4631
    %6311 = vmatpush1.msra.mxu0 %v4630
    %6312 = vmatprep.subr.mxu0 %v4639
    %6313 = vmatpush1.msra.mxu0 %v4638
    %6314 = vmatprep.subr.mxu0 %v4647
    %6315 = vmatpush1.msra.mxu0 %v4646
    %6316 = vmatprep.subr.mxu0 %v4655
    %6317 = vmatpush1.msra.mxu0 %v4654
    %6318 = vmatprep.subr.mxu0 %v4663
    %6319 = vmatpush1.msra.mxu0 %v4662
    %6320 = vmatprep.subr.mxu0 %v4671
    %6321 = vmatpush1.msra.mxu0 %v4670
    %6322 = vmatprep.subr.mxu0 %v4679
    %6323 = vmatpush1.msra.mxu0 %v4678
    %6324 = vmatprep.subr.mxu0 %v4687
    %6325 = vmatpush1.msra.mxu0 %v4686
    %6326 = vmatprep.subr.mxu0 %v4695
    %6327 = vmatpush1.msra.mxu0 %v4694
    %6328 = vmatprep.subr.mxu0 %v4703
    %6329 = vmatpush1.msra.mxu0 %v4702
    %6330 = vmatprep.subr.mxu0 %v4711
    %6331 = vmatpush1.msra.mxu0 %v4710
    %6332 = vmatprep.subr.mxu0 %v4719
    %6333 = vmatpush1.msra.mxu0 %v4718
    %6334 = vmatprep.subr.mxu0 %v4727
    %6335 = vmatpush1.msra.mxu0 %v4726
    %6336 = vmatprep.subr.mxu0 %v4735
    %6337 = vmatpush1.msra.mxu0 %v4734
    %6338 = vmatprep.subr.mxu0 %v4743
    %6339 = vmatpush1.msra.mxu0 %v4742
    %6340 = vmatprep.subr.mxu0 %v4751
    %6341 = vmatpush1.msra.mxu0 %v4750
    %6342 = vmatprep.subr.mxu0 %v4759
    %6343 = vmatpush1.msra.mxu0 %v4758
    %6344 = vmatprep.subr.mxu0 %v4767
    %6345 = vmatpush1.msra.mxu0 %v4766
    %6346 = vmatprep.mubr.f32.mxu0 %v6279
    %6347 = vmatmul.mubr.f32.gmra.mrb[0].mxu0 %v6278
    %v6348 = vpop.f32.mrb[0].mxu0
    %v6349 = vadd.f32 0.0, %v6348
    %v6350 = vpop.f32.mrb[0].mxu0
    %v6351 = vadd.f32 0.0, %v6350
    %6352 = vdwg.mxu0
    %6353 = vmatprep.subr.mxu0 %v4521
    %6354 = vmatpush1.msra.mxu0 %v4520
    %6355 = vmatprep.subr.mxu0 %v4529
    %6356 = vmatpush1.msra.mxu0 %v4528
    %6357 = vmatprep.subr.mxu0 %v4537
    %6358 = vmatpush1.msra.mxu0 %v4536
    %6359 = vmatprep.subr.mxu0 %v4545
    %6360 = vmatpush1.msra.mxu0 %v4544
    %6361 = vmatprep.subr.mxu0 %v4553
    %6362 = vmatpush1.msra.mxu0 %v4552
    %6363 = vmatprep.subr.mxu0 %v4561
    %6364 = vmatpush1.msra.mxu0 %v4560
    %6365 = vmatprep.subr.mxu0 %v4569
    %6366 = vmatpush1.msra.mxu0 %v4568
    %6367 = vmatprep.subr.mxu0 %v4577
    %6368 = vmatpush1.msra.mxu0 %v4576
    %6369 = vmatprep.subr.mxu0 %v4585
    %6370 = vmatpush1.msra.mxu0 %v4584
    %6371 = vmatprep.subr.mxu0 %v4593
    %6372 = vmatpush1.msra.mxu0 %v4592
    %6373 = vmatprep.subr.mxu0 %v4601
    %6374 = vmatpush1.msra.mxu0 %v4600
    %6375 = vmatprep.subr.mxu0 %v4609
    %6376 = vmatpush1.msra.mxu0 %v4608
    %6377 = vmatprep.subr.mxu0 %v4617
    %6378 = vmatpush1.msra.mxu0 %v4616
    %6379 = vmatprep.subr.mxu0 %v4625
    %6380 = vmatpush1.msra.mxu0 %v4624
    %6381 = vmatprep.subr.mxu0 %v4633
    %6382 = vmatpush1.msra.mxu0 %v4632
    %6383 = vmatprep.subr.mxu0 %v4641
    %6384 = vmatpush1.msra.mxu0 %v4640
    %6385 = vmatprep.subr.mxu0 %v4649
    %6386 = vmatpush1.msra.mxu0 %v4648
    %6387 = vmatprep.subr.mxu0 %v4657
    %6388 = vmatpush1.msra.mxu0 %v4656
    %6389 = vmatprep.subr.mxu0 %v4665
    %6390 = vmatpush1.msra.mxu0 %v4664
    %6391 = vmatprep.subr.mxu0 %v4673
    %6392 = vmatpush1.msra.mxu0 %v4672
    %6393 = vmatprep.subr.mxu0 %v4681
    %6394 = vmatpush1.msra.mxu0 %v4680
    %6395 = vmatprep.subr.mxu0 %v4689
    %6396 = vmatpush1.msra.mxu0 %v4688
    %6397 = vmatprep.subr.mxu0 %v4697
    %6398 = vmatpush1.msra.mxu0 %v4696
    %6399 = vmatprep.subr.mxu0 %v4705
    %6400 = vmatpush1.msra.mxu0 %v4704
    %6401 = vmatprep.subr.mxu0 %v4713
    %6402 = vmatpush1.msra.mxu0 %v4712
    %6403 = vmatprep.subr.mxu0 %v4721
    %6404 = vmatpush1.msra.mxu0 %v4720
    %6405 = vmatprep.subr.mxu0 %v4729
    %6406 = vmatpush1.msra.mxu0 %v4728
    %6407 = vmatprep.subr.mxu0 %v4737
    %6408 = vmatpush1.msra.mxu0 %v4736
    %6409 = vmatprep.subr.mxu0 %v4745
    %6410 = vmatpush1.msra.mxu0 %v4744
    %6411 = vmatprep.subr.mxu0 %v4753
    %6412 = vmatpush1.msra.mxu0 %v4752
    %6413 = vmatprep.subr.mxu0 %v4761
    %6414 = vmatpush1.msra.mxu0 %v4760
    %6415 = vmatprep.subr.mxu0 %v4769
    %6416 = vmatpush1.msra.mxu0 %v4768
    %6417 = vmatprep.mubr.f32.mxu0 %v6279
    %6418 = vmatmul.mubr.f32.gmra.mrb[0].mxu0 %v6278
    %v6419 = vpop.f32.mrb[0].mxu0
    %v6420 = vadd.f32 0.0, %v6419
    %v6421 = vpop.f32.mrb[0].mxu0
    %v6422 = vadd.f32 0.0, %v6421
    %6423 = vdwg.mxu0
    %6424 = vmatprep.subr.mxu0 %v4523
    %6425 = vmatpush1.msra.mxu0 %v4522
    %6426 = vmatprep.subr.mxu0 %v4531
    %6427 = vmatpush1.msra.mxu0 %v4530
    %6428 = vmatprep.subr.mxu0 %v4539
    %6429 = vmatpush1.msra.mxu0 %v4538
    %6430 = vmatprep.subr.mxu0 %v4547
    %6431 = vmatpush1.msra.mxu0 %v4546
    %6432 = vmatprep.subr.mxu0 %v4555
    %6433 = vmatpush1.msra.mxu0 %v4554
    %6434 = vmatprep.subr.mxu0 %v4563
    %6435 = vmatpush1.msra.mxu0 %v4562
    %6436 = vmatprep.subr.mxu0 %v4571
    %6437 = vmatpush1.msra.mxu0 %v4570
    %6438 = vmatprep.subr.mxu0 %v4579
    %6439 = vmatpush1.msra.mxu0 %v4578
    %6440 = vmatprep.subr.mxu0 %v4587
    %6441 = vmatpush1.msra.mxu0 %v4586
    %6442 = vmatprep.subr.mxu0 %v4595
    %6443 = vmatpush1.msra.mxu0 %v4594
    %6444 = vmatprep.subr.mxu0 %v4603
    %6445 = vmatpush1.msra.mxu0 %v4602
    %6446 = vmatprep.subr.mxu0 %v4611
    %6447 = vmatpush1.msra.mxu0 %v4610
    %6448 = vmatprep.subr.mxu0 %v4619
    %6449 = vmatpush1.msra.mxu0 %v4618
    %6450 = vmatprep.subr.mxu0 %v4627
    %6451 = vmatpush1.msra.mxu0 %v4626
    %6452 = vmatprep.subr.mxu0 %v4635
    %6453 = vmatpush1.msra.mxu0 %v4634
    %6454 = vmatprep.subr.mxu0 %v4643
    %6455 = vmatpush1.msra.mxu0 %v4642
    %6456 = vmatprep.subr.mxu0 %v4651
    %6457 = vmatpush1.msra.mxu0 %v4650
    %6458 = vmatprep.subr.mxu0 %v4659
    %6459 = vmatpush1.msra.mxu0 %v4658
    %6460 = vmatprep.subr.mxu0 %v4667
    %6461 = vmatpush1.msra.mxu0 %v4666
    %6462 = vmatprep.subr.mxu0 %v4675
    %6463 = vmatpush1.msra.mxu0 %v4674
    %6464 = vmatprep.subr.mxu0 %v4683
    %6465 = vmatpush1.msra.mxu0 %v4682
    %6466 = vmatprep.subr.mxu0 %v4691
    %6467 = vmatpush1.msra.mxu0 %v4690
    %6468 = vmatprep.subr.mxu0 %v4699
    %6469 = vmatpush1.msra.mxu0 %v4698
    %6470 = vmatprep.subr.mxu0 %v4707
    %6471 = vmatpush1.msra.mxu0 %v4706
    %6472 = vmatprep.subr.mxu0 %v4715
    %6473 = vmatpush1.msra.mxu0 %v4714
    %6474 = vmatprep.subr.mxu0 %v4723
    %6475 = vmatpush1.msra.mxu0 %v4722
    %6476 = vmatprep.subr.mxu0 %v4731
    %6477 = vmatpush1.msra.mxu0 %v4730
    %6478 = vmatprep.subr.mxu0 %v4739
    %6479 = vmatpush1.msra.mxu0 %v4738
    %6480 = vmatprep.subr.mxu0 %v4747
    %6481 = vmatpush1.msra.mxu0 %v4746
    %6482 = vmatprep.subr.mxu0 %v4755
    %6483 = vmatpush1.msra.mxu0 %v4754
    %6484 = vmatprep.subr.mxu0 %v4763
    %6485 = vmatpush1.msra.mxu0 %v4762
    %6486 = vmatprep.subr.mxu0 %v4771
    %6487 = vmatpush1.msra.mxu0 %v4770
    %6488 = vmatprep.mubr.f32.mxu0 %v6279
    %6489 = vmatmul.mubr.f32.gmra.mrb[0].mxu0 %v6278
    %v6490 = vpop.f32.mrb[0].mxu0
    %v6491 = vadd.f32 0.0, %v6490
    %v6492 = vpop.f32.mrb[0].mxu0
    %v6493 = vadd.f32 0.0, %v6492
    %6494 = vdwg.mxu0
    %6495 = vmatprep.subr.mxu0 %v4525
    %6496 = vmatpush1.msra.mxu0 %v4524
    %6497 = vmatprep.subr.mxu0 %v4533
    %6498 = vmatpush1.msra.mxu0 %v4532
    %6499 = vmatprep.subr.mxu0 %v4541
    %6500 = vmatpush1.msra.mxu0 %v4540
    %6501 = vmatprep.subr.mxu0 %v4549
    %6502 = vmatpush1.msra.mxu0 %v4548
    %6503 = vmatprep.subr.mxu0 %v4557
    %6504 = vmatpush1.msra.mxu0 %v4556
    %6505 = vmatprep.subr.mxu0 %v4565
    %6506 = vmatpush1.msra.mxu0 %v4564
    %6507 = vmatprep.subr.mxu0 %v4573
    %6508 = vmatpush1.msra.mxu0 %v4572
    %6509 = vmatprep.subr.mxu0 %v4581
    %6510 = vmatpush1.msra.mxu0 %v4580
    %6511 = vmatprep.subr.mxu0 %v4589
    %6512 = vmatpush1.msra.mxu0 %v4588
    %6513 = vmatprep.subr.mxu0 %v4597
    %6514 = vmatpush1.msra.mxu0 %v4596
    %6515 = vmatprep.subr.mxu0 %v4605
    %6516 = vmatpush1.msra.mxu0 %v4604
    %6517 = vmatprep.subr.mxu0 %v4613
    %6518 = vmatpush1.msra.mxu0 %v4612
    %6519 = vmatprep.subr.mxu0 %v4621
    %6520 = vmatpush1.msra.mxu0 %v4620
    %6521 = vmatprep.subr.mxu0 %v4629
    %6522 = vmatpush1.msra.mxu0 %v4628
    %6523 = vmatprep.subr.mxu0 %v4637
    %6524 = vmatpush1.msra.mxu0 %v4636
    %6525 = vmatprep.subr.mxu0 %v4645
    %6526 = vmatpush1.msra.mxu0 %v4644
    %6527 = vmatprep.subr.mxu0 %v4653
    %6528 = vmatpush1.msra.mxu0 %v4652
    %6529 = vmatprep.subr.mxu0 %v4661
    %6530 = vmatpush1.msra.mxu0 %v4660
    %6531 = vmatprep.subr.mxu0 %v4669
    %6532 = vmatpush1.msra.mxu0 %v4668
    %6533 = vmatprep.subr.mxu0 %v4677
    %6534 = vmatpush1.msra.mxu0 %v4676
    %6535 = vmatprep.subr.mxu0 %v4685
    %6536 = vmatpush1.msra.mxu0 %v4684
    %6537 = vmatprep.subr.mxu0 %v4693
    %6538 = vmatpush1.msra.mxu0 %v4692
    %6539 = vmatprep.subr.mxu0 %v4701
    %6540 = vmatpush1.msra.mxu0 %v4700
    %6541 = vmatprep.subr.mxu0 %v4709
    %6542 = vmatpush1.msra.mxu0 %v4708
    %6543 = vmatprep.subr.mxu0 %v4717
    %6544 = vmatpush1.msra.mxu0 %v4716
    %6545 = vmatprep.subr.mxu0 %v4725
    %6546 = vmatpush1.msra.mxu0 %v4724
    %6547 = vmatprep.subr.mxu0 %v4733
    %6548 = vmatpush1.msra.mxu0 %v4732
    %6549 = vmatprep.subr.mxu0 %v4741
    %6550 = vmatpush1.msra.mxu0 %v4740
    %6551 = vmatprep.subr.mxu0 %v4749
    %6552 = vmatpush1.msra.mxu0 %v4748
    %6553 = vmatprep.subr.mxu0 %v4757
    %6554 = vmatpush1.msra.mxu0 %v4756
    %6555 = vmatprep.subr.mxu0 %v4765
    %6556 = vmatpush1.msra.mxu0 %v4764
    %6557 = vmatprep.subr.mxu0 %v4773
    %6558 = vmatpush1.msra.mxu0 %v4772
    %6559 = vmatprep.mubr.f32.mxu0 %v6279
    %6560 = vmatmul.mubr.f32.gmra.mrb[0].mxu0 %v6278
    %v6561 = vpop.f32.mrb[0].mxu0
    %v6562 = vadd.f32 0.0, %v6561
    %v6563 = vpop.f32.mrb[0].mxu0
    %v6564 = vadd.f32 0.0, %v6563
    %6565 = vdwg.mxu0
    %v6566 = vadd.f32 %v6268, %v6349
    %v6567 = vadd.f32 %v6269, %v6351
    %v6568 = vadd.f32 %v6270, %v6420
    %v6569 = vadd.f32 %v6271, %v6422
    %v6570 = vadd.f32 %v6272, %v6491
    %v6571 = vadd.f32 %v6273, %v6493
    %v6572 = vadd.f32 %v6274, %v6562
    %v6573 = vadd.f32 %v6275, %v6564
    %v6574 = vxor.u32 %v6566, 2147483648
    %v6575 = vxor.u32 %v6567, 2147483648
    %v6576 = vxor.u32 %v6568, 2147483648
    %v6577 = vxor.u32 %v6569, 2147483648
    %v6578 = vxor.u32 %v6570, 2147483648
    %v6579 = vxor.u32 %v6571, 2147483648
    %v6580 = vmul.f32 %v6574, 1.442695
    %v6581 = vpow.pop %v6580
    %v6582 = vmul.f32 %v6575, 1.442695
    %v6583 = vpow.pop %v6582
    %v6584 = vmul.f32 %v6576, 1.442695
    %v6585 = vpow.pop %v6584
    %v6586 = vmul.f32 %v6577, 1.442695
    %v6587 = vpow.pop %v6586
    %v6588 = vmul.f32 %v6578, 1.442695
    %v6589 = vpow.pop %v6588
    %v6590 = vmul.f32 %v6579, 1.442695
    %v6591 = vpow.pop %v6590
    %v6592 = vadd.f32 %v6581, 1.0
    %v6593 = vadd.f32 %v6583, 1.0
    %v6594 = vadd.f32 %v6585, 1.0
    %v6595 = vadd.f32 %v6587, 1.0
    %v6596 = vadd.f32 %v6589, 1.0
    %v6597 = vadd.f32 %v6591, 1.0
    %v6598 = vrcp.pop %v6592
    %v6599 = vmul.f32 1.0, %v6598
    %v6600 = vrcp.pop %v6593
    %v6601 = vmul.f32 1.0, %v6600
    %v6602 = vrcp.pop %v6594
    %v6603 = vmul.f32 1.0, %v6602
    %v6604 = vrcp.pop %v6595
    %v6605 = vmul.f32 1.0, %v6604
    %v6606 = vrcp.pop %v6596
    %v6607 = vmul.f32 1.0, %v6606
    %v6608 = vrcp.pop %v6597
    %v6609 = vmul.f32 1.0, %v6608
    %v6610 = vtanh.pop %v6572
    %v6611 = vtanh.pop %v6573
    %v6614 = vrot.slane %v6262, 6
    %v6615 = vrot.slane %v6263, 6
    %v6618 = vmul.f32 %v6603, %v6614
    %v6619 = vmul.f32 %v6605, %v6615
    %v6620 = vmul.f32 %v6599, %v6610
    %v6621 = vmul.f32 %v6601, %v6611
    %v6622 = vadd.f32 %v6618, %v6620
    %v6623 = vadd.f32 %v6619, %v6621
    %v6624 = vtanh.pop %v6622
    %v6625 = vtanh.pop %v6623
    %v6626 = vmul.f32 %v6607, %v6624
    %v6627 = vmul.f32 %v6609, %v6625
    %v6628 = vld [vmem:[#allocation2 + $0x40] sm:$0xc]
    %v6629 = vld [vmem:[#allocation2 + $0x48] sm:$0xc]
    %v6630 = vld [vmem:[#allocation2 + $0x50] sm:$0xc]
    %v6631 = vld [vmem:[#allocation2 + $0x58] sm:$0xc]
    %v6632 = vld [vmem:[#allocation2 + $0x60] sm:$0xc]
    %v6633 = vld [vmem:[#allocation2 + $0x68] sm:$0xc]
    %v6634 = vld [vmem:[#allocation2 + $0x70] sm:$0xc]
    %v6635 = vld [vmem:[#allocation2 + $0x78] sm:$0xc]
    %6636 = vmatprep.subr.mxu0 %v4519
    %6637 = vmatpush1.msra.mxu0 %v4518
    %6638 = vmatprep.subr.mxu0 %v4527
    %6639 = vmatpush1.msra.mxu0 %v4526
    %6640 = vmatprep.subr.mxu0 %v4535
    %6641 = vmatpush1.msra.mxu0 %v4534
    %6642 = vmatprep.subr.mxu0 %v4543
    %6643 = vmatpush1.msra.mxu0 %v4542
    %6644 = vmatprep.subr.mxu0 %v4551
    %6645 = vmatpush1.msra.mxu0 %v4550
    %6646 = vmatprep.subr.mxu0 %v4559
    %6647 = vmatpush1.msra.mxu0 %v4558
    %6648 = vmatprep.subr.mxu0 %v4567
    %6649 = vmatpush1.msra.mxu0 %v4566
    %6650 = vmatprep.subr.mxu0 %v4575
    %6651 = vmatpush1.msra.mxu0 %v4574
    %6652 = vmatprep.subr.mxu0 %v4583
    %6653 = vmatpush1.msra.mxu0 %v4582
    %6654 = vmatprep.subr.mxu0 %v4591
    %6655 = vmatpush1.msra.mxu0 %v4590
    %6656 = vmatprep.subr.mxu0 %v4599
    %6657 = vmatpush1.msra.mxu0 %v4598
    %6658 = vmatprep.subr.mxu0 %v4607
    %6659 = vmatpush1.msra.mxu0 %v4606
    %6660 = vmatprep.subr.mxu0 %v4615
    %6661 = vmatpush1.msra.mxu0 %v4614
    %6662 = vmatprep.subr.mxu0 %v4623
    %6663 = vmatpush1.msra.mxu0 %v4622
    %6664 = vmatprep.subr.mxu0 %v4631
    %6665 = vmatpush1.msra.mxu0 %v4630
    %6666 = vmatprep.subr.mxu0 %v4639
    %6667 = vmatpush1.msra.mxu0 %v4638
    %6668 = vmatprep.subr.mxu0 %v4647
    %6669 = vmatpush1.msra.mxu0 %v4646
    %6670 = vmatprep.subr.mxu0 %v4655
    %6671 = vmatpush1.msra.mxu0 %v4654
    %6672 = vmatprep.subr.mxu0 %v4663
    %6673 = vmatpush1.msra.mxu0 %v4662
    %6674 = vmatprep.subr.mxu0 %v4671
    %6675 = vmatpush1.msra.mxu0 %v4670
    %6676 = vmatprep.subr.mxu0 %v4679
    %6677 = vmatpush1.msra.mxu0 %v4678
    %6678 = vmatprep.subr.mxu0 %v4687
    %6679 = vmatpush1.msra.mxu0 %v4686
    %6680 = vmatprep.subr.mxu0 %v4695
    %6681 = vmatpush1.msra.mxu0 %v4694
    %6682 = vmatprep.subr.mxu0 %v4703
    %6683 = vmatpush1.msra.mxu0 %v4702
    %6684 = vmatprep.subr.mxu0 %v4711
    %6685 = vmatpush1.msra.mxu0 %v4710
    %6686 = vmatprep.subr.mxu0 %v4719
    %6687 = vmatpush1.msra.mxu0 %v4718
    %6688 = vmatprep.subr.mxu0 %v4727
    %6689 = vmatpush1.msra.mxu0 %v4726
    %6690 = vmatprep.subr.mxu0 %v4735
    %6691 = vmatpush1.msra.mxu0 %v4734
    %6692 = vmatprep.subr.mxu0 %v4743
    %6693 = vmatpush1.msra.mxu0 %v4742
    %6694 = vmatprep.subr.mxu0 %v4751
    %6695 = vmatpush1.msra.mxu0 %v4750
    %6696 = vmatprep.subr.mxu0 %v4759
    %6697 = vmatpush1.msra.mxu0 %v4758
    %6698 = vmatprep.subr.mxu0 %v4767
    %6699 = vmatpush1.msra.mxu0 %v4766
    %6700 = vmatprep.mubr.f32.mxu0 %v6627
    %6701 = vmatmul.mubr.f32.gmra.mrb[0].mxu0 %v6626
    %v6702 = vpop.f32.mrb[0].mxu0
    %v6703 = vadd.f32 0.0, %v6702
    %v6704 = vpop.f32.mrb[0].mxu0
    %v6705 = vadd.f32 0.0, %v6704
    %6706 = vdwg.mxu0
    %6707 = vmatprep.subr.mxu0 %v4521
    %6708 = vmatpush1.msra.mxu0 %v4520
    %6709 = vmatprep.subr.mxu0 %v4529
    %6710 = vmatpush1.msra.mxu0 %v4528
    %6711 = vmatprep.subr.mxu0 %v4537
    %6712 = vmatpush1.msra.mxu0 %v4536
    %6713 = vmatprep.subr.mxu0 %v4545
    %6714 = vmatpush1.msra.mxu0 %v4544
    %6715 = vmatprep.subr.mxu0 %v4553
    %6716 = vmatpush1.msra.mxu0 %v4552
    %6717 = vmatprep.subr.mxu0 %v4561
    %6718 = vmatpush1.msra.mxu0 %v4560
    %6719 = vmatprep.subr.mxu0 %v4569
    %6720 = vmatpush1.msra.mxu0 %v4568
    %6721 = vmatprep.subr.mxu0 %v4577
    %6722 = vmatpush1.msra.mxu0 %v4576
    %6723 = vmatprep.subr.mxu0 %v4585
    %6724 = vmatpush1.msra.mxu0 %v4584
    %6725 = vmatprep.subr.mxu0 %v4593
    %6726 = vmatpush1.msra.mxu0 %v4592
    %6727 = vmatprep.subr.mxu0 %v4601
    %6728 = vmatpush1.msra.mxu0 %v4600
    %6729 = vmatprep.subr.mxu0 %v4609
    %6730 = vmatpush1.msra.mxu0 %v4608
    %6731 = vmatprep.subr.mxu0 %v4617
    %6732 = vmatpush1.msra.mxu0 %v4616
    %6733 = vmatprep.subr.mxu0 %v4625
    %6734 = vmatpush1.msra.mxu0 %v4624
    %6735 = vmatprep.subr.mxu0 %v4633
    %6736 = vmatpush1.msra.mxu0 %v4632
    %6737 = vmatprep.subr.mxu0 %v4641
    %6738 = vmatpush1.msra.mxu0 %v4640
    %6739 = vmatprep.subr.mxu0 %v4649
    %6740 = vmatpush1.msra.mxu0 %v4648
    %6741 = vmatprep.subr.mxu0 %v4657
    %6742 = vmatpush1.msra.mxu0 %v4656
    %6743 = vmatprep.subr.mxu0 %v4665
    %6744 = vmatpush1.msra.mxu0 %v4664
    %6745 = vmatprep.subr.mxu0 %v4673
    %6746 = vmatpush1.msra.mxu0 %v4672
    %6747 = vmatprep.subr.mxu0 %v4681
    %6748 = vmatpush1.msra.mxu0 %v4680
    %6749 = vmatprep.subr.mxu0 %v4689
    %6750 = vmatpush1.msra.mxu0 %v4688
    %6751 = vmatprep.subr.mxu0 %v4697
    %6752 = vmatpush1.msra.mxu0 %v4696
    %6753 = vmatprep.subr.mxu0 %v4705
    %6754 = vmatpush1.msra.mxu0 %v4704
    %6755 = vmatprep.subr.mxu0 %v4713
    %6756 = vmatpush1.msra.mxu0 %v4712
    %6757 = vmatprep.subr.mxu0 %v4721
    %6758 = vmatpush1.msra.mxu0 %v4720
    %6759 = vmatprep.subr.mxu0 %v4729
    %6760 = vmatpush1.msra.mxu0 %v4728
    %6761 = vmatprep.subr.mxu0 %v4737
    %6762 = vmatpush1.msra.mxu0 %v4736
    %6763 = vmatprep.subr.mxu0 %v4745
    %6764 = vmatpush1.msra.mxu0 %v4744
    %6765 = vmatprep.subr.mxu0 %v4753
    %6766 = vmatpush1.msra.mxu0 %v4752
    %6767 = vmatprep.subr.mxu0 %v4761
    %6768 = vmatpush1.msra.mxu0 %v4760
    %6769 = vmatprep.subr.mxu0 %v4769
    %6770 = vmatpush1.msra.mxu0 %v4768
    %6771 = vmatprep.mubr.f32.mxu0 %v6627
    %6772 = vmatmul.mubr.f32.gmra.mrb[0].mxu0 %v6626
    %v6773 = vpop.f32.mrb[0].mxu0
    %v6774 = vadd.f32 0.0, %v6773
    %v6775 = vpop.f32.mrb[0].mxu0
    %v6776 = vadd.f32 0.0, %v6775
    %6777 = vdwg.mxu0
    %6778 = vmatprep.subr.mxu0 %v4523
    %6779 = vmatpush1.msra.mxu0 %v4522
    %6780 = vmatprep.subr.mxu0 %v4531
    %6781 = vmatpush1.msra.mxu0 %v4530
    %6782 = vmatprep.subr.mxu0 %v4539
    %6783 = vmatpush1.msra.mxu0 %v4538
    %6784 = vmatprep.subr.mxu0 %v4547
    %6785 = vmatpush1.msra.mxu0 %v4546
    %6786 = vmatprep.subr.mxu0 %v4555
    %6787 = vmatpush1.msra.mxu0 %v4554
    %6788 = vmatprep.subr.mxu0 %v4563
    %6789 = vmatpush1.msra.mxu0 %v4562
    %6790 = vmatprep.subr.mxu0 %v4571
    %6791 = vmatpush1.msra.mxu0 %v4570
    %6792 = vmatprep.subr.mxu0 %v4579
    %6793 = vmatpush1.msra.mxu0 %v4578
    %6794 = vmatprep.subr.mxu0 %v4587
    %6795 = vmatpush1.msra.mxu0 %v4586
    %6796 = vmatprep.subr.mxu0 %v4595
    %6797 = vmatpush1.msra.mxu0 %v4594
    %6798 = vmatprep.subr.mxu0 %v4603
    %6799 = vmatpush1.msra.mxu0 %v4602
    %6800 = vmatprep.subr.mxu0 %v4611
    %6801 = vmatpush1.msra.mxu0 %v4610
    %6802 = vmatprep.subr.mxu0 %v4619
    %6803 = vmatpush1.msra.mxu0 %v4618
    %6804 = vmatprep.subr.mxu0 %v4627
    %6805 = vmatpush1.msra.mxu0 %v4626
    %6806 = vmatprep.subr.mxu0 %v4635
    %6807 = vmatpush1.msra.mxu0 %v4634
    %6808 = vmatprep.subr.mxu0 %v4643
    %6809 = vmatpush1.msra.mxu0 %v4642
    %6810 = vmatprep.subr.mxu0 %v4651
    %6811 = vmatpush1.msra.mxu0 %v4650
    %6812 = vmatprep.subr.mxu0 %v4659
    %6813 = vmatpush1.msra.mxu0 %v4658
    %6814 = vmatprep.subr.mxu0 %v4667
    %6815 = vmatpush1.msra.mxu0 %v4666
    %6816 = vmatprep.subr.mxu0 %v4675
    %6817 = vmatpush1.msra.mxu0 %v4674
    %6818 = vmatprep.subr.mxu0 %v4683
    %6819 = vmatpush1.msra.mxu0 %v4682
    %6820 = vmatprep.subr.mxu0 %v4691
    %6821 = vmatpush1.msra.mxu0 %v4690
    %6822 = vmatprep.subr.mxu0 %v4699
    %6823 = vmatpush1.msra.mxu0 %v4698
    %6824 = vmatprep.subr.mxu0 %v4707
    %6825 = vmatpush1.msra.mxu0 %v4706
    %6826 = vmatprep.subr.mxu0 %v4715
    %6827 = vmatpush1.msra.mxu0 %v4714
    %6828 = vmatprep.subr.mxu0 %v4723
    %6829 = vmatpush1.msra.mxu0 %v4722
    %6830 = vmatprep.subr.mxu0 %v4731
    %6831 = vmatpush1.msra.mxu0 %v4730
    %6832 = vmatprep.subr.mxu0 %v4739
    %6833 = vmatpush1.msra.mxu0 %v4738
    %6834 = vmatprep.subr.mxu0 %v4747
    %6835 = vmatpush1.msra.mxu0 %v4746
    %6836 = vmatprep.subr.mxu0 %v4755
    %6837 = vmatpush1.msra.mxu0 %v4754
    %6838 = vmatprep.subr.mxu0 %v4763
    %6839 = vmatpush1.msra.mxu0 %v4762
    %6840 = vmatprep.subr.mxu0 %v4771
    %6841 = vmatpush1.msra.mxu0 %v4770
    %6842 = vmatprep.mubr.f32.mxu0 %v6627
    %6843 = vmatmul.mubr.f32.gmra.mrb[0].mxu0 %v6626
    %v6844 = vpop.f32.mrb[0].mxu0
    %v6845 = vadd.f32 0.0, %v6844
    %v6846 = vpop.f32.mrb[0].mxu0
    %v6847 = vadd.f32 0.0, %v6846
    %6848 = vdwg.mxu0
    %6849 = vmatprep.subr.mxu0 %v4525
    %6850 = vmatpush1.msra.mxu0 %v4524
    %6851 = vmatprep.subr.mxu0 %v4533
    %6852 = vmatpush1.msra.mxu0 %v4532
    %6853 = vmatprep.subr.mxu0 %v4541
    %6854 = vmatpush1.msra.mxu0 %v4540
    %6855 = vmatprep.subr.mxu0 %v4549
    %6856 = vmatpush1.msra.mxu0 %v4548
    %6857 = vmatprep.subr.mxu0 %v4557
    %6858 = vmatpush1.msra.mxu0 %v4556
    %6859 = vmatprep.subr.mxu0 %v4565
    %6860 = vmatpush1.msra.mxu0 %v4564
    %6861 = vmatprep.subr.mxu0 %v4573
    %6862 = vmatpush1.msra.mxu0 %v4572
    %6863 = vmatprep.subr.mxu0 %v4581
    %6864 = vmatpush1.msra.mxu0 %v4580
    %6865 = vmatprep.subr.mxu0 %v4589
    %6866 = vmatpush1.msra.mxu0 %v4588
    %6867 = vmatprep.subr.mxu0 %v4597
    %6868 = vmatpush1.msra.mxu0 %v4596
    %6869 = vmatprep.subr.mxu0 %v4605
    %6870 = vmatpush1.msra.mxu0 %v4604
    %6871 = vmatprep.subr.mxu0 %v4613
    %6872 = vmatpush1.msra.mxu0 %v4612
    %6873 = vmatprep.subr.mxu0 %v4621
    %6874 = vmatpush1.msra.mxu0 %v4620
    %6875 = vmatprep.subr.mxu0 %v4629
    %6876 = vmatpush1.msra.mxu0 %v4628
    %6877 = vmatprep.subr.mxu0 %v4637
    %6878 = vmatpush1.msra.mxu0 %v4636
    %6879 = vmatprep.subr.mxu0 %v4645
    %6880 = vmatpush1.msra.mxu0 %v4644
    %6881 = vmatprep.subr.mxu0 %v4653
    %6882 = vmatpush1.msra.mxu0 %v4652
    %6883 = vmatprep.subr.mxu0 %v4661
    %6884 = vmatpush1.msra.mxu0 %v4660
    %6885 = vmatprep.subr.mxu0 %v4669
    %6886 = vmatpush1.msra.mxu0 %v4668
    %6887 = vmatprep.subr.mxu0 %v4677
    %6888 = vmatpush1.msra.mxu0 %v4676
    %6889 = vmatprep.subr.mxu0 %v4685
    %6890 = vmatpush1.msra.mxu0 %v4684
    %6891 = vmatprep.subr.mxu0 %v4693
    %6892 = vmatpush1.msra.mxu0 %v4692
    %6893 = vmatprep.subr.mxu0 %v4701
    %6894 = vmatpush1.msra.mxu0 %v4700
    %6895 = vmatprep.subr.mxu0 %v4709
    %6896 = vmatpush1.msra.mxu0 %v4708
    %6897 = vmatprep.subr.mxu0 %v4717
    %6898 = vmatpush1.msra.mxu0 %v4716
    %6899 = vmatprep.subr.mxu0 %v4725
    %6900 = vmatpush1.msra.mxu0 %v4724
    %6901 = vmatprep.subr.mxu0 %v4733
    %6902 = vmatpush1.msra.mxu0 %v4732
    %6903 = vmatprep.subr.mxu0 %v4741
    %6904 = vmatpush1.msra.mxu0 %v4740
    %6905 = vmatprep.subr.mxu0 %v4749
    %6906 = vmatpush1.msra.mxu0 %v4748
    %6907 = vmatprep.subr.mxu0 %v4757
    %6908 = vmatpush1.msra.mxu0 %v4756
    %6909 = vmatprep.subr.mxu0 %v4765
    %6910 = vmatpush1.msra.mxu0 %v4764
    %6911 = vmatprep.subr.mxu0 %v4773
    %6912 = vmatpush1.msra.mxu0 %v4772
    %6913 = vmatprep.mubr.f32.mxu0 %v6627
    %6914 = vmatmul.mubr.f32.gmra.mrb[0].mxu0 %v6626
    %v6915 = vpop.f32.mrb[0].mxu0
    %v6916 = vadd.f32 0.0, %v6915
    %v6917 = vpop.f32.mrb[0].mxu0
    %v6918 = vadd.f32 0.0, %v6917
    %6919 = vdwg.mxu0
    %v6928 = vrot.slane %v6703, 6
    %v6929 = vrot.slane %v6705, 6
    %v6930 = vrot.slane %v6774, 6
    %v6931 = vrot.slane %v6776, 6
    %v6932 = vrot.slane %v6845, 6
    %v6933 = vrot.slane %v6847, 6
    %v6934 = vrot.slane %v6916, 6
    %v6935 = vrot.slane %v6918, 6
    %v6944 = vadd.f32 %v6628, %v6928
    %v6945 = vadd.f32 %v6629, %v6929
    %v6946 = vadd.f32 %v6630, %v6930
    %v6947 = vadd.f32 %v6631, %v6931
    %v6948 = vadd.f32 %v6632, %v6932
    %v6949 = vadd.f32 %v6633, %v6933
    %v6950 = vadd.f32 %v6634, %v6934
    %v6951 = vadd.f32 %v6635, %v6935
    %v6952 = vxor.u32 %v6944, 2147483648
    %v6953 = vxor.u32 %v6945, 2147483648
    %v6954 = vxor.u32 %v6946, 2147483648
    %v6955 = vxor.u32 %v6947, 2147483648
    %v6956 = vxor.u32 %v6948, 2147483648
    %v6957 = vxor.u32 %v6949, 2147483648
    %v6958 = vmul.f32 %v6952, 1.442695
    %v6959 = vpow.pop %v6958
    %v6960 = vmul.f32 %v6953, 1.442695
    %v6961 = vpow.pop %v6960
    %v6962 = vmul.f32 %v6954, 1.442695
    %v6963 = vpow.pop %v6962
    %v6964 = vmul.f32 %v6955, 1.442695
    %v6965 = vpow.pop %v6964
    %v6966 = vmul.f32 %v6956, 1.442695
    %v6967 = vpow.pop %v6966
    %v6968 = vmul.f32 %v6957, 1.442695
    %v6969 = vpow.pop %v6968
    %v6970 = vadd.f32 %v6959, 1.0
    %v6971 = vadd.f32 %v6961, 1.0
    %v6972 = vadd.f32 %v6963, 1.0
    %v6973 = vadd.f32 %v6965, 1.0
    %v6974 = vadd.f32 %v6967, 1.0
    %v6975 = vadd.f32 %v6969, 1.0
    %v6976 = vrcp.pop %v6970
    %v6977 = vmul.f32 1.0, %v6976
    %v6978 = vrcp.pop %v6971
    %v6979 = vmul.f32 1.0, %v6978
    %v6980 = vrcp.pop %v6972
    %v6981 = vmul.f32 1.0, %v6980
    %v6982 = vrcp.pop %v6973
    %v6983 = vmul.f32 1.0, %v6982
    %v6984 = vrcp.pop %v6974
    %v6985 = vmul.f32 1.0, %v6984
    %v6986 = vrcp.pop %v6975
    %v6987 = vmul.f32 1.0, %v6986
    %v6988 = vtanh.pop %v6950
    %v6989 = vtanh.pop %v6951
    %v6992 = vrot.slane %v6622, 6
    %v6993 = vrot.slane %v6623, 6
    %v6996 = vmul.f32 %v6981, %v6992
    %v6997 = vmul.f32 %v6983, %v6993
    %v6998 = vmul.f32 %v6977, %v6988
    %v6999 = vmul.f32 %v6979, %v6989
    %v7000 = vadd.f32 %v6996, %v6998
    %v7001 = vadd.f32 %v6997, %v6999
    %v7002 = vtanh.pop %v7000
    %v7003 = vtanh.pop %v7001
    %v7004 = vmul.f32 %v6985, %v7002
    %v7005 = vmul.f32 %v6987, %v7003
    %v7006 = vld [vmem:[#allocation2 + $0x40] sm:$0x30]
    %v7007 = vld [vmem:[#allocation2 + $0x48] sm:$0x30]
    %v7008 = vld [vmem:[#allocation2 + $0x50] sm:$0x30]
    %v7009 = vld [vmem:[#allocation2 + $0x58] sm:$0x30]
    %v7010 = vld [vmem:[#allocation2 + $0x60] sm:$0x30]
    %v7011 = vld [vmem:[#allocation2 + $0x68] sm:$0x30]
    %v7012 = vld [vmem:[#allocation2 + $0x70] sm:$0x30]
    %v7013 = vld [vmem:[#allocation2 + $0x78] sm:$0x30]
    %v7016 = vrot.slane %v7004, 2
    %v7017 = vrot.slane %v7005, 2
    %7020 = vmatprep.subr.mxu0 %v4519
    %7021 = vmatpush1.msra.mxu0 %v4518
    %7022 = vmatprep.subr.mxu0 %v4527
    %7023 = vmatpush1.msra.mxu0 %v4526
    %7024 = vmatprep.subr.mxu0 %v4535
    %7025 = vmatpush1.msra.mxu0 %v4534
    %7026 = vmatprep.subr.mxu0 %v4543
    %7027 = vmatpush1.msra.mxu0 %v4542
    %7028 = vmatprep.subr.mxu0 %v4551
    %7029 = vmatpush1.msra.mxu0 %v4550
    %7030 = vmatprep.subr.mxu0 %v4559
    %7031 = vmatpush1.msra.mxu0 %v4558
    %7032 = vmatprep.subr.mxu0 %v4567
    %7033 = vmatpush1.msra.mxu0 %v4566
    %7034 = vmatprep.subr.mxu0 %v4575
    %7035 = vmatpush1.msra.mxu0 %v4574
    %7036 = vmatprep.subr.mxu0 %v4583
    %7037 = vmatpush1.msra.mxu0 %v4582
    %7038 = vmatprep.subr.mxu0 %v4591
    %7039 = vmatpush1.msra.mxu0 %v4590
    %7040 = vmatprep.subr.mxu0 %v4599
    %7041 = vmatpush1.msra.mxu0 %v4598
    %7042 = vmatprep.subr.mxu0 %v4607
    %7043 = vmatpush1.msra.mxu0 %v4606
    %7044 = vmatprep.subr.mxu0 %v4615
    %7045 = vmatpush1.msra.mxu0 %v4614
    %7046 = vmatprep.subr.mxu0 %v4623
    %7047 = vmatpush1.msra.mxu0 %v4622
    %7048 = vmatprep.subr.mxu0 %v4631
    %7049 = vmatpush1.msra.mxu0 %v4630
    %7050 = vmatprep.subr.mxu0 %v4639
    %7051 = vmatpush1.msra.mxu0 %v4638
    %7052 = vmatprep.subr.mxu0 %v4647
    %7053 = vmatpush1.msra.mxu0 %v4646
    %7054 = vmatprep.subr.mxu0 %v4655
    %7055 = vmatpush1.msra.mxu0 %v4654
    %7056 = vmatprep.subr.mxu0 %v4663
    %7057 = vmatpush1.msra.mxu0 %v4662
    %7058 = vmatprep.subr.mxu0 %v4671
    %7059 = vmatpush1.msra.mxu0 %v4670
    %7060 = vmatprep.subr.mxu0 %v4679
    %7061 = vmatpush1.msra.mxu0 %v4678
    %7062 = vmatprep.subr.mxu0 %v4687
    %7063 = vmatpush1.msra.mxu0 %v4686
    %7064 = vmatprep.subr.mxu0 %v4695
    %7065 = vmatpush1.msra.mxu0 %v4694
    %7066 = vmatprep.subr.mxu0 %v4703
    %7067 = vmatpush1.msra.mxu0 %v4702
    %7068 = vmatprep.subr.mxu0 %v4711
    %7069 = vmatpush1.msra.mxu0 %v4710
    %7070 = vmatprep.subr.mxu0 %v4719
    %7071 = vmatpush1.msra.mxu0 %v4718
    %7072 = vmatprep.subr.mxu0 %v4727
    %7073 = vmatpush1.msra.mxu0 %v4726
    %7074 = vmatprep.subr.mxu0 %v4735
    %7075 = vmatpush1.msra.mxu0 %v4734
    %7076 = vmatprep.subr.mxu0 %v4743
    %7077 = vmatpush1.msra.mxu0 %v4742
    %7078 = vmatprep.subr.mxu0 %v4751
    %7079 = vmatpush1.msra.mxu0 %v4750
    %7080 = vmatprep.subr.mxu0 %v4759
    %7081 = vmatpush1.msra.mxu0 %v4758
    %7082 = vmatprep.subr.mxu0 %v4767
    %7083 = vmatpush1.msra.mxu0 %v4766
    %7084 = vmatprep.mubr.f32.mxu0 %v7017
    %7085 = vmatmul.mubr.f32.gmra.mrb[0].mxu0 %v7016
    %v7086 = vpop.f32.mrb[0].mxu0
    %v7087 = vadd.f32 0.0, %v7086
    %v7088 = vpop.f32.mrb[0].mxu0
    %v7089 = vadd.f32 0.0, %v7088
    %7090 = vdwg.mxu0
    %7091 = vmatprep.subr.mxu0 %v4521
    %7092 = vmatpush1.msra.mxu0 %v4520
    %7093 = vmatprep.subr.mxu0 %v4529
    %7094 = vmatpush1.msra.mxu0 %v4528
    %7095 = vmatprep.subr.mxu0 %v4537
    %7096 = vmatpush1.msra.mxu0 %v4536
    %7097 = vmatprep.subr.mxu0 %v4545
    %7098 = vmatpush1.msra.mxu0 %v4544
    %7099 = vmatprep.subr.mxu0 %v4553
    %7100 = vmatpush1.msra.mxu0 %v4552
    %7101 = vmatprep.subr.mxu0 %v4561
    %7102 = vmatpush1.msra.mxu0 %v4560
    %7103 = vmatprep.subr.mxu0 %v4569
    %7104 = vmatpush1.msra.mxu0 %v4568
    %7105 = vmatprep.subr.mxu0 %v4577
    %7106 = vmatpush1.msra.mxu0 %v4576
    %7107 = vmatprep.subr.mxu0 %v4585
    %7108 = vmatpush1.msra.mxu0 %v4584
    %7109 = vmatprep.subr.mxu0 %v4593
    %7110 = vmatpush1.msra.mxu0 %v4592
    %7111 = vmatprep.subr.mxu0 %v4601
    %7112 = vmatpush1.msra.mxu0 %v4600
    %7113 = vmatprep.subr.mxu0 %v4609
    %7114 = vmatpush1.msra.mxu0 %v4608
    %7115 = vmatprep.subr.mxu0 %v4617
    %7116 = vmatpush1.msra.mxu0 %v4616
    %7117 = vmatprep.subr.mxu0 %v4625
    %7118 = vmatpush1.msra.mxu0 %v4624
    %7119 = vmatprep.subr.mxu0 %v4633
    %7120 = vmatpush1.msra.mxu0 %v4632
    %7121 = vmatprep.subr.mxu0 %v4641
    %7122 = vmatpush1.msra.mxu0 %v4640
    %7123 = vmatprep.subr.mxu0 %v4649
    %7124 = vmatpush1.msra.mxu0 %v4648
    %7125 = vmatprep.subr.mxu0 %v4657
    %7126 = vmatpush1.msra.mxu0 %v4656
    %7127 = vmatprep.subr.mxu0 %v4665
    %7128 = vmatpush1.msra.mxu0 %v4664
    %7129 = vmatprep.subr.mxu0 %v4673
    %7130 = vmatpush1.msra.mxu0 %v4672
    %7131 = vmatprep.subr.mxu0 %v4681
    %7132 = vmatpush1.msra.mxu0 %v4680
    %7133 = vmatprep.subr.mxu0 %v4689
    %7134 = vmatpush1.msra.mxu0 %v4688
    %7135 = vmatprep.subr.mxu0 %v4697
    %7136 = vmatpush1.msra.mxu0 %v4696
    %7137 = vmatprep.subr.mxu0 %v4705
    %7138 = vmatpush1.msra.mxu0 %v4704
    %7139 = vmatprep.subr.mxu0 %v4713
    %7140 = vmatpush1.msra.mxu0 %v4712
    %7141 = vmatprep.subr.mxu0 %v4721
    %7142 = vmatpush1.msra.mxu0 %v4720
    %7143 = vmatprep.subr.mxu0 %v4729
    %7144 = vmatpush1.msra.mxu0 %v4728
    %7145 = vmatprep.subr.mxu0 %v4737
    %7146 = vmatpush1.msra.mxu0 %v4736
    %7147 = vmatprep.subr.mxu0 %v4745
    %7148 = vmatpush1.msra.mxu0 %v4744
    %7149 = vmatprep.subr.mxu0 %v4753
    %7150 = vmatpush1.msra.mxu0 %v4752
    %7151 = vmatprep.subr.mxu0 %v4761
    %7152 = vmatpush1.msra.mxu0 %v4760
    %7153 = vmatprep.subr.mxu0 %v4769
    %7154 = vmatpush1.msra.mxu0 %v4768
    %7155 = vmatprep.mubr.f32.mxu0 %v7017
    %7156 = vmatmul.mubr.f32.gmra.mrb[0].mxu0 %v7016
    %v7157 = vpop.f32.mrb[0].mxu0
    %v7158 = vadd.f32 0.0, %v7157
    %v7159 = vpop.f32.mrb[0].mxu0
    %v7160 = vadd.f32 0.0, %v7159
    %7161 = vdwg.mxu0
    %7162 = vmatprep.subr.mxu0 %v4523
    %7163 = vmatpush1.msra.mxu0 %v4522
    %7164 = vmatprep.subr.mxu0 %v4531
    %7165 = vmatpush1.msra.mxu0 %v4530
    %7166 = vmatprep.subr.mxu0 %v4539
    %7167 = vmatpush1.msra.mxu0 %v4538
    %7168 = vmatprep.subr.mxu0 %v4547
    %7169 = vmatpush1.msra.mxu0 %v4546
    %7170 = vmatprep.subr.mxu0 %v4555
    %7171 = vmatpush1.msra.mxu0 %v4554
    %7172 = vmatprep.subr.mxu0 %v4563
    %7173 = vmatpush1.msra.mxu0 %v4562
    %7174 = vmatprep.subr.mxu0 %v4571
    %7175 = vmatpush1.msra.mxu0 %v4570
    %7176 = vmatprep.subr.mxu0 %v4579
    %7177 = vmatpush1.msra.mxu0 %v4578
    %7178 = vmatprep.subr.mxu0 %v4587
    %7179 = vmatpush1.msra.mxu0 %v4586
    %7180 = vmatprep.subr.mxu0 %v4595
    %7181 = vmatpush1.msra.mxu0 %v4594
    %7182 = vmatprep.subr.mxu0 %v4603
    %7183 = vmatpush1.msra.mxu0 %v4602
    %7184 = vmatprep.subr.mxu0 %v4611
    %7185 = vmatpush1.msra.mxu0 %v4610
    %7186 = vmatprep.subr.mxu0 %v4619
    %7187 = vmatpush1.msra.mxu0 %v4618
    %7188 = vmatprep.subr.mxu0 %v4627
    %7189 = vmatpush1.msra.mxu0 %v4626
    %7190 = vmatprep.subr.mxu0 %v4635
    %7191 = vmatpush1.msra.mxu0 %v4634
    %7192 = vmatprep.subr.mxu0 %v4643
    %7193 = vmatpush1.msra.mxu0 %v4642
    %7194 = vmatprep.subr.mxu0 %v4651
    %7195 = vmatpush1.msra.mxu0 %v4650
    %7196 = vmatprep.subr.mxu0 %v4659
    %7197 = vmatpush1.msra.mxu0 %v4658
    %7198 = vmatprep.subr.mxu0 %v4667
    %7199 = vmatpush1.msra.mxu0 %v4666
    %7200 = vmatprep.subr.mxu0 %v4675
    %7201 = vmatpush1.msra.mxu0 %v4674
    %7202 = vmatprep.subr.mxu0 %v4683
    %7203 = vmatpush1.msra.mxu0 %v4682
    %7204 = vmatprep.subr.mxu0 %v4691
    %7205 = vmatpush1.msra.mxu0 %v4690
    %7206 = vmatprep.subr.mxu0 %v4699
    %7207 = vmatpush1.msra.mxu0 %v4698
    %7208 = vmatprep.subr.mxu0 %v4707
    %7209 = vmatpush1.msra.mxu0 %v4706
    %7210 = vmatprep.subr.mxu0 %v4715
    %7211 = vmatpush1.msra.mxu0 %v4714
    %7212 = vmatprep.subr.mxu0 %v4723
    %7213 = vmatpush1.msra.mxu0 %v4722
    %7214 = vmatprep.subr.mxu0 %v4731
    %7215 = vmatpush1.msra.mxu0 %v4730
    %7216 = vmatprep.subr.mxu0 %v4739
    %7217 = vmatpush1.msra.mxu0 %v4738
    %7218 = vmatprep.subr.mxu0 %v4747
    %7219 = vmatpush1.msra.mxu0 %v4746
    %7220 = vmatprep.subr.mxu0 %v4755
    %7221 = vmatpush1.msra.mxu0 %v4754
    %7222 = vmatprep.subr.mxu0 %v4763
    %7223 = vmatpush1.msra.mxu0 %v4762
    %7224 = vmatprep.subr.mxu0 %v4771
    %7225 = vmatpush1.msra.mxu0 %v4770
    %7226 = vmatprep.mubr.f32.mxu0 %v7017
    %7227 = vmatmul.mubr.f32.gmra.mrb[0].mxu0 %v7016
    %v7228 = vpop.f32.mrb[0].mxu0
    %v7229 = vadd.f32 0.0, %v7228
    %v7230 = vpop.f32.mrb[0].mxu0
    %v7231 = vadd.f32 0.0, %v7230
    %7232 = vdwg.mxu0
    %7233 = vmatprep.subr.mxu0 %v4525
    %7234 = vmatpush1.msra.mxu0 %v4524
    %7235 = vmatprep.subr.mxu0 %v4533
    %7236 = vmatpush1.msra.mxu0 %v4532
    %7237 = vmatprep.subr.mxu0 %v4541
    %7238 = vmatpush1.msra.mxu0 %v4540
    %7239 = vmatprep.subr.mxu0 %v4549
    %7240 = vmatpush1.msra.mxu0 %v4548
    %7241 = vmatprep.subr.mxu0 %v4557
    %7242 = vmatpush1.msra.mxu0 %v4556
    %7243 = vmatprep.subr.mxu0 %v4565
    %7244 = vmatpush1.msra.mxu0 %v4564
    %7245 = vmatprep.subr.mxu0 %v4573
    %7246 = vmatpush1.msra.mxu0 %v4572
    %7247 = vmatprep.subr.mxu0 %v4581
    %7248 = vmatpush1.msra.mxu0 %v4580
    %7249 = vmatprep.subr.mxu0 %v4589
    %7250 = vmatpush1.msra.mxu0 %v4588
    %7251 = vmatprep.subr.mxu0 %v4597
    %7252 = vmatpush1.msra.mxu0 %v4596
    %7253 = vmatprep.subr.mxu0 %v4605
    %7254 = vmatpush1.msra.mxu0 %v4604
    %7255 = vmatprep.subr.mxu0 %v4613
    %7256 = vmatpush1.msra.mxu0 %v4612
    %7257 = vmatprep.subr.mxu0 %v4621
    %7258 = vmatpush1.msra.mxu0 %v4620
    %7259 = vmatprep.subr.mxu0 %v4629
    %7260 = vmatpush1.msra.mxu0 %v4628
    %7261 = vmatprep.subr.mxu0 %v4637
    %7262 = vmatpush1.msra.mxu0 %v4636
    %7263 = vmatprep.subr.mxu0 %v4645
    %7264 = vmatpush1.msra.mxu0 %v4644
    %7265 = vmatprep.subr.mxu0 %v4653
    %7266 = vmatpush1.msra.mxu0 %v4652
    %7267 = vmatprep.subr.mxu0 %v4661
    %7268 = vmatpush1.msra.mxu0 %v4660
    %7269 = vmatprep.subr.mxu0 %v4669
    %7270 = vmatpush1.msra.mxu0 %v4668
    %7271 = vmatprep.subr.mxu0 %v4677
    %7272 = vmatpush1.msra.mxu0 %v4676
    %7273 = vmatprep.subr.mxu0 %v4685
    %7274 = vmatpush1.msra.mxu0 %v4684
    %7275 = vmatprep.subr.mxu0 %v4693
    %7276 = vmatpush1.msra.mxu0 %v4692
    %7277 = vmatprep.subr.mxu0 %v4701
    %7278 = vmatpush1.msra.mxu0 %v4700
    %7279 = vmatprep.subr.mxu0 %v4709
    %7280 = vmatpush1.msra.mxu0 %v4708
    %7281 = vmatprep.subr.mxu0 %v4717
    %7282 = vmatpush1.msra.mxu0 %v4716
    %7283 = vmatprep.subr.mxu0 %v4725
    %7284 = vmatpush1.msra.mxu0 %v4724
    %7285 = vmatprep.subr.mxu0 %v4733
    %7286 = vmatpush1.msra.mxu0 %v4732
    %7287 = vmatprep.subr.mxu0 %v4741
    %7288 = vmatpush1.msra.mxu0 %v4740
    %7289 = vmatprep.subr.mxu0 %v4749
    %7290 = vmatpush1.msra.mxu0 %v4748
    %7291 = vmatprep.subr.mxu0 %v4757
    %7292 = vmatpush1.msra.mxu0 %v4756
    %7293 = vmatprep.subr.mxu0 %v4765
    %7294 = vmatpush1.msra.mxu0 %v4764
    %7295 = vmatprep.subr.mxu0 %v4773
    %7296 = vmatpush1.msra.mxu0 %v4772
    %7297 = vmatprep.mubr.f32.mxu0 %v7017
    %7298 = vmatmul.mubr.f32.gmra.mrb[0].mxu0 %v7016
    %v7299 = vpop.f32.mrb[0].mxu0
    %v7300 = vadd.f32 0.0, %v7299
    %v7301 = vpop.f32.mrb[0].mxu0
    %v7302 = vadd.f32 0.0, %v7301
    %7303 = vdwg.mxu0
    %v7312 = vrot.slane %v7087, 4
    %v7313 = vrot.slane %v7089, 4
    %v7314 = vrot.slane %v7158, 4
    %v7315 = vrot.slane %v7160, 4
    %v7316 = vrot.slane %v7229, 4
    %v7317 = vrot.slane %v7231, 4
    %v7318 = vrot.slane %v7300, 4
    %v7319 = vrot.slane %v7302, 4
    %v7328 = vadd.f32 %v7006, %v7312
    %v7329 = vadd.f32 %v7007, %v7313
    %v7330 = vadd.f32 %v7008, %v7314
    %v7331 = vadd.f32 %v7009, %v7315
    %v7332 = vadd.f32 %v7010, %v7316
    %v7333 = vadd.f32 %v7011, %v7317
    %v7334 = vadd.f32 %v7012, %v7318
    %v7335 = vadd.f32 %v7013, %v7319
    %v7336 = vxor.u32 %v7328, 2147483648
    %v7337 = vxor.u32 %v7329, 2147483648
    %v7338 = vxor.u32 %v7330, 2147483648
    %v7339 = vxor.u32 %v7331, 2147483648
    %v7340 = vxor.u32 %v7332, 2147483648
    %v7341 = vxor.u32 %v7333, 2147483648
    %v7342 = vmul.f32 %v7336, 1.442695
    %v7343 = vpow.pop %v7342
    %v7344 = vmul.f32 %v7337, 1.442695
    %v7345 = vpow.pop %v7344
    %v7346 = vmul.f32 %v7338, 1.442695
    %v7347 = vpow.pop %v7346
    %v7348 = vmul.f32 %v7339, 1.442695
    %v7349 = vpow.pop %v7348
    %v7350 = vmul.f32 %v7340, 1.442695
    %v7351 = vpow.pop %v7350
    %v7352 = vmul.f32 %v7341, 1.442695
    %v7353 = vpow.pop %v7352
    %v7354 = vadd.f32 %v7343, 1.0
    %v7355 = vadd.f32 %v7345, 1.0
    %v7356 = vadd.f32 %v7347, 1.0
    %v7357 = vadd.f32 %v7349, 1.0
    %v7358 = vadd.f32 %v7351, 1.0
    %v7359 = vadd.f32 %v7353, 1.0
    %v7360 = vrcp.pop %v7354
    %v7361 = vmul.f32 1.0, %v7360
    %v7362 = vrcp.pop %v7355
    %v7363 = vmul.f32 1.0, %v7362
    %v7364 = vrcp.pop %v7356
    %v7365 = vmul.f32 1.0, %v7364
    %v7366 = vrcp.pop %v7357
    %v7367 = vmul.f32 1.0, %v7366
    %v7368 = vrcp.pop %v7358
    %v7369 = vmul.f32 1.0, %v7368
    %v7370 = vrcp.pop %v7359
    %v7371 = vmul.f32 1.0, %v7370
    %v7372 = vtanh.pop %v7334
    %v7373 = vtanh.pop %v7335
    %v7376 = vrot.slane %v7000, 6
    %v7377 = vrot.slane %v7001, 6
    %v7380 = vmul.f32 %v7365, %v7376
    %v7381 = vmul.f32 %v7367, %v7377
    %v7382 = vmul.f32 %v7361, %v7372
    %v7383 = vmul.f32 %v7363, %v7373
    %v7384 = vadd.f32 %v7380, %v7382
    %v7385 = vadd.f32 %v7381, %v7383
    %v7386 = vtanh.pop %v7384
    %v7387 = vtanh.pop %v7385
    %v7388 = vmul.f32 %v7369, %v7386
    %v7389 = vmul.f32 %v7371, %v7387
    %v7390 = vld [vmem:[#allocation2 + $0x40] sm:$0xc0]
    %v7391 = vld [vmem:[#allocation2 + $0x48] sm:$0xc0]
    %v7392 = vld [vmem:[#allocation2 + $0x50] sm:$0xc0]
    %v7393 = vld [vmem:[#allocation2 + $0x58] sm:$0xc0]
    %v7394 = vld [vmem:[#allocation2 + $0x60] sm:$0xc0]
    %v7395 = vld [vmem:[#allocation2 + $0x68] sm:$0xc0]
    %v7396 = vld [vmem:[#allocation2 + $0x70] sm:$0xc0]
    %v7397 = vld [vmem:[#allocation2 + $0x78] sm:$0xc0]
    %v7400 = vrot.slane %v7388, 4
    %v7401 = vrot.slane %v7389, 4
    %7404 = vmatprep.subr.mxu0 %v4519
    %7405 = vmatpush1.msra.mxu0 %v4518
    %7406 = vmatprep.subr.mxu0 %v4527
    %7407 = vmatpush1.msra.mxu0 %v4526
    %7408 = vmatprep.subr.mxu0 %v4535
    %7409 = vmatpush1.msra.mxu0 %v4534
    %7410 = vmatprep.subr.mxu0 %v4543
    %7411 = vmatpush1.msra.mxu0 %v4542
    %7412 = vmatprep.subr.mxu0 %v4551
    %7413 = vmatpush1.msra.mxu0 %v4550
    %7414 = vmatprep.subr.mxu0 %v4559
    %7415 = vmatpush1.msra.mxu0 %v4558
    %7416 = vmatprep.subr.mxu0 %v4567
    %7417 = vmatpush1.msra.mxu0 %v4566
    %7418 = vmatprep.subr.mxu0 %v4575
    %7419 = vmatpush1.msra.mxu0 %v4574
    %7420 = vmatprep.subr.mxu0 %v4583
    %7421 = vmatpush1.msra.mxu0 %v4582
    %7422 = vmatprep.subr.mxu0 %v4591
    %7423 = vmatpush1.msra.mxu0 %v4590
    %7424 = vmatprep.subr.mxu0 %v4599
    %7425 = vmatpush1.msra.mxu0 %v4598
    %7426 = vmatprep.subr.mxu0 %v4607
    %7427 = vmatpush1.msra.mxu0 %v4606
    %7428 = vmatprep.subr.mxu0 %v4615
    %7429 = vmatpush1.msra.mxu0 %v4614
    %7430 = vmatprep.subr.mxu0 %v4623
    %7431 = vmatpush1.msra.mxu0 %v4622
    %7432 = vmatprep.subr.mxu0 %v4631
    %7433 = vmatpush1.msra.mxu0 %v4630
    %7434 = vmatprep.subr.mxu0 %v4639
    %7435 = vmatpush1.msra.mxu0 %v4638
    %7436 = vmatprep.subr.mxu0 %v4647
    %7437 = vmatpush1.msra.mxu0 %v4646
    %7438 = vmatprep.subr.mxu0 %v4655
    %7439 = vmatpush1.msra.mxu0 %v4654
    %7440 = vmatprep.subr.mxu0 %v4663
    %7441 = vmatpush1.msra.mxu0 %v4662
    %7442 = vmatprep.subr.mxu0 %v4671
    %7443 = vmatpush1.msra.mxu0 %v4670
    %7444 = vmatprep.subr.mxu0 %v4679
    %7445 = vmatpush1.msra.mxu0 %v4678
    %7446 = vmatprep.subr.mxu0 %v4687
    %7447 = vmatpush1.msra.mxu0 %v4686
    %7448 = vmatprep.subr.mxu0 %v4695
    %7449 = vmatpush1.msra.mxu0 %v4694
    %7450 = vmatprep.subr.mxu0 %v4703
    %7451 = vmatpush1.msra.mxu0 %v4702
    %7452 = vmatprep.subr.mxu0 %v4711
    %7453 = vmatpush1.msra.mxu0 %v4710
    %7454 = vmatprep.subr.mxu0 %v4719
    %7455 = vmatpush1.msra.mxu0 %v4718
    %7456 = vmatprep.subr.mxu0 %v4727
    %7457 = vmatpush1.msra.mxu0 %v4726
    %7458 = vmatprep.subr.mxu0 %v4735
    %7459 = vmatpush1.msra.mxu0 %v4734
    %7460 = vmatprep.subr.mxu0 %v4743
    %7461 = vmatpush1.msra.mxu0 %v4742
    %7462 = vmatprep.subr.mxu0 %v4751
    %7463 = vmatpush1.msra.mxu0 %v4750
    %7464 = vmatprep.subr.mxu0 %v4759
    %7465 = vmatpush1.msra.mxu0 %v4758
    %7466 = vmatprep.subr.mxu0 %v4767
    %7467 = vmatpush1.msra.mxu0 %v4766
    %7468 = vmatprep.mubr.f32.mxu0 %v7401
    %7469 = vmatmul.mubr.f32.gmra.mrb[0].mxu0 %v7400
    %v7470 = vpop.f32.mrb[0].mxu0
    %v7471 = vadd.f32 0.0, %v7470
    %v7472 = vpop.f32.mrb[0].mxu0
    %v7473 = vadd.f32 0.0, %v7472
    %7474 = vdwg.mxu0
    %7475 = vmatprep.subr.mxu0 %v4521
    %7476 = vmatpush1.msra.mxu0 %v4520
    %7477 = vmatprep.subr.mxu0 %v4529
    %7478 = vmatpush1.msra.mxu0 %v4528
    %7479 = vmatprep.subr.mxu0 %v4537
    %7480 = vmatpush1.msra.mxu0 %v4536
    %7481 = vmatprep.subr.mxu0 %v4545
    %7482 = vmatpush1.msra.mxu0 %v4544
    %7483 = vmatprep.subr.mxu0 %v4553
    %7484 = vmatpush1.msra.mxu0 %v4552
    %7485 = vmatprep.subr.mxu0 %v4561
    %7486 = vmatpush1.msra.mxu0 %v4560
    %7487 = vmatprep.subr.mxu0 %v4569
    %7488 = vmatpush1.msra.mxu0 %v4568
    %7489 = vmatprep.subr.mxu0 %v4577
    %7490 = vmatpush1.msra.mxu0 %v4576
    %7491 = vmatprep.subr.mxu0 %v4585
    %7492 = vmatpush1.msra.mxu0 %v4584
    %7493 = vmatprep.subr.mxu0 %v4593
    %7494 = vmatpush1.msra.mxu0 %v4592
    %7495 = vmatprep.subr.mxu0 %v4601
    %7496 = vmatpush1.msra.mxu0 %v4600
    %7497 = vmatprep.subr.mxu0 %v4609
    %7498 = vmatpush1.msra.mxu0 %v4608
    %7499 = vmatprep.subr.mxu0 %v4617
    %7500 = vmatpush1.msra.mxu0 %v4616
    %7501 = vmatprep.subr.mxu0 %v4625
    %7502 = vmatpush1.msra.mxu0 %v4624
    %7503 = vmatprep.subr.mxu0 %v4633
    %7504 = vmatpush1.msra.mxu0 %v4632
    %7505 = vmatprep.subr.mxu0 %v4641
    %7506 = vmatpush1.msra.mxu0 %v4640
    %7507 = vmatprep.subr.mxu0 %v4649
    %7508 = vmatpush1.msra.mxu0 %v4648
    %7509 = vmatprep.subr.mxu0 %v4657
    %7510 = vmatpush1.msra.mxu0 %v4656
    %7511 = vmatprep.subr.mxu0 %v4665
    %7512 = vmatpush1.msra.mxu0 %v4664
    %7513 = vmatprep.subr.mxu0 %v4673
    %7514 = vmatpush1.msra.mxu0 %v4672
    %7515 = vmatprep.subr.mxu0 %v4681
    %7516 = vmatpush1.msra.mxu0 %v4680
    %7517 = vmatprep.subr.mxu0 %v4689
    %7518 = vmatpush1.msra.mxu0 %v4688
    %7519 = vmatprep.subr.mxu0 %v4697
    %7520 = vmatpush1.msra.mxu0 %v4696
    %7521 = vmatprep.subr.mxu0 %v4705
    %7522 = vmatpush1.msra.mxu0 %v4704
    %7523 = vmatprep.subr.mxu0 %v4713
    %7524 = vmatpush1.msra.mxu0 %v4712
    %7525 = vmatprep.subr.mxu0 %v4721
    %7526 = vmatpush1.msra.mxu0 %v4720
    %7527 = vmatprep.subr.mxu0 %v4729
    %7528 = vmatpush1.msra.mxu0 %v4728
    %7529 = vmatprep.subr.mxu0 %v4737
    %7530 = vmatpush1.msra.mxu0 %v4736
    %7531 = vmatprep.subr.mxu0 %v4745
    %7532 = vmatpush1.msra.mxu0 %v4744
    %7533 = vmatprep.subr.mxu0 %v4753
    %7534 = vmatpush1.msra.mxu0 %v4752
    %7535 = vmatprep.subr.mxu0 %v4761
    %7536 = vmatpush1.msra.mxu0 %v4760
    %7537 = vmatprep.subr.mxu0 %v4769
    %7538 = vmatpush1.msra.mxu0 %v4768
    %7539 = vmatprep.mubr.f32.mxu0 %v7401
    %7540 = vmatmul.mubr.f32.gmra.mrb[0].mxu0 %v7400
    %v7541 = vpop.f32.mrb[0].mxu0
    %v7542 = vadd.f32 0.0, %v7541
    %v7543 = vpop.f32.mrb[0].mxu0
    %v7544 = vadd.f32 0.0, %v7543
    %7545 = vdwg.mxu0
    %7546 = vmatprep.subr.mxu0 %v4523
    %7547 = vmatpush1.msra.mxu0 %v4522
    %7548 = vmatprep.subr.mxu0 %v4531
    %7549 = vmatpush1.msra.mxu0 %v4530
    %7550 = vmatprep.subr.mxu0 %v4539
    %7551 = vmatpush1.msra.mxu0 %v4538
    %7552 = vmatprep.subr.mxu0 %v4547
    %7553 = vmatpush1.msra.mxu0 %v4546
    %7554 = vmatprep.subr.mxu0 %v4555
    %7555 = vmatpush1.msra.mxu0 %v4554
    %7556 = vmatprep.subr.mxu0 %v4563
    %7557 = vmatpush1.msra.mxu0 %v4562
    %7558 = vmatprep.subr.mxu0 %v4571
    %7559 = vmatpush1.msra.mxu0 %v4570
    %7560 = vmatprep.subr.mxu0 %v4579
    %7561 = vmatpush1.msra.mxu0 %v4578
    %7562 = vmatprep.subr.mxu0 %v4587
    %7563 = vmatpush1.msra.mxu0 %v4586
    %7564 = vmatprep.subr.mxu0 %v4595
    %7565 = vmatpush1.msra.mxu0 %v4594
    %7566 = vmatprep.subr.mxu0 %v4603
    %7567 = vmatpush1.msra.mxu0 %v4602
    %7568 = vmatprep.subr.mxu0 %v4611
    %7569 = vmatpush1.msra.mxu0 %v4610
    %7570 = vmatprep.subr.mxu0 %v4619
    %7571 = vmatpush1.msra.mxu0 %v4618
    %7572 = vmatprep.subr.mxu0 %v4627
    %7573 = vmatpush1.msra.mxu0 %v4626
    %7574 = vmatprep.subr.mxu0 %v4635
    %7575 = vmatpush1.msra.mxu0 %v4634
    %7576 = vmatprep.subr.mxu0 %v4643
    %7577 = vmatpush1.msra.mxu0 %v4642
    %7578 = vmatprep.subr.mxu0 %v4651
    %7579 = vmatpush1.msra.mxu0 %v4650
    %7580 = vmatprep.subr.mxu0 %v4659
    %7581 = vmatpush1.msra.mxu0 %v4658
    %7582 = vmatprep.subr.mxu0 %v4667
    %7583 = vmatpush1.msra.mxu0 %v4666
    %7584 = vmatprep.subr.mxu0 %v4675
    %7585 = vmatpush1.msra.mxu0 %v4674
    %7586 = vmatprep.subr.mxu0 %v4683
    %7587 = vmatpush1.msra.mxu0 %v4682
    %7588 = vmatprep.subr.mxu0 %v4691
    %7589 = vmatpush1.msra.mxu0 %v4690
    %7590 = vmatprep.subr.mxu0 %v4699
    %7591 = vmatpush1.msra.mxu0 %v4698
    %7592 = vmatprep.subr.mxu0 %v4707
    %7593 = vmatpush1.msra.mxu0 %v4706
    %7594 = vmatprep.subr.mxu0 %v4715
    %7595 = vmatpush1.msra.mxu0 %v4714
    %7596 = vmatprep.subr.mxu0 %v4723
    %7597 = vmatpush1.msra.mxu0 %v4722
    %7598 = vmatprep.subr.mxu0 %v4731
    %7599 = vmatpush1.msra.mxu0 %v4730
    %7600 = vmatprep.subr.mxu0 %v4739
    %7601 = vmatpush1.msra.mxu0 %v4738
    %7602 = vmatprep.subr.mxu0 %v4747
    %7603 = vmatpush1.msra.mxu0 %v4746
    %7604 = vmatprep.subr.mxu0 %v4755
    %7605 = vmatpush1.msra.mxu0 %v4754
    %7606 = vmatprep.subr.mxu0 %v4763
    %7607 = vmatpush1.msra.mxu0 %v4762
    %7608 = vmatprep.subr.mxu0 %v4771
    %7609 = vmatpush1.msra.mxu0 %v4770
    %7610 = vmatprep.mubr.f32.mxu0 %v7401
    %7611 = vmatmul.mubr.f32.gmra.mrb[0].mxu0 %v7400
    %v7612 = vpop.f32.mrb[0].mxu0
    %v7613 = vadd.f32 0.0, %v7612
    %v7614 = vpop.f32.mrb[0].mxu0
    %v7615 = vadd.f32 0.0, %v7614
    %7616 = vdwg.mxu0
    %7617 = vmatprep.subr.mxu0 %v4525
    %7618 = vmatpush1.msra.mxu0 %v4524
    %7619 = vmatprep.subr.mxu0 %v4533
    %7620 = vmatpush1.msra.mxu0 %v4532
    %7621 = vmatprep.subr.mxu0 %v4541
    %7622 = vmatpush1.msra.mxu0 %v4540
    %7623 = vmatprep.subr.mxu0 %v4549
    %7624 = vmatpush1.msra.mxu0 %v4548
    %7625 = vmatprep.subr.mxu0 %v4557
    %7626 = vmatpush1.msra.mxu0 %v4556
    %7627 = vmatprep.subr.mxu0 %v4565
    %7628 = vmatpush1.msra.mxu0 %v4564
    %7629 = vmatprep.subr.mxu0 %v4573
    %7630 = vmatpush1.msra.mxu0 %v4572
    %7631 = vmatprep.subr.mxu0 %v4581
    %7632 = vmatpush1.msra.mxu0 %v4580
    %7633 = vmatprep.subr.mxu0 %v4589
    %7634 = vmatpush1.msra.mxu0 %v4588
    %7635 = vmatprep.subr.mxu0 %v4597
    %7636 = vmatpush1.msra.mxu0 %v4596
    %7637 = vmatprep.subr.mxu0 %v4605
    %7638 = vmatpush1.msra.mxu0 %v4604
    %7639 = vmatprep.subr.mxu0 %v4613
    %7640 = vmatpush1.msra.mxu0 %v4612
    %7641 = vmatprep.subr.mxu0 %v4621
    %7642 = vmatpush1.msra.mxu0 %v4620
    %7643 = vmatprep.subr.mxu0 %v4629
    %7644 = vmatpush1.msra.mxu0 %v4628
    %7645 = vmatprep.subr.mxu0 %v4637
    %7646 = vmatpush1.msra.mxu0 %v4636
    %7647 = vmatprep.subr.mxu0 %v4645
    %7648 = vmatpush1.msra.mxu0 %v4644
    %7649 = vmatprep.subr.mxu0 %v4653
    %7650 = vmatpush1.msra.mxu0 %v4652
    %7651 = vmatprep.subr.mxu0 %v4661
    %7652 = vmatpush1.msra.mxu0 %v4660
    %7653 = vmatprep.subr.mxu0 %v4669
    %7654 = vmatpush1.msra.mxu0 %v4668
    %7655 = vmatprep.subr.mxu0 %v4677
    %7656 = vmatpush1.msra.mxu0 %v4676
    %7657 = vmatprep.subr.mxu0 %v4685
    %7658 = vmatpush1.msra.mxu0 %v4684
    %7659 = vmatprep.subr.mxu0 %v4693
    %7660 = vmatpush1.msra.mxu0 %v4692
    %7661 = vmatprep.subr.mxu0 %v4701
    %7662 = vmatpush1.msra.mxu0 %v4700
    %7663 = vmatprep.subr.mxu0 %v4709
    %7664 = vmatpush1.msra.mxu0 %v4708
    %7665 = vmatprep.subr.mxu0 %v4717
    %7666 = vmatpush1.msra.mxu0 %v4716
    %7667 = vmatprep.subr.mxu0 %v4725
    %7668 = vmatpush1.msra.mxu0 %v4724
    %7669 = vmatprep.subr.mxu0 %v4733
    %7670 = vmatpush1.msra.mxu0 %v4732
    %7671 = vmatprep.subr.mxu0 %v4741
    %7672 = vmatpush1.msra.mxu0 %v4740
    %7673 = vmatprep.subr.mxu0 %v4749
    %7674 = vmatpush1.msra.mxu0 %v4748
    %7675 = vmatprep.subr.mxu0 %v4757
    %7676 = vmatpush1.msra.mxu0 %v4756
    %7677 = vmatprep.subr.mxu0 %v4765
    %7678 = vmatpush1.msra.mxu0 %v4764
    %7679 = vmatprep.subr.mxu0 %v4773
    %7680 = vmatpush1.msra.mxu0 %v4772
    %7681 = vmatprep.mubr.f32.mxu0 %v7401
    %7682 = vmatmul.mubr.f32.gmra.mrb[0].mxu0 %v7400
    %v7683 = vpop.f32.mrb[0].mxu0
    %v7684 = vadd.f32 0.0, %v7683
    %v7685 = vpop.f32.mrb[0].mxu0
    %v7686 = vadd.f32 0.0, %v7685
    %7687 = vdwg.mxu0
    %v7696 = vrot.slane %v7471, 2
    %v7697 = vrot.slane %v7473, 2
    %v7698 = vrot.slane %v7542, 2
    %v7699 = vrot.slane %v7544, 2
    %v7700 = vrot.slane %v7613, 2
    %v7701 = vrot.slane %v7615, 2
    %v7702 = vrot.slane %v7684, 2
    %v7703 = vrot.slane %v7686, 2
    %v7712 = vadd.f32 %v7390, %v7696
    %v7713 = vadd.f32 %v7391, %v7697
    %v7714 = vadd.f32 %v7392, %v7698
    %v7715 = vadd.f32 %v7393, %v7699
    %v7716 = vadd.f32 %v7394, %v7700
    %v7717 = vadd.f32 %v7395, %v7701
    %v7718 = vadd.f32 %v7396, %v7702
    %v7719 = vadd.f32 %v7397, %v7703
    %v7720 = vxor.u32 %v7712, 2147483648
    %v7721 = vxor.u32 %v7713, 2147483648
    %v7722 = vxor.u32 %v7714, 2147483648
    %v7723 = vxor.u32 %v7715, 2147483648
    %v7724 = vxor.u32 %v7716, 2147483648
    %v7725 = vxor.u32 %v7717, 2147483648
    %v7726 = vmul.f32 %v7720, 1.442695
    %v7727 = vpow.pop %v7726
    %v7728 = vmul.f32 %v7721, 1.442695
    %v7729 = vpow.pop %v7728
    %v7730 = vmul.f32 %v7722, 1.442695
    %v7731 = vpow.pop %v7730
    %v7732 = vmul.f32 %v7723, 1.442695
    %v7733 = vpow.pop %v7732
    %v7734 = vmul.f32 %v7724, 1.442695
    %v7735 = vpow.pop %v7734
    %v7736 = vmul.f32 %v7725, 1.442695
    %v7737 = vpow.pop %v7736
    %v7738 = vadd.f32 %v7727, 1.0
    %v7739 = vadd.f32 %v7729, 1.0
    %v7740 = vadd.f32 %v7731, 1.0
    %v7741 = vadd.f32 %v7733, 1.0
    %v7742 = vadd.f32 %v7735, 1.0
    %v7743 = vadd.f32 %v7737, 1.0
    %v7744 = vrcp.pop %v7738
    %v7745 = vmul.f32 1.0, %v7744
    %v7746 = vrcp.pop %v7739
    %v7747 = vmul.f32 1.0, %v7746
    %v7748 = vrcp.pop %v7740
    %v7749 = vmul.f32 1.0, %v7748
    %v7750 = vrcp.pop %v7741
    %v7751 = vmul.f32 1.0, %v7750
    %v7752 = vrcp.pop %v7742
    %v7753 = vmul.f32 1.0, %v7752
    %v7754 = vrcp.pop %v7743
    %v7755 = vmul.f32 1.0, %v7754
    %v7756 = vtanh.pop %v7718
    %v7757 = vtanh.pop %v7719
    %v7760 = vrot.slane %v7384, 6
    %v7761 = vrot.slane %v7385, 6
    %v7764 = vmul.f32 %v7749, %v7760
    %v7765 = vmul.f32 %v7751, %v7761
    %v7766 = vmul.f32 %v7745, %v7756
    %v7767 = vmul.f32 %v7747, %v7757
    %v7768 = vadd.f32 %v7764, %v7766
    %v7769 = vadd.f32 %v7765, %v7767
    %v7770 = vtanh.pop %v7768
    %v7771 = vtanh.pop %v7769
    %v7772 = vmul.f32 %v7753, %v7770
    %v7773 = vmul.f32 %v7755, %v7771
    %v7776 = vcombine.high %v7772, %v7773
    %v7778 = vunpack.c.l.s4 1983009808
    %v7779 = vunpack.c.0.s8 %v7778
    %v7780 = vlaneseq
    %v7781 = vshrl.u32 %v7780, 7
    %v7782 = vsub.s32 %v7779, %v7781
    %v7783 = vrot.slane %v7776, %v7782
    %v7784 = vcombine.high %v7783, %v7783
    %s7786 = scalar_lea.vmem [#allocation13], 4
    %7787 = vst [vmem:[%s7786] sm:$0xf] %v7784
    %v7790 = vcombine.high %v7768, %v7769
    %v7792 = vunpack.c.l.s4 1983009808
    %v7793 = vunpack.c.0.s8 %v7792
    %v7794 = vlaneseq
    %v7795 = vshrl.u32 %v7794, 7
    %v7796 = vsub.s32 %v7793, %v7795
    %v7797 = vrot.slane %v7790, %v7796
    %v7798 = vcombine.high %v7797, %v7797
    %s7800 = scalar_lea.vmem [#allocation14], 4
    %7801 = vst [vmem:[%s7800] sm:$0xf] %v7798
    // Predicated region
    $region50: #{tpu_custom_call.1} parent=1 // pred_check
      _
    $region51: #{tpu_custom_call.1} parent=1 // pred_check_branch
      %7803 = sbr.rel (0) target = $region53
    $region52: #{tpu_custom_call.1} parent=1 // pred_region
      %s7805 = ssub.s32 128, 128
      %7806 = vsyncadd [#allocation6], %s7805
      %s7807 = sshll.u32 [#allocation13], 4
      %s7808 = int_to_ptr.vmem [resolvable:$true] %s7807
      %7813 = dma.vmem_to_hbm [thread:$0]  %s7808, 128, %s7, [#allocation6], 64, 64, 4
    $region53: #{tpu_custom_call.1} parent=1 // pred_fallthru
      _
    // Predicated region
    $region54: #{tpu_custom_call.1} parent=1 // pred_check
      _
    $region55: #{tpu_custom_call.1} parent=1 // pred_check_branch
      %7815 = sbr.rel (0) target = $region57
    $region56: #{tpu_custom_call.1} parent=1 // pred_region
      %s7817 = ssub.s32 128, 128
      %7818 = vsyncadd [#allocation15], %s7817
      %s7819 = sshll.u32 [#allocation14], 4
      %s7820 = int_to_ptr.vmem [resolvable:$true] %s7819
      %7825 = dma.vmem_to_hbm [thread:$0]  %s7820, 128, %s8, [#allocation15], 64, 64, 4
    $region57: #{tpu_custom_call.1} parent=1 // pred_fallthru
      _
    // Predicated region
    $region58: #{tpu_custom_call.1} parent=1 // pred_check
      _
    $region59: #{tpu_custom_call.1} parent=1 // pred_check_branch
      %7827 = sbr.rel (0) target = $region61
    $region60: #{tpu_custom_call.1} parent=1 // pred_region
      %7828 = dma.done [#allocation6], 128
    $region61: #{tpu_custom_call.1} parent=1 // pred_fallthru
      _
    // Predicated region
    $region62: #{tpu_custom_call.1} parent=1 // pred_check
      _
    $region63: #{tpu_custom_call.1} parent=1 // pred_check_branch
      %7830 = sbr.rel (0) target = $region65
    $region64: #{tpu_custom_call.1} parent=1 // pred_region
      %7831 = dma.done [#allocation15], 128
    $region65: #{tpu_custom_call.1} parent=1 // pred_fallthru
      _
    %7832 = vsyncpa [#allocation5], 1
    %7833 = vsyncpa [#allocation8], 1
    %7834 = vsyncpa [#allocation11], 1
    %7835 = vsyncpa [#allocation6], 1
    %7836 = vsyncpa [#allocation15], 1

</llo_original>
